<compile_context>
chip_gen: v7x
topology: tpu7x:2x2x1
jax: 0.10.0
libtpu: 0.0.40
codegen_flags: <defaults>
</compile_context>

<pallas_src>
import functools

import jax
import jax.numpy as jnp
from jax.experimental import pallas as pl
from jax.experimental.pallas import tpu as pltpu

D_INPUT = 3
N_FREQS = 10
D_FILTER = 256
N_LAYERS = 8                              # -> 7 hidden Linear layers + output
SKIP = 4
D_ENC = D_INPUT * (1 + 2 * N_FREQS)       # 63
D_ENC_PAD = 64                            # zero-padded encoding width
D_OUT = 4


def _round_up(v, m):
    return (v + m - 1) // m * m


# --------------------------------------------------------------------------
# Positional encoding (matches PosEnc with log_space=True:
# order is [x, sin(2^0 x), cos(2^0 x), sin(2^1 x), cos(2^1 x), ...]).
# Computed in f32 for accuracy of sin/cos at high frequencies.
# --------------------------------------------------------------------------
def posenc(x):
    outs = [x]
    for k in range(N_FREQS):
        f = 2.0 ** k
        outs.append(jnp.sin(x * f))
        outs.append(jnp.cos(x * f))
    return jnp.concatenate(outs, axis=-1)          # (N, 63) f32


# --------------------------------------------------------------------------
# Pallas kernel: 7 x (Linear + ReLU) with a skip at layer 4, then output
# Linear.  bf16 operands, f32 MXU accumulation, f32 biases, f32 output.
# --------------------------------------------------------------------------
def nerf_mlp_kernel(xpos_ref,
                    w0_ref, b0_ref, w1_ref, b1_ref, w2_ref, b2_ref,
                    w3_ref, b3_ref, w4a_ref, w4b_ref, b4_ref,
                    w5_ref, b5_ref, w6_ref, b6_ref,
                    wout_ref, bout_ref,
                    out_ref):
    dot = functools.partial(jnp.dot, preferred_element_type=jnp.float32)
    act = lambda v: jnp.maximum(v, 0.0).astype(jnp.bfloat16)   # ReLU + bf16

    xp = xpos_ref[...]                                          # (TM, 64) bf16
    h = act(dot(xp, w0_ref[...]) + b0_ref[...])                 # (TM, 256)
    h = act(dot(h, w1_ref[...]) + b1_ref[...])
    h = act(dot(h, w2_ref[...]) + b2_ref[...])
    h = act(dot(h, w3_ref[...]) + b3_ref[...])
    # skip layer i == 4: cat([h, x_pos]) @ W4 == h @ W4a + x_pos @ W4b
    h = act(dot(h, w4a_ref[...]) + dot(xp, w4b_ref[...]) + b4_ref[...])
    h = act(dot(h, w5_ref[...]) + b5_ref[...])
    h = act(dot(h, w6_ref[...]) + b6_ref[...])
    out_ref[...] = (dot(h, wout_ref[...]) + bout_ref[...]).astype(out_ref.dtype)


@functools.partial(jax.jit, static_argnames=("tm",))
def nerf_forward(x, params, *, tm=1024):
    """x: (N, 3) float32 points.  Returns (N, 4) float32."""
    (w0, b0, w1, b1, w2, b2, w3, b3,
     w4a, w4b, b4, w5, b5, w6, b6, wout, bout) = params

    n = x.shape[0]
    tm_eff = min(tm, _round_up(n, 8))
    n_pad = _round_up(n, tm_eff)

    # Encoding: f32 math, pad 63 -> 64 columns and N -> n_pad rows, cast bf16.
    xpos = posenc(x)
    xpos = jnp.pad(xpos, ((0, n_pad - n), (0, D_ENC_PAD - D_ENC)))
    xpos = xpos.astype(jnp.bfloat16)

    bf = lambda w: w.astype(jnp.bfloat16)
    pad_k = lambda w: jnp.pad(w, ((0, D_ENC_PAD - D_ENC), (0, 0)))
    weight_args = [bf(pad_k(w0)), b0, bf(w1), b1, bf(w2), b2, bf(w3), b3,
                   bf(w4a), bf(pad_k(w4b)), b4, bf(w5), b5, bf(w6), b6,
                   bf(wout), bout]

    in_specs = [pl.BlockSpec((tm_eff, D_ENC_PAD), lambda i: (i, 0))]
    for w in weight_args:
        in_specs.append(pl.BlockSpec(w.shape, lambda i: (0, 0)))

    out = pl.pallas_call(
        nerf_mlp_kernel,
        out_shape=jax.ShapeDtypeStruct((n_pad, D_OUT), jnp.float32),
        grid_spec=pltpu.PrefetchScalarGridSpec(
            num_scalar_prefetch=0,
            grid=(n_pad // tm_eff,),
            in_specs=in_specs,
            out_specs=pl.BlockSpec((tm_eff, D_OUT), lambda i: (i, 0)),
        ),
        compiler_params=pltpu.CompilerParams(
            dimension_semantics=("parallel",),
            vmem_limit_bytes=32 * 1024 * 1024,
        ),
    )(xpos, *weight_args)
    return out[:n]


# --------------------------------------------------------------------------
# Deterministic parameter init (PyTorch-Linear-style uniform(-k, k),
# k = 1/sqrt(fan_in)).  Weights stored pre-transposed as (in, out).
# --------------------------------------------------------------------------
def init_params(key):
    def linear(key, fan_in, fan_out):
        k = 1.0 / jnp.sqrt(float(fan_in))
        kw, kb = jax.random.split(key)
        w = jax.random.uniform(kw, (fan_in, fan_out), jnp.float32, -k, k)
        b = jax.random.uniform(kb, (1, fan_out), jnp.float32, -k, k)
        return w, b

    keys = jax.random.split(key, 9)
    w0, b0 = linear(keys[0], D_ENC, D_FILTER)
    w1, b1 = linear(keys[1], D_FILTER, D_FILTER)
    w2, b2 = linear(keys[2], D_FILTER, D_FILTER)
    w3, b3 = linear(keys[3], D_FILTER, D_FILTER)
    w4, b4 = linear(keys[4], D_FILTER + D_ENC, D_FILTER)   # skip layer
    w4a, w4b = w4[:D_FILTER], w4[D_FILTER:]
    w5, b5 = linear(keys[5], D_FILTER, D_FILTER)
    w6, b6 = linear(keys[6], D_FILTER, D_FILTER)
    wout, bout = linear(keys[7], D_FILTER, D_OUT)
    return (w0, b0, w1, b1, w2, b2, w3, b3,
            w4a, w4b, b4, w5, b5, w6, b6, wout, bout)


# --------------------------------------------------------------------------
# Pure-JAX reference (mirrors the PyTorch forward).  compute_dtype=bfloat16
# mirrors the kernel's precision (bf16 operands, f32 accumulation).
# --------------------------------------------------------------------------
def nerf_reference(x, params, compute_dtype=jnp.float32):
    (w0, b0, w1, b1, w2, b2, w3, b3,
     w4a, w4b, b4, w5, b5, w6, b6, wout, bout) = params
    c = lambda a: a.astype(compute_dtype)
    dot = lambda a, b: jnp.dot(c(a), c(b), preferred_element_type=jnp.float32)
    relu = lambda v: jnp.maximum(v, 0.0)

    xp = posenc(x)
    h = relu(dot(xp, w0) + b0)
    h = relu(dot(h, w1) + b1)
    h = relu(dot(h, w2) + b2)
    h = relu(dot(h, w3) + b3)
    h = relu(dot(h, w4a) + dot(xp, w4b) + b4)    # == cat([h, xp]) @ W4 + b4
    h = relu(dot(h, w5) + b5)
    h = relu(dot(h, w6) + b6)
    return dot(h, wout) + bout


if __name__ == "__main__":
    key = jax.random.PRNGKey(0)
    kx, kp = jax.random.split(key)

    N = 4096                      # e.g. rays x samples; grid of 4 row tiles
    x = jax.random.uniform(kx, (N, D_INPUT), jnp.float32, -1.0, 1.0)
    params = init_params(kp)

    out = jax.block_until_ready(nerf_forward(x, params, tm=1024))
    assert out.shape == (N, D_OUT)
    assert bool(jnp.all(jnp.isfinite(out)))

    # Reference run at the same (bf16) operand precision as the kernel;
    # tolerance loosened vs. the old pure-f32 check accordingly.
    ref = nerf_reference(x, params, compute_dtype=jnp.bfloat16)
    err = float(jnp.max(jnp.abs(out - ref)))
    assert err < 2e-2, err

    print("KERNEL_OK")
</pallas_src>

<mosaic_0001>
module attributes {stable_mosaic.version = 11 : i64} {
  func.func @nerf_mlp_kernel(%arg0: i32, %arg1: memref<1024x64xbf16, #tpu.memory_space<vmem>>, %arg2: memref<64x256xbf16, #tpu.memory_space<vmem>>, %arg3: memref<1x256xf32, #tpu.memory_space<vmem>>, %arg4: memref<256x256xbf16, #tpu.memory_space<vmem>>, %arg5: memref<1x256xf32, #tpu.memory_space<vmem>>, %arg6: memref<256x256xbf16, #tpu.memory_space<vmem>>, %arg7: memref<1x256xf32, #tpu.memory_space<vmem>>, %arg8: memref<256x256xbf16, #tpu.memory_space<vmem>>, %arg9: memref<1x256xf32, #tpu.memory_space<vmem>>, %arg10: memref<256x256xbf16, #tpu.memory_space<vmem>>, %arg11: memref<64x256xbf16, #tpu.memory_space<vmem>>, %arg12: memref<1x256xf32, #tpu.memory_space<vmem>>, %arg13: memref<256x256xbf16, #tpu.memory_space<vmem>>, %arg14: memref<1x256xf32, #tpu.memory_space<vmem>>, %arg15: memref<256x256xbf16, #tpu.memory_space<vmem>>, %arg16: memref<1x256xf32, #tpu.memory_space<vmem>>, %arg17: memref<256x4xbf16, #tpu.memory_space<vmem>>, %arg18: memref<1x4xf32, #tpu.memory_space<vmem>>, %arg19: memref<1024x4xf32, #tpu.memory_space<vmem>>) attributes {dimension_semantics = [#tpu.dimension_semantics<parallel>], iteration_bounds = array<i64: 4>, scalar_prefetch = 0 : i64, scratch_operands = 0 : i64, tpu.core_type = #tpu.core_type<tc>, window_params = [{transform_indices = @transform_0, window_bounds = array<i64: 1024, 64>}, {pipeline_mode = #tpu.pipeline_mode<synchronous>, transform_indices = @transform_1, window_bounds = array<i64: 64, 256>}, {pipeline_mode = #tpu.pipeline_mode<synchronous>, transform_indices = @transform_2, window_bounds = array<i64: 1, 256>}, {pipeline_mode = #tpu.pipeline_mode<synchronous>, transform_indices = @transform_3, window_bounds = array<i64: 256, 256>}, {pipeline_mode = #tpu.pipeline_mode<synchronous>, transform_indices = @transform_4, window_bounds = array<i64: 1, 256>}, {pipeline_mode = #tpu.pipeline_mode<synchronous>, transform_indices = @transform_5, window_bounds = array<i64: 256, 256>}, {pipeline_mode = #tpu.pipeline_mode<synchronous>, transform_indices = @transform_6, window_bounds = array<i64: 1, 256>}, {pipeline_mode = #tpu.pipeline_mode<synchronous>, transform_indices = @transform_7, window_bounds = array<i64: 256, 256>}, {pipeline_mode = #tpu.pipeline_mode<synchronous>, transform_indices = @transform_8, window_bounds = array<i64: 1, 256>}, {pipeline_mode = #tpu.pipeline_mode<synchronous>, transform_indices = @transform_9, window_bounds = array<i64: 256, 256>}, {pipeline_mode = #tpu.pipeline_mode<synchronous>, transform_indices = @transform_10, window_bounds = array<i64: 64, 256>}, {pipeline_mode = #tpu.pipeline_mode<synchronous>, transform_indices = @transform_11, window_bounds = array<i64: 1, 256>}, {pipeline_mode = #tpu.pipeline_mode<synchronous>, transform_indices = @transform_12, window_bounds = array<i64: 256, 256>}, {pipeline_mode = #tpu.pipeline_mode<synchronous>, transform_indices = @transform_13, window_bounds = array<i64: 1, 256>}, {pipeline_mode = #tpu.pipeline_mode<synchronous>, transform_indices = @transform_14, window_bounds = array<i64: 256, 256>}, {pipeline_mode = #tpu.pipeline_mode<synchronous>, transform_indices = @transform_15, window_bounds = array<i64: 1, 256>}, {pipeline_mode = #tpu.pipeline_mode<synchronous>, transform_indices = @transform_16, window_bounds = array<i64: 256, 4>}, {pipeline_mode = #tpu.pipeline_mode<synchronous>, transform_indices = @transform_17, window_bounds = array<i64: 1, 4>}, {transform_indices = @transform_18, window_bounds = array<i64: 1024, 4>}]} {
    %c0 = arith.constant 0 : index
    %c0_0 = arith.constant 0 : index
    %0 = vector.load %arg1[%c0, %c0_0] : memref<1024x64xbf16, #tpu.memory_space<vmem>>, vector<1024x64xbf16>
    %c0_1 = arith.constant 0 : index
    %c0_2 = arith.constant 0 : index
    %1 = vector.load %arg2[%c0_1, %c0_2] : memref<64x256xbf16, #tpu.memory_space<vmem>>, vector<64x256xbf16>
    %cst = arith.constant dense<0.000000e+00> : vector<1024x256xf32>
    %2 = tpu.matmul %0, %1, %cst {dimension_numbers = #tpu.dot_dimension_numbers<[1], [0], [0], [1], [0, 0, 1, 1], [], []>} : vector<1024x64xbf16>, vector<64x256xbf16>, vector<1024x256xf32> -> vector<1024x256xf32>
    %c0_3 = arith.constant 0 : index
    %c0_4 = arith.constant 0 : index
    %3 = vector.load %arg3[%c0_3, %c0_4] : memref<1x256xf32, #tpu.memory_space<vmem>>, vector<1x256xf32>
    %4 = vector.broadcast %3 : vector<1x256xf32> to vector<1024x256xf32>
    %5 = arith.addf %2, %4 : vector<1024x256xf32>
    %cst_5 = arith.constant 0.000000e+00 : f32
    %6 = vector.broadcast %cst_5 : f32 to vector<1024x256xf32>
    %7 = arith.maximumf %5, %6 : vector<1024x256xf32>
    %8 = arith.truncf %7 : vector<1024x256xf32> to vector<1024x256xbf16>
    %c0_6 = arith.constant 0 : index
    %c0_7 = arith.constant 0 : index
    %9 = vector.load %arg4[%c0_6, %c0_7] : memref<256x256xbf16, #tpu.memory_space<vmem>>, vector<256x256xbf16>
    %cst_8 = arith.constant dense<0.000000e+00> : vector<1024x256xf32>
    %10 = tpu.matmul %8, %9, %cst_8 {dimension_numbers = #tpu.dot_dimension_numbers<[1], [0], [0], [1], [0, 0, 1, 1], [], []>} : vector<1024x256xbf16>, vector<256x256xbf16>, vector<1024x256xf32> -> vector<1024x256xf32>
    %c0_9 = arith.constant 0 : index
    %c0_10 = arith.constant 0 : index
    %11 = vector.load %arg5[%c0_9, %c0_10] : memref<1x256xf32, #tpu.memory_space<vmem>>, vector<1x256xf32>
    %12 = vector.broadcast %11 : vector<1x256xf32> to vector<1024x256xf32>
    %13 = arith.addf %10, %12 : vector<1024x256xf32>
    %cst_11 = arith.constant 0.000000e+00 : f32
    %14 = vector.broadcast %cst_11 : f32 to vector<1024x256xf32>
    %15 = arith.maximumf %13, %14 : vector<1024x256xf32>
    %16 = arith.truncf %15 : vector<1024x256xf32> to vector<1024x256xbf16>
    %c0_12 = arith.constant 0 : index
    %c0_13 = arith.constant 0 : index
    %17 = vector.load %arg6[%c0_12, %c0_13] : memref<256x256xbf16, #tpu.memory_space<vmem>>, vector<256x256xbf16>
    %cst_14 = arith.constant dense<0.000000e+00> : vector<1024x256xf32>
    %18 = tpu.matmul %16, %17, %cst_14 {dimension_numbers = #tpu.dot_dimension_numbers<[1], [0], [0], [1], [0, 0, 1, 1], [], []>} : vector<1024x256xbf16>, vector<256x256xbf16>, vector<1024x256xf32> -> vector<1024x256xf32>
    %c0_15 = arith.constant 0 : index
    %c0_16 = arith.constant 0 : index
    %19 = vector.load %arg7[%c0_15, %c0_16] : memref<1x256xf32, #tpu.memory_space<vmem>>, vector<1x256xf32>
    %20 = vector.broadcast %19 : vector<1x256xf32> to vector<1024x256xf32>
    %21 = arith.addf %18, %20 : vector<1024x256xf32>
    %cst_17 = arith.constant 0.000000e+00 : f32
    %22 = vector.broadcast %cst_17 : f32 to vector<1024x256xf32>
    %23 = arith.maximumf %21, %22 : vector<1024x256xf32>
    %24 = arith.truncf %23 : vector<1024x256xf32> to vector<1024x256xbf16>
    %c0_18 = arith.constant 0 : index
    %c0_19 = arith.constant 0 : index
    %25 = vector.load %arg8[%c0_18, %c0_19] : memref<256x256xbf16, #tpu.memory_space<vmem>>, vector<256x256xbf16>
    %cst_20 = arith.constant dense<0.000000e+00> : vector<1024x256xf32>
    %26 = tpu.matmul %24, %25, %cst_20 {dimension_numbers = #tpu.dot_dimension_numbers<[1], [0], [0], [1], [0, 0, 1, 1], [], []>} : vector<1024x256xbf16>, vector<256x256xbf16>, vector<1024x256xf32> -> vector<1024x256xf32>
    %c0_21 = arith.constant 0 : index
    %c0_22 = arith.constant 0 : index
    %27 = vector.load %arg9[%c0_21, %c0_22] : memref<1x256xf32, #tpu.memory_space<vmem>>, vector<1x256xf32>
    %28 = vector.broadcast %27 : vector<1x256xf32> to vector<1024x256xf32>
    %29 = arith.addf %26, %28 : vector<1024x256xf32>
    %cst_23 = arith.constant 0.000000e+00 : f32
    %30 = vector.broadcast %cst_23 : f32 to vector<1024x256xf32>
    %31 = arith.maximumf %29, %30 : vector<1024x256xf32>
    %32 = arith.truncf %31 : vector<1024x256xf32> to vector<1024x256xbf16>
    %c0_24 = arith.constant 0 : index
    %c0_25 = arith.constant 0 : index
    %33 = vector.load %arg10[%c0_24, %c0_25] : memref<256x256xbf16, #tpu.memory_space<vmem>>, vector<256x256xbf16>
    %cst_26 = arith.constant dense<0.000000e+00> : vector<1024x256xf32>
    %34 = tpu.matmul %32, %33, %cst_26 {dimension_numbers = #tpu.dot_dimension_numbers<[1], [0], [0], [1], [0, 0, 1, 1], [], []>} : vector<1024x256xbf16>, vector<256x256xbf16>, vector<1024x256xf32> -> vector<1024x256xf32>
    %c0_27 = arith.constant 0 : index
    %c0_28 = arith.constant 0 : index
    %35 = vector.load %arg11[%c0_27, %c0_28] : memref<64x256xbf16, #tpu.memory_space<vmem>>, vector<64x256xbf16>
    %cst_29 = arith.constant dense<0.000000e+00> : vector<1024x256xf32>
    %36 = tpu.matmul %0, %35, %cst_29 {dimension_numbers = #tpu.dot_dimension_numbers<[1], [0], [0], [1], [0, 0, 1, 1], [], []>} : vector<1024x64xbf16>, vector<64x256xbf16>, vector<1024x256xf32> -> vector<1024x256xf32>
    %37 = arith.addf %34, %36 : vector<1024x256xf32>
    %c0_30 = arith.constant 0 : index
    %c0_31 = arith.constant 0 : index
    %38 = vector.load %arg12[%c0_30, %c0_31] : memref<1x256xf32, #tpu.memory_space<vmem>>, vector<1x256xf32>
    %39 = vector.broadcast %38 : vector<1x256xf32> to vector<1024x256xf32>
    %40 = arith.addf %37, %39 : vector<1024x256xf32>
    %cst_32 = arith.constant 0.000000e+00 : f32
    %41 = vector.broadcast %cst_32 : f32 to vector<1024x256xf32>
    %42 = arith.maximumf %40, %41 : vector<1024x256xf32>
    %43 = arith.truncf %42 : vector<1024x256xf32> to vector<1024x256xbf16>
    %c0_33 = arith.constant 0 : index
    %c0_34 = arith.constant 0 : index
    %44 = vector.load %arg13[%c0_33, %c0_34] : memref<256x256xbf16, #tpu.memory_space<vmem>>, vector<256x256xbf16>
    %cst_35 = arith.constant dense<0.000000e+00> : vector<1024x256xf32>
    %45 = tpu.matmul %43, %44, %cst_35 {dimension_numbers = #tpu.dot_dimension_numbers<[1], [0], [0], [1], [0, 0, 1, 1], [], []>} : vector<1024x256xbf16>, vector<256x256xbf16>, vector<1024x256xf32> -> vector<1024x256xf32>
    %c0_36 = arith.constant 0 : index
    %c0_37 = arith.constant 0 : index
    %46 = vector.load %arg14[%c0_36, %c0_37] : memref<1x256xf32, #tpu.memory_space<vmem>>, vector<1x256xf32>
    %47 = vector.broadcast %46 : vector<1x256xf32> to vector<1024x256xf32>
    %48 = arith.addf %45, %47 : vector<1024x256xf32>
    %cst_38 = arith.constant 0.000000e+00 : f32
    %49 = vector.broadcast %cst_38 : f32 to vector<1024x256xf32>
    %50 = arith.maximumf %48, %49 : vector<1024x256xf32>
    %51 = arith.truncf %50 : vector<1024x256xf32> to vector<1024x256xbf16>
    %c0_39 = arith.constant 0 : index
    %c0_40 = arith.constant 0 : index
    %52 = vector.load %arg15[%c0_39, %c0_40] : memref<256x256xbf16, #tpu.memory_space<vmem>>, vector<256x256xbf16>
    %cst_41 = arith.constant dense<0.000000e+00> : vector<1024x256xf32>
    %53 = tpu.matmul %51, %52, %cst_41 {dimension_numbers = #tpu.dot_dimension_numbers<[1], [0], [0], [1], [0, 0, 1, 1], [], []>} : vector<1024x256xbf16>, vector<256x256xbf16>, vector<1024x256xf32> -> vector<1024x256xf32>
    %c0_42 = arith.constant 0 : index
    %c0_43 = arith.constant 0 : index
    %54 = vector.load %arg16[%c0_42, %c0_43] : memref<1x256xf32, #tpu.memory_space<vmem>>, vector<1x256xf32>
    %55 = vector.broadcast %54 : vector<1x256xf32> to vector<1024x256xf32>
    %56 = arith.addf %53, %55 : vector<1024x256xf32>
    %cst_44 = arith.constant 0.000000e+00 : f32
    %57 = vector.broadcast %cst_44 : f32 to vector<1024x256xf32>
    %58 = arith.maximumf %56, %57 : vector<1024x256xf32>
    %59 = arith.truncf %58 : vector<1024x256xf32> to vector<1024x256xbf16>
    %c0_45 = arith.constant 0 : index
    %c0_46 = arith.constant 0 : index
    %60 = vector.load %arg17[%c0_45, %c0_46] : memref<256x4xbf16, #tpu.memory_space<vmem>>, vector<256x4xbf16>
    %cst_47 = arith.constant dense<0.000000e+00> : vector<1024x4xf32>
    %61 = tpu.matmul %59, %60, %cst_47 {dimension_numbers = #tpu.dot_dimension_numbers<[1], [0], [0], [1], [0, 0, 1, 1], [], []>} : vector<1024x256xbf16>, vector<256x4xbf16>, vector<1024x4xf32> -> vector<1024x4xf32>
    %c0_48 = arith.constant 0 : index
    %c0_49 = arith.constant 0 : index
    %62 = vector.load %arg18[%c0_48, %c0_49] : memref<1x4xf32, #tpu.memory_space<vmem>>, vector<1x4xf32>
    %63 = vector.broadcast %62 : vector<1x4xf32> to vector<1024x4xf32>
    %64 = arith.addf %61, %63 : vector<1024x4xf32>
    %c0_50 = arith.constant 0 : index
    %c0_51 = arith.constant 0 : index
    %65 = vector.load %arg19[%c0_50, %c0_51] : memref<1024x4xf32, #tpu.memory_space<vmem>>, vector<1024x4xf32>
    tpu.vector_store %arg19[%c0_50, %c0_51], %64 {strides = array<i32>} : memref<1024x4xf32, #tpu.memory_space<vmem>>, vector<1024x4xf32>,
    return
  }
  func.func @transform_0(%arg0: i32) -> (i32, i32) {
    %c0_i32 = arith.constant 0 : i32
    %c0_i32_0 = arith.constant 0 : i32
    return %arg0, %c0_i32 : i32, i32
  }
  func.func @transform_1(%arg0: i32) -> (i32, i32) {
    %c0_i32 = arith.constant 0 : i32
    %c0_i32_0 = arith.constant 0 : i32
    %c0_i32_1 = arith.constant 0 : i32
    return %c0_i32, %c0_i32_0 : i32, i32
  }
  func.func @transform_2(%arg0: i32) -> (i32, i32) {
    %c0_i32 = arith.constant 0 : i32
    %c0_i32_0 = arith.constant 0 : i32
    %c0_i32_1 = arith.constant 0 : i32
    return %c0_i32, %c0_i32_0 : i32, i32
  }
  func.func @transform_3(%arg0: i32) -> (i32, i32) {
    %c0_i32 = arith.constant 0 : i32
    %c0_i32_0 = arith.constant 0 : i32
    %c0_i32_1 = arith.constant 0 : i32
    return %c0_i32, %c0_i32_0 : i32, i32
  }
  func.func @transform_4(%arg0: i32) -> (i32, i32) {
    %c0_i32 = arith.constant 0 : i32
    %c0_i32_0 = arith.constant 0 : i32
    %c0_i32_1 = arith.constant 0 : i32
    return %c0_i32, %c0_i32_0 : i32, i32
  }
  func.func @transform_5(%arg0: i32) -> (i32, i32) {
    %c0_i32 = arith.constant 0 : i32
    %c0_i32_0 = arith.constant 0 : i32
    %c0_i32_1 = arith.constant 0 : i32
    return %c0_i32, %c0_i32_0 : i32, i32
  }
  func.func @transform_6(%arg0: i32) -> (i32, i32) {
    %c0_i32 = arith.constant 0 : i32
    %c0_i32_0 = arith.constant 0 : i32
    %c0_i32_1 = arith.constant 0 : i32
    return %c0_i32, %c0_i32_0 : i32, i32
  }
  func.func @transform_7(%arg0: i32) -> (i32, i32) {
    %c0_i32 = arith.constant 0 : i32
    %c0_i32_0 = arith.constant 0 : i32
    %c0_i32_1 = arith.constant 0 : i32
    return %c0_i32, %c0_i32_0 : i32, i32
  }
  func.func @transform_8(%arg0: i32) -> (i32, i32) {
    %c0_i32 = arith.constant 0 : i32
    %c0_i32_0 = arith.constant 0 : i32
    %c0_i32_1 = arith.constant 0 : i32
    return %c0_i32, %c0_i32_0 : i32, i32
  }
  func.func @transform_9(%arg0: i32) -> (i32, i32) {
    %c0_i32 = arith.constant 0 : i32
    %c0_i32_0 = arith.constant 0 : i32
    %c0_i32_1 = arith.constant 0 : i32
    return %c0_i32, %c0_i32_0 : i32, i32
  }
  func.func @transform_10(%arg0: i32) -> (i32, i32) {
    %c0_i32 = arith.constant 0 : i32
    %c0_i32_0 = arith.constant 0 : i32
    %c0_i32_1 = arith.constant 0 : i32
    return %c0_i32, %c0_i32_0 : i32, i32
  }
  func.func @transform_11(%arg0: i32) -> (i32, i32) {
    %c0_i32 = arith.constant 0 : i32
    %c0_i32_0 = arith.constant 0 : i32
    %c0_i32_1 = arith.constant 0 : i32
    return %c0_i32, %c0_i32_0 : i32, i32
  }
  func.func @transform_12(%arg0: i32) -> (i32, i32) {
    %c0_i32 = arith.constant 0 : i32
    %c0_i32_0 = arith.constant 0 : i32
    %c0_i32_1 = arith.constant 0 : i32
    return %c0_i32, %c0_i32_0 : i32, i32
  }
  func.func @transform_13(%arg0: i32) -> (i32, i32) {
    %c0_i32 = arith.constant 0 : i32
    %c0_i32_0 = arith.constant 0 : i32
    %c0_i32_1 = arith.constant 0 : i32
    return %c0_i32, %c0_i32_0 : i32, i32
  }
  func.func @transform_14(%arg0: i32) -> (i32, i32) {
    %c0_i32 = arith.constant 0 : i32
    %c0_i32_0 = arith.constant 0 : i32
    %c0_i32_1 = arith.constant 0 : i32
    return %c0_i32, %c0_i32_0 : i32, i32
  }
  func.func @transform_15(%arg0: i32) -> (i32, i32) {
    %c0_i32 = arith.constant 0 : i32
    %c0_i32_0 = arith.constant 0 : i32
    %c0_i32_1 = arith.constant 0 : i32
    return %c0_i32, %c0_i32_0 : i32, i32
  }
  func.func @transform_16(%arg0: i32) -> (i32, i32) {
    %c0_i32 = arith.constant 0 : i32
    %c0_i32_0 = arith.constant 0 : i32
    %c0_i32_1 = arith.constant 0 : i32
    return %c0_i32, %c0_i32_0 : i32, i32
  }
  func.func @transform_17(%arg0: i32) -> (i32, i32) {
    %c0_i32 = arith.constant 0 : i32
    %c0_i32_0 = arith.constant 0 : i32
    %c0_i32_1 = arith.constant 0 : i32
    return %c0_i32, %c0_i32_0 : i32, i32
  }
  func.func @transform_18(%arg0: i32) -> (i32, i32) {
    %c0_i32 = arith.constant 0 : i32
    %c0_i32_0 = arith.constant 0 : i32
    return %arg0, %c0_i32 : i32, i32
  }
}

</mosaic_0001>

<llo_original>
// kernel: nerf_forward.1
$region0: #{nerf_forward.1}
  #allocation0 [shape = 'u32[]', space=smem, size = 0x4, offset = 0x4, fixed_abs, tag = 'smem constant byte address 0x4 - core index']
  #allocation1 [shape = 'u32[144,128]{1,0:T(1,128)}', space=vmem, size = 0x12000, scoped, tag = 'internal scratch']
  %s0 = inlined_call_operand.vmem [shape: bf16[4096,64], index: 0, kind: input, shape index: {}]
  %s1 = inlined_call_operand.vmem [shape: bf16[64,256], index: 1, kind: input, shape index: {}]
  %s2 = inlined_call_operand.vmem [shape: f32[1,256], index: 2, kind: input, shape index: {}]
  %s3 = inlined_call_operand.vmem [shape: bf16[256,256], index: 3, kind: input, shape index: {}]
  %s4 = inlined_call_operand.vmem [shape: f32[1,256], index: 4, kind: input, shape index: {}]
  %s5 = inlined_call_operand.vmem [shape: bf16[256,256], index: 5, kind: input, shape index: {}]
  %s6 = inlined_call_operand.vmem [shape: f32[1,256], index: 6, kind: input, shape index: {}]
  %s7 = inlined_call_operand.vmem [shape: bf16[256,256], index: 7, kind: input, shape index: {}]
  %s8 = inlined_call_operand.vmem [shape: f32[1,256], index: 8, kind: input, shape index: {}]
  %s9 = inlined_call_operand.vmem [shape: bf16[256,256], index: 9, kind: input, shape index: {}]
  %s10 = inlined_call_operand.vmem [shape: bf16[64,256], index: 10, kind: input, shape index: {}]
  %s11 = inlined_call_operand.vmem [shape: f32[1,256], index: 11, kind: input, shape index: {}]
  %s12 = inlined_call_operand.vmem [shape: bf16[256,256], index: 12, kind: input, shape index: {}]
  %s13 = inlined_call_operand.vmem [shape: f32[1,256], index: 13, kind: input, shape index: {}]
  %s14 = inlined_call_operand.vmem [shape: bf16[256,256], index: 14, kind: input, shape index: {}]
  %s15 = inlined_call_operand.vmem [shape: f32[1,256], index: 15, kind: input, shape index: {}]
  %s16 = inlined_call_operand.vmem [shape: bf16[256,4], index: 16, kind: input, shape index: {}]
  %s17 = inlined_call_operand.vmem [shape: f32[1,4], index: 17, kind: input, shape index: {}]
  %s18 = inlined_call_operand.vmem [shape: f32[4096,4], index: 18, kind: output, shape index: {}]
  %s19 = sld [smem:[#allocation0]]
  $region105: #{nerf_forward.1} parent=0
    _
  %s21 = ssub.s32 1, %s19
  %s22 = scalar_select 0, %s21, %s19
  loop: start=0, step=1, limit=6
  $region2: #{nerf_forward.1} parent=0 // loop_pre_header
    _
  $region3: #{nerf_forward.1} parent=0 // loop_header
    %s24 = sphi 0, %s28
    %p25 = scmp.ge.s32.totalorder %s24, 6
    %s34 = sphi 0, %s36
    %s37 = sphi 0, %s34
    %s38 = sphi 0, %s37
    %s54 = sphi 0, %s38
    %s58 = sphi 0, %s58
    %s60 = sphi 0, %s58
    %s61 = sphi 0, %s60
    %s75 = sphi 0, %s61
    %s79 = sphi 0, %s79
    %s81 = sphi 0, %s79
    %s82 = sphi 0, %s81
    %s96 = sphi 0, %s82
    %s100 = sphi 0, %s100
    %s102 = sphi 0, %s100
    %s103 = sphi 0, %s102
    %s117 = sphi 0, %s103
    %s121 = sphi 0, %s121
    %s123 = sphi 0, %s121
    %s124 = sphi 0, %s123
    %s138 = sphi 0, %s124
    %s142 = sphi 0, %s142
    %s144 = sphi 0, %s142
    %s145 = sphi 0, %s144
    %s159 = sphi 0, %s145
    %s163 = sphi 0, %s163
    %s165 = sphi 0, %s163
    %s166 = sphi 0, %s165
    %s180 = sphi 0, %s166
    %s184 = sphi 0, %s184
    %s186 = sphi 0, %s184
    %s187 = sphi 0, %s186
    %s201 = sphi 0, %s187
    %s205 = sphi 0, %s205
    %s207 = sphi 0, %s205
    %s208 = sphi 0, %s207
    %s222 = sphi 0, %s208
    %s226 = sphi 0, %s226
    %s228 = sphi 0, %s226
    %s229 = sphi 0, %s228
    %s243 = sphi 0, %s229
    %s247 = sphi 0, %s247
    %s249 = sphi 0, %s247
    %s250 = sphi 0, %s249
    %s264 = sphi 0, %s250
    %s268 = sphi 0, %s268
    %s270 = sphi 0, %s268
    %s271 = sphi 0, %s270
    %s285 = sphi 0, %s271
    %s289 = sphi 0, %s289
    %s291 = sphi 0, %s289
    %s292 = sphi 0, %s291
    %s306 = sphi 0, %s292
    %s310 = sphi 0, %s310
    %s312 = sphi 0, %s310
    %s313 = sphi 0, %s312
    %s327 = sphi 0, %s313
    %s331 = sphi 0, %s331
    %s333 = sphi 0, %s331
    %s334 = sphi 0, %s333
    %s348 = sphi 0, %s334
    %s352 = sphi 0, %s352
    %s354 = sphi 0, %s352
    %s355 = sphi 0, %s354
    %s369 = sphi 0, %s355
    %s373 = sphi 0, %s373
    %s375 = sphi 0, %s373
    %s376 = sphi 0, %s375
    %s390 = sphi 0, %s376
    %s394 = sphi 0, %s394
    %s396 = sphi 0, %s394
    %s397 = sphi 0, %s396
    %s411 = sphi 0, %s397
    %s417 = sphi 0, %s419
    %s420 = sphi 0, %s417
    %s421 = sphi 0, %s420
    %s437 = sphi 0, %s421
  $region4: #{nerf_forward.1} parent=0 // loop_header_branch
    %27 = sbr.rel (%p25) target = $region8
  $region5: #{nerf_forward.1} parent=0 // loop_body
    %s29 = ssub.s32 %s24, 1
    %s30 = ssub.s32 %s24, 2
    %s31 = sadd.s32 %s24, 1
    %s32 = ssub.s32 %s24, %s31
    %p33 = scmp.eq.s32.totalorder %s32, 0
    %s35 = sadd.s32 %s34, 1
    %s36 = scalar_select %p33, %s34, %s35
    %p39 = pneg %p33
    %p40 = scmp.eq.s32.totalorder %s24, 3
    %p41 = por %p39, %p40
    %p42 = scmp.ne.s32.totalorder %s34, %s37
    %p43 = scmp.eq.s32.totalorder %s24, 0
    %p44 = por %p42, %p43
    %p45 = scmp.ne.s32.totalorder %s34, %s37
    %p46 = scmp.eq.s32.totalorder %s29, 3
    %p47 = por %p45, %p46
    %p48 = scmp.ne.s32.totalorder %s37, %s38
    %p49 = scmp.eq.s32.totalorder %s29, 0
    %p50 = por %p48, %p49
    %p51 = scmp.ne.s32.totalorder %s37, %s38
    %p52 = scmp.eq.s32.totalorder %s30, 3
    %p53 = por %p51, %p52
    %p55 = scmp.ne.s32.totalorder %s38, %s54
    %p56 = scmp.eq.s32.totalorder %s30, 0
    %p57 = por %p55, %p56
    %s59 = sadd.s32 %s58, 1
    %p62 = scmp.eq.s32.totalorder %s24, 3
    %p63 = scmp.ne.s32.totalorder %s58, %s60
    %p64 = scmp.eq.s32.totalorder %s24, 0
    %p65 = por %p63, %p64
    %p66 = scmp.ne.s32.totalorder %s58, %s60
    %p67 = scmp.eq.s32.totalorder %s29, 3
    %p68 = por %p66, %p67
    %p69 = scmp.ne.s32.totalorder %s60, %s61
    %p70 = scmp.eq.s32.totalorder %s29, 0
    %p71 = por %p69, %p70
    %p72 = scmp.ne.s32.totalorder %s60, %s61
    %p73 = scmp.eq.s32.totalorder %s30, 3
    %p74 = por %p72, %p73
    %p76 = scmp.ne.s32.totalorder %s61, %s75
    %p77 = scmp.eq.s32.totalorder %s30, 0
    %p78 = por %p76, %p77
    %s80 = sadd.s32 %s79, 1
    %p83 = scmp.eq.s32.totalorder %s24, 3
    %p84 = scmp.ne.s32.totalorder %s79, %s81
    %p85 = scmp.eq.s32.totalorder %s24, 0
    %p86 = por %p84, %p85
    %p87 = scmp.ne.s32.totalorder %s79, %s81
    %p88 = scmp.eq.s32.totalorder %s29, 3
    %p89 = por %p87, %p88
    %p90 = scmp.ne.s32.totalorder %s81, %s82
    %p91 = scmp.eq.s32.totalorder %s29, 0
    %p92 = por %p90, %p91
    %p93 = scmp.ne.s32.totalorder %s81, %s82
    %p94 = scmp.eq.s32.totalorder %s30, 3
    %p95 = por %p93, %p94
    %p97 = scmp.ne.s32.totalorder %s82, %s96
    %p98 = scmp.eq.s32.totalorder %s30, 0
    %p99 = por %p97, %p98
    %s101 = sadd.s32 %s100, 1
    %p104 = scmp.eq.s32.totalorder %s24, 3
    %p105 = scmp.ne.s32.totalorder %s100, %s102
    %p106 = scmp.eq.s32.totalorder %s24, 0
    %p107 = por %p105, %p106
    %p108 = scmp.ne.s32.totalorder %s100, %s102
    %p109 = scmp.eq.s32.totalorder %s29, 3
    %p110 = por %p108, %p109
    %p111 = scmp.ne.s32.totalorder %s102, %s103
    %p112 = scmp.eq.s32.totalorder %s29, 0
    %p113 = por %p111, %p112
    %p114 = scmp.ne.s32.totalorder %s102, %s103
    %p115 = scmp.eq.s32.totalorder %s30, 3
    %p116 = por %p114, %p115
    %p118 = scmp.ne.s32.totalorder %s103, %s117
    %p119 = scmp.eq.s32.totalorder %s30, 0
    %p120 = por %p118, %p119
    %s122 = sadd.s32 %s121, 1
    %p125 = scmp.eq.s32.totalorder %s24, 3
    %p126 = scmp.ne.s32.totalorder %s121, %s123
    %p127 = scmp.eq.s32.totalorder %s24, 0
    %p128 = por %p126, %p127
    %p129 = scmp.ne.s32.totalorder %s121, %s123
    %p130 = scmp.eq.s32.totalorder %s29, 3
    %p131 = por %p129, %p130
    %p132 = scmp.ne.s32.totalorder %s123, %s124
    %p133 = scmp.eq.s32.totalorder %s29, 0
    %p134 = por %p132, %p133
    %p135 = scmp.ne.s32.totalorder %s123, %s124
    %p136 = scmp.eq.s32.totalorder %s30, 3
    %p137 = por %p135, %p136
    %p139 = scmp.ne.s32.totalorder %s124, %s138
    %p140 = scmp.eq.s32.totalorder %s30, 0
    %p141 = por %p139, %p140
    %s143 = sadd.s32 %s142, 1
    %p146 = scmp.eq.s32.totalorder %s24, 3
    %p147 = scmp.ne.s32.totalorder %s142, %s144
    %p148 = scmp.eq.s32.totalorder %s24, 0
    %p149 = por %p147, %p148
    %p150 = scmp.ne.s32.totalorder %s142, %s144
    %p151 = scmp.eq.s32.totalorder %s29, 3
    %p152 = por %p150, %p151
    %p153 = scmp.ne.s32.totalorder %s144, %s145
    %p154 = scmp.eq.s32.totalorder %s29, 0
    %p155 = por %p153, %p154
    %p156 = scmp.ne.s32.totalorder %s144, %s145
    %p157 = scmp.eq.s32.totalorder %s30, 3
    %p158 = por %p156, %p157
    %p160 = scmp.ne.s32.totalorder %s145, %s159
    %p161 = scmp.eq.s32.totalorder %s30, 0
    %p162 = por %p160, %p161
    %s164 = sadd.s32 %s163, 1
    %p167 = scmp.eq.s32.totalorder %s24, 3
    %p168 = scmp.ne.s32.totalorder %s163, %s165
    %p169 = scmp.eq.s32.totalorder %s24, 0
    %p170 = por %p168, %p169
    %p171 = scmp.ne.s32.totalorder %s163, %s165
    %p172 = scmp.eq.s32.totalorder %s29, 3
    %p173 = por %p171, %p172
    %p174 = scmp.ne.s32.totalorder %s165, %s166
    %p175 = scmp.eq.s32.totalorder %s29, 0
    %p176 = por %p174, %p175
    %p177 = scmp.ne.s32.totalorder %s165, %s166
    %p178 = scmp.eq.s32.totalorder %s30, 3
    %p179 = por %p177, %p178
    %p181 = scmp.ne.s32.totalorder %s166, %s180
    %p182 = scmp.eq.s32.totalorder %s30, 0
    %p183 = por %p181, %p182
    %s185 = sadd.s32 %s184, 1
    %p188 = scmp.eq.s32.totalorder %s24, 3
    %p189 = scmp.ne.s32.totalorder %s184, %s186
    %p190 = scmp.eq.s32.totalorder %s24, 0
    %p191 = por %p189, %p190
    %p192 = scmp.ne.s32.totalorder %s184, %s186
    %p193 = scmp.eq.s32.totalorder %s29, 3
    %p194 = por %p192, %p193
    %p195 = scmp.ne.s32.totalorder %s186, %s187
    %p196 = scmp.eq.s32.totalorder %s29, 0
    %p197 = por %p195, %p196
    %p198 = scmp.ne.s32.totalorder %s186, %s187
    %p199 = scmp.eq.s32.totalorder %s30, 3
    %p200 = por %p198, %p199
    %p202 = scmp.ne.s32.totalorder %s187, %s201
    %p203 = scmp.eq.s32.totalorder %s30, 0
    %p204 = por %p202, %p203
    %s206 = sadd.s32 %s205, 1
    %p209 = scmp.eq.s32.totalorder %s24, 3
    %p210 = scmp.ne.s32.totalorder %s205, %s207
    %p211 = scmp.eq.s32.totalorder %s24, 0
    %p212 = por %p210, %p211
    %p213 = scmp.ne.s32.totalorder %s205, %s207
    %p214 = scmp.eq.s32.totalorder %s29, 3
    %p215 = por %p213, %p214
    %p216 = scmp.ne.s32.totalorder %s207, %s208
    %p217 = scmp.eq.s32.totalorder %s29, 0
    %p218 = por %p216, %p217
    %p219 = scmp.ne.s32.totalorder %s207, %s208
    %p220 = scmp.eq.s32.totalorder %s30, 3
    %p221 = por %p219, %p220
    %p223 = scmp.ne.s32.totalorder %s208, %s222
    %p224 = scmp.eq.s32.totalorder %s30, 0
    %p225 = por %p223, %p224
    %s227 = sadd.s32 %s226, 1
    %p230 = scmp.eq.s32.totalorder %s24, 3
    %p231 = scmp.ne.s32.totalorder %s226, %s228
    %p232 = scmp.eq.s32.totalorder %s24, 0
    %p233 = por %p231, %p232
    %p234 = scmp.ne.s32.totalorder %s226, %s228
    %p235 = scmp.eq.s32.totalorder %s29, 3
    %p236 = por %p234, %p235
    %p237 = scmp.ne.s32.totalorder %s228, %s229
    %p238 = scmp.eq.s32.totalorder %s29, 0
    %p239 = por %p237, %p238
    %p240 = scmp.ne.s32.totalorder %s228, %s229
    %p241 = scmp.eq.s32.totalorder %s30, 3
    %p242 = por %p240, %p241
    %p244 = scmp.ne.s32.totalorder %s229, %s243
    %p245 = scmp.eq.s32.totalorder %s30, 0
    %p246 = por %p244, %p245
    %s248 = sadd.s32 %s247, 1
    %p251 = scmp.eq.s32.totalorder %s24, 3
    %p252 = scmp.ne.s32.totalorder %s247, %s249
    %p253 = scmp.eq.s32.totalorder %s24, 0
    %p254 = por %p252, %p253
    %p255 = scmp.ne.s32.totalorder %s247, %s249
    %p256 = scmp.eq.s32.totalorder %s29, 3
    %p257 = por %p255, %p256
    %p258 = scmp.ne.s32.totalorder %s249, %s250
    %p259 = scmp.eq.s32.totalorder %s29, 0
    %p260 = por %p258, %p259
    %p261 = scmp.ne.s32.totalorder %s249, %s250
    %p262 = scmp.eq.s32.totalorder %s30, 3
    %p263 = por %p261, %p262
    %p265 = scmp.ne.s32.totalorder %s250, %s264
    %p266 = scmp.eq.s32.totalorder %s30, 0
    %p267 = por %p265, %p266
    %s269 = sadd.s32 %s268, 1
    %p272 = scmp.eq.s32.totalorder %s24, 3
    %p273 = scmp.ne.s32.totalorder %s268, %s270
    %p274 = scmp.eq.s32.totalorder %s24, 0
    %p275 = por %p273, %p274
    %p276 = scmp.ne.s32.totalorder %s268, %s270
    %p277 = scmp.eq.s32.totalorder %s29, 3
    %p278 = por %p276, %p277
    %p279 = scmp.ne.s32.totalorder %s270, %s271
    %p280 = scmp.eq.s32.totalorder %s29, 0
    %p281 = por %p279, %p280
    %p282 = scmp.ne.s32.totalorder %s270, %s271
    %p283 = scmp.eq.s32.totalorder %s30, 3
    %p284 = por %p282, %p283
    %p286 = scmp.ne.s32.totalorder %s271, %s285
    %p287 = scmp.eq.s32.totalorder %s30, 0
    %p288 = por %p286, %p287
    %s290 = sadd.s32 %s289, 1
    %p293 = scmp.eq.s32.totalorder %s24, 3
    %p294 = scmp.ne.s32.totalorder %s289, %s291
    %p295 = scmp.eq.s32.totalorder %s24, 0
    %p296 = por %p294, %p295
    %p297 = scmp.ne.s32.totalorder %s289, %s291
    %p298 = scmp.eq.s32.totalorder %s29, 3
    %p299 = por %p297, %p298
    %p300 = scmp.ne.s32.totalorder %s291, %s292
    %p301 = scmp.eq.s32.totalorder %s29, 0
    %p302 = por %p300, %p301
    %p303 = scmp.ne.s32.totalorder %s291, %s292
    %p304 = scmp.eq.s32.totalorder %s30, 3
    %p305 = por %p303, %p304
    %p307 = scmp.ne.s32.totalorder %s292, %s306
    %p308 = scmp.eq.s32.totalorder %s30, 0
    %p309 = por %p307, %p308
    %s311 = sadd.s32 %s310, 1
    %p314 = scmp.eq.s32.totalorder %s24, 3
    %p315 = scmp.ne.s32.totalorder %s310, %s312
    %p316 = scmp.eq.s32.totalorder %s24, 0
    %p317 = por %p315, %p316
    %p318 = scmp.ne.s32.totalorder %s310, %s312
    %p319 = scmp.eq.s32.totalorder %s29, 3
    %p320 = por %p318, %p319
    %p321 = scmp.ne.s32.totalorder %s312, %s313
    %p322 = scmp.eq.s32.totalorder %s29, 0
    %p323 = por %p321, %p322
    %p324 = scmp.ne.s32.totalorder %s312, %s313
    %p325 = scmp.eq.s32.totalorder %s30, 3
    %p326 = por %p324, %p325
    %p328 = scmp.ne.s32.totalorder %s313, %s327
    %p329 = scmp.eq.s32.totalorder %s30, 0
    %p330 = por %p328, %p329
    %s332 = sadd.s32 %s331, 1
    %p335 = scmp.eq.s32.totalorder %s24, 3
    %p336 = scmp.ne.s32.totalorder %s331, %s333
    %p337 = scmp.eq.s32.totalorder %s24, 0
    %p338 = por %p336, %p337
    %p339 = scmp.ne.s32.totalorder %s331, %s333
    %p340 = scmp.eq.s32.totalorder %s29, 3
    %p341 = por %p339, %p340
    %p342 = scmp.ne.s32.totalorder %s333, %s334
    %p343 = scmp.eq.s32.totalorder %s29, 0
    %p344 = por %p342, %p343
    %p345 = scmp.ne.s32.totalorder %s333, %s334
    %p346 = scmp.eq.s32.totalorder %s30, 3
    %p347 = por %p345, %p346
    %p349 = scmp.ne.s32.totalorder %s334, %s348
    %p350 = scmp.eq.s32.totalorder %s30, 0
    %p351 = por %p349, %p350
    %s353 = sadd.s32 %s352, 1
    %p356 = scmp.eq.s32.totalorder %s24, 3
    %p357 = scmp.ne.s32.totalorder %s352, %s354
    %p358 = scmp.eq.s32.totalorder %s24, 0
    %p359 = por %p357, %p358
    %p360 = scmp.ne.s32.totalorder %s352, %s354
    %p361 = scmp.eq.s32.totalorder %s29, 3
    %p362 = por %p360, %p361
    %p363 = scmp.ne.s32.totalorder %s354, %s355
    %p364 = scmp.eq.s32.totalorder %s29, 0
    %p365 = por %p363, %p364
    %p366 = scmp.ne.s32.totalorder %s354, %s355
    %p367 = scmp.eq.s32.totalorder %s30, 3
    %p368 = por %p366, %p367
    %p370 = scmp.ne.s32.totalorder %s355, %s369
    %p371 = scmp.eq.s32.totalorder %s30, 0
    %p372 = por %p370, %p371
    %s374 = sadd.s32 %s373, 1
    %p377 = scmp.eq.s32.totalorder %s24, 3
    %p378 = scmp.ne.s32.totalorder %s373, %s375
    %p379 = scmp.eq.s32.totalorder %s24, 0
    %p380 = por %p378, %p379
    %p381 = scmp.ne.s32.totalorder %s373, %s375
    %p382 = scmp.eq.s32.totalorder %s29, 3
    %p383 = por %p381, %p382
    %p384 = scmp.ne.s32.totalorder %s375, %s376
    %p385 = scmp.eq.s32.totalorder %s29, 0
    %p386 = por %p384, %p385
    %p387 = scmp.ne.s32.totalorder %s375, %s376
    %p388 = scmp.eq.s32.totalorder %s30, 3
    %p389 = por %p387, %p388
    %p391 = scmp.ne.s32.totalorder %s376, %s390
    %p392 = scmp.eq.s32.totalorder %s30, 0
    %p393 = por %p391, %p392
    %s395 = sadd.s32 %s394, 1
    %p398 = scmp.eq.s32.totalorder %s24, 3
    %p399 = scmp.ne.s32.totalorder %s394, %s396
    %p400 = scmp.eq.s32.totalorder %s24, 0
    %p401 = por %p399, %p400
    %p402 = scmp.ne.s32.totalorder %s394, %s396
    %p403 = scmp.eq.s32.totalorder %s29, 3
    %p404 = por %p402, %p403
    %p405 = scmp.ne.s32.totalorder %s396, %s397
    %p406 = scmp.eq.s32.totalorder %s29, 0
    %p407 = por %p405, %p406
    %p408 = scmp.ne.s32.totalorder %s396, %s397
    %p409 = scmp.eq.s32.totalorder %s30, 3
    %p410 = por %p408, %p409
    %p412 = scmp.ne.s32.totalorder %s397, %s411
    %p413 = scmp.eq.s32.totalorder %s30, 0
    %p414 = por %p412, %p413
    %s415 = ssub.s32 %s24, %s31
    %p416 = scmp.eq.s32.totalorder %s415, 0
    %s418 = sadd.s32 %s417, 1
    %s419 = scalar_select %p416, %s417, %s418
    %p422 = pneg %p416
    %p423 = scmp.eq.s32.totalorder %s24, 3
    %p424 = por %p422, %p423
    %p425 = scmp.ne.s32.totalorder %s417, %s420
    %p426 = scmp.eq.s32.totalorder %s24, 0
    %p427 = por %p425, %p426
    %p428 = scmp.ne.s32.totalorder %s417, %s420
    %p429 = scmp.eq.s32.totalorder %s29, 3
    %p430 = por %p428, %p429
    %p431 = scmp.ne.s32.totalorder %s420, %s421
    %p432 = scmp.eq.s32.totalorder %s29, 0
    %p433 = por %p431, %p432
    %p434 = scmp.ne.s32.totalorder %s420, %s421
    %p435 = scmp.eq.s32.totalorder %s30, 3
    %p436 = por %p434, %p435
    %p438 = scmp.ne.s32.totalorder %s421, %s437
    %p439 = scmp.eq.s32.totalorder %s30, 0
    %p440 = por %p438, %p439
    %p441 = scmp.le.s32.totalorder 1, %s24
    %p442 = scmp.lt.s32.totalorder %s24, 5
    %p443 = pnand %p441, %p442
    %p444 = pneg %p443
    // Predicated region
    $region9: #{nerf_forward.1} parent=5 // pred_check
      _
    $region10: #{nerf_forward.1} parent=5 // pred_check_branch
      %446 = sbr.rel (%p443) target = $region12
    $region11: #{nerf_forward.1} parent=5 // pred_region
      %s447 = ssub.s32 %s24, 1
      // Predicated region
      $region13: #{nerf_forward.1} parent=11 // pred_check
        %p448 = pneg %p71
      $region14: #{nerf_forward.1} parent=11 // pred_check_branch
        %450 = sbr.rel (%p448) target = $region16
      $region15: #{nerf_forward.1} parent=11 // pred_region
        _
      $region16: #{nerf_forward.1} parent=11 // pred_fallthru
        _
      // Predicated region
      $region17: #{nerf_forward.1} parent=11 // pred_check
        %p451 = pneg %p92
      $region18: #{nerf_forward.1} parent=11 // pred_check_branch
        %453 = sbr.rel (%p451) target = $region20
      $region19: #{nerf_forward.1} parent=11 // pred_region
        _
      $region20: #{nerf_forward.1} parent=11 // pred_fallthru
        _
      // Predicated region
      $region21: #{nerf_forward.1} parent=11 // pred_check
        %p454 = pneg %p113
      $region22: #{nerf_forward.1} parent=11 // pred_check_branch
        %456 = sbr.rel (%p454) target = $region24
      $region23: #{nerf_forward.1} parent=11 // pred_region
        _
      $region24: #{nerf_forward.1} parent=11 // pred_fallthru
        _
      // Predicated region
      $region25: #{nerf_forward.1} parent=11 // pred_check
        %p457 = pneg %p134
      $region26: #{nerf_forward.1} parent=11 // pred_check_branch
        %459 = sbr.rel (%p457) target = $region28
      $region27: #{nerf_forward.1} parent=11 // pred_region
        _
      $region28: #{nerf_forward.1} parent=11 // pred_fallthru
        _
      // Predicated region
      $region29: #{nerf_forward.1} parent=11 // pred_check
        %p460 = pneg %p155
      $region30: #{nerf_forward.1} parent=11 // pred_check_branch
        %462 = sbr.rel (%p460) target = $region32
      $region31: #{nerf_forward.1} parent=11 // pred_region
        _
      $region32: #{nerf_forward.1} parent=11 // pred_fallthru
        _
      // Predicated region
      $region33: #{nerf_forward.1} parent=11 // pred_check
        %p463 = pneg %p176
      $region34: #{nerf_forward.1} parent=11 // pred_check_branch
        %465 = sbr.rel (%p463) target = $region36
      $region35: #{nerf_forward.1} parent=11 // pred_region
        _
      $region36: #{nerf_forward.1} parent=11 // pred_fallthru
        _
      // Predicated region
      $region37: #{nerf_forward.1} parent=11 // pred_check
        %p466 = pneg %p197
      $region38: #{nerf_forward.1} parent=11 // pred_check_branch
        %468 = sbr.rel (%p466) target = $region40
      $region39: #{nerf_forward.1} parent=11 // pred_region
        _
      $region40: #{nerf_forward.1} parent=11 // pred_fallthru
        _
      // Predicated region
      $region41: #{nerf_forward.1} parent=11 // pred_check
        %p469 = pneg %p218
      $region42: #{nerf_forward.1} parent=11 // pred_check_branch
        %471 = sbr.rel (%p469) target = $region44
      $region43: #{nerf_forward.1} parent=11 // pred_region
        _
      $region44: #{nerf_forward.1} parent=11 // pred_fallthru
        _
      // Predicated region
      $region45: #{nerf_forward.1} parent=11 // pred_check
        %p472 = pneg %p239
      $region46: #{nerf_forward.1} parent=11 // pred_check_branch
        %474 = sbr.rel (%p472) target = $region48
      $region47: #{nerf_forward.1} parent=11 // pred_region
        _
      $region48: #{nerf_forward.1} parent=11 // pred_fallthru
        _
      // Predicated region
      $region49: #{nerf_forward.1} parent=11 // pred_check
        %p475 = pneg %p260
      $region50: #{nerf_forward.1} parent=11 // pred_check_branch
        %477 = sbr.rel (%p475) target = $region52
      $region51: #{nerf_forward.1} parent=11 // pred_region
        _
      $region52: #{nerf_forward.1} parent=11 // pred_fallthru
        _
      // Predicated region
      $region53: #{nerf_forward.1} parent=11 // pred_check
        %p478 = pneg %p281
      $region54: #{nerf_forward.1} parent=11 // pred_check_branch
        %480 = sbr.rel (%p478) target = $region56
      $region55: #{nerf_forward.1} parent=11 // pred_region
        _
      $region56: #{nerf_forward.1} parent=11 // pred_fallthru
        _
      // Predicated region
      $region57: #{nerf_forward.1} parent=11 // pred_check
        %p481 = pneg %p302
      $region58: #{nerf_forward.1} parent=11 // pred_check_branch
        %483 = sbr.rel (%p481) target = $region60
      $region59: #{nerf_forward.1} parent=11 // pred_region
        _
      $region60: #{nerf_forward.1} parent=11 // pred_fallthru
        _
      // Predicated region
      $region61: #{nerf_forward.1} parent=11 // pred_check
        %p484 = pneg %p323
      $region62: #{nerf_forward.1} parent=11 // pred_check_branch
        %486 = sbr.rel (%p484) target = $region64
      $region63: #{nerf_forward.1} parent=11 // pred_region
        _
      $region64: #{nerf_forward.1} parent=11 // pred_fallthru
        _
      // Predicated region
      $region65: #{nerf_forward.1} parent=11 // pred_check
        %p487 = pneg %p344
      $region66: #{nerf_forward.1} parent=11 // pred_check_branch
        %489 = sbr.rel (%p487) target = $region68
      $region67: #{nerf_forward.1} parent=11 // pred_region
        _
      $region68: #{nerf_forward.1} parent=11 // pred_fallthru
        _
      // Predicated region
      $region69: #{nerf_forward.1} parent=11 // pred_check
        %p490 = pneg %p365
      $region70: #{nerf_forward.1} parent=11 // pred_check_branch
        %492 = sbr.rel (%p490) target = $region72
      $region71: #{nerf_forward.1} parent=11 // pred_region
        _
      $region72: #{nerf_forward.1} parent=11 // pred_fallthru
        _
      // Predicated region
      $region73: #{nerf_forward.1} parent=11 // pred_check
        %p493 = pneg %p386
      $region74: #{nerf_forward.1} parent=11 // pred_check_branch
        %495 = sbr.rel (%p493) target = $region76
      $region75: #{nerf_forward.1} parent=11 // pred_region
        _
      $region76: #{nerf_forward.1} parent=11 // pred_fallthru
        _
      // Predicated region
      $region77: #{nerf_forward.1} parent=11 // pred_check
        %p496 = pneg %p407
      $region78: #{nerf_forward.1} parent=11 // pred_check_branch
        %498 = sbr.rel (%p496) target = $region80
      $region79: #{nerf_forward.1} parent=11 // pred_region
        _
      $region80: #{nerf_forward.1} parent=11 // pred_fallthru
        _
    $region12: #{nerf_forward.1} parent=5 // pred_fallthru
      _
    %p499 = scmp.lt.s32.totalorder %s24, 4
    // Predicated region
    $region81: #{nerf_forward.1} parent=5 // pred_check
      %p500 = pneg %p499
    $region82: #{nerf_forward.1} parent=5 // pred_check_branch
      %502 = sbr.rel (%p500) target = $region84
    $region83: #{nerf_forward.1} parent=5 // pred_region
      // Predicated region
      $region85: #{nerf_forward.1} parent=83 // pred_check
        %p503 = pneg %p44
      $region86: #{nerf_forward.1} parent=83 // pred_check_branch
        %505 = sbr.rel (%p503) target = $region88
      $region87: #{nerf_forward.1} parent=83 // pred_region
        %s506 = smul.u32 128, %s24
        %p507 = scmp.lt.s32.totalorder %s506, 511
        %s508 = scalar_select %p507, %s506, 511
        %s509 = smul.addr %s508, 4
        %s510 = scalar_lea.vmem %s0, %s509
        %s511 = smul.u32 128, %s24
      $region88: #{nerf_forward.1} parent=83 // pred_fallthru
        _
    $region84: #{nerf_forward.1} parent=5 // pred_fallthru
      _
    %p512 = scmp.le.s32.totalorder 1, %s24
    %p513 = scmp.lt.s32.totalorder %s24, 5
    %p514 = pnand %p512, %p513
    %p515 = pneg %p514
    // Predicated region
    $region89: #{nerf_forward.1} parent=5 // pred_check
      _
    $region90: #{nerf_forward.1} parent=5 // pred_check_branch
      %517 = sbr.rel (%p514) target = $region92
    $region91: #{nerf_forward.1} parent=5 // pred_region
      %s518 = ssub.s32 %s24, 1
      %s519 = smul.u32 128, %s29
      %p520 = scmp.lt.s32.totalorder %s519, 511
      %s521 = scalar_select %p520, %s519, 511
      %s522 = smul.addr %s521, 4
      %s523 = scalar_lea.vmem %s0, %s522
      %p524 = pneg %p50
      %p525 = pneg %p47
      %p526 = pneg %p71
      %p527 = pneg %p68
      %p528 = pneg %p92
      %p529 = pneg %p89
      %p530 = pneg %p113
      %p531 = pneg %p110
      %p532 = pneg %p134
      %p533 = pneg %p131
      %p534 = pneg %p155
      %p535 = pneg %p152
      %p536 = pneg %p176
      %p537 = pneg %p173
      %p538 = pneg %p197
      %p539 = pneg %p194
      %p540 = pneg %p218
      %p541 = pneg %p215
      %p542 = pneg %p239
      %p543 = pneg %p236
      %p544 = pneg %p260
      %p545 = pneg %p257
      %p546 = pneg %p281
      %p547 = pneg %p278
      %p548 = pneg %p302
      %p549 = pneg %p299
      %p550 = pneg %p323
      %p551 = pneg %p320
      %p552 = pneg %p344
      %p553 = pneg %p341
      %p554 = pneg %p365
      %p555 = pneg %p362
      %p556 = pneg %p386
      %p557 = pneg %p383
      %p558 = pneg %p407
      %p559 = pneg %p404
      %p560 = pneg %p433
      %p561 = pneg %p430
      %s562 = smul.u32 128, %s29
      %p563 = scmp.lt.s32.totalorder %s562, 511
      %s564 = scalar_select %p563, %s562, 511
      %s565 = smul.addr %s564, 8
      %s566 = scalar_lea.vmem %s18, %s565
      %s567 = smul.u32 128, %s29
      %p568 = scmp.lt.s32.totalorder %s567, 511
      %s569 = scalar_select %p568, %s567, 511
      %s570 = smul.addr %s569, 4
      %s571 = scalar_lea.vmem %s0, %s570
      %s572 = smul.u32 128, %s29
      %s573 = smul.u32 128, %s29
      %p574 = scmp.lt.s32.totalorder %s573, 511
      %s575 = scalar_select %p574, %s573, 511
      %s576 = smul.addr %s575, 8
      %s577 = scalar_lea.vmem %s18, %s576
      %s578 = smul.u32 128, %s29
      %v580 = vld [vmem:[%s571] sm:$0xf]
      %v581 = vld [vmem:[%s571 + $0x4] sm:$0xf]
      %v582 = vld [vmem:[%s571 + $0x8] sm:$0xf]
      %v583 = vld [vmem:[%s571 + $0xc] sm:$0xf]
      %v584 = vld [vmem:[%s571 + $0x10] sm:$0xf]
      %v585 = vld [vmem:[%s571 + $0x14] sm:$0xf]
      %v586 = vld [vmem:[%s571 + $0x18] sm:$0xf]
      %v587 = vld [vmem:[%s571 + $0x1c] sm:$0xf]
      %v588 = vld [vmem:[%s571 + $0x20] sm:$0xf]
      %v589 = vld [vmem:[%s571 + $0x24] sm:$0xf]
      %v590 = vld [vmem:[%s571 + $0x28] sm:$0xf]
      %v591 = vld [vmem:[%s571 + $0x2c] sm:$0xf]
      %v592 = vld [vmem:[%s571 + $0x30] sm:$0xf]
      %v593 = vld [vmem:[%s571 + $0x34] sm:$0xf]
      %v594 = vld [vmem:[%s571 + $0x38] sm:$0xf]
      %v595 = vld [vmem:[%s571 + $0x3c] sm:$0xf]
      %v596 = vld [vmem:[%s571 + $0x40] sm:$0xf]
      %v597 = vld [vmem:[%s571 + $0x44] sm:$0xf]
      %v598 = vld [vmem:[%s571 + $0x48] sm:$0xf]
      %v599 = vld [vmem:[%s571 + $0x4c] sm:$0xf]
      %v600 = vld [vmem:[%s571 + $0x50] sm:$0xf]
      %v601 = vld [vmem:[%s571 + $0x54] sm:$0xf]
      %v602 = vld [vmem:[%s571 + $0x58] sm:$0xf]
      %v603 = vld [vmem:[%s571 + $0x5c] sm:$0xf]
      %v604 = vld [vmem:[%s571 + $0x60] sm:$0xf]
      %v605 = vld [vmem:[%s571 + $0x64] sm:$0xf]
      %v606 = vld [vmem:[%s571 + $0x68] sm:$0xf]
      %v607 = vld [vmem:[%s571 + $0x6c] sm:$0xf]
      %v608 = vld [vmem:[%s571 + $0x70] sm:$0xf]
      %v609 = vld [vmem:[%s571 + $0x74] sm:$0xf]
      %v610 = vld [vmem:[%s571 + $0x78] sm:$0xf]
      %v611 = vld [vmem:[%s571 + $0x7c] sm:$0xf]
      %v612 = vld [vmem:[%s571 + $0x80] sm:$0xf]
      %v613 = vld [vmem:[%s571 + $0x84] sm:$0xf]
      %v614 = vld [vmem:[%s571 + $0x88] sm:$0xf]
      %v615 = vld [vmem:[%s571 + $0x8c] sm:$0xf]
      %v616 = vld [vmem:[%s571 + $0x90] sm:$0xf]
      %v617 = vld [vmem:[%s571 + $0x94] sm:$0xf]
      %v618 = vld [vmem:[%s571 + $0x98] sm:$0xf]
      %v619 = vld [vmem:[%s571 + $0x9c] sm:$0xf]
      %v620 = vld [vmem:[%s571 + $0xa0] sm:$0xf]
      %v621 = vld [vmem:[%s571 + $0xa4] sm:$0xf]
      %v622 = vld [vmem:[%s571 + $0xa8] sm:$0xf]
      %v623 = vld [vmem:[%s571 + $0xac] sm:$0xf]
      %v624 = vld [vmem:[%s571 + $0xb0] sm:$0xf]
      %v625 = vld [vmem:[%s571 + $0xb4] sm:$0xf]
      %v626 = vld [vmem:[%s571 + $0xb8] sm:$0xf]
      %v627 = vld [vmem:[%s571 + $0xbc] sm:$0xf]
      %v628 = vld [vmem:[%s571 + $0xc0] sm:$0xf]
      %v629 = vld [vmem:[%s571 + $0xc4] sm:$0xf]
      %v630 = vld [vmem:[%s571 + $0xc8] sm:$0xf]
      %v631 = vld [vmem:[%s571 + $0xcc] sm:$0xf]
      %v632 = vld [vmem:[%s571 + $0xd0] sm:$0xf]
      %v633 = vld [vmem:[%s571 + $0xd4] sm:$0xf]
      %v634 = vld [vmem:[%s571 + $0xd8] sm:$0xf]
      %v635 = vld [vmem:[%s571 + $0xdc] sm:$0xf]
      %v636 = vld [vmem:[%s571 + $0xe0] sm:$0xf]
      %v637 = vld [vmem:[%s571 + $0xe4] sm:$0xf]
      %v638 = vld [vmem:[%s571 + $0xe8] sm:$0xf]
      %v639 = vld [vmem:[%s571 + $0xec] sm:$0xf]
      %v640 = vld [vmem:[%s571 + $0xf0] sm:$0xf]
      %v641 = vld [vmem:[%s571 + $0xf4] sm:$0xf]
      %v642 = vld [vmem:[%s571 + $0xf8] sm:$0xf]
      %v643 = vld [vmem:[%s571 + $0xfc] sm:$0xf]
      %v644 = vld [vmem:[%s571 + $0x100] sm:$0xf]
      %v645 = vld [vmem:[%s571 + $0x104] sm:$0xf]
      %v646 = vld [vmem:[%s571 + $0x108] sm:$0xf]
      %v647 = vld [vmem:[%s571 + $0x10c] sm:$0xf]
      %v648 = vld [vmem:[%s571 + $0x110] sm:$0xf]
      %v649 = vld [vmem:[%s571 + $0x114] sm:$0xf]
      %v650 = vld [vmem:[%s571 + $0x118] sm:$0xf]
      %v651 = vld [vmem:[%s571 + $0x11c] sm:$0xf]
      %v652 = vld [vmem:[%s571 + $0x120] sm:$0xf]
      %v653 = vld [vmem:[%s571 + $0x124] sm:$0xf]
      %v654 = vld [vmem:[%s571 + $0x128] sm:$0xf]
      %v655 = vld [vmem:[%s571 + $0x12c] sm:$0xf]
      %v656 = vld [vmem:[%s571 + $0x130] sm:$0xf]
      %v657 = vld [vmem:[%s571 + $0x134] sm:$0xf]
      %v658 = vld [vmem:[%s571 + $0x138] sm:$0xf]
      %v659 = vld [vmem:[%s571 + $0x13c] sm:$0xf]
      %v660 = vld [vmem:[%s571 + $0x140] sm:$0xf]
      %v661 = vld [vmem:[%s571 + $0x144] sm:$0xf]
      %v662 = vld [vmem:[%s571 + $0x148] sm:$0xf]
      %v663 = vld [vmem:[%s571 + $0x14c] sm:$0xf]
      %v664 = vld [vmem:[%s571 + $0x150] sm:$0xf]
      %v665 = vld [vmem:[%s571 + $0x154] sm:$0xf]
      %v666 = vld [vmem:[%s571 + $0x158] sm:$0xf]
      %v667 = vld [vmem:[%s571 + $0x15c] sm:$0xf]
      %v668 = vld [vmem:[%s571 + $0x160] sm:$0xf]
      %v669 = vld [vmem:[%s571 + $0x164] sm:$0xf]
      %v670 = vld [vmem:[%s571 + $0x168] sm:$0xf]
      %v671 = vld [vmem:[%s571 + $0x16c] sm:$0xf]
      %v672 = vld [vmem:[%s571 + $0x170] sm:$0xf]
      %v673 = vld [vmem:[%s571 + $0x174] sm:$0xf]
      %v674 = vld [vmem:[%s571 + $0x178] sm:$0xf]
      %v675 = vld [vmem:[%s571 + $0x17c] sm:$0xf]
      %v676 = vld [vmem:[%s571 + $0x180] sm:$0xf]
      %v677 = vld [vmem:[%s571 + $0x184] sm:$0xf]
      %v678 = vld [vmem:[%s571 + $0x188] sm:$0xf]
      %v679 = vld [vmem:[%s571 + $0x18c] sm:$0xf]
      %v680 = vld [vmem:[%s571 + $0x190] sm:$0xf]
      %v681 = vld [vmem:[%s571 + $0x194] sm:$0xf]
      %v682 = vld [vmem:[%s571 + $0x198] sm:$0xf]
      %v683 = vld [vmem:[%s571 + $0x19c] sm:$0xf]
      %v684 = vld [vmem:[%s571 + $0x1a0] sm:$0xf]
      %v685 = vld [vmem:[%s571 + $0x1a4] sm:$0xf]
      %v686 = vld [vmem:[%s571 + $0x1a8] sm:$0xf]
      %v687 = vld [vmem:[%s571 + $0x1ac] sm:$0xf]
      %v688 = vld [vmem:[%s571 + $0x1b0] sm:$0xf]
      %v689 = vld [vmem:[%s571 + $0x1b4] sm:$0xf]
      %v690 = vld [vmem:[%s571 + $0x1b8] sm:$0xf]
      %v691 = vld [vmem:[%s571 + $0x1bc] sm:$0xf]
      %v692 = vld [vmem:[%s571 + $0x1c0] sm:$0xf]
      %v693 = vld [vmem:[%s571 + $0x1c4] sm:$0xf]
      %v694 = vld [vmem:[%s571 + $0x1c8] sm:$0xf]
      %v695 = vld [vmem:[%s571 + $0x1cc] sm:$0xf]
      %v696 = vld [vmem:[%s571 + $0x1d0] sm:$0xf]
      %v697 = vld [vmem:[%s571 + $0x1d4] sm:$0xf]
      %v698 = vld [vmem:[%s571 + $0x1d8] sm:$0xf]
      %v699 = vld [vmem:[%s571 + $0x1dc] sm:$0xf]
      %v700 = vld [vmem:[%s571 + $0x1e0] sm:$0xf]
      %v701 = vld [vmem:[%s571 + $0x1e4] sm:$0xf]
      %v702 = vld [vmem:[%s571 + $0x1e8] sm:$0xf]
      %v703 = vld [vmem:[%s571 + $0x1ec] sm:$0xf]
      %v704 = vld [vmem:[%s571 + $0x1f0] sm:$0xf]
      %v705 = vld [vmem:[%s571 + $0x1f4] sm:$0xf]
      %v706 = vld [vmem:[%s571 + $0x1f8] sm:$0xf]
      %v707 = vld [vmem:[%s571 + $0x1fc] sm:$0xf]
      %v708 = vld [vmem:[%s1] sm:$0xff]
      %v709 = vld [vmem:[%s1 + $0x8] sm:$0xff]
      %v710 = vld [vmem:[%s1 + $0x10] sm:$0xff]
      %v711 = vld [vmem:[%s1 + $0x18] sm:$0xff]
      %v712 = vld [vmem:[%s1 + $0x20] sm:$0xff]
      %v713 = vld [vmem:[%s1 + $0x28] sm:$0xff]
      %v714 = vld [vmem:[%s1 + $0x30] sm:$0xff]
      %v715 = vld [vmem:[%s1 + $0x38] sm:$0xff]
      %v716 = vld [vmem:[%s2] sm:$0x3]
      %v718 = vlaneseq
      %v719 = vshrl.u32 %v718, 7
      %v720 = vsub.s32 0, %v719
      %v721 = vrot.slane %v716, %v720
      %v722 = vlaneseq
      %v723 = vshrl.u32 %v722, 7
      %v724 = vsub.s32 1, %v723
      %v725 = vrot.slane %v716, %v724
      %v856 = vunpack.c.l.b16 %v580
      %v857 = vunpack.c.l.b16 %v581
      %v858 = vunpack.c.l.b16 %v582
      %v859 = vunpack.c.l.b16 %v583
      %v860 = vunpack.c.l.b16 %v584
      %v861 = vunpack.c.l.b16 %v585
      %v862 = vunpack.c.l.b16 %v586
      %v863 = vunpack.c.l.b16 %v587
      %v864 = vunpack.c.l.b16 %v588
      %v865 = vunpack.c.l.b16 %v589
      %v866 = vunpack.c.l.b16 %v590
      %v867 = vunpack.c.l.b16 %v591
      %v868 = vunpack.c.l.b16 %v592
      %v869 = vunpack.c.l.b16 %v593
      %v870 = vunpack.c.l.b16 %v594
      %v871 = vunpack.c.l.b16 %v595
      %v872 = vunpack.c.l.b16 %v596
      %v873 = vunpack.c.l.b16 %v597
      %v874 = vunpack.c.l.b16 %v598
      %v875 = vunpack.c.l.b16 %v599
      %v876 = vunpack.c.l.b16 %v600
      %v877 = vunpack.c.l.b16 %v601
      %v878 = vunpack.c.l.b16 %v602
      %v879 = vunpack.c.l.b16 %v603
      %v880 = vunpack.c.l.b16 %v604
      %v881 = vunpack.c.l.b16 %v605
      %v882 = vunpack.c.l.b16 %v606
      %v883 = vunpack.c.l.b16 %v607
      %v884 = vunpack.c.l.b16 %v608
      %v885 = vunpack.c.l.b16 %v609
      %v886 = vunpack.c.l.b16 %v610
      %v887 = vunpack.c.l.b16 %v611
      %v888 = vunpack.c.l.b16 %v612
      %v889 = vunpack.c.l.b16 %v613
      %v890 = vunpack.c.l.b16 %v614
      %v891 = vunpack.c.l.b16 %v615
      %v892 = vunpack.c.l.b16 %v616
      %v893 = vunpack.c.l.b16 %v617
      %v894 = vunpack.c.l.b16 %v618
      %v895 = vunpack.c.l.b16 %v619
      %v896 = vunpack.c.l.b16 %v620
      %v897 = vunpack.c.l.b16 %v621
      %v898 = vunpack.c.l.b16 %v622
      %v899 = vunpack.c.l.b16 %v623
      %v900 = vunpack.c.l.b16 %v624
      %v901 = vunpack.c.l.b16 %v625
      %v902 = vunpack.c.l.b16 %v626
      %v903 = vunpack.c.l.b16 %v627
      %v904 = vunpack.c.l.b16 %v628
      %v905 = vunpack.c.l.b16 %v629
      %v906 = vunpack.c.l.b16 %v630
      %v907 = vunpack.c.l.b16 %v631
      %v908 = vunpack.c.l.b16 %v632
      %v909 = vunpack.c.l.b16 %v633
      %v910 = vunpack.c.l.b16 %v634
      %v911 = vunpack.c.l.b16 %v635
      %v912 = vunpack.c.l.b16 %v636
      %v913 = vunpack.c.l.b16 %v637
      %v914 = vunpack.c.l.b16 %v638
      %v915 = vunpack.c.l.b16 %v639
      %v916 = vunpack.c.l.b16 %v640
      %v917 = vunpack.c.l.b16 %v641
      %v918 = vunpack.c.l.b16 %v642
      %v919 = vunpack.c.l.b16 %v643
      %v920 = vunpack.c.l.b16 %v644
      %v921 = vunpack.c.l.b16 %v645
      %v922 = vunpack.c.l.b16 %v646
      %v923 = vunpack.c.l.b16 %v647
      %v924 = vunpack.c.l.b16 %v648
      %v925 = vunpack.c.l.b16 %v649
      %v926 = vunpack.c.l.b16 %v650
      %v927 = vunpack.c.l.b16 %v651
      %v928 = vunpack.c.l.b16 %v652
      %v929 = vunpack.c.l.b16 %v653
      %v930 = vunpack.c.l.b16 %v654
      %v931 = vunpack.c.l.b16 %v655
      %v932 = vunpack.c.l.b16 %v656
      %v933 = vunpack.c.l.b16 %v657
      %v934 = vunpack.c.l.b16 %v658
      %v935 = vunpack.c.l.b16 %v659
      %v936 = vunpack.c.l.b16 %v660
      %v937 = vunpack.c.l.b16 %v661
      %v938 = vunpack.c.l.b16 %v662
      %v939 = vunpack.c.l.b16 %v663
      %v940 = vunpack.c.l.b16 %v664
      %v941 = vunpack.c.l.b16 %v665
      %v942 = vunpack.c.l.b16 %v666
      %v943 = vunpack.c.l.b16 %v667
      %v944 = vunpack.c.l.b16 %v668
      %v945 = vunpack.c.l.b16 %v669
      %v946 = vunpack.c.l.b16 %v670
      %v947 = vunpack.c.l.b16 %v671
      %v948 = vunpack.c.l.b16 %v672
      %v949 = vunpack.c.l.b16 %v673
      %v950 = vunpack.c.l.b16 %v674
      %v951 = vunpack.c.l.b16 %v675
      %v952 = vunpack.c.l.b16 %v676
      %v953 = vunpack.c.l.b16 %v677
      %v954 = vunpack.c.l.b16 %v678
      %v955 = vunpack.c.l.b16 %v679
      %v956 = vunpack.c.l.b16 %v680
      %v957 = vunpack.c.l.b16 %v681
      %v958 = vunpack.c.l.b16 %v682
      %v959 = vunpack.c.l.b16 %v683
      %v960 = vunpack.c.l.b16 %v684
      %v961 = vunpack.c.l.b16 %v685
      %v962 = vunpack.c.l.b16 %v686
      %v963 = vunpack.c.l.b16 %v687
      %v964 = vunpack.c.l.b16 %v688
      %v965 = vunpack.c.l.b16 %v689
      %v966 = vunpack.c.l.b16 %v690
      %v967 = vunpack.c.l.b16 %v691
      %v968 = vunpack.c.l.b16 %v692
      %v969 = vunpack.c.l.b16 %v693
      %v970 = vunpack.c.l.b16 %v694
      %v971 = vunpack.c.l.b16 %v695
      %v972 = vunpack.c.l.b16 %v696
      %v973 = vunpack.c.l.b16 %v697
      %v974 = vunpack.c.l.b16 %v698
      %v975 = vunpack.c.l.b16 %v699
      %v976 = vunpack.c.l.b16 %v700
      %v977 = vunpack.c.l.b16 %v701
      %v978 = vunpack.c.l.b16 %v702
      %v979 = vunpack.c.l.b16 %v703
      %v980 = vunpack.c.l.b16 %v704
      %v981 = vunpack.c.l.b16 %v705
      %v982 = vunpack.c.l.b16 %v706
      %v983 = vunpack.c.l.b16 %v707
      %v984 = vpack.c.b16 %v857, %v856
      %v985 = vpack.c.b16 %v859, %v858
      %v986 = vpack.c.b16 %v861, %v860
      %v987 = vpack.c.b16 %v863, %v862
      %v988 = vpack.c.b16 %v865, %v864
      %v989 = vpack.c.b16 %v867, %v866
      %v990 = vpack.c.b16 %v869, %v868
      %v991 = vpack.c.b16 %v871, %v870
      %v992 = vpack.c.b16 %v873, %v872
      %v993 = vpack.c.b16 %v875, %v874
      %v994 = vpack.c.b16 %v877, %v876
      %v995 = vpack.c.b16 %v879, %v878
      %v996 = vpack.c.b16 %v881, %v880
      %v997 = vpack.c.b16 %v883, %v882
      %v998 = vpack.c.b16 %v885, %v884
      %v999 = vpack.c.b16 %v887, %v886
      %v1000 = vpack.c.b16 %v889, %v888
      %v1001 = vpack.c.b16 %v891, %v890
      %v1002 = vpack.c.b16 %v893, %v892
      %v1003 = vpack.c.b16 %v895, %v894
      %v1004 = vpack.c.b16 %v897, %v896
      %v1005 = vpack.c.b16 %v899, %v898
      %v1006 = vpack.c.b16 %v901, %v900
      %v1007 = vpack.c.b16 %v903, %v902
      %v1008 = vpack.c.b16 %v905, %v904
      %v1009 = vpack.c.b16 %v907, %v906
      %v1010 = vpack.c.b16 %v909, %v908
      %v1011 = vpack.c.b16 %v911, %v910
      %v1012 = vpack.c.b16 %v913, %v912
      %v1013 = vpack.c.b16 %v915, %v914
      %v1014 = vpack.c.b16 %v917, %v916
      %v1015 = vpack.c.b16 %v919, %v918
      %v1016 = vpack.c.b16 %v921, %v920
      %v1017 = vpack.c.b16 %v923, %v922
      %v1018 = vpack.c.b16 %v925, %v924
      %v1019 = vpack.c.b16 %v927, %v926
      %v1020 = vpack.c.b16 %v929, %v928
      %v1021 = vpack.c.b16 %v931, %v930
      %v1022 = vpack.c.b16 %v933, %v932
      %v1023 = vpack.c.b16 %v935, %v934
      %v1024 = vpack.c.b16 %v937, %v936
      %v1025 = vpack.c.b16 %v939, %v938
      %v1026 = vpack.c.b16 %v941, %v940
      %v1027 = vpack.c.b16 %v943, %v942
      %v1028 = vpack.c.b16 %v945, %v944
      %v1029 = vpack.c.b16 %v947, %v946
      %v1030 = vpack.c.b16 %v949, %v948
      %v1031 = vpack.c.b16 %v951, %v950
      %v1032 = vpack.c.b16 %v953, %v952
      %v1033 = vpack.c.b16 %v955, %v954
      %v1034 = vpack.c.b16 %v957, %v956
      %v1035 = vpack.c.b16 %v959, %v958
      %v1036 = vpack.c.b16 %v961, %v960
      %v1037 = vpack.c.b16 %v963, %v962
      %v1038 = vpack.c.b16 %v965, %v964
      %v1039 = vpack.c.b16 %v967, %v966
      %v1040 = vpack.c.b16 %v969, %v968
      %v1041 = vpack.c.b16 %v971, %v970
      %v1042 = vpack.c.b16 %v973, %v972
      %v1043 = vpack.c.b16 %v975, %v974
      %v1044 = vpack.c.b16 %v977, %v976
      %v1045 = vpack.c.b16 %v979, %v978
      %v1046 = vpack.c.b16 %v981, %v980
      %v1047 = vpack.c.b16 %v983, %v982
      %v1056 = vunpack.c.l.b16 %v708
      %v1057 = vunpack.c.h.b16 %v708
      %v1058 = vunpack.c.l.b16 %v709
      %v1059 = vunpack.c.h.b16 %v709
      %v1060 = vunpack.c.l.b16 %v710
      %v1061 = vunpack.c.h.b16 %v710
      %v1062 = vunpack.c.l.b16 %v711
      %v1063 = vunpack.c.h.b16 %v711
      %v1064 = vunpack.c.l.b16 %v712
      %v1065 = vunpack.c.h.b16 %v712
      %v1066 = vunpack.c.l.b16 %v713
      %v1067 = vunpack.c.h.b16 %v713
      %v1068 = vunpack.c.l.b16 %v714
      %v1069 = vunpack.c.h.b16 %v714
      %v1070 = vunpack.c.l.b16 %v715
      %v1071 = vunpack.c.h.b16 %v715
      %v1072 = vpack.c.b16 %v1058, %v1056
      %v1073 = vpack.c.b16 %v1059, %v1057
      %v1074 = vpack.c.b16 %v1062, %v1060
      %v1075 = vpack.c.b16 %v1063, %v1061
      %v1076 = vpack.c.b16 %v1066, %v1064
      %v1077 = vpack.c.b16 %v1067, %v1065
      %v1078 = vpack.c.b16 %v1070, %v1068
      %v1079 = vpack.c.b16 %v1071, %v1069
      %vm1088 = vcmask 523264
      %v1090 = vsel %vm1088, %v984, 0
      %v1093 = vsel %vm1088, %v985, 0
      %v1096 = vsel %vm1088, %v986, 0
      %v1099 = vsel %vm1088, %v987, 0
      %v1102 = vsel %vm1088, %v988, 0
      %v1105 = vsel %vm1088, %v989, 0
      %v1108 = vsel %vm1088, %v990, 0
      %v1111 = vsel %vm1088, %v991, 0
      %v1114 = vsel %vm1088, %v992, 0
      %v1117 = vsel %vm1088, %v993, 0
      %v1120 = vsel %vm1088, %v994, 0
      %v1123 = vsel %vm1088, %v995, 0
      %v1126 = vsel %vm1088, %v996, 0
      %v1129 = vsel %vm1088, %v997, 0
      %v1132 = vsel %vm1088, %v998, 0
      %v1135 = vsel %vm1088, %v999, 0
      %v1138 = vsel %vm1088, %v1000, 0
      %v1141 = vsel %vm1088, %v1001, 0
      %v1144 = vsel %vm1088, %v1002, 0
      %v1147 = vsel %vm1088, %v1003, 0
      %v1150 = vsel %vm1088, %v1004, 0
      %v1153 = vsel %vm1088, %v1005, 0
      %v1156 = vsel %vm1088, %v1006, 0
      %v1159 = vsel %vm1088, %v1007, 0
      %v1162 = vsel %vm1088, %v1008, 0
      %v1165 = vsel %vm1088, %v1009, 0
      %v1168 = vsel %vm1088, %v1010, 0
      %v1171 = vsel %vm1088, %v1011, 0
      %v1174 = vsel %vm1088, %v1012, 0
      %v1177 = vsel %vm1088, %v1013, 0
      %v1180 = vsel %vm1088, %v1014, 0
      %v1183 = vsel %vm1088, %v1015, 0
      %v1186 = vsel %vm1088, %v1016, 0
      %v1189 = vsel %vm1088, %v1017, 0
      %v1192 = vsel %vm1088, %v1018, 0
      %v1195 = vsel %vm1088, %v1019, 0
      %v1198 = vsel %vm1088, %v1020, 0
      %v1201 = vsel %vm1088, %v1021, 0
      %v1204 = vsel %vm1088, %v1022, 0
      %v1207 = vsel %vm1088, %v1023, 0
      %v1210 = vsel %vm1088, %v1024, 0
      %v1213 = vsel %vm1088, %v1025, 0
      %v1216 = vsel %vm1088, %v1026, 0
      %v1219 = vsel %vm1088, %v1027, 0
      %v1222 = vsel %vm1088, %v1028, 0
      %v1225 = vsel %vm1088, %v1029, 0
      %v1228 = vsel %vm1088, %v1030, 0
      %v1231 = vsel %vm1088, %v1031, 0
      %v1234 = vsel %vm1088, %v1032, 0
      %v1237 = vsel %vm1088, %v1033, 0
      %v1240 = vsel %vm1088, %v1034, 0
      %v1243 = vsel %vm1088, %v1035, 0
      %v1246 = vsel %vm1088, %v1036, 0
      %v1249 = vsel %vm1088, %v1037, 0
      %v1252 = vsel %vm1088, %v1038, 0
      %v1255 = vsel %vm1088, %v1039, 0
      %v1258 = vsel %vm1088, %v1040, 0
      %v1261 = vsel %vm1088, %v1041, 0
      %v1264 = vsel %vm1088, %v1042, 0
      %v1267 = vsel %vm1088, %v1043, 0
      %v1270 = vsel %vm1088, %v1044, 0
      %v1273 = vsel %vm1088, %v1045, 0
      %v1276 = vsel %vm1088, %v1046, 0
      %v1279 = vsel %vm1088, %v1047, 0
      %1281 = vmatprep.subr.bf16.mxu0 %v1073
      %1282 = vmatpush1.bf16.msra.mxu0 %v1072
      %1283 = vmatprep.subr.bf16.mxu0 %v1075
      %1284 = vmatpush1.bf16.msra.mxu0 %v1074
      %1285 = vmatprep.subr.bf16.mxu0 %v1077
      %1286 = vmatpush1.bf16.msra.mxu0 %v1076
      %1287 = vmatprep.subr.bf16.mxu0 %v1079
      %1288 = vmatpush1.bf16.msra.mxu0 %v1078
      %1289 = vmatprep.subr.bf16.mxu0 0
      %1290 = vmatpush1.bf16.msra.mxu0 0
      %1291 = vmatprep.subr.bf16.mxu0 0
      %1292 = vmatpush1.bf16.msra.mxu0 0
      %1293 = vmatprep.subr.bf16.mxu0 0
      %1294 = vmatpush1.bf16.msra.mxu0 0
      %1295 = vmatprep.subr.bf16.mxu0 0
      %1296 = vmatpush1.bf16.msra.mxu0 0
      %1297 = vmatprep.subr.bf16.mxu0 0
      %1298 = vmatpush1.bf16.msra.mxu0 0
      %1299 = vmatprep.subr.bf16.mxu0 0
      %1300 = vmatpush1.bf16.msra.mxu0 0
      %1301 = vmatprep.subr.bf16.mxu0 0
      %1302 = vmatpush1.bf16.msra.mxu0 0
      %1303 = vmatprep.subr.bf16.mxu0 0
      %1304 = vmatpush1.bf16.msra.mxu0 0
      %1305 = vmatprep.subr.bf16.mxu0 0
      %1306 = vmatpush1.bf16.msra.mxu0 0
      %1307 = vmatprep.subr.bf16.mxu0 0
      %1308 = vmatpush1.bf16.msra.mxu0 0
      %1309 = vmatprep.subr.bf16.mxu0 0
      %1310 = vmatpush1.bf16.msra.mxu0 0
      %1311 = vmatprep.subr.bf16.mxu0 0
      %1312 = vmatpush1.bf16.msra.mxu0 0
      %1313 = vmatprep.mubr.bf16.mxu0 0
      %1314 = vmatmul.mubr.bf16.gmra.mrb[0].mxu0 %v1090
      %v1315 = vpop.f32.mrb[0].mxu0
      %v1316 = vadd.f32 %v721, %v1315
      %v1317 = vpop.f32.mrb[0].mxu0
      %v1318 = vadd.f32 %v725, %v1317
      %v1319 = vpop.f32.mrb[0].mxu0
      %v1320 = vadd.f32 %v721, %v1319
      %v1321 = vpop.f32.mrb[0].mxu0
      %v1322 = vadd.f32 %v725, %v1321
      %1323 = vmatprep.mubr.bf16.mxu0 0
      %1324 = vmatmul.mubr.bf16.gmra.mrb[0].mxu0 %v1093
      %v1325 = vpop.f32.mrb[0].mxu0
      %v1326 = vadd.f32 %v721, %v1325
      %v1327 = vpop.f32.mrb[0].mxu0
      %v1328 = vadd.f32 %v725, %v1327
      %v1329 = vpop.f32.mrb[0].mxu0
      %v1330 = vadd.f32 %v721, %v1329
      %v1331 = vpop.f32.mrb[0].mxu0
      %v1332 = vadd.f32 %v725, %v1331
      %1333 = vmatprep.mubr.bf16.mxu0 0
      %1334 = vmatmul.mubr.bf16.gmra.mrb[0].mxu0 %v1096
      %v1335 = vpop.f32.mrb[0].mxu0
      %v1336 = vadd.f32 %v721, %v1335
      %v1337 = vpop.f32.mrb[0].mxu0
      %v1338 = vadd.f32 %v725, %v1337
      %v1339 = vpop.f32.mrb[0].mxu0
      %v1340 = vadd.f32 %v721, %v1339
      %v1341 = vpop.f32.mrb[0].mxu0
      %v1342 = vadd.f32 %v725, %v1341
      %1343 = vmatprep.mubr.bf16.mxu0 0
      %1344 = vmatmul.mubr.bf16.gmra.mrb[0].mxu0 %v1099
      %v1345 = vpop.f32.mrb[0].mxu0
      %v1346 = vadd.f32 %v721, %v1345
      %v1347 = vpop.f32.mrb[0].mxu0
      %v1348 = vadd.f32 %v725, %v1347
      %v1349 = vpop.f32.mrb[0].mxu0
      %v1350 = vadd.f32 %v721, %v1349
      %v1351 = vpop.f32.mrb[0].mxu0
      %v1352 = vadd.f32 %v725, %v1351
      %1353 = vmatprep.mubr.bf16.mxu0 0
      %1354 = vmatmul.mubr.bf16.gmra.mrb[0].mxu0 %v1102
      %v1355 = vpop.f32.mrb[0].mxu0
      %v1356 = vadd.f32 %v721, %v1355
      %v1357 = vpop.f32.mrb[0].mxu0
      %v1358 = vadd.f32 %v725, %v1357
      %v1359 = vpop.f32.mrb[0].mxu0
      %v1360 = vadd.f32 %v721, %v1359
      %v1361 = vpop.f32.mrb[0].mxu0
      %v1362 = vadd.f32 %v725, %v1361
      %1363 = vmatprep.mubr.bf16.mxu0 0
      %1364 = vmatmul.mubr.bf16.gmra.mrb[0].mxu0 %v1105
      %v1365 = vpop.f32.mrb[0].mxu0
      %v1366 = vadd.f32 %v721, %v1365
      %v1367 = vpop.f32.mrb[0].mxu0
      %v1368 = vadd.f32 %v725, %v1367
      %v1369 = vpop.f32.mrb[0].mxu0
      %v1370 = vadd.f32 %v721, %v1369
      %v1371 = vpop.f32.mrb[0].mxu0
      %v1372 = vadd.f32 %v725, %v1371
      %1373 = vmatprep.mubr.bf16.mxu0 0
      %1374 = vmatmul.mubr.bf16.gmra.mrb[0].mxu0 %v1108
      %v1375 = vpop.f32.mrb[0].mxu0
      %v1376 = vadd.f32 %v721, %v1375
      %v1377 = vpop.f32.mrb[0].mxu0
      %v1378 = vadd.f32 %v725, %v1377
      %v1379 = vpop.f32.mrb[0].mxu0
      %v1380 = vadd.f32 %v721, %v1379
      %v1381 = vpop.f32.mrb[0].mxu0
      %v1382 = vadd.f32 %v725, %v1381
      %1383 = vmatprep.mubr.bf16.mxu0 0
      %1384 = vmatmul.mubr.bf16.gmra.mrb[0].mxu0 %v1111
      %v1385 = vpop.f32.mrb[0].mxu0
      %v1386 = vadd.f32 %v721, %v1385
      %v1387 = vpop.f32.mrb[0].mxu0
      %v1388 = vadd.f32 %v725, %v1387
      %v1389 = vpop.f32.mrb[0].mxu0
      %v1390 = vadd.f32 %v721, %v1389
      %v1391 = vpop.f32.mrb[0].mxu0
      %v1392 = vadd.f32 %v725, %v1391
      %1393 = vmatprep.mubr.bf16.mxu0 0
      %1394 = vmatmul.mubr.bf16.gmra.mrb[0].mxu0 %v1114
      %v1395 = vpop.f32.mrb[0].mxu0
      %v1396 = vadd.f32 %v721, %v1395
      %v1397 = vpop.f32.mrb[0].mxu0
      %v1398 = vadd.f32 %v725, %v1397
      %v1399 = vpop.f32.mrb[0].mxu0
      %v1400 = vadd.f32 %v721, %v1399
      %v1401 = vpop.f32.mrb[0].mxu0
      %v1402 = vadd.f32 %v725, %v1401
      %1403 = vmatprep.mubr.bf16.mxu0 0
      %1404 = vmatmul.mubr.bf16.gmra.mrb[0].mxu0 %v1117
      %v1405 = vpop.f32.mrb[0].mxu0
      %v1406 = vadd.f32 %v721, %v1405
      %v1407 = vpop.f32.mrb[0].mxu0
      %v1408 = vadd.f32 %v725, %v1407
      %v1409 = vpop.f32.mrb[0].mxu0
      %v1410 = vadd.f32 %v721, %v1409
      %v1411 = vpop.f32.mrb[0].mxu0
      %v1412 = vadd.f32 %v725, %v1411
      %1413 = vmatprep.mubr.bf16.mxu0 0
      %1414 = vmatmul.mubr.bf16.gmra.mrb[0].mxu0 %v1120
      %v1415 = vpop.f32.mrb[0].mxu0
      %v1416 = vadd.f32 %v721, %v1415
      %v1417 = vpop.f32.mrb[0].mxu0
      %v1418 = vadd.f32 %v725, %v1417
      %v1419 = vpop.f32.mrb[0].mxu0
      %v1420 = vadd.f32 %v721, %v1419
      %v1421 = vpop.f32.mrb[0].mxu0
      %v1422 = vadd.f32 %v725, %v1421
      %1423 = vmatprep.mubr.bf16.mxu0 0
      %1424 = vmatmul.mubr.bf16.gmra.mrb[0].mxu0 %v1123
      %v1425 = vpop.f32.mrb[0].mxu0
      %v1426 = vadd.f32 %v721, %v1425
      %v1427 = vpop.f32.mrb[0].mxu0
      %v1428 = vadd.f32 %v725, %v1427
      %v1429 = vpop.f32.mrb[0].mxu0
      %v1430 = vadd.f32 %v721, %v1429
      %v1431 = vpop.f32.mrb[0].mxu0
      %v1432 = vadd.f32 %v725, %v1431
      %1433 = vmatprep.mubr.bf16.mxu0 0
      %1434 = vmatmul.mubr.bf16.gmra.mrb[0].mxu0 %v1126
      %v1435 = vpop.f32.mrb[0].mxu0
      %v1436 = vadd.f32 %v721, %v1435
      %v1437 = vpop.f32.mrb[0].mxu0
      %v1438 = vadd.f32 %v725, %v1437
      %v1439 = vpop.f32.mrb[0].mxu0
      %v1440 = vadd.f32 %v721, %v1439
      %v1441 = vpop.f32.mrb[0].mxu0
      %v1442 = vadd.f32 %v725, %v1441
      %1443 = vmatprep.mubr.bf16.mxu0 0
      %1444 = vmatmul.mubr.bf16.gmra.mrb[0].mxu0 %v1129
      %v1445 = vpop.f32.mrb[0].mxu0
      %v1446 = vadd.f32 %v721, %v1445
      %v1447 = vpop.f32.mrb[0].mxu0
      %v1448 = vadd.f32 %v725, %v1447
      %v1449 = vpop.f32.mrb[0].mxu0
      %v1450 = vadd.f32 %v721, %v1449
      %v1451 = vpop.f32.mrb[0].mxu0
      %v1452 = vadd.f32 %v725, %v1451
      %1453 = vmatprep.mubr.bf16.mxu0 0
      %1454 = vmatmul.mubr.bf16.gmra.mrb[0].mxu0 %v1132
      %v1455 = vpop.f32.mrb[0].mxu0
      %v1456 = vadd.f32 %v721, %v1455
      %v1457 = vpop.f32.mrb[0].mxu0
      %v1458 = vadd.f32 %v725, %v1457
      %v1459 = vpop.f32.mrb[0].mxu0
      %v1460 = vadd.f32 %v721, %v1459
      %v1461 = vpop.f32.mrb[0].mxu0
      %v1462 = vadd.f32 %v725, %v1461
      %1463 = vmatprep.mubr.bf16.mxu0 0
      %1464 = vmatmul.mubr.bf16.gmra.mrb[0].mxu0 %v1135
      %v1465 = vpop.f32.mrb[0].mxu0
      %v1466 = vadd.f32 %v721, %v1465
      %v1467 = vpop.f32.mrb[0].mxu0
      %v1468 = vadd.f32 %v725, %v1467
      %v1469 = vpop.f32.mrb[0].mxu0
      %v1470 = vadd.f32 %v721, %v1469
      %v1471 = vpop.f32.mrb[0].mxu0
      %v1472 = vadd.f32 %v725, %v1471
      %1473 = vmatprep.mubr.bf16.mxu0 0
      %1474 = vmatmul.mubr.bf16.gmra.mrb[0].mxu0 %v1138
      %v1475 = vpop.f32.mrb[0].mxu0
      %v1476 = vadd.f32 %v721, %v1475
      %v1477 = vpop.f32.mrb[0].mxu0
      %v1478 = vadd.f32 %v725, %v1477
      %v1479 = vpop.f32.mrb[0].mxu0
      %v1480 = vadd.f32 %v721, %v1479
      %v1481 = vpop.f32.mrb[0].mxu0
      %v1482 = vadd.f32 %v725, %v1481
      %1483 = vmatprep.mubr.bf16.mxu0 0
      %1484 = vmatmul.mubr.bf16.gmra.mrb[0].mxu0 %v1141
      %v1485 = vpop.f32.mrb[0].mxu0
      %v1486 = vadd.f32 %v721, %v1485
      %v1487 = vpop.f32.mrb[0].mxu0
      %v1488 = vadd.f32 %v725, %v1487
      %v1489 = vpop.f32.mrb[0].mxu0
      %v1490 = vadd.f32 %v721, %v1489
      %v1491 = vpop.f32.mrb[0].mxu0
      %v1492 = vadd.f32 %v725, %v1491
      %1493 = vmatprep.mubr.bf16.mxu0 0
      %1494 = vmatmul.mubr.bf16.gmra.mrb[0].mxu0 %v1144
      %v1495 = vpop.f32.mrb[0].mxu0
      %v1496 = vadd.f32 %v721, %v1495
      %v1497 = vpop.f32.mrb[0].mxu0
      %v1498 = vadd.f32 %v725, %v1497
      %v1499 = vpop.f32.mrb[0].mxu0
      %v1500 = vadd.f32 %v721, %v1499
      %v1501 = vpop.f32.mrb[0].mxu0
      %v1502 = vadd.f32 %v725, %v1501
      %1503 = vmatprep.mubr.bf16.mxu0 0
      %1504 = vmatmul.mubr.bf16.gmra.mrb[0].mxu0 %v1147
      %v1505 = vpop.f32.mrb[0].mxu0
      %v1506 = vadd.f32 %v721, %v1505
      %v1507 = vpop.f32.mrb[0].mxu0
      %v1508 = vadd.f32 %v725, %v1507
      %v1509 = vpop.f32.mrb[0].mxu0
      %v1510 = vadd.f32 %v721, %v1509
      %v1511 = vpop.f32.mrb[0].mxu0
      %v1512 = vadd.f32 %v725, %v1511
      %1513 = vmatprep.mubr.bf16.mxu0 0
      %1514 = vmatmul.mubr.bf16.gmra.mrb[0].mxu0 %v1150
      %v1515 = vpop.f32.mrb[0].mxu0
      %v1516 = vadd.f32 %v721, %v1515
      %v1517 = vpop.f32.mrb[0].mxu0
      %v1518 = vadd.f32 %v725, %v1517
      %v1519 = vpop.f32.mrb[0].mxu0
      %v1520 = vadd.f32 %v721, %v1519
      %v1521 = vpop.f32.mrb[0].mxu0
      %v1522 = vadd.f32 %v725, %v1521
      %1523 = vmatprep.mubr.bf16.mxu0 0
      %1524 = vmatmul.mubr.bf16.gmra.mrb[0].mxu0 %v1153
      %v1525 = vpop.f32.mrb[0].mxu0
      %v1526 = vadd.f32 %v721, %v1525
      %v1527 = vpop.f32.mrb[0].mxu0
      %v1528 = vadd.f32 %v725, %v1527
      %v1529 = vpop.f32.mrb[0].mxu0
      %v1530 = vadd.f32 %v721, %v1529
      %v1531 = vpop.f32.mrb[0].mxu0
      %v1532 = vadd.f32 %v725, %v1531
      %1533 = vmatprep.mubr.bf16.mxu0 0
      %1534 = vmatmul.mubr.bf16.gmra.mrb[0].mxu0 %v1156
      %v1535 = vpop.f32.mrb[0].mxu0
      %v1536 = vadd.f32 %v721, %v1535
      %v1537 = vpop.f32.mrb[0].mxu0
      %v1538 = vadd.f32 %v725, %v1537
      %v1539 = vpop.f32.mrb[0].mxu0
      %v1540 = vadd.f32 %v721, %v1539
      %v1541 = vpop.f32.mrb[0].mxu0
      %v1542 = vadd.f32 %v725, %v1541
      %1543 = vmatprep.mubr.bf16.mxu0 0
      %1544 = vmatmul.mubr.bf16.gmra.mrb[0].mxu0 %v1159
      %v1545 = vpop.f32.mrb[0].mxu0
      %v1546 = vadd.f32 %v721, %v1545
      %v1547 = vpop.f32.mrb[0].mxu0
      %v1548 = vadd.f32 %v725, %v1547
      %v1549 = vpop.f32.mrb[0].mxu0
      %v1550 = vadd.f32 %v721, %v1549
      %v1551 = vpop.f32.mrb[0].mxu0
      %v1552 = vadd.f32 %v725, %v1551
      %1553 = vmatprep.mubr.bf16.mxu0 0
      %1554 = vmatmul.mubr.bf16.gmra.mrb[0].mxu0 %v1162
      %v1555 = vpop.f32.mrb[0].mxu0
      %v1556 = vadd.f32 %v721, %v1555
      %v1557 = vpop.f32.mrb[0].mxu0
      %v1558 = vadd.f32 %v725, %v1557
      %v1559 = vpop.f32.mrb[0].mxu0
      %v1560 = vadd.f32 %v721, %v1559
      %v1561 = vpop.f32.mrb[0].mxu0
      %v1562 = vadd.f32 %v725, %v1561
      %1563 = vmatprep.mubr.bf16.mxu0 0
      %1564 = vmatmul.mubr.bf16.gmra.mrb[0].mxu0 %v1165
      %v1565 = vpop.f32.mrb[0].mxu0
      %v1566 = vadd.f32 %v721, %v1565
      %v1567 = vpop.f32.mrb[0].mxu0
      %v1568 = vadd.f32 %v725, %v1567
      %v1569 = vpop.f32.mrb[0].mxu0
      %v1570 = vadd.f32 %v721, %v1569
      %v1571 = vpop.f32.mrb[0].mxu0
      %v1572 = vadd.f32 %v725, %v1571
      %1573 = vmatprep.mubr.bf16.mxu0 0
      %1574 = vmatmul.mubr.bf16.gmra.mrb[0].mxu0 %v1168
      %v1575 = vpop.f32.mrb[0].mxu0
      %v1576 = vadd.f32 %v721, %v1575
      %v1577 = vpop.f32.mrb[0].mxu0
      %v1578 = vadd.f32 %v725, %v1577
      %v1579 = vpop.f32.mrb[0].mxu0
      %v1580 = vadd.f32 %v721, %v1579
      %v1581 = vpop.f32.mrb[0].mxu0
      %v1582 = vadd.f32 %v725, %v1581
      %1583 = vmatprep.mubr.bf16.mxu0 0
      %1584 = vmatmul.mubr.bf16.gmra.mrb[0].mxu0 %v1171
      %v1585 = vpop.f32.mrb[0].mxu0
      %v1586 = vadd.f32 %v721, %v1585
      %v1587 = vpop.f32.mrb[0].mxu0
      %v1588 = vadd.f32 %v725, %v1587
      %v1589 = vpop.f32.mrb[0].mxu0
      %v1590 = vadd.f32 %v721, %v1589
      %v1591 = vpop.f32.mrb[0].mxu0
      %v1592 = vadd.f32 %v725, %v1591
      %1593 = vmatprep.mubr.bf16.mxu0 0
      %1594 = vmatmul.mubr.bf16.gmra.mrb[0].mxu0 %v1174
      %v1595 = vpop.f32.mrb[0].mxu0
      %v1596 = vadd.f32 %v721, %v1595
      %v1597 = vpop.f32.mrb[0].mxu0
      %v1598 = vadd.f32 %v725, %v1597
      %v1599 = vpop.f32.mrb[0].mxu0
      %v1600 = vadd.f32 %v721, %v1599
      %v1601 = vpop.f32.mrb[0].mxu0
      %v1602 = vadd.f32 %v725, %v1601
      %1603 = vmatprep.mubr.bf16.mxu0 0
      %1604 = vmatmul.mubr.bf16.gmra.mrb[0].mxu0 %v1177
      %v1605 = vpop.f32.mrb[0].mxu0
      %v1606 = vadd.f32 %v721, %v1605
      %v1607 = vpop.f32.mrb[0].mxu0
      %v1608 = vadd.f32 %v725, %v1607
      %v1609 = vpop.f32.mrb[0].mxu0
      %v1610 = vadd.f32 %v721, %v1609
      %v1611 = vpop.f32.mrb[0].mxu0
      %v1612 = vadd.f32 %v725, %v1611
      %1613 = vmatprep.mubr.bf16.mxu0 0
      %1614 = vmatmul.mubr.bf16.gmra.mrb[0].mxu0 %v1180
      %v1615 = vpop.f32.mrb[0].mxu0
      %v1616 = vadd.f32 %v721, %v1615
      %v1617 = vpop.f32.mrb[0].mxu0
      %v1618 = vadd.f32 %v725, %v1617
      %v1619 = vpop.f32.mrb[0].mxu0
      %v1620 = vadd.f32 %v721, %v1619
      %v1621 = vpop.f32.mrb[0].mxu0
      %v1622 = vadd.f32 %v725, %v1621
      %1623 = vmatprep.mubr.bf16.mxu0 0
      %1624 = vmatmul.mubr.bf16.gmra.mrb[0].mxu0 %v1183
      %v1625 = vpop.f32.mrb[0].mxu0
      %v1626 = vadd.f32 %v721, %v1625
      %v1627 = vpop.f32.mrb[0].mxu0
      %v1628 = vadd.f32 %v725, %v1627
      %v1629 = vpop.f32.mrb[0].mxu0
      %v1630 = vadd.f32 %v721, %v1629
      %v1631 = vpop.f32.mrb[0].mxu0
      %v1632 = vadd.f32 %v725, %v1631
      %1633 = vmatprep.mubr.bf16.mxu0 0
      %1634 = vmatmul.mubr.bf16.gmra.mrb[0].mxu0 %v1186
      %v1635 = vpop.f32.mrb[0].mxu0
      %v1636 = vadd.f32 %v721, %v1635
      %v1637 = vpop.f32.mrb[0].mxu0
      %v1638 = vadd.f32 %v725, %v1637
      %v1639 = vpop.f32.mrb[0].mxu0
      %v1640 = vadd.f32 %v721, %v1639
      %v1641 = vpop.f32.mrb[0].mxu0
      %v1642 = vadd.f32 %v725, %v1641
      %1643 = vmatprep.mubr.bf16.mxu0 0
      %1644 = vmatmul.mubr.bf16.gmra.mrb[0].mxu0 %v1189
      %v1645 = vpop.f32.mrb[0].mxu0
      %v1646 = vadd.f32 %v721, %v1645
      %v1647 = vpop.f32.mrb[0].mxu0
      %v1648 = vadd.f32 %v725, %v1647
      %v1649 = vpop.f32.mrb[0].mxu0
      %v1650 = vadd.f32 %v721, %v1649
      %v1651 = vpop.f32.mrb[0].mxu0
      %v1652 = vadd.f32 %v725, %v1651
      %1653 = vmatprep.mubr.bf16.mxu0 0
      %1654 = vmatmul.mubr.bf16.gmra.mrb[0].mxu0 %v1192
      %v1655 = vpop.f32.mrb[0].mxu0
      %v1656 = vadd.f32 %v721, %v1655
      %v1657 = vpop.f32.mrb[0].mxu0
      %v1658 = vadd.f32 %v725, %v1657
      %v1659 = vpop.f32.mrb[0].mxu0
      %v1660 = vadd.f32 %v721, %v1659
      %v1661 = vpop.f32.mrb[0].mxu0
      %v1662 = vadd.f32 %v725, %v1661
      %1663 = vmatprep.mubr.bf16.mxu0 0
      %1664 = vmatmul.mubr.bf16.gmra.mrb[0].mxu0 %v1195
      %v1665 = vpop.f32.mrb[0].mxu0
      %v1666 = vadd.f32 %v721, %v1665
      %v1667 = vpop.f32.mrb[0].mxu0
      %v1668 = vadd.f32 %v725, %v1667
      %v1669 = vpop.f32.mrb[0].mxu0
      %v1670 = vadd.f32 %v721, %v1669
      %v1671 = vpop.f32.mrb[0].mxu0
      %v1672 = vadd.f32 %v725, %v1671
      %1673 = vmatprep.mubr.bf16.mxu0 0
      %1674 = vmatmul.mubr.bf16.gmra.mrb[0].mxu0 %v1198
      %v1675 = vpop.f32.mrb[0].mxu0
      %v1676 = vadd.f32 %v721, %v1675
      %v1677 = vpop.f32.mrb[0].mxu0
      %v1678 = vadd.f32 %v725, %v1677
      %v1679 = vpop.f32.mrb[0].mxu0
      %v1680 = vadd.f32 %v721, %v1679
      %v1681 = vpop.f32.mrb[0].mxu0
      %v1682 = vadd.f32 %v725, %v1681
      %1683 = vmatprep.mubr.bf16.mxu0 0
      %1684 = vmatmul.mubr.bf16.gmra.mrb[0].mxu0 %v1201
      %v1685 = vpop.f32.mrb[0].mxu0
      %v1686 = vadd.f32 %v721, %v1685
      %v1687 = vpop.f32.mrb[0].mxu0
      %v1688 = vadd.f32 %v725, %v1687
      %v1689 = vpop.f32.mrb[0].mxu0
      %v1690 = vadd.f32 %v721, %v1689
      %v1691 = vpop.f32.mrb[0].mxu0
      %v1692 = vadd.f32 %v725, %v1691
      %1693 = vmatprep.mubr.bf16.mxu0 0
      %1694 = vmatmul.mubr.bf16.gmra.mrb[0].mxu0 %v1204
      %v1695 = vpop.f32.mrb[0].mxu0
      %v1696 = vadd.f32 %v721, %v1695
      %v1697 = vpop.f32.mrb[0].mxu0
      %v1698 = vadd.f32 %v725, %v1697
      %v1699 = vpop.f32.mrb[0].mxu0
      %v1700 = vadd.f32 %v721, %v1699
      %v1701 = vpop.f32.mrb[0].mxu0
      %v1702 = vadd.f32 %v725, %v1701
      %1703 = vmatprep.mubr.bf16.mxu0 0
      %1704 = vmatmul.mubr.bf16.gmra.mrb[0].mxu0 %v1207
      %v1705 = vpop.f32.mrb[0].mxu0
      %v1706 = vadd.f32 %v721, %v1705
      %v1707 = vpop.f32.mrb[0].mxu0
      %v1708 = vadd.f32 %v725, %v1707
      %v1709 = vpop.f32.mrb[0].mxu0
      %v1710 = vadd.f32 %v721, %v1709
      %v1711 = vpop.f32.mrb[0].mxu0
      %v1712 = vadd.f32 %v725, %v1711
      %1713 = vmatprep.mubr.bf16.mxu0 0
      %1714 = vmatmul.mubr.bf16.gmra.mrb[0].mxu0 %v1210
      %v1715 = vpop.f32.mrb[0].mxu0
      %v1716 = vadd.f32 %v721, %v1715
      %v1717 = vpop.f32.mrb[0].mxu0
      %v1718 = vadd.f32 %v725, %v1717
      %v1719 = vpop.f32.mrb[0].mxu0
      %v1720 = vadd.f32 %v721, %v1719
      %v1721 = vpop.f32.mrb[0].mxu0
      %v1722 = vadd.f32 %v725, %v1721
      %1723 = vmatprep.mubr.bf16.mxu0 0
      %1724 = vmatmul.mubr.bf16.gmra.mrb[0].mxu0 %v1213
      %v1725 = vpop.f32.mrb[0].mxu0
      %v1726 = vadd.f32 %v721, %v1725
      %v1727 = vpop.f32.mrb[0].mxu0
      %v1728 = vadd.f32 %v725, %v1727
      %v1729 = vpop.f32.mrb[0].mxu0
      %v1730 = vadd.f32 %v721, %v1729
      %v1731 = vpop.f32.mrb[0].mxu0
      %v1732 = vadd.f32 %v725, %v1731
      %1733 = vmatprep.mubr.bf16.mxu0 0
      %1734 = vmatmul.mubr.bf16.gmra.mrb[0].mxu0 %v1216
      %v1735 = vpop.f32.mrb[0].mxu0
      %v1736 = vadd.f32 %v721, %v1735
      %v1737 = vpop.f32.mrb[0].mxu0
      %v1738 = vadd.f32 %v725, %v1737
      %v1739 = vpop.f32.mrb[0].mxu0
      %v1740 = vadd.f32 %v721, %v1739
      %v1741 = vpop.f32.mrb[0].mxu0
      %v1742 = vadd.f32 %v725, %v1741
      %1743 = vmatprep.mubr.bf16.mxu0 0
      %1744 = vmatmul.mubr.bf16.gmra.mrb[0].mxu0 %v1219
      %v1745 = vpop.f32.mrb[0].mxu0
      %v1746 = vadd.f32 %v721, %v1745
      %v1747 = vpop.f32.mrb[0].mxu0
      %v1748 = vadd.f32 %v725, %v1747
      %v1749 = vpop.f32.mrb[0].mxu0
      %v1750 = vadd.f32 %v721, %v1749
      %v1751 = vpop.f32.mrb[0].mxu0
      %v1752 = vadd.f32 %v725, %v1751
      %1753 = vmatprep.mubr.bf16.mxu0 0
      %1754 = vmatmul.mubr.bf16.gmra.mrb[0].mxu0 %v1222
      %v1755 = vpop.f32.mrb[0].mxu0
      %v1756 = vadd.f32 %v721, %v1755
      %v1757 = vpop.f32.mrb[0].mxu0
      %v1758 = vadd.f32 %v725, %v1757
      %v1759 = vpop.f32.mrb[0].mxu0
      %v1760 = vadd.f32 %v721, %v1759
      %v1761 = vpop.f32.mrb[0].mxu0
      %v1762 = vadd.f32 %v725, %v1761
      %1763 = vmatprep.mubr.bf16.mxu0 0
      %1764 = vmatmul.mubr.bf16.gmra.mrb[0].mxu0 %v1225
      %v1765 = vpop.f32.mrb[0].mxu0
      %v1766 = vadd.f32 %v721, %v1765
      %v1767 = vpop.f32.mrb[0].mxu0
      %v1768 = vadd.f32 %v725, %v1767
      %v1769 = vpop.f32.mrb[0].mxu0
      %v1770 = vadd.f32 %v721, %v1769
      %v1771 = vpop.f32.mrb[0].mxu0
      %v1772 = vadd.f32 %v725, %v1771
      %1773 = vmatprep.mubr.bf16.mxu0 0
      %1774 = vmatmul.mubr.bf16.gmra.mrb[0].mxu0 %v1228
      %v1775 = vpop.f32.mrb[0].mxu0
      %v1776 = vadd.f32 %v721, %v1775
      %v1777 = vpop.f32.mrb[0].mxu0
      %v1778 = vadd.f32 %v725, %v1777
      %v1779 = vpop.f32.mrb[0].mxu0
      %v1780 = vadd.f32 %v721, %v1779
      %v1781 = vpop.f32.mrb[0].mxu0
      %v1782 = vadd.f32 %v725, %v1781
      %1783 = vmatprep.mubr.bf16.mxu0 0
      %1784 = vmatmul.mubr.bf16.gmra.mrb[0].mxu0 %v1231
      %v1785 = vpop.f32.mrb[0].mxu0
      %v1786 = vadd.f32 %v721, %v1785
      %v1787 = vpop.f32.mrb[0].mxu0
      %v1788 = vadd.f32 %v725, %v1787
      %v1789 = vpop.f32.mrb[0].mxu0
      %v1790 = vadd.f32 %v721, %v1789
      %v1791 = vpop.f32.mrb[0].mxu0
      %v1792 = vadd.f32 %v725, %v1791
      %1793 = vmatprep.mubr.bf16.mxu0 0
      %1794 = vmatmul.mubr.bf16.gmra.mrb[0].mxu0 %v1234
      %v1795 = vpop.f32.mrb[0].mxu0
      %v1796 = vadd.f32 %v721, %v1795
      %v1797 = vpop.f32.mrb[0].mxu0
      %v1798 = vadd.f32 %v725, %v1797
      %v1799 = vpop.f32.mrb[0].mxu0
      %v1800 = vadd.f32 %v721, %v1799
      %v1801 = vpop.f32.mrb[0].mxu0
      %v1802 = vadd.f32 %v725, %v1801
      %1803 = vmatprep.mubr.bf16.mxu0 0
      %1804 = vmatmul.mubr.bf16.gmra.mrb[0].mxu0 %v1237
      %v1805 = vpop.f32.mrb[0].mxu0
      %v1806 = vadd.f32 %v721, %v1805
      %v1807 = vpop.f32.mrb[0].mxu0
      %v1808 = vadd.f32 %v725, %v1807
      %v1809 = vpop.f32.mrb[0].mxu0
      %v1810 = vadd.f32 %v721, %v1809
      %v1811 = vpop.f32.mrb[0].mxu0
      %v1812 = vadd.f32 %v725, %v1811
      %1813 = vmatprep.mubr.bf16.mxu0 0
      %1814 = vmatmul.mubr.bf16.gmra.mrb[0].mxu0 %v1240
      %v1815 = vpop.f32.mrb[0].mxu0
      %v1816 = vadd.f32 %v721, %v1815
      %v1817 = vpop.f32.mrb[0].mxu0
      %v1818 = vadd.f32 %v725, %v1817
      %v1819 = vpop.f32.mrb[0].mxu0
      %v1820 = vadd.f32 %v721, %v1819
      %v1821 = vpop.f32.mrb[0].mxu0
      %v1822 = vadd.f32 %v725, %v1821
      %1823 = vmatprep.mubr.bf16.mxu0 0
      %1824 = vmatmul.mubr.bf16.gmra.mrb[0].mxu0 %v1243
      %v1825 = vpop.f32.mrb[0].mxu0
      %v1826 = vadd.f32 %v721, %v1825
      %v1827 = vpop.f32.mrb[0].mxu0
      %v1828 = vadd.f32 %v725, %v1827
      %v1829 = vpop.f32.mrb[0].mxu0
      %v1830 = vadd.f32 %v721, %v1829
      %v1831 = vpop.f32.mrb[0].mxu0
      %v1832 = vadd.f32 %v725, %v1831
      %1833 = vmatprep.mubr.bf16.mxu0 0
      %1834 = vmatmul.mubr.bf16.gmra.mrb[0].mxu0 %v1246
      %v1835 = vpop.f32.mrb[0].mxu0
      %v1836 = vadd.f32 %v721, %v1835
      %v1837 = vpop.f32.mrb[0].mxu0
      %v1838 = vadd.f32 %v725, %v1837
      %v1839 = vpop.f32.mrb[0].mxu0
      %v1840 = vadd.f32 %v721, %v1839
      %v1841 = vpop.f32.mrb[0].mxu0
      %v1842 = vadd.f32 %v725, %v1841
      %1843 = vmatprep.mubr.bf16.mxu0 0
      %1844 = vmatmul.mubr.bf16.gmra.mrb[0].mxu0 %v1249
      %v1845 = vpop.f32.mrb[0].mxu0
      %v1846 = vadd.f32 %v721, %v1845
      %v1847 = vpop.f32.mrb[0].mxu0
      %v1848 = vadd.f32 %v725, %v1847
      %v1849 = vpop.f32.mrb[0].mxu0
      %v1850 = vadd.f32 %v721, %v1849
      %v1851 = vpop.f32.mrb[0].mxu0
      %v1852 = vadd.f32 %v725, %v1851
      %1853 = vmatprep.mubr.bf16.mxu0 0
      %1854 = vmatmul.mubr.bf16.gmra.mrb[0].mxu0 %v1252
      %v1855 = vpop.f32.mrb[0].mxu0
      %v1856 = vadd.f32 %v721, %v1855
      %v1857 = vpop.f32.mrb[0].mxu0
      %v1858 = vadd.f32 %v725, %v1857
      %v1859 = vpop.f32.mrb[0].mxu0
      %v1860 = vadd.f32 %v721, %v1859
      %v1861 = vpop.f32.mrb[0].mxu0
      %v1862 = vadd.f32 %v725, %v1861
      %1863 = vmatprep.mubr.bf16.mxu0 0
      %1864 = vmatmul.mubr.bf16.gmra.mrb[0].mxu0 %v1255
      %v1865 = vpop.f32.mrb[0].mxu0
      %v1866 = vadd.f32 %v721, %v1865
      %v1867 = vpop.f32.mrb[0].mxu0
      %v1868 = vadd.f32 %v725, %v1867
      %v1869 = vpop.f32.mrb[0].mxu0
      %v1870 = vadd.f32 %v721, %v1869
      %v1871 = vpop.f32.mrb[0].mxu0
      %v1872 = vadd.f32 %v725, %v1871
      %1873 = vmatprep.mubr.bf16.mxu0 0
      %1874 = vmatmul.mubr.bf16.gmra.mrb[0].mxu0 %v1258
      %v1875 = vpop.f32.mrb[0].mxu0
      %v1876 = vadd.f32 %v721, %v1875
      %v1877 = vpop.f32.mrb[0].mxu0
      %v1878 = vadd.f32 %v725, %v1877
      %v1879 = vpop.f32.mrb[0].mxu0
      %v1880 = vadd.f32 %v721, %v1879
      %v1881 = vpop.f32.mrb[0].mxu0
      %v1882 = vadd.f32 %v725, %v1881
      %1883 = vmatprep.mubr.bf16.mxu0 0
      %1884 = vmatmul.mubr.bf16.gmra.mrb[0].mxu0 %v1261
      %v1885 = vpop.f32.mrb[0].mxu0
      %v1886 = vadd.f32 %v721, %v1885
      %v1887 = vpop.f32.mrb[0].mxu0
      %v1888 = vadd.f32 %v725, %v1887
      %v1889 = vpop.f32.mrb[0].mxu0
      %v1890 = vadd.f32 %v721, %v1889
      %v1891 = vpop.f32.mrb[0].mxu0
      %v1892 = vadd.f32 %v725, %v1891
      %1893 = vmatprep.mubr.bf16.mxu0 0
      %1894 = vmatmul.mubr.bf16.gmra.mrb[0].mxu0 %v1264
      %v1895 = vpop.f32.mrb[0].mxu0
      %v1896 = vadd.f32 %v721, %v1895
      %v1897 = vpop.f32.mrb[0].mxu0
      %v1898 = vadd.f32 %v725, %v1897
      %v1899 = vpop.f32.mrb[0].mxu0
      %v1900 = vadd.f32 %v721, %v1899
      %v1901 = vpop.f32.mrb[0].mxu0
      %v1902 = vadd.f32 %v725, %v1901
      %1903 = vmatprep.mubr.bf16.mxu0 0
      %1904 = vmatmul.mubr.bf16.gmra.mrb[0].mxu0 %v1267
      %v1905 = vpop.f32.mrb[0].mxu0
      %v1906 = vadd.f32 %v721, %v1905
      %v1907 = vpop.f32.mrb[0].mxu0
      %v1908 = vadd.f32 %v725, %v1907
      %v1909 = vpop.f32.mrb[0].mxu0
      %v1910 = vadd.f32 %v721, %v1909
      %v1911 = vpop.f32.mrb[0].mxu0
      %v1912 = vadd.f32 %v725, %v1911
      %1913 = vmatprep.mubr.bf16.mxu0 0
      %1914 = vmatmul.mubr.bf16.gmra.mrb[0].mxu0 %v1270
      %v1915 = vpop.f32.mrb[0].mxu0
      %v1916 = vadd.f32 %v721, %v1915
      %v1917 = vpop.f32.mrb[0].mxu0
      %v1918 = vadd.f32 %v725, %v1917
      %v1919 = vpop.f32.mrb[0].mxu0
      %v1920 = vadd.f32 %v721, %v1919
      %v1921 = vpop.f32.mrb[0].mxu0
      %v1922 = vadd.f32 %v725, %v1921
      %1923 = vmatprep.mubr.bf16.mxu0 0
      %1924 = vmatmul.mubr.bf16.gmra.mrb[0].mxu0 %v1273
      %v1925 = vpop.f32.mrb[0].mxu0
      %v1926 = vadd.f32 %v721, %v1925
      %v1927 = vpop.f32.mrb[0].mxu0
      %v1928 = vadd.f32 %v725, %v1927
      %v1929 = vpop.f32.mrb[0].mxu0
      %v1930 = vadd.f32 %v721, %v1929
      %v1931 = vpop.f32.mrb[0].mxu0
      %v1932 = vadd.f32 %v725, %v1931
      %1933 = vmatprep.mubr.bf16.mxu0 0
      %1934 = vmatmul.mubr.bf16.gmra.mrb[0].mxu0 %v1276
      %v1935 = vpop.f32.mrb[0].mxu0
      %v1936 = vadd.f32 %v721, %v1935
      %v1937 = vpop.f32.mrb[0].mxu0
      %v1938 = vadd.f32 %v725, %v1937
      %v1939 = vpop.f32.mrb[0].mxu0
      %v1940 = vadd.f32 %v721, %v1939
      %v1941 = vpop.f32.mrb[0].mxu0
      %v1942 = vadd.f32 %v725, %v1941
      %1943 = vmatprep.mubr.bf16.mxu0 0
      %1944 = vmatmul.mubr.bf16.gmra.mrb[0].mxu0 %v1279
      %v1945 = vpop.f32.mrb[0].mxu0
      %v1946 = vadd.f32 %v721, %v1945
      %v1947 = vpop.f32.mrb[0].mxu0
      %v1948 = vadd.f32 %v725, %v1947
      %v1949 = vpop.f32.mrb[0].mxu0
      %v1950 = vadd.f32 %v721, %v1949
      %v1951 = vpop.f32.mrb[0].mxu0
      %v1952 = vadd.f32 %v725, %v1951
      %1953 = vdwg.mxu0
      %v1954 = vmax.f32 %v1316, 0.0
      %v1955 = vmax.f32 %v1318, 0.0
      %v1956 = vmax.f32 %v1320, 0.0
      %v1957 = vmax.f32 %v1322, 0.0
      %v1958 = vmax.f32 %v1326, 0.0
      %v1959 = vmax.f32 %v1328, 0.0
      %v1960 = vmax.f32 %v1330, 0.0
      %v1961 = vmax.f32 %v1332, 0.0
      %v1962 = vmax.f32 %v1336, 0.0
      %v1963 = vmax.f32 %v1338, 0.0
      %v1964 = vmax.f32 %v1340, 0.0
      %v1965 = vmax.f32 %v1342, 0.0
      %v1966 = vmax.f32 %v1346, 0.0
      %v1967 = vmax.f32 %v1348, 0.0
      %v1968 = vmax.f32 %v1350, 0.0
      %v1969 = vmax.f32 %v1352, 0.0
      %v1970 = vmax.f32 %v1356, 0.0
      %v1971 = vmax.f32 %v1358, 0.0
      %v1972 = vmax.f32 %v1360, 0.0
      %v1973 = vmax.f32 %v1362, 0.0
      %v1974 = vmax.f32 %v1366, 0.0
      %v1975 = vmax.f32 %v1368, 0.0
      %v1976 = vmax.f32 %v1370, 0.0
      %v1977 = vmax.f32 %v1372, 0.0
      %v1978 = vmax.f32 %v1376, 0.0
      %v1979 = vmax.f32 %v1378, 0.0
      %v1980 = vmax.f32 %v1380, 0.0
      %v1981 = vmax.f32 %v1382, 0.0
      %v1982 = vmax.f32 %v1386, 0.0
      %v1983 = vmax.f32 %v1388, 0.0
      %v1984 = vmax.f32 %v1390, 0.0
      %v1985 = vmax.f32 %v1392, 0.0
      %v1986 = vmax.f32 %v1396, 0.0
      %v1987 = vmax.f32 %v1398, 0.0
      %v1988 = vmax.f32 %v1400, 0.0
      %v1989 = vmax.f32 %v1402, 0.0
      %v1990 = vmax.f32 %v1406, 0.0
      %v1991 = vmax.f32 %v1408, 0.0
      %v1992 = vmax.f32 %v1410, 0.0
      %v1993 = vmax.f32 %v1412, 0.0
      %v1994 = vmax.f32 %v1416, 0.0
      %v1995 = vmax.f32 %v1418, 0.0
      %v1996 = vmax.f32 %v1420, 0.0
      %v1997 = vmax.f32 %v1422, 0.0
      %v1998 = vmax.f32 %v1426, 0.0
      %v1999 = vmax.f32 %v1428, 0.0
      %v2000 = vmax.f32 %v1430, 0.0
      %v2001 = vmax.f32 %v1432, 0.0
      %v2002 = vmax.f32 %v1436, 0.0
      %v2003 = vmax.f32 %v1438, 0.0
      %v2004 = vmax.f32 %v1440, 0.0
      %v2005 = vmax.f32 %v1442, 0.0
      %v2006 = vmax.f32 %v1446, 0.0
      %v2007 = vmax.f32 %v1448, 0.0
      %v2008 = vmax.f32 %v1450, 0.0
      %v2009 = vmax.f32 %v1452, 0.0
      %v2010 = vmax.f32 %v1456, 0.0
      %v2011 = vmax.f32 %v1458, 0.0
      %v2012 = vmax.f32 %v1460, 0.0
      %v2013 = vmax.f32 %v1462, 0.0
      %v2014 = vmax.f32 %v1466, 0.0
      %v2015 = vmax.f32 %v1468, 0.0
      %v2016 = vmax.f32 %v1470, 0.0
      %v2017 = vmax.f32 %v1472, 0.0
      %v2018 = vmax.f32 %v1476, 0.0
      %v2019 = vmax.f32 %v1478, 0.0
      %v2020 = vmax.f32 %v1480, 0.0
      %v2021 = vmax.f32 %v1482, 0.0
      %v2022 = vmax.f32 %v1486, 0.0
      %v2023 = vmax.f32 %v1488, 0.0
      %v2024 = vmax.f32 %v1490, 0.0
      %v2025 = vmax.f32 %v1492, 0.0
      %v2026 = vmax.f32 %v1496, 0.0
      %v2027 = vmax.f32 %v1498, 0.0
      %v2028 = vmax.f32 %v1500, 0.0
      %v2029 = vmax.f32 %v1502, 0.0
      %v2030 = vmax.f32 %v1506, 0.0
      %v2031 = vmax.f32 %v1508, 0.0
      %v2032 = vmax.f32 %v1510, 0.0
      %v2033 = vmax.f32 %v1512, 0.0
      %v2034 = vmax.f32 %v1516, 0.0
      %v2035 = vmax.f32 %v1518, 0.0
      %v2036 = vmax.f32 %v1520, 0.0
      %v2037 = vmax.f32 %v1522, 0.0
      %v2038 = vmax.f32 %v1526, 0.0
      %v2039 = vmax.f32 %v1528, 0.0
      %v2040 = vmax.f32 %v1530, 0.0
      %v2041 = vmax.f32 %v1532, 0.0
      %v2042 = vmax.f32 %v1536, 0.0
      %v2043 = vmax.f32 %v1538, 0.0
      %v2044 = vmax.f32 %v1540, 0.0
      %v2045 = vmax.f32 %v1542, 0.0
      %v2046 = vmax.f32 %v1546, 0.0
      %v2047 = vmax.f32 %v1548, 0.0
      %v2048 = vmax.f32 %v1550, 0.0
      %v2049 = vmax.f32 %v1552, 0.0
      %v2050 = vmax.f32 %v1556, 0.0
      %v2051 = vmax.f32 %v1558, 0.0
      %v2052 = vmax.f32 %v1560, 0.0
      %v2053 = vmax.f32 %v1562, 0.0
      %v2054 = vmax.f32 %v1566, 0.0
      %v2055 = vmax.f32 %v1568, 0.0
      %v2056 = vmax.f32 %v1570, 0.0
      %v2057 = vmax.f32 %v1572, 0.0
      %v2058 = vmax.f32 %v1576, 0.0
      %v2059 = vmax.f32 %v1578, 0.0
      %v2060 = vmax.f32 %v1580, 0.0
      %v2061 = vmax.f32 %v1582, 0.0
      %v2062 = vmax.f32 %v1586, 0.0
      %v2063 = vmax.f32 %v1588, 0.0
      %v2064 = vmax.f32 %v1590, 0.0
      %v2065 = vmax.f32 %v1592, 0.0
      %v2066 = vmax.f32 %v1596, 0.0
      %v2067 = vmax.f32 %v1598, 0.0
      %v2068 = vmax.f32 %v1600, 0.0
      %v2069 = vmax.f32 %v1602, 0.0
      %v2070 = vmax.f32 %v1606, 0.0
      %v2071 = vmax.f32 %v1608, 0.0
      %v2072 = vmax.f32 %v1610, 0.0
      %v2073 = vmax.f32 %v1612, 0.0
      %v2074 = vmax.f32 %v1616, 0.0
      %v2075 = vmax.f32 %v1618, 0.0
      %v2076 = vmax.f32 %v1620, 0.0
      %v2077 = vmax.f32 %v1622, 0.0
      %v2078 = vmax.f32 %v1626, 0.0
      %v2079 = vmax.f32 %v1628, 0.0
      %v2080 = vmax.f32 %v1630, 0.0
      %v2081 = vmax.f32 %v1632, 0.0
      %v2082 = vmax.f32 %v1636, 0.0
      %v2083 = vmax.f32 %v1638, 0.0
      %v2084 = vmax.f32 %v1640, 0.0
      %v2085 = vmax.f32 %v1642, 0.0
      %v2086 = vmax.f32 %v1646, 0.0
      %v2087 = vmax.f32 %v1648, 0.0
      %v2088 = vmax.f32 %v1650, 0.0
      %v2089 = vmax.f32 %v1652, 0.0
      %v2090 = vmax.f32 %v1656, 0.0
      %v2091 = vmax.f32 %v1658, 0.0
      %v2092 = vmax.f32 %v1660, 0.0
      %v2093 = vmax.f32 %v1662, 0.0
      %v2094 = vmax.f32 %v1666, 0.0
      %v2095 = vmax.f32 %v1668, 0.0
      %v2096 = vmax.f32 %v1670, 0.0
      %v2097 = vmax.f32 %v1672, 0.0
      %v2098 = vmax.f32 %v1676, 0.0
      %v2099 = vmax.f32 %v1678, 0.0
      %v2100 = vmax.f32 %v1680, 0.0
      %v2101 = vmax.f32 %v1682, 0.0
      %v2102 = vmax.f32 %v1686, 0.0
      %v2103 = vmax.f32 %v1688, 0.0
      %v2104 = vmax.f32 %v1690, 0.0
      %v2105 = vmax.f32 %v1692, 0.0
      %v2106 = vmax.f32 %v1696, 0.0
      %v2107 = vmax.f32 %v1698, 0.0
      %v2108 = vmax.f32 %v1700, 0.0
      %v2109 = vmax.f32 %v1702, 0.0
      %v2110 = vmax.f32 %v1706, 0.0
      %v2111 = vmax.f32 %v1708, 0.0
      %v2112 = vmax.f32 %v1710, 0.0
      %v2113 = vmax.f32 %v1712, 0.0
      %v2114 = vmax.f32 %v1716, 0.0
      %v2115 = vmax.f32 %v1718, 0.0
      %v2116 = vmax.f32 %v1720, 0.0
      %v2117 = vmax.f32 %v1722, 0.0
      %v2118 = vmax.f32 %v1726, 0.0
      %v2119 = vmax.f32 %v1728, 0.0
      %v2120 = vmax.f32 %v1730, 0.0
      %v2121 = vmax.f32 %v1732, 0.0
      %v2122 = vmax.f32 %v1736, 0.0
      %v2123 = vmax.f32 %v1738, 0.0
      %v2124 = vmax.f32 %v1740, 0.0
      %v2125 = vmax.f32 %v1742, 0.0
      %v2126 = vmax.f32 %v1746, 0.0
      %v2127 = vmax.f32 %v1748, 0.0
      %v2128 = vmax.f32 %v1750, 0.0
      %v2129 = vmax.f32 %v1752, 0.0
      %v2130 = vmax.f32 %v1756, 0.0
      %v2131 = vmax.f32 %v1758, 0.0
      %v2132 = vmax.f32 %v1760, 0.0
      %v2133 = vmax.f32 %v1762, 0.0
      %v2134 = vmax.f32 %v1766, 0.0
      %v2135 = vmax.f32 %v1768, 0.0
      %v2136 = vmax.f32 %v1770, 0.0
      %v2137 = vmax.f32 %v1772, 0.0
      %v2138 = vmax.f32 %v1776, 0.0
      %v2139 = vmax.f32 %v1778, 0.0
      %v2140 = vmax.f32 %v1780, 0.0
      %v2141 = vmax.f32 %v1782, 0.0
      %v2142 = vmax.f32 %v1786, 0.0
      %v2143 = vmax.f32 %v1788, 0.0
      %v2144 = vmax.f32 %v1790, 0.0
      %v2145 = vmax.f32 %v1792, 0.0
      %v2146 = vmax.f32 %v1796, 0.0
      %v2147 = vmax.f32 %v1798, 0.0
      %v2148 = vmax.f32 %v1800, 0.0
      %v2149 = vmax.f32 %v1802, 0.0
      %v2150 = vmax.f32 %v1806, 0.0
      %v2151 = vmax.f32 %v1808, 0.0
      %v2152 = vmax.f32 %v1810, 0.0
      %v2153 = vmax.f32 %v1812, 0.0
      %v2154 = vmax.f32 %v1816, 0.0
      %v2155 = vmax.f32 %v1818, 0.0
      %v2156 = vmax.f32 %v1820, 0.0
      %v2157 = vmax.f32 %v1822, 0.0
      %v2158 = vmax.f32 %v1826, 0.0
      %v2159 = vmax.f32 %v1828, 0.0
      %v2160 = vmax.f32 %v1830, 0.0
      %v2161 = vmax.f32 %v1832, 0.0
      %v2162 = vmax.f32 %v1836, 0.0
      %v2163 = vmax.f32 %v1838, 0.0
      %v2164 = vmax.f32 %v1840, 0.0
      %v2165 = vmax.f32 %v1842, 0.0
      %v2166 = vmax.f32 %v1846, 0.0
      %v2167 = vmax.f32 %v1848, 0.0
      %v2168 = vmax.f32 %v1850, 0.0
      %v2169 = vmax.f32 %v1852, 0.0
      %v2170 = vmax.f32 %v1856, 0.0
      %v2171 = vmax.f32 %v1858, 0.0
      %v2172 = vmax.f32 %v1860, 0.0
      %v2173 = vmax.f32 %v1862, 0.0
      %v2174 = vmax.f32 %v1866, 0.0
      %v2175 = vmax.f32 %v1868, 0.0
      %v2176 = vmax.f32 %v1870, 0.0
      %v2177 = vmax.f32 %v1872, 0.0
      %v2178 = vmax.f32 %v1876, 0.0
      %v2179 = vmax.f32 %v1878, 0.0
      %v2180 = vmax.f32 %v1880, 0.0
      %v2181 = vmax.f32 %v1882, 0.0
      %v2182 = vmax.f32 %v1886, 0.0
      %v2183 = vmax.f32 %v1888, 0.0
      %v2184 = vmax.f32 %v1890, 0.0
      %v2185 = vmax.f32 %v1892, 0.0
      %v2186 = vmax.f32 %v1896, 0.0
      %v2187 = vmax.f32 %v1898, 0.0
      %v2188 = vmax.f32 %v1900, 0.0
      %v2189 = vmax.f32 %v1902, 0.0
      %v2190 = vmax.f32 %v1906, 0.0
      %v2191 = vmax.f32 %v1908, 0.0
      %v2192 = vmax.f32 %v1910, 0.0
      %v2193 = vmax.f32 %v1912, 0.0
      %v2194 = vmax.f32 %v1916, 0.0
      %v2195 = vmax.f32 %v1918, 0.0
      %v2196 = vmax.f32 %v1920, 0.0
      %v2197 = vmax.f32 %v1922, 0.0
      %v2198 = vmax.f32 %v1926, 0.0
      %v2199 = vmax.f32 %v1928, 0.0
      %v2200 = vmax.f32 %v1930, 0.0
      %v2201 = vmax.f32 %v1932, 0.0
      %v2202 = vmax.f32 %v1936, 0.0
      %v2203 = vmax.f32 %v1938, 0.0
      %v2204 = vmax.f32 %v1940, 0.0
      %v2205 = vmax.f32 %v1942, 0.0
      %v2206 = vmax.f32 %v1946, 0.0
      %v2207 = vmax.f32 %v1948, 0.0
      %v2208 = vmax.f32 %v1950, 0.0
      %v2209 = vmax.f32 %v1952, 0.0
      %v2210 = vpack.c.bf16 %v1956, %v1954
      %v2211 = vpack.c.bf16 %v1957, %v1955
      %v2212 = vpack.c.bf16 %v1960, %v1958
      %v2213 = vpack.c.bf16 %v1961, %v1959
      %v2214 = vpack.c.bf16 %v1964, %v1962
      %v2215 = vpack.c.bf16 %v1965, %v1963
      %v2216 = vpack.c.bf16 %v1968, %v1966
      %v2217 = vpack.c.bf16 %v1969, %v1967
      %v2218 = vpack.c.bf16 %v1972, %v1970
      %v2219 = vpack.c.bf16 %v1973, %v1971
      %v2220 = vpack.c.bf16 %v1976, %v1974
      %v2221 = vpack.c.bf16 %v1977, %v1975
      %v2222 = vpack.c.bf16 %v1980, %v1978
      %v2223 = vpack.c.bf16 %v1981, %v1979
      %v2224 = vpack.c.bf16 %v1984, %v1982
      %v2225 = vpack.c.bf16 %v1985, %v1983
      %v2226 = vpack.c.bf16 %v1988, %v1986
      %v2227 = vpack.c.bf16 %v1989, %v1987
      %v2228 = vpack.c.bf16 %v1992, %v1990
      %v2229 = vpack.c.bf16 %v1993, %v1991
      %v2230 = vpack.c.bf16 %v1996, %v1994
      %v2231 = vpack.c.bf16 %v1997, %v1995
      %v2232 = vpack.c.bf16 %v2000, %v1998
      %v2233 = vpack.c.bf16 %v2001, %v1999
      %v2234 = vpack.c.bf16 %v2004, %v2002
      %v2235 = vpack.c.bf16 %v2005, %v2003
      %v2236 = vpack.c.bf16 %v2008, %v2006
      %v2237 = vpack.c.bf16 %v2009, %v2007
      %v2238 = vpack.c.bf16 %v2012, %v2010
      %v2239 = vpack.c.bf16 %v2013, %v2011
      %v2240 = vpack.c.bf16 %v2016, %v2014
      %v2241 = vpack.c.bf16 %v2017, %v2015
      %v2242 = vpack.c.bf16 %v2020, %v2018
      %v2243 = vpack.c.bf16 %v2021, %v2019
      %v2244 = vpack.c.bf16 %v2024, %v2022
      %v2245 = vpack.c.bf16 %v2025, %v2023
      %v2246 = vpack.c.bf16 %v2028, %v2026
      %v2247 = vpack.c.bf16 %v2029, %v2027
      %v2248 = vpack.c.bf16 %v2032, %v2030
      %v2249 = vpack.c.bf16 %v2033, %v2031
      %v2250 = vpack.c.bf16 %v2036, %v2034
      %v2251 = vpack.c.bf16 %v2037, %v2035
      %v2252 = vpack.c.bf16 %v2040, %v2038
      %v2253 = vpack.c.bf16 %v2041, %v2039
      %v2254 = vpack.c.bf16 %v2044, %v2042
      %v2255 = vpack.c.bf16 %v2045, %v2043
      %v2256 = vpack.c.bf16 %v2048, %v2046
      %v2257 = vpack.c.bf16 %v2049, %v2047
      %v2258 = vpack.c.bf16 %v2052, %v2050
      %v2259 = vpack.c.bf16 %v2053, %v2051
      %v2260 = vpack.c.bf16 %v2056, %v2054
      %v2261 = vpack.c.bf16 %v2057, %v2055
      %v2262 = vpack.c.bf16 %v2060, %v2058
      %v2263 = vpack.c.bf16 %v2061, %v2059
      %v2264 = vpack.c.bf16 %v2064, %v2062
      %v2265 = vpack.c.bf16 %v2065, %v2063
      %v2266 = vpack.c.bf16 %v2068, %v2066
      %v2267 = vpack.c.bf16 %v2069, %v2067
      %v2268 = vpack.c.bf16 %v2072, %v2070
      %v2269 = vpack.c.bf16 %v2073, %v2071
      %v2270 = vpack.c.bf16 %v2076, %v2074
      %v2271 = vpack.c.bf16 %v2077, %v2075
      %v2272 = vpack.c.bf16 %v2080, %v2078
      %v2273 = vpack.c.bf16 %v2081, %v2079
      %v2274 = vpack.c.bf16 %v2084, %v2082
      %v2275 = vpack.c.bf16 %v2085, %v2083
      %v2276 = vpack.c.bf16 %v2088, %v2086
      %v2277 = vpack.c.bf16 %v2089, %v2087
      %v2278 = vpack.c.bf16 %v2092, %v2090
      %v2279 = vpack.c.bf16 %v2093, %v2091
      %v2280 = vpack.c.bf16 %v2096, %v2094
      %v2281 = vpack.c.bf16 %v2097, %v2095
      %v2282 = vpack.c.bf16 %v2100, %v2098
      %v2283 = vpack.c.bf16 %v2101, %v2099
      %v2284 = vpack.c.bf16 %v2104, %v2102
      %v2285 = vpack.c.bf16 %v2105, %v2103
      %v2286 = vpack.c.bf16 %v2108, %v2106
      %v2287 = vpack.c.bf16 %v2109, %v2107
      %v2288 = vpack.c.bf16 %v2112, %v2110
      %v2289 = vpack.c.bf16 %v2113, %v2111
      %v2290 = vpack.c.bf16 %v2116, %v2114
      %v2291 = vpack.c.bf16 %v2117, %v2115
      %v2292 = vpack.c.bf16 %v2120, %v2118
      %v2293 = vpack.c.bf16 %v2121, %v2119
      %v2294 = vpack.c.bf16 %v2124, %v2122
      %v2295 = vpack.c.bf16 %v2125, %v2123
      %v2296 = vpack.c.bf16 %v2128, %v2126
      %v2297 = vpack.c.bf16 %v2129, %v2127
      %v2298 = vpack.c.bf16 %v2132, %v2130
      %v2299 = vpack.c.bf16 %v2133, %v2131
      %v2300 = vpack.c.bf16 %v2136, %v2134
      %v2301 = vpack.c.bf16 %v2137, %v2135
      %v2302 = vpack.c.bf16 %v2140, %v2138
      %v2303 = vpack.c.bf16 %v2141, %v2139
      %v2304 = vpack.c.bf16 %v2144, %v2142
      %v2305 = vpack.c.bf16 %v2145, %v2143
      %v2306 = vpack.c.bf16 %v2148, %v2146
      %v2307 = vpack.c.bf16 %v2149, %v2147
      %v2308 = vpack.c.bf16 %v2152, %v2150
      %v2309 = vpack.c.bf16 %v2153, %v2151
      %v2310 = vpack.c.bf16 %v2156, %v2154
      %v2311 = vpack.c.bf16 %v2157, %v2155
      %v2312 = vpack.c.bf16 %v2160, %v2158
      %v2313 = vpack.c.bf16 %v2161, %v2159
      %v2314 = vpack.c.bf16 %v2164, %v2162
      %v2315 = vpack.c.bf16 %v2165, %v2163
      %v2316 = vpack.c.bf16 %v2168, %v2166
      %v2317 = vpack.c.bf16 %v2169, %v2167
      %v2318 = vpack.c.bf16 %v2172, %v2170
      %v2319 = vpack.c.bf16 %v2173, %v2171
      %v2320 = vpack.c.bf16 %v2176, %v2174
      %v2321 = vpack.c.bf16 %v2177, %v2175
      %v2322 = vpack.c.bf16 %v2180, %v2178
      %v2323 = vpack.c.bf16 %v2181, %v2179
      %v2324 = vpack.c.bf16 %v2184, %v2182
      %v2325 = vpack.c.bf16 %v2185, %v2183
      %v2326 = vpack.c.bf16 %v2188, %v2186
      %v2327 = vpack.c.bf16 %v2189, %v2187
      %v2328 = vpack.c.bf16 %v2192, %v2190
      %v2329 = vpack.c.bf16 %v2193, %v2191
      %v2330 = vpack.c.bf16 %v2196, %v2194
      %v2331 = vpack.c.bf16 %v2197, %v2195
      %v2332 = vpack.c.bf16 %v2200, %v2198
      %v2333 = vpack.c.bf16 %v2201, %v2199
      %v2334 = vpack.c.bf16 %v2204, %v2202
      %v2335 = vpack.c.bf16 %v2205, %v2203
      %v2336 = vpack.c.bf16 %v2208, %v2206
      %v2337 = vpack.c.bf16 %v2209, %v2207
      %v2338 = vld [vmem:[%s3] sm:$0xff]
      %v2339 = vld [vmem:[%s3 + $0x8] sm:$0xff]
      %v2340 = vld [vmem:[%s3 + $0x10] sm:$0xff]
      %v2341 = vld [vmem:[%s3 + $0x18] sm:$0xff]
      %v2342 = vld [vmem:[%s3 + $0x20] sm:$0xff]
      %v2343 = vld [vmem:[%s3 + $0x28] sm:$0xff]
      %v2344 = vld [vmem:[%s3 + $0x30] sm:$0xff]
      %v2345 = vld [vmem:[%s3 + $0x38] sm:$0xff]
      %v2346 = vld [vmem:[%s3 + $0x40] sm:$0xff]
      %v2347 = vld [vmem:[%s3 + $0x48] sm:$0xff]
      %v2348 = vld [vmem:[%s3 + $0x50] sm:$0xff]
      %v2349 = vld [vmem:[%s3 + $0x58] sm:$0xff]
      %v2350 = vld [vmem:[%s3 + $0x60] sm:$0xff]
      %v2351 = vld [vmem:[%s3 + $0x68] sm:$0xff]
      %v2352 = vld [vmem:[%s3 + $0x70] sm:$0xff]
      %v2353 = vld [vmem:[%s3 + $0x78] sm:$0xff]
      %v2354 = vld [vmem:[%s3 + $0x80] sm:$0xff]
      %v2355 = vld [vmem:[%s3 + $0x88] sm:$0xff]
      %v2356 = vld [vmem:[%s3 + $0x90] sm:$0xff]
      %v2357 = vld [vmem:[%s3 + $0x98] sm:$0xff]
      %v2358 = vld [vmem:[%s3 + $0xa0] sm:$0xff]
      %v2359 = vld [vmem:[%s3 + $0xa8] sm:$0xff]
      %v2360 = vld [vmem:[%s3 + $0xb0] sm:$0xff]
      %v2361 = vld [vmem:[%s3 + $0xb8] sm:$0xff]
      %v2362 = vld [vmem:[%s3 + $0xc0] sm:$0xff]
      %v2363 = vld [vmem:[%s3 + $0xc8] sm:$0xff]
      %v2364 = vld [vmem:[%s3 + $0xd0] sm:$0xff]
      %v2365 = vld [vmem:[%s3 + $0xd8] sm:$0xff]
      %v2366 = vld [vmem:[%s3 + $0xe0] sm:$0xff]
      %v2367 = vld [vmem:[%s3 + $0xe8] sm:$0xff]
      %v2368 = vld [vmem:[%s3 + $0xf0] sm:$0xff]
      %v2369 = vld [vmem:[%s3 + $0xf8] sm:$0xff]
      %v2370 = vld [vmem:[%s4] sm:$0x3]
      %v2372 = vlaneseq
      %v2373 = vshrl.u32 %v2372, 7
      %v2374 = vsub.s32 0, %v2373
      %v2375 = vrot.slane %v2370, %v2374
      %v2376 = vlaneseq
      %v2377 = vshrl.u32 %v2376, 7
      %v2378 = vsub.s32 1, %v2377
      %v2379 = vrot.slane %v2370, %v2378
      %v2414 = vunpack.c.l.b16 %v2338
      %v2415 = vunpack.c.h.b16 %v2338
      %v2416 = vunpack.c.l.b16 %v2339
      %v2417 = vunpack.c.h.b16 %v2339
      %v2418 = vunpack.c.l.b16 %v2340
      %v2419 = vunpack.c.h.b16 %v2340
      %v2420 = vunpack.c.l.b16 %v2341
      %v2421 = vunpack.c.h.b16 %v2341
      %v2422 = vunpack.c.l.b16 %v2342
      %v2423 = vunpack.c.h.b16 %v2342
      %v2424 = vunpack.c.l.b16 %v2343
      %v2425 = vunpack.c.h.b16 %v2343
      %v2426 = vunpack.c.l.b16 %v2344
      %v2427 = vunpack.c.h.b16 %v2344
      %v2428 = vunpack.c.l.b16 %v2345
      %v2429 = vunpack.c.h.b16 %v2345
      %v2430 = vunpack.c.l.b16 %v2346
      %v2431 = vunpack.c.h.b16 %v2346
      %v2432 = vunpack.c.l.b16 %v2347
      %v2433 = vunpack.c.h.b16 %v2347
      %v2434 = vunpack.c.l.b16 %v2348
      %v2435 = vunpack.c.h.b16 %v2348
      %v2436 = vunpack.c.l.b16 %v2349
      %v2437 = vunpack.c.h.b16 %v2349
      %v2438 = vunpack.c.l.b16 %v2350
      %v2439 = vunpack.c.h.b16 %v2350
      %v2440 = vunpack.c.l.b16 %v2351
      %v2441 = vunpack.c.h.b16 %v2351
      %v2442 = vunpack.c.l.b16 %v2352
      %v2443 = vunpack.c.h.b16 %v2352
      %v2444 = vunpack.c.l.b16 %v2353
      %v2445 = vunpack.c.h.b16 %v2353
      %v2446 = vunpack.c.l.b16 %v2354
      %v2447 = vunpack.c.h.b16 %v2354
      %v2448 = vunpack.c.l.b16 %v2355
      %v2449 = vunpack.c.h.b16 %v2355
      %v2450 = vunpack.c.l.b16 %v2356
      %v2451 = vunpack.c.h.b16 %v2356
      %v2452 = vunpack.c.l.b16 %v2357
      %v2453 = vunpack.c.h.b16 %v2357
      %v2454 = vunpack.c.l.b16 %v2358
      %v2455 = vunpack.c.h.b16 %v2358
      %v2456 = vunpack.c.l.b16 %v2359
      %v2457 = vunpack.c.h.b16 %v2359
      %v2458 = vunpack.c.l.b16 %v2360
      %v2459 = vunpack.c.h.b16 %v2360
      %v2460 = vunpack.c.l.b16 %v2361
      %v2461 = vunpack.c.h.b16 %v2361
      %v2462 = vunpack.c.l.b16 %v2362
      %v2463 = vunpack.c.h.b16 %v2362
      %v2464 = vunpack.c.l.b16 %v2363
      %v2465 = vunpack.c.h.b16 %v2363
      %v2466 = vunpack.c.l.b16 %v2364
      %v2467 = vunpack.c.h.b16 %v2364
      %v2468 = vunpack.c.l.b16 %v2365
      %v2469 = vunpack.c.h.b16 %v2365
      %v2470 = vunpack.c.l.b16 %v2366
      %v2471 = vunpack.c.h.b16 %v2366
      %v2472 = vunpack.c.l.b16 %v2367
      %v2473 = vunpack.c.h.b16 %v2367
      %v2474 = vunpack.c.l.b16 %v2368
      %v2475 = vunpack.c.h.b16 %v2368
      %v2476 = vunpack.c.l.b16 %v2369
      %v2477 = vunpack.c.h.b16 %v2369
      %v2478 = vpack.c.b16 %v2416, %v2414
      %v2479 = vpack.c.b16 %v2417, %v2415
      %v2480 = vpack.c.b16 %v2420, %v2418
      %v2481 = vpack.c.b16 %v2421, %v2419
      %v2482 = vpack.c.b16 %v2424, %v2422
      %v2483 = vpack.c.b16 %v2425, %v2423
      %v2484 = vpack.c.b16 %v2428, %v2426
      %v2485 = vpack.c.b16 %v2429, %v2427
      %v2486 = vpack.c.b16 %v2432, %v2430
      %v2487 = vpack.c.b16 %v2433, %v2431
      %v2488 = vpack.c.b16 %v2436, %v2434
      %v2489 = vpack.c.b16 %v2437, %v2435
      %v2490 = vpack.c.b16 %v2440, %v2438
      %v2491 = vpack.c.b16 %v2441, %v2439
      %v2492 = vpack.c.b16 %v2444, %v2442
      %v2493 = vpack.c.b16 %v2445, %v2443
      %v2494 = vpack.c.b16 %v2448, %v2446
      %v2495 = vpack.c.b16 %v2449, %v2447
      %v2496 = vpack.c.b16 %v2452, %v2450
      %v2497 = vpack.c.b16 %v2453, %v2451
      %v2498 = vpack.c.b16 %v2456, %v2454
      %v2499 = vpack.c.b16 %v2457, %v2455
      %v2500 = vpack.c.b16 %v2460, %v2458
      %v2501 = vpack.c.b16 %v2461, %v2459
      %v2502 = vpack.c.b16 %v2464, %v2462
      %v2503 = vpack.c.b16 %v2465, %v2463
      %v2504 = vpack.c.b16 %v2468, %v2466
      %v2505 = vpack.c.b16 %v2469, %v2467
      %v2506 = vpack.c.b16 %v2472, %v2470
      %v2507 = vpack.c.b16 %v2473, %v2471
      %v2508 = vpack.c.b16 %v2476, %v2474
      %v2509 = vpack.c.b16 %v2477, %v2475
      %2542 = vmatprep.subr.bf16.mxu0 %v2479
      %2543 = vmatpush1.bf16.msra.mxu0 %v2478
      %2544 = vmatprep.subr.bf16.mxu0 %v2481
      %2545 = vmatpush1.bf16.msra.mxu0 %v2480
      %2546 = vmatprep.subr.bf16.mxu0 %v2483
      %2547 = vmatpush1.bf16.msra.mxu0 %v2482
      %2548 = vmatprep.subr.bf16.mxu0 %v2485
      %2549 = vmatpush1.bf16.msra.mxu0 %v2484
      %2550 = vmatprep.subr.bf16.mxu0 %v2487
      %2551 = vmatpush1.bf16.msra.mxu0 %v2486
      %2552 = vmatprep.subr.bf16.mxu0 %v2489
      %2553 = vmatpush1.bf16.msra.mxu0 %v2488
      %2554 = vmatprep.subr.bf16.mxu0 %v2491
      %2555 = vmatpush1.bf16.msra.mxu0 %v2490
      %2556 = vmatprep.subr.bf16.mxu0 %v2493
      %2557 = vmatpush1.bf16.msra.mxu0 %v2492
      %2558 = vmatprep.subr.bf16.mxu0 %v2495
      %2559 = vmatpush1.bf16.msra.mxu0 %v2494
      %2560 = vmatprep.subr.bf16.mxu0 %v2497
      %2561 = vmatpush1.bf16.msra.mxu0 %v2496
      %2562 = vmatprep.subr.bf16.mxu0 %v2499
      %2563 = vmatpush1.bf16.msra.mxu0 %v2498
      %2564 = vmatprep.subr.bf16.mxu0 %v2501
      %2565 = vmatpush1.bf16.msra.mxu0 %v2500
      %2566 = vmatprep.subr.bf16.mxu0 %v2503
      %2567 = vmatpush1.bf16.msra.mxu0 %v2502
      %2568 = vmatprep.subr.bf16.mxu0 %v2505
      %2569 = vmatpush1.bf16.msra.mxu0 %v2504
      %2570 = vmatprep.subr.bf16.mxu0 %v2507
      %2571 = vmatpush1.bf16.msra.mxu0 %v2506
      %2572 = vmatprep.subr.bf16.mxu0 %v2509
      %2573 = vmatpush1.bf16.msra.mxu0 %v2508
      %2574 = vmatprep.mubr.bf16.mxu0 %v2211
      %2575 = vmatmul.mubr.bf16.gmra.mrb[0].mxu0 %v2210
      %v2576 = vpop.f32.mrb[0].mxu0
      %v2577 = vadd.f32 %v2375, %v2576
      %v2578 = vpop.f32.mrb[0].mxu0
      %v2579 = vadd.f32 %v2379, %v2578
      %v2580 = vpop.f32.mrb[0].mxu0
      %v2581 = vadd.f32 %v2375, %v2580
      %v2582 = vpop.f32.mrb[0].mxu0
      %v2583 = vadd.f32 %v2379, %v2582
      %2584 = vmatprep.mubr.bf16.mxu0 %v2213
      %2585 = vmatmul.mubr.bf16.gmra.mrb[0].mxu0 %v2212
      %v2586 = vpop.f32.mrb[0].mxu0
      %v2587 = vadd.f32 %v2375, %v2586
      %v2588 = vpop.f32.mrb[0].mxu0
      %v2589 = vadd.f32 %v2379, %v2588
      %v2590 = vpop.f32.mrb[0].mxu0
      %v2591 = vadd.f32 %v2375, %v2590
      %v2592 = vpop.f32.mrb[0].mxu0
      %v2593 = vadd.f32 %v2379, %v2592
      %2594 = vmatprep.mubr.bf16.mxu0 %v2215
      %2595 = vmatmul.mubr.bf16.gmra.mrb[0].mxu0 %v2214
      %v2596 = vpop.f32.mrb[0].mxu0
      %v2597 = vadd.f32 %v2375, %v2596
      %v2598 = vpop.f32.mrb[0].mxu0
      %v2599 = vadd.f32 %v2379, %v2598
      %v2600 = vpop.f32.mrb[0].mxu0
      %v2601 = vadd.f32 %v2375, %v2600
      %v2602 = vpop.f32.mrb[0].mxu0
      %v2603 = vadd.f32 %v2379, %v2602
      %2604 = vmatprep.mubr.bf16.mxu0 %v2217
      %2605 = vmatmul.mubr.bf16.gmra.mrb[0].mxu0 %v2216
      %v2606 = vpop.f32.mrb[0].mxu0
      %v2607 = vadd.f32 %v2375, %v2606
      %v2608 = vpop.f32.mrb[0].mxu0
      %v2609 = vadd.f32 %v2379, %v2608
      %v2610 = vpop.f32.mrb[0].mxu0
      %v2611 = vadd.f32 %v2375, %v2610
      %v2612 = vpop.f32.mrb[0].mxu0
      %v2613 = vadd.f32 %v2379, %v2612
      %2614 = vmatprep.mubr.bf16.mxu0 %v2219
      %2615 = vmatmul.mubr.bf16.gmra.mrb[0].mxu0 %v2218
      %v2616 = vpop.f32.mrb[0].mxu0
      %v2617 = vadd.f32 %v2375, %v2616
      %v2618 = vpop.f32.mrb[0].mxu0
      %v2619 = vadd.f32 %v2379, %v2618
      %v2620 = vpop.f32.mrb[0].mxu0
      %v2621 = vadd.f32 %v2375, %v2620
      %v2622 = vpop.f32.mrb[0].mxu0
      %v2623 = vadd.f32 %v2379, %v2622
      %2624 = vmatprep.mubr.bf16.mxu0 %v2221
      %2625 = vmatmul.mubr.bf16.gmra.mrb[0].mxu0 %v2220
      %v2626 = vpop.f32.mrb[0].mxu0
      %v2627 = vadd.f32 %v2375, %v2626
      %v2628 = vpop.f32.mrb[0].mxu0
      %v2629 = vadd.f32 %v2379, %v2628
      %v2630 = vpop.f32.mrb[0].mxu0
      %v2631 = vadd.f32 %v2375, %v2630
      %v2632 = vpop.f32.mrb[0].mxu0
      %v2633 = vadd.f32 %v2379, %v2632
      %2634 = vmatprep.mubr.bf16.mxu0 %v2223
      %2635 = vmatmul.mubr.bf16.gmra.mrb[0].mxu0 %v2222
      %v2636 = vpop.f32.mrb[0].mxu0
      %v2637 = vadd.f32 %v2375, %v2636
      %v2638 = vpop.f32.mrb[0].mxu0
      %v2639 = vadd.f32 %v2379, %v2638
      %v2640 = vpop.f32.mrb[0].mxu0
      %v2641 = vadd.f32 %v2375, %v2640
      %v2642 = vpop.f32.mrb[0].mxu0
      %v2643 = vadd.f32 %v2379, %v2642
      %2644 = vmatprep.mubr.bf16.mxu0 %v2225
      %2645 = vmatmul.mubr.bf16.gmra.mrb[0].mxu0 %v2224
      %v2646 = vpop.f32.mrb[0].mxu0
      %v2647 = vadd.f32 %v2375, %v2646
      %v2648 = vpop.f32.mrb[0].mxu0
      %v2649 = vadd.f32 %v2379, %v2648
      %v2650 = vpop.f32.mrb[0].mxu0
      %v2651 = vadd.f32 %v2375, %v2650
      %v2652 = vpop.f32.mrb[0].mxu0
      %v2653 = vadd.f32 %v2379, %v2652
      %2654 = vmatprep.mubr.bf16.mxu0 %v2227
      %2655 = vmatmul.mubr.bf16.gmra.mrb[0].mxu0 %v2226
      %v2656 = vpop.f32.mrb[0].mxu0
      %v2657 = vadd.f32 %v2375, %v2656
      %v2658 = vpop.f32.mrb[0].mxu0
      %v2659 = vadd.f32 %v2379, %v2658
      %v2660 = vpop.f32.mrb[0].mxu0
      %v2661 = vadd.f32 %v2375, %v2660
      %v2662 = vpop.f32.mrb[0].mxu0
      %v2663 = vadd.f32 %v2379, %v2662
      %2664 = vmatprep.mubr.bf16.mxu0 %v2229
      %2665 = vmatmul.mubr.bf16.gmra.mrb[0].mxu0 %v2228
      %v2666 = vpop.f32.mrb[0].mxu0
      %v2667 = vadd.f32 %v2375, %v2666
      %v2668 = vpop.f32.mrb[0].mxu0
      %v2669 = vadd.f32 %v2379, %v2668
      %v2670 = vpop.f32.mrb[0].mxu0
      %v2671 = vadd.f32 %v2375, %v2670
      %v2672 = vpop.f32.mrb[0].mxu0
      %v2673 = vadd.f32 %v2379, %v2672
      %2674 = vmatprep.mubr.bf16.mxu0 %v2231
      %2675 = vmatmul.mubr.bf16.gmra.mrb[0].mxu0 %v2230
      %v2676 = vpop.f32.mrb[0].mxu0
      %v2677 = vadd.f32 %v2375, %v2676
      %v2678 = vpop.f32.mrb[0].mxu0
      %v2679 = vadd.f32 %v2379, %v2678
      %v2680 = vpop.f32.mrb[0].mxu0
      %v2681 = vadd.f32 %v2375, %v2680
      %v2682 = vpop.f32.mrb[0].mxu0
      %v2683 = vadd.f32 %v2379, %v2682
      %2684 = vmatprep.mubr.bf16.mxu0 %v2233
      %2685 = vmatmul.mubr.bf16.gmra.mrb[0].mxu0 %v2232
      %v2686 = vpop.f32.mrb[0].mxu0
      %v2687 = vadd.f32 %v2375, %v2686
      %v2688 = vpop.f32.mrb[0].mxu0
      %v2689 = vadd.f32 %v2379, %v2688
      %v2690 = vpop.f32.mrb[0].mxu0
      %v2691 = vadd.f32 %v2375, %v2690
      %v2692 = vpop.f32.mrb[0].mxu0
      %v2693 = vadd.f32 %v2379, %v2692
      %2694 = vmatprep.mubr.bf16.mxu0 %v2235
      %2695 = vmatmul.mubr.bf16.gmra.mrb[0].mxu0 %v2234
      %v2696 = vpop.f32.mrb[0].mxu0
      %v2697 = vadd.f32 %v2375, %v2696
      %v2698 = vpop.f32.mrb[0].mxu0
      %v2699 = vadd.f32 %v2379, %v2698
      %v2700 = vpop.f32.mrb[0].mxu0
      %v2701 = vadd.f32 %v2375, %v2700
      %v2702 = vpop.f32.mrb[0].mxu0
      %v2703 = vadd.f32 %v2379, %v2702
      %2704 = vmatprep.mubr.bf16.mxu0 %v2237
      %2705 = vmatmul.mubr.bf16.gmra.mrb[0].mxu0 %v2236
      %v2706 = vpop.f32.mrb[0].mxu0
      %v2707 = vadd.f32 %v2375, %v2706
      %v2708 = vpop.f32.mrb[0].mxu0
      %v2709 = vadd.f32 %v2379, %v2708
      %v2710 = vpop.f32.mrb[0].mxu0
      %v2711 = vadd.f32 %v2375, %v2710
      %v2712 = vpop.f32.mrb[0].mxu0
      %v2713 = vadd.f32 %v2379, %v2712
      %2714 = vmatprep.mubr.bf16.mxu0 %v2239
      %2715 = vmatmul.mubr.bf16.gmra.mrb[0].mxu0 %v2238
      %v2716 = vpop.f32.mrb[0].mxu0
      %v2717 = vadd.f32 %v2375, %v2716
      %v2718 = vpop.f32.mrb[0].mxu0
      %v2719 = vadd.f32 %v2379, %v2718
      %v2720 = vpop.f32.mrb[0].mxu0
      %v2721 = vadd.f32 %v2375, %v2720
      %v2722 = vpop.f32.mrb[0].mxu0
      %v2723 = vadd.f32 %v2379, %v2722
      %2724 = vmatprep.mubr.bf16.mxu0 %v2241
      %2725 = vmatmul.mubr.bf16.gmra.mrb[0].mxu0 %v2240
      %v2726 = vpop.f32.mrb[0].mxu0
      %v2727 = vadd.f32 %v2375, %v2726
      %v2728 = vpop.f32.mrb[0].mxu0
      %v2729 = vadd.f32 %v2379, %v2728
      %v2730 = vpop.f32.mrb[0].mxu0
      %v2731 = vadd.f32 %v2375, %v2730
      %v2732 = vpop.f32.mrb[0].mxu0
      %v2733 = vadd.f32 %v2379, %v2732
      %2734 = vmatprep.mubr.bf16.mxu0 %v2243
      %2735 = vmatmul.mubr.bf16.gmra.mrb[0].mxu0 %v2242
      %v2736 = vpop.f32.mrb[0].mxu0
      %v2737 = vadd.f32 %v2375, %v2736
      %v2738 = vpop.f32.mrb[0].mxu0
      %v2739 = vadd.f32 %v2379, %v2738
      %v2740 = vpop.f32.mrb[0].mxu0
      %v2741 = vadd.f32 %v2375, %v2740
      %v2742 = vpop.f32.mrb[0].mxu0
      %v2743 = vadd.f32 %v2379, %v2742
      %2744 = vmatprep.mubr.bf16.mxu0 %v2245
      %2745 = vmatmul.mubr.bf16.gmra.mrb[0].mxu0 %v2244
      %v2746 = vpop.f32.mrb[0].mxu0
      %v2747 = vadd.f32 %v2375, %v2746
      %v2748 = vpop.f32.mrb[0].mxu0
      %v2749 = vadd.f32 %v2379, %v2748
      %v2750 = vpop.f32.mrb[0].mxu0
      %v2751 = vadd.f32 %v2375, %v2750
      %v2752 = vpop.f32.mrb[0].mxu0
      %v2753 = vadd.f32 %v2379, %v2752
      %2754 = vmatprep.mubr.bf16.mxu0 %v2247
      %2755 = vmatmul.mubr.bf16.gmra.mrb[0].mxu0 %v2246
      %v2756 = vpop.f32.mrb[0].mxu0
      %v2757 = vadd.f32 %v2375, %v2756
      %v2758 = vpop.f32.mrb[0].mxu0
      %v2759 = vadd.f32 %v2379, %v2758
      %v2760 = vpop.f32.mrb[0].mxu0
      %v2761 = vadd.f32 %v2375, %v2760
      %v2762 = vpop.f32.mrb[0].mxu0
      %v2763 = vadd.f32 %v2379, %v2762
      %2764 = vmatprep.mubr.bf16.mxu0 %v2249
      %2765 = vmatmul.mubr.bf16.gmra.mrb[0].mxu0 %v2248
      %v2766 = vpop.f32.mrb[0].mxu0
      %v2767 = vadd.f32 %v2375, %v2766
      %v2768 = vpop.f32.mrb[0].mxu0
      %v2769 = vadd.f32 %v2379, %v2768
      %v2770 = vpop.f32.mrb[0].mxu0
      %v2771 = vadd.f32 %v2375, %v2770
      %v2772 = vpop.f32.mrb[0].mxu0
      %v2773 = vadd.f32 %v2379, %v2772
      %2774 = vmatprep.mubr.bf16.mxu0 %v2251
      %2775 = vmatmul.mubr.bf16.gmra.mrb[0].mxu0 %v2250
      %v2776 = vpop.f32.mrb[0].mxu0
      %v2777 = vadd.f32 %v2375, %v2776
      %v2778 = vpop.f32.mrb[0].mxu0
      %v2779 = vadd.f32 %v2379, %v2778
      %v2780 = vpop.f32.mrb[0].mxu0
      %v2781 = vadd.f32 %v2375, %v2780
      %v2782 = vpop.f32.mrb[0].mxu0
      %v2783 = vadd.f32 %v2379, %v2782
      %2784 = vmatprep.mubr.bf16.mxu0 %v2253
      %2785 = vmatmul.mubr.bf16.gmra.mrb[0].mxu0 %v2252
      %v2786 = vpop.f32.mrb[0].mxu0
      %v2787 = vadd.f32 %v2375, %v2786
      %v2788 = vpop.f32.mrb[0].mxu0
      %v2789 = vadd.f32 %v2379, %v2788
      %v2790 = vpop.f32.mrb[0].mxu0
      %v2791 = vadd.f32 %v2375, %v2790
      %v2792 = vpop.f32.mrb[0].mxu0
      %v2793 = vadd.f32 %v2379, %v2792
      %2794 = vmatprep.mubr.bf16.mxu0 %v2255
      %2795 = vmatmul.mubr.bf16.gmra.mrb[0].mxu0 %v2254
      %v2796 = vpop.f32.mrb[0].mxu0
      %v2797 = vadd.f32 %v2375, %v2796
      %v2798 = vpop.f32.mrb[0].mxu0
      %v2799 = vadd.f32 %v2379, %v2798
      %v2800 = vpop.f32.mrb[0].mxu0
      %v2801 = vadd.f32 %v2375, %v2800
      %v2802 = vpop.f32.mrb[0].mxu0
      %v2803 = vadd.f32 %v2379, %v2802
      %2804 = vmatprep.mubr.bf16.mxu0 %v2257
      %2805 = vmatmul.mubr.bf16.gmra.mrb[0].mxu0 %v2256
      %v2806 = vpop.f32.mrb[0].mxu0
      %v2807 = vadd.f32 %v2375, %v2806
      %v2808 = vpop.f32.mrb[0].mxu0
      %v2809 = vadd.f32 %v2379, %v2808
      %v2810 = vpop.f32.mrb[0].mxu0
      %v2811 = vadd.f32 %v2375, %v2810
      %v2812 = vpop.f32.mrb[0].mxu0
      %v2813 = vadd.f32 %v2379, %v2812
      %2814 = vmatprep.mubr.bf16.mxu0 %v2259
      %2815 = vmatmul.mubr.bf16.gmra.mrb[0].mxu0 %v2258
      %v2816 = vpop.f32.mrb[0].mxu0
      %v2817 = vadd.f32 %v2375, %v2816
      %v2818 = vpop.f32.mrb[0].mxu0
      %v2819 = vadd.f32 %v2379, %v2818
      %v2820 = vpop.f32.mrb[0].mxu0
      %v2821 = vadd.f32 %v2375, %v2820
      %v2822 = vpop.f32.mrb[0].mxu0
      %v2823 = vadd.f32 %v2379, %v2822
      %2824 = vmatprep.mubr.bf16.mxu0 %v2261
      %2825 = vmatmul.mubr.bf16.gmra.mrb[0].mxu0 %v2260
      %v2826 = vpop.f32.mrb[0].mxu0
      %v2827 = vadd.f32 %v2375, %v2826
      %v2828 = vpop.f32.mrb[0].mxu0
      %v2829 = vadd.f32 %v2379, %v2828
      %v2830 = vpop.f32.mrb[0].mxu0
      %v2831 = vadd.f32 %v2375, %v2830
      %v2832 = vpop.f32.mrb[0].mxu0
      %v2833 = vadd.f32 %v2379, %v2832
      %2834 = vmatprep.mubr.bf16.mxu0 %v2263
      %2835 = vmatmul.mubr.bf16.gmra.mrb[0].mxu0 %v2262
      %v2836 = vpop.f32.mrb[0].mxu0
      %v2837 = vadd.f32 %v2375, %v2836
      %v2838 = vpop.f32.mrb[0].mxu0
      %v2839 = vadd.f32 %v2379, %v2838
      %v2840 = vpop.f32.mrb[0].mxu0
      %v2841 = vadd.f32 %v2375, %v2840
      %v2842 = vpop.f32.mrb[0].mxu0
      %v2843 = vadd.f32 %v2379, %v2842
      %2844 = vmatprep.mubr.bf16.mxu0 %v2265
      %2845 = vmatmul.mubr.bf16.gmra.mrb[0].mxu0 %v2264
      %v2846 = vpop.f32.mrb[0].mxu0
      %v2847 = vadd.f32 %v2375, %v2846
      %v2848 = vpop.f32.mrb[0].mxu0
      %v2849 = vadd.f32 %v2379, %v2848
      %v2850 = vpop.f32.mrb[0].mxu0
      %v2851 = vadd.f32 %v2375, %v2850
      %v2852 = vpop.f32.mrb[0].mxu0
      %v2853 = vadd.f32 %v2379, %v2852
      %2854 = vmatprep.mubr.bf16.mxu0 %v2267
      %2855 = vmatmul.mubr.bf16.gmra.mrb[0].mxu0 %v2266
      %v2856 = vpop.f32.mrb[0].mxu0
      %v2857 = vadd.f32 %v2375, %v2856
      %v2858 = vpop.f32.mrb[0].mxu0
      %v2859 = vadd.f32 %v2379, %v2858
      %v2860 = vpop.f32.mrb[0].mxu0
      %v2861 = vadd.f32 %v2375, %v2860
      %v2862 = vpop.f32.mrb[0].mxu0
      %v2863 = vadd.f32 %v2379, %v2862
      %2864 = vmatprep.mubr.bf16.mxu0 %v2269
      %2865 = vmatmul.mubr.bf16.gmra.mrb[0].mxu0 %v2268
      %v2866 = vpop.f32.mrb[0].mxu0
      %v2867 = vadd.f32 %v2375, %v2866
      %v2868 = vpop.f32.mrb[0].mxu0
      %v2869 = vadd.f32 %v2379, %v2868
      %v2870 = vpop.f32.mrb[0].mxu0
      %v2871 = vadd.f32 %v2375, %v2870
      %v2872 = vpop.f32.mrb[0].mxu0
      %v2873 = vadd.f32 %v2379, %v2872
      %2874 = vmatprep.mubr.bf16.mxu0 %v2271
      %2875 = vmatmul.mubr.bf16.gmra.mrb[0].mxu0 %v2270
      %v2876 = vpop.f32.mrb[0].mxu0
      %v2877 = vadd.f32 %v2375, %v2876
      %v2878 = vpop.f32.mrb[0].mxu0
      %v2879 = vadd.f32 %v2379, %v2878
      %v2880 = vpop.f32.mrb[0].mxu0
      %v2881 = vadd.f32 %v2375, %v2880
      %v2882 = vpop.f32.mrb[0].mxu0
      %v2883 = vadd.f32 %v2379, %v2882
      %2884 = vmatprep.mubr.bf16.mxu0 %v2273
      %2885 = vmatmul.mubr.bf16.gmra.mrb[0].mxu0 %v2272
      %v2886 = vpop.f32.mrb[0].mxu0
      %v2887 = vadd.f32 %v2375, %v2886
      %v2888 = vpop.f32.mrb[0].mxu0
      %v2889 = vadd.f32 %v2379, %v2888
      %v2890 = vpop.f32.mrb[0].mxu0
      %v2891 = vadd.f32 %v2375, %v2890
      %v2892 = vpop.f32.mrb[0].mxu0
      %v2893 = vadd.f32 %v2379, %v2892
      %2894 = vmatprep.mubr.bf16.mxu0 %v2275
      %2895 = vmatmul.mubr.bf16.gmra.mrb[0].mxu0 %v2274
      %v2896 = vpop.f32.mrb[0].mxu0
      %v2897 = vadd.f32 %v2375, %v2896
      %v2898 = vpop.f32.mrb[0].mxu0
      %v2899 = vadd.f32 %v2379, %v2898
      %v2900 = vpop.f32.mrb[0].mxu0
      %v2901 = vadd.f32 %v2375, %v2900
      %v2902 = vpop.f32.mrb[0].mxu0
      %v2903 = vadd.f32 %v2379, %v2902
      %2904 = vmatprep.mubr.bf16.mxu0 %v2277
      %2905 = vmatmul.mubr.bf16.gmra.mrb[0].mxu0 %v2276
      %v2906 = vpop.f32.mrb[0].mxu0
      %v2907 = vadd.f32 %v2375, %v2906
      %v2908 = vpop.f32.mrb[0].mxu0
      %v2909 = vadd.f32 %v2379, %v2908
      %v2910 = vpop.f32.mrb[0].mxu0
      %v2911 = vadd.f32 %v2375, %v2910
      %v2912 = vpop.f32.mrb[0].mxu0
      %v2913 = vadd.f32 %v2379, %v2912
      %2914 = vmatprep.mubr.bf16.mxu0 %v2279
      %2915 = vmatmul.mubr.bf16.gmra.mrb[0].mxu0 %v2278
      %v2916 = vpop.f32.mrb[0].mxu0
      %v2917 = vadd.f32 %v2375, %v2916
      %v2918 = vpop.f32.mrb[0].mxu0
      %v2919 = vadd.f32 %v2379, %v2918
      %v2920 = vpop.f32.mrb[0].mxu0
      %v2921 = vadd.f32 %v2375, %v2920
      %v2922 = vpop.f32.mrb[0].mxu0
      %v2923 = vadd.f32 %v2379, %v2922
      %2924 = vmatprep.mubr.bf16.mxu0 %v2281
      %2925 = vmatmul.mubr.bf16.gmra.mrb[0].mxu0 %v2280
      %v2926 = vpop.f32.mrb[0].mxu0
      %v2927 = vadd.f32 %v2375, %v2926
      %v2928 = vpop.f32.mrb[0].mxu0
      %v2929 = vadd.f32 %v2379, %v2928
      %v2930 = vpop.f32.mrb[0].mxu0
      %v2931 = vadd.f32 %v2375, %v2930
      %v2932 = vpop.f32.mrb[0].mxu0
      %v2933 = vadd.f32 %v2379, %v2932
      %2934 = vmatprep.mubr.bf16.mxu0 %v2283
      %2935 = vmatmul.mubr.bf16.gmra.mrb[0].mxu0 %v2282
      %v2936 = vpop.f32.mrb[0].mxu0
      %v2937 = vadd.f32 %v2375, %v2936
      %v2938 = vpop.f32.mrb[0].mxu0
      %v2939 = vadd.f32 %v2379, %v2938
      %v2940 = vpop.f32.mrb[0].mxu0
      %v2941 = vadd.f32 %v2375, %v2940
      %v2942 = vpop.f32.mrb[0].mxu0
      %v2943 = vadd.f32 %v2379, %v2942
      %2944 = vmatprep.mubr.bf16.mxu0 %v2285
      %2945 = vmatmul.mubr.bf16.gmra.mrb[0].mxu0 %v2284
      %v2946 = vpop.f32.mrb[0].mxu0
      %v2947 = vadd.f32 %v2375, %v2946
      %v2948 = vpop.f32.mrb[0].mxu0
      %v2949 = vadd.f32 %v2379, %v2948
      %v2950 = vpop.f32.mrb[0].mxu0
      %v2951 = vadd.f32 %v2375, %v2950
      %v2952 = vpop.f32.mrb[0].mxu0
      %v2953 = vadd.f32 %v2379, %v2952
      %2954 = vmatprep.mubr.bf16.mxu0 %v2287
      %2955 = vmatmul.mubr.bf16.gmra.mrb[0].mxu0 %v2286
      %v2956 = vpop.f32.mrb[0].mxu0
      %v2957 = vadd.f32 %v2375, %v2956
      %v2958 = vpop.f32.mrb[0].mxu0
      %v2959 = vadd.f32 %v2379, %v2958
      %v2960 = vpop.f32.mrb[0].mxu0
      %v2961 = vadd.f32 %v2375, %v2960
      %v2962 = vpop.f32.mrb[0].mxu0
      %v2963 = vadd.f32 %v2379, %v2962
      %2964 = vmatprep.mubr.bf16.mxu0 %v2289
      %2965 = vmatmul.mubr.bf16.gmra.mrb[0].mxu0 %v2288
      %v2966 = vpop.f32.mrb[0].mxu0
      %v2967 = vadd.f32 %v2375, %v2966
      %v2968 = vpop.f32.mrb[0].mxu0
      %v2969 = vadd.f32 %v2379, %v2968
      %v2970 = vpop.f32.mrb[0].mxu0
      %v2971 = vadd.f32 %v2375, %v2970
      %v2972 = vpop.f32.mrb[0].mxu0
      %v2973 = vadd.f32 %v2379, %v2972
      %2974 = vmatprep.mubr.bf16.mxu0 %v2291
      %2975 = vmatmul.mubr.bf16.gmra.mrb[0].mxu0 %v2290
      %v2976 = vpop.f32.mrb[0].mxu0
      %v2977 = vadd.f32 %v2375, %v2976
      %v2978 = vpop.f32.mrb[0].mxu0
      %v2979 = vadd.f32 %v2379, %v2978
      %v2980 = vpop.f32.mrb[0].mxu0
      %v2981 = vadd.f32 %v2375, %v2980
      %v2982 = vpop.f32.mrb[0].mxu0
      %v2983 = vadd.f32 %v2379, %v2982
      %2984 = vmatprep.mubr.bf16.mxu0 %v2293
      %2985 = vmatmul.mubr.bf16.gmra.mrb[0].mxu0 %v2292
      %v2986 = vpop.f32.mrb[0].mxu0
      %v2987 = vadd.f32 %v2375, %v2986
      %v2988 = vpop.f32.mrb[0].mxu0
      %v2989 = vadd.f32 %v2379, %v2988
      %v2990 = vpop.f32.mrb[0].mxu0
      %v2991 = vadd.f32 %v2375, %v2990
      %v2992 = vpop.f32.mrb[0].mxu0
      %v2993 = vadd.f32 %v2379, %v2992
      %2994 = vmatprep.mubr.bf16.mxu0 %v2295
      %2995 = vmatmul.mubr.bf16.gmra.mrb[0].mxu0 %v2294
      %v2996 = vpop.f32.mrb[0].mxu0
      %v2997 = vadd.f32 %v2375, %v2996
      %v2998 = vpop.f32.mrb[0].mxu0
      %v2999 = vadd.f32 %v2379, %v2998
      %v3000 = vpop.f32.mrb[0].mxu0
      %v3001 = vadd.f32 %v2375, %v3000
      %v3002 = vpop.f32.mrb[0].mxu0
      %v3003 = vadd.f32 %v2379, %v3002
      %3004 = vmatprep.mubr.bf16.mxu0 %v2297
      %3005 = vmatmul.mubr.bf16.gmra.mrb[0].mxu0 %v2296
      %v3006 = vpop.f32.mrb[0].mxu0
      %v3007 = vadd.f32 %v2375, %v3006
      %v3008 = vpop.f32.mrb[0].mxu0
      %v3009 = vadd.f32 %v2379, %v3008
      %v3010 = vpop.f32.mrb[0].mxu0
      %v3011 = vadd.f32 %v2375, %v3010
      %v3012 = vpop.f32.mrb[0].mxu0
      %v3013 = vadd.f32 %v2379, %v3012
      %3014 = vmatprep.mubr.bf16.mxu0 %v2299
      %3015 = vmatmul.mubr.bf16.gmra.mrb[0].mxu0 %v2298
      %v3016 = vpop.f32.mrb[0].mxu0
      %v3017 = vadd.f32 %v2375, %v3016
      %v3018 = vpop.f32.mrb[0].mxu0
      %v3019 = vadd.f32 %v2379, %v3018
      %v3020 = vpop.f32.mrb[0].mxu0
      %v3021 = vadd.f32 %v2375, %v3020
      %v3022 = vpop.f32.mrb[0].mxu0
      %v3023 = vadd.f32 %v2379, %v3022
      %3024 = vmatprep.mubr.bf16.mxu0 %v2301
      %3025 = vmatmul.mubr.bf16.gmra.mrb[0].mxu0 %v2300
      %v3026 = vpop.f32.mrb[0].mxu0
      %v3027 = vadd.f32 %v2375, %v3026
      %v3028 = vpop.f32.mrb[0].mxu0
      %v3029 = vadd.f32 %v2379, %v3028
      %v3030 = vpop.f32.mrb[0].mxu0
      %v3031 = vadd.f32 %v2375, %v3030
      %v3032 = vpop.f32.mrb[0].mxu0
      %v3033 = vadd.f32 %v2379, %v3032
      %3034 = vmatprep.mubr.bf16.mxu0 %v2303
      %3035 = vmatmul.mubr.bf16.gmra.mrb[0].mxu0 %v2302
      %v3036 = vpop.f32.mrb[0].mxu0
      %v3037 = vadd.f32 %v2375, %v3036
      %v3038 = vpop.f32.mrb[0].mxu0
      %v3039 = vadd.f32 %v2379, %v3038
      %v3040 = vpop.f32.mrb[0].mxu0
      %v3041 = vadd.f32 %v2375, %v3040
      %v3042 = vpop.f32.mrb[0].mxu0
      %v3043 = vadd.f32 %v2379, %v3042
      %3044 = vmatprep.mubr.bf16.mxu0 %v2305
      %3045 = vmatmul.mubr.bf16.gmra.mrb[0].mxu0 %v2304
      %v3046 = vpop.f32.mrb[0].mxu0
      %v3047 = vadd.f32 %v2375, %v3046
      %v3048 = vpop.f32.mrb[0].mxu0
      %v3049 = vadd.f32 %v2379, %v3048
      %v3050 = vpop.f32.mrb[0].mxu0
      %v3051 = vadd.f32 %v2375, %v3050
      %v3052 = vpop.f32.mrb[0].mxu0
      %v3053 = vadd.f32 %v2379, %v3052
      %3054 = vmatprep.mubr.bf16.mxu0 %v2307
      %3055 = vmatmul.mubr.bf16.gmra.mrb[0].mxu0 %v2306
      %v3056 = vpop.f32.mrb[0].mxu0
      %v3057 = vadd.f32 %v2375, %v3056
      %v3058 = vpop.f32.mrb[0].mxu0
      %v3059 = vadd.f32 %v2379, %v3058
      %v3060 = vpop.f32.mrb[0].mxu0
      %v3061 = vadd.f32 %v2375, %v3060
      %v3062 = vpop.f32.mrb[0].mxu0
      %v3063 = vadd.f32 %v2379, %v3062
      %3064 = vmatprep.mubr.bf16.mxu0 %v2309
      %3065 = vmatmul.mubr.bf16.gmra.mrb[0].mxu0 %v2308
      %v3066 = vpop.f32.mrb[0].mxu0
      %v3067 = vadd.f32 %v2375, %v3066
      %v3068 = vpop.f32.mrb[0].mxu0
      %v3069 = vadd.f32 %v2379, %v3068
      %v3070 = vpop.f32.mrb[0].mxu0
      %v3071 = vadd.f32 %v2375, %v3070
      %v3072 = vpop.f32.mrb[0].mxu0
      %v3073 = vadd.f32 %v2379, %v3072
      %3074 = vmatprep.mubr.bf16.mxu0 %v2311
      %3075 = vmatmul.mubr.bf16.gmra.mrb[0].mxu0 %v2310
      %v3076 = vpop.f32.mrb[0].mxu0
      %v3077 = vadd.f32 %v2375, %v3076
      %v3078 = vpop.f32.mrb[0].mxu0
      %v3079 = vadd.f32 %v2379, %v3078
      %v3080 = vpop.f32.mrb[0].mxu0
      %v3081 = vadd.f32 %v2375, %v3080
      %v3082 = vpop.f32.mrb[0].mxu0
      %v3083 = vadd.f32 %v2379, %v3082
      %3084 = vmatprep.mubr.bf16.mxu0 %v2313
      %3085 = vmatmul.mubr.bf16.gmra.mrb[0].mxu0 %v2312
      %v3086 = vpop.f32.mrb[0].mxu0
      %v3087 = vadd.f32 %v2375, %v3086
      %v3088 = vpop.f32.mrb[0].mxu0
      %v3089 = vadd.f32 %v2379, %v3088
      %v3090 = vpop.f32.mrb[0].mxu0
      %v3091 = vadd.f32 %v2375, %v3090
      %v3092 = vpop.f32.mrb[0].mxu0
      %v3093 = vadd.f32 %v2379, %v3092
      %3094 = vmatprep.mubr.bf16.mxu0 %v2315
      %3095 = vmatmul.mubr.bf16.gmra.mrb[0].mxu0 %v2314
      %v3096 = vpop.f32.mrb[0].mxu0
      %v3097 = vadd.f32 %v2375, %v3096
      %v3098 = vpop.f32.mrb[0].mxu0
      %v3099 = vadd.f32 %v2379, %v3098
      %v3100 = vpop.f32.mrb[0].mxu0
      %v3101 = vadd.f32 %v2375, %v3100
      %v3102 = vpop.f32.mrb[0].mxu0
      %v3103 = vadd.f32 %v2379, %v3102
      %3104 = vmatprep.mubr.bf16.mxu0 %v2317
      %3105 = vmatmul.mubr.bf16.gmra.mrb[0].mxu0 %v2316
      %v3106 = vpop.f32.mrb[0].mxu0
      %v3107 = vadd.f32 %v2375, %v3106
      %v3108 = vpop.f32.mrb[0].mxu0
      %v3109 = vadd.f32 %v2379, %v3108
      %v3110 = vpop.f32.mrb[0].mxu0
      %v3111 = vadd.f32 %v2375, %v3110
      %v3112 = vpop.f32.mrb[0].mxu0
      %v3113 = vadd.f32 %v2379, %v3112
      %3114 = vmatprep.mubr.bf16.mxu0 %v2319
      %3115 = vmatmul.mubr.bf16.gmra.mrb[0].mxu0 %v2318
      %v3116 = vpop.f32.mrb[0].mxu0
      %v3117 = vadd.f32 %v2375, %v3116
      %v3118 = vpop.f32.mrb[0].mxu0
      %v3119 = vadd.f32 %v2379, %v3118
      %v3120 = vpop.f32.mrb[0].mxu0
      %v3121 = vadd.f32 %v2375, %v3120
      %v3122 = vpop.f32.mrb[0].mxu0
      %v3123 = vadd.f32 %v2379, %v3122
      %3124 = vmatprep.mubr.bf16.mxu0 %v2321
      %3125 = vmatmul.mubr.bf16.gmra.mrb[0].mxu0 %v2320
      %v3126 = vpop.f32.mrb[0].mxu0
      %v3127 = vadd.f32 %v2375, %v3126
      %v3128 = vpop.f32.mrb[0].mxu0
      %v3129 = vadd.f32 %v2379, %v3128
      %v3130 = vpop.f32.mrb[0].mxu0
      %v3131 = vadd.f32 %v2375, %v3130
      %v3132 = vpop.f32.mrb[0].mxu0
      %v3133 = vadd.f32 %v2379, %v3132
      %3134 = vmatprep.mubr.bf16.mxu0 %v2323
      %3135 = vmatmul.mubr.bf16.gmra.mrb[0].mxu0 %v2322
      %v3136 = vpop.f32.mrb[0].mxu0
      %v3137 = vadd.f32 %v2375, %v3136
      %v3138 = vpop.f32.mrb[0].mxu0
      %v3139 = vadd.f32 %v2379, %v3138
      %v3140 = vpop.f32.mrb[0].mxu0
      %v3141 = vadd.f32 %v2375, %v3140
      %v3142 = vpop.f32.mrb[0].mxu0
      %v3143 = vadd.f32 %v2379, %v3142
      %3144 = vmatprep.mubr.bf16.mxu0 %v2325
      %3145 = vmatmul.mubr.bf16.gmra.mrb[0].mxu0 %v2324
      %v3146 = vpop.f32.mrb[0].mxu0
      %v3147 = vadd.f32 %v2375, %v3146
      %v3148 = vpop.f32.mrb[0].mxu0
      %v3149 = vadd.f32 %v2379, %v3148
      %v3150 = vpop.f32.mrb[0].mxu0
      %v3151 = vadd.f32 %v2375, %v3150
      %v3152 = vpop.f32.mrb[0].mxu0
      %v3153 = vadd.f32 %v2379, %v3152
      %3154 = vmatprep.mubr.bf16.mxu0 %v2327
      %3155 = vmatmul.mubr.bf16.gmra.mrb[0].mxu0 %v2326
      %v3156 = vpop.f32.mrb[0].mxu0
      %v3157 = vadd.f32 %v2375, %v3156
      %v3158 = vpop.f32.mrb[0].mxu0
      %v3159 = vadd.f32 %v2379, %v3158
      %v3160 = vpop.f32.mrb[0].mxu0
      %v3161 = vadd.f32 %v2375, %v3160
      %v3162 = vpop.f32.mrb[0].mxu0
      %v3163 = vadd.f32 %v2379, %v3162
      %3164 = vmatprep.mubr.bf16.mxu0 %v2329
      %3165 = vmatmul.mubr.bf16.gmra.mrb[0].mxu0 %v2328
      %v3166 = vpop.f32.mrb[0].mxu0
      %v3167 = vadd.f32 %v2375, %v3166
      %v3168 = vpop.f32.mrb[0].mxu0
      %v3169 = vadd.f32 %v2379, %v3168
      %v3170 = vpop.f32.mrb[0].mxu0
      %v3171 = vadd.f32 %v2375, %v3170
      %v3172 = vpop.f32.mrb[0].mxu0
      %v3173 = vadd.f32 %v2379, %v3172
      %3174 = vmatprep.mubr.bf16.mxu0 %v2331
      %3175 = vmatmul.mubr.bf16.gmra.mrb[0].mxu0 %v2330
      %v3176 = vpop.f32.mrb[0].mxu0
      %v3177 = vadd.f32 %v2375, %v3176
      %v3178 = vpop.f32.mrb[0].mxu0
      %v3179 = vadd.f32 %v2379, %v3178
      %v3180 = vpop.f32.mrb[0].mxu0
      %v3181 = vadd.f32 %v2375, %v3180
      %v3182 = vpop.f32.mrb[0].mxu0
      %v3183 = vadd.f32 %v2379, %v3182
      %3184 = vmatprep.mubr.bf16.mxu0 %v2333
      %3185 = vmatmul.mubr.bf16.gmra.mrb[0].mxu0 %v2332
      %v3186 = vpop.f32.mrb[0].mxu0
      %v3187 = vadd.f32 %v2375, %v3186
      %v3188 = vpop.f32.mrb[0].mxu0
      %v3189 = vadd.f32 %v2379, %v3188
      %v3190 = vpop.f32.mrb[0].mxu0
      %v3191 = vadd.f32 %v2375, %v3190
      %v3192 = vpop.f32.mrb[0].mxu0
      %v3193 = vadd.f32 %v2379, %v3192
      %3194 = vmatprep.mubr.bf16.mxu0 %v2335
      %3195 = vmatmul.mubr.bf16.gmra.mrb[0].mxu0 %v2334
      %v3196 = vpop.f32.mrb[0].mxu0
      %v3197 = vadd.f32 %v2375, %v3196
      %v3198 = vpop.f32.mrb[0].mxu0
      %v3199 = vadd.f32 %v2379, %v3198
      %v3200 = vpop.f32.mrb[0].mxu0
      %v3201 = vadd.f32 %v2375, %v3200
      %v3202 = vpop.f32.mrb[0].mxu0
      %v3203 = vadd.f32 %v2379, %v3202
      %3204 = vmatprep.mubr.bf16.mxu0 %v2337
      %3205 = vmatmul.mubr.bf16.gmra.mrb[0].mxu0 %v2336
      %v3206 = vpop.f32.mrb[0].mxu0
      %v3207 = vadd.f32 %v2375, %v3206
      %v3208 = vpop.f32.mrb[0].mxu0
      %v3209 = vadd.f32 %v2379, %v3208
      %v3210 = vpop.f32.mrb[0].mxu0
      %v3211 = vadd.f32 %v2375, %v3210
      %v3212 = vpop.f32.mrb[0].mxu0
      %v3213 = vadd.f32 %v2379, %v3212
      %3214 = vdwg.mxu0
      %v3215 = vmax.f32 %v2577, 0.0
      %v3216 = vmax.f32 %v2579, 0.0
      %v3217 = vmax.f32 %v2581, 0.0
      %v3218 = vmax.f32 %v2583, 0.0
      %v3219 = vmax.f32 %v2587, 0.0
      %v3220 = vmax.f32 %v2589, 0.0
      %v3221 = vmax.f32 %v2591, 0.0
      %v3222 = vmax.f32 %v2593, 0.0
      %v3223 = vmax.f32 %v2597, 0.0
      %v3224 = vmax.f32 %v2599, 0.0
      %v3225 = vmax.f32 %v2601, 0.0
      %v3226 = vmax.f32 %v2603, 0.0
      %v3227 = vmax.f32 %v2607, 0.0
      %v3228 = vmax.f32 %v2609, 0.0
      %v3229 = vmax.f32 %v2611, 0.0
      %v3230 = vmax.f32 %v2613, 0.0
      %v3231 = vmax.f32 %v2617, 0.0
      %v3232 = vmax.f32 %v2619, 0.0
      %v3233 = vmax.f32 %v2621, 0.0
      %v3234 = vmax.f32 %v2623, 0.0
      %v3235 = vmax.f32 %v2627, 0.0
      %v3236 = vmax.f32 %v2629, 0.0
      %v3237 = vmax.f32 %v2631, 0.0
      %v3238 = vmax.f32 %v2633, 0.0
      %v3239 = vmax.f32 %v2637, 0.0
      %v3240 = vmax.f32 %v2639, 0.0
      %v3241 = vmax.f32 %v2641, 0.0
      %v3242 = vmax.f32 %v2643, 0.0
      %v3243 = vmax.f32 %v2647, 0.0
      %v3244 = vmax.f32 %v2649, 0.0
      %v3245 = vmax.f32 %v2651, 0.0
      %v3246 = vmax.f32 %v2653, 0.0
      %v3247 = vmax.f32 %v2657, 0.0
      %v3248 = vmax.f32 %v2659, 0.0
      %v3249 = vmax.f32 %v2661, 0.0
      %v3250 = vmax.f32 %v2663, 0.0
      %v3251 = vmax.f32 %v2667, 0.0
      %v3252 = vmax.f32 %v2669, 0.0
      %v3253 = vmax.f32 %v2671, 0.0
      %v3254 = vmax.f32 %v2673, 0.0
      %v3255 = vmax.f32 %v2677, 0.0
      %v3256 = vmax.f32 %v2679, 0.0
      %v3257 = vmax.f32 %v2681, 0.0
      %v3258 = vmax.f32 %v2683, 0.0
      %v3259 = vmax.f32 %v2687, 0.0
      %v3260 = vmax.f32 %v2689, 0.0
      %v3261 = vmax.f32 %v2691, 0.0
      %v3262 = vmax.f32 %v2693, 0.0
      %v3263 = vmax.f32 %v2697, 0.0
      %v3264 = vmax.f32 %v2699, 0.0
      %v3265 = vmax.f32 %v2701, 0.0
      %v3266 = vmax.f32 %v2703, 0.0
      %v3267 = vmax.f32 %v2707, 0.0
      %v3268 = vmax.f32 %v2709, 0.0
      %v3269 = vmax.f32 %v2711, 0.0
      %v3270 = vmax.f32 %v2713, 0.0
      %v3271 = vmax.f32 %v2717, 0.0
      %v3272 = vmax.f32 %v2719, 0.0
      %v3273 = vmax.f32 %v2721, 0.0
      %v3274 = vmax.f32 %v2723, 0.0
      %v3275 = vmax.f32 %v2727, 0.0
      %v3276 = vmax.f32 %v2729, 0.0
      %v3277 = vmax.f32 %v2731, 0.0
      %v3278 = vmax.f32 %v2733, 0.0
      %v3279 = vmax.f32 %v2737, 0.0
      %v3280 = vmax.f32 %v2739, 0.0
      %v3281 = vmax.f32 %v2741, 0.0
      %v3282 = vmax.f32 %v2743, 0.0
      %v3283 = vmax.f32 %v2747, 0.0
      %v3284 = vmax.f32 %v2749, 0.0
      %v3285 = vmax.f32 %v2751, 0.0
      %v3286 = vmax.f32 %v2753, 0.0
      %v3287 = vmax.f32 %v2757, 0.0
      %v3288 = vmax.f32 %v2759, 0.0
      %v3289 = vmax.f32 %v2761, 0.0
      %v3290 = vmax.f32 %v2763, 0.0
      %v3291 = vmax.f32 %v2767, 0.0
      %v3292 = vmax.f32 %v2769, 0.0
      %v3293 = vmax.f32 %v2771, 0.0
      %v3294 = vmax.f32 %v2773, 0.0
      %v3295 = vmax.f32 %v2777, 0.0
      %v3296 = vmax.f32 %v2779, 0.0
      %v3297 = vmax.f32 %v2781, 0.0
      %v3298 = vmax.f32 %v2783, 0.0
      %v3299 = vmax.f32 %v2787, 0.0
      %v3300 = vmax.f32 %v2789, 0.0
      %v3301 = vmax.f32 %v2791, 0.0
      %v3302 = vmax.f32 %v2793, 0.0
      %v3303 = vmax.f32 %v2797, 0.0
      %v3304 = vmax.f32 %v2799, 0.0
      %v3305 = vmax.f32 %v2801, 0.0
      %v3306 = vmax.f32 %v2803, 0.0
      %v3307 = vmax.f32 %v2807, 0.0
      %v3308 = vmax.f32 %v2809, 0.0
      %v3309 = vmax.f32 %v2811, 0.0
      %v3310 = vmax.f32 %v2813, 0.0
      %v3311 = vmax.f32 %v2817, 0.0
      %v3312 = vmax.f32 %v2819, 0.0
      %v3313 = vmax.f32 %v2821, 0.0
      %v3314 = vmax.f32 %v2823, 0.0
      %v3315 = vmax.f32 %v2827, 0.0
      %v3316 = vmax.f32 %v2829, 0.0
      %v3317 = vmax.f32 %v2831, 0.0
      %v3318 = vmax.f32 %v2833, 0.0
      %v3319 = vmax.f32 %v2837, 0.0
      %v3320 = vmax.f32 %v2839, 0.0
      %v3321 = vmax.f32 %v2841, 0.0
      %v3322 = vmax.f32 %v2843, 0.0
      %v3323 = vmax.f32 %v2847, 0.0
      %v3324 = vmax.f32 %v2849, 0.0
      %v3325 = vmax.f32 %v2851, 0.0
      %v3326 = vmax.f32 %v2853, 0.0
      %v3327 = vmax.f32 %v2857, 0.0
      %v3328 = vmax.f32 %v2859, 0.0
      %v3329 = vmax.f32 %v2861, 0.0
      %v3330 = vmax.f32 %v2863, 0.0
      %v3331 = vmax.f32 %v2867, 0.0
      %v3332 = vmax.f32 %v2869, 0.0
      %v3333 = vmax.f32 %v2871, 0.0
      %v3334 = vmax.f32 %v2873, 0.0
      %v3335 = vmax.f32 %v2877, 0.0
      %v3336 = vmax.f32 %v2879, 0.0
      %v3337 = vmax.f32 %v2881, 0.0
      %v3338 = vmax.f32 %v2883, 0.0
      %v3339 = vmax.f32 %v2887, 0.0
      %v3340 = vmax.f32 %v2889, 0.0
      %v3341 = vmax.f32 %v2891, 0.0
      %v3342 = vmax.f32 %v2893, 0.0
      %v3343 = vmax.f32 %v2897, 0.0
      %v3344 = vmax.f32 %v2899, 0.0
      %v3345 = vmax.f32 %v2901, 0.0
      %v3346 = vmax.f32 %v2903, 0.0
      %v3347 = vmax.f32 %v2907, 0.0
      %v3348 = vmax.f32 %v2909, 0.0
      %v3349 = vmax.f32 %v2911, 0.0
      %v3350 = vmax.f32 %v2913, 0.0
      %v3351 = vmax.f32 %v2917, 0.0
      %v3352 = vmax.f32 %v2919, 0.0
      %v3353 = vmax.f32 %v2921, 0.0
      %v3354 = vmax.f32 %v2923, 0.0
      %v3355 = vmax.f32 %v2927, 0.0
      %v3356 = vmax.f32 %v2929, 0.0
      %v3357 = vmax.f32 %v2931, 0.0
      %v3358 = vmax.f32 %v2933, 0.0
      %v3359 = vmax.f32 %v2937, 0.0
      %v3360 = vmax.f32 %v2939, 0.0
      %v3361 = vmax.f32 %v2941, 0.0
      %v3362 = vmax.f32 %v2943, 0.0
      %v3363 = vmax.f32 %v2947, 0.0
      %v3364 = vmax.f32 %v2949, 0.0
      %v3365 = vmax.f32 %v2951, 0.0
      %v3366 = vmax.f32 %v2953, 0.0
      %v3367 = vmax.f32 %v2957, 0.0
      %v3368 = vmax.f32 %v2959, 0.0
      %v3369 = vmax.f32 %v2961, 0.0
      %v3370 = vmax.f32 %v2963, 0.0
      %v3371 = vmax.f32 %v2967, 0.0
      %v3372 = vmax.f32 %v2969, 0.0
      %v3373 = vmax.f32 %v2971, 0.0
      %v3374 = vmax.f32 %v2973, 0.0
      %v3375 = vmax.f32 %v2977, 0.0
      %v3376 = vmax.f32 %v2979, 0.0
      %v3377 = vmax.f32 %v2981, 0.0
      %v3378 = vmax.f32 %v2983, 0.0
      %v3379 = vmax.f32 %v2987, 0.0
      %v3380 = vmax.f32 %v2989, 0.0
      %v3381 = vmax.f32 %v2991, 0.0
      %v3382 = vmax.f32 %v2993, 0.0
      %v3383 = vmax.f32 %v2997, 0.0
      %v3384 = vmax.f32 %v2999, 0.0
      %v3385 = vmax.f32 %v3001, 0.0
      %v3386 = vmax.f32 %v3003, 0.0
      %v3387 = vmax.f32 %v3007, 0.0
      %v3388 = vmax.f32 %v3009, 0.0
      %v3389 = vmax.f32 %v3011, 0.0
      %v3390 = vmax.f32 %v3013, 0.0
      %v3391 = vmax.f32 %v3017, 0.0
      %v3392 = vmax.f32 %v3019, 0.0
      %v3393 = vmax.f32 %v3021, 0.0
      %v3394 = vmax.f32 %v3023, 0.0
      %v3395 = vmax.f32 %v3027, 0.0
      %v3396 = vmax.f32 %v3029, 0.0
      %v3397 = vmax.f32 %v3031, 0.0
      %v3398 = vmax.f32 %v3033, 0.0
      %v3399 = vmax.f32 %v3037, 0.0
      %v3400 = vmax.f32 %v3039, 0.0
      %v3401 = vmax.f32 %v3041, 0.0
      %v3402 = vmax.f32 %v3043, 0.0
      %v3403 = vmax.f32 %v3047, 0.0
      %v3404 = vmax.f32 %v3049, 0.0
      %v3405 = vmax.f32 %v3051, 0.0
      %v3406 = vmax.f32 %v3053, 0.0
      %v3407 = vmax.f32 %v3057, 0.0
      %v3408 = vmax.f32 %v3059, 0.0
      %v3409 = vmax.f32 %v3061, 0.0
      %v3410 = vmax.f32 %v3063, 0.0
      %v3411 = vmax.f32 %v3067, 0.0
      %v3412 = vmax.f32 %v3069, 0.0
      %v3413 = vmax.f32 %v3071, 0.0
      %v3414 = vmax.f32 %v3073, 0.0
      %v3415 = vmax.f32 %v3077, 0.0
      %v3416 = vmax.f32 %v3079, 0.0
      %v3417 = vmax.f32 %v3081, 0.0
      %v3418 = vmax.f32 %v3083, 0.0
      %v3419 = vmax.f32 %v3087, 0.0
      %v3420 = vmax.f32 %v3089, 0.0
      %v3421 = vmax.f32 %v3091, 0.0
      %v3422 = vmax.f32 %v3093, 0.0
      %v3423 = vmax.f32 %v3097, 0.0
      %v3424 = vmax.f32 %v3099, 0.0
      %v3425 = vmax.f32 %v3101, 0.0
      %v3426 = vmax.f32 %v3103, 0.0
      %v3427 = vmax.f32 %v3107, 0.0
      %v3428 = vmax.f32 %v3109, 0.0
      %v3429 = vmax.f32 %v3111, 0.0
      %v3430 = vmax.f32 %v3113, 0.0
      %v3431 = vmax.f32 %v3117, 0.0
      %v3432 = vmax.f32 %v3119, 0.0
      %v3433 = vmax.f32 %v3121, 0.0
      %v3434 = vmax.f32 %v3123, 0.0
      %v3435 = vmax.f32 %v3127, 0.0
      %v3436 = vmax.f32 %v3129, 0.0
      %v3437 = vmax.f32 %v3131, 0.0
      %v3438 = vmax.f32 %v3133, 0.0
      %v3439 = vmax.f32 %v3137, 0.0
      %v3440 = vmax.f32 %v3139, 0.0
      %v3441 = vmax.f32 %v3141, 0.0
      %v3442 = vmax.f32 %v3143, 0.0
      %v3443 = vmax.f32 %v3147, 0.0
      %v3444 = vmax.f32 %v3149, 0.0
      %v3445 = vmax.f32 %v3151, 0.0
      %v3446 = vmax.f32 %v3153, 0.0
      %v3447 = vmax.f32 %v3157, 0.0
      %v3448 = vmax.f32 %v3159, 0.0
      %v3449 = vmax.f32 %v3161, 0.0
      %v3450 = vmax.f32 %v3163, 0.0
      %v3451 = vmax.f32 %v3167, 0.0
      %v3452 = vmax.f32 %v3169, 0.0
      %v3453 = vmax.f32 %v3171, 0.0
      %v3454 = vmax.f32 %v3173, 0.0
      %v3455 = vmax.f32 %v3177, 0.0
      %v3456 = vmax.f32 %v3179, 0.0
      %v3457 = vmax.f32 %v3181, 0.0
      %v3458 = vmax.f32 %v3183, 0.0
      %v3459 = vmax.f32 %v3187, 0.0
      %v3460 = vmax.f32 %v3189, 0.0
      %v3461 = vmax.f32 %v3191, 0.0
      %v3462 = vmax.f32 %v3193, 0.0
      %v3463 = vmax.f32 %v3197, 0.0
      %v3464 = vmax.f32 %v3199, 0.0
      %v3465 = vmax.f32 %v3201, 0.0
      %v3466 = vmax.f32 %v3203, 0.0
      %v3467 = vmax.f32 %v3207, 0.0
      %v3468 = vmax.f32 %v3209, 0.0
      %v3469 = vmax.f32 %v3211, 0.0
      %v3470 = vmax.f32 %v3213, 0.0
      %v3471 = vpack.c.bf16 %v3217, %v3215
      %v3472 = vpack.c.bf16 %v3218, %v3216
      %v3473 = vpack.c.bf16 %v3221, %v3219
      %v3474 = vpack.c.bf16 %v3222, %v3220
      %v3475 = vpack.c.bf16 %v3225, %v3223
      %v3476 = vpack.c.bf16 %v3226, %v3224
      %v3477 = vpack.c.bf16 %v3229, %v3227
      %v3478 = vpack.c.bf16 %v3230, %v3228
      %v3479 = vpack.c.bf16 %v3233, %v3231
      %v3480 = vpack.c.bf16 %v3234, %v3232
      %v3481 = vpack.c.bf16 %v3237, %v3235
      %v3482 = vpack.c.bf16 %v3238, %v3236
      %v3483 = vpack.c.bf16 %v3241, %v3239
      %v3484 = vpack.c.bf16 %v3242, %v3240
      %v3485 = vpack.c.bf16 %v3245, %v3243
      %v3486 = vpack.c.bf16 %v3246, %v3244
      %v3487 = vpack.c.bf16 %v3249, %v3247
      %v3488 = vpack.c.bf16 %v3250, %v3248
      %v3489 = vpack.c.bf16 %v3253, %v3251
      %v3490 = vpack.c.bf16 %v3254, %v3252
      %v3491 = vpack.c.bf16 %v3257, %v3255
      %v3492 = vpack.c.bf16 %v3258, %v3256
      %v3493 = vpack.c.bf16 %v3261, %v3259
      %v3494 = vpack.c.bf16 %v3262, %v3260
      %v3495 = vpack.c.bf16 %v3265, %v3263
      %v3496 = vpack.c.bf16 %v3266, %v3264
      %v3497 = vpack.c.bf16 %v3269, %v3267
      %v3498 = vpack.c.bf16 %v3270, %v3268
      %v3499 = vpack.c.bf16 %v3273, %v3271
      %v3500 = vpack.c.bf16 %v3274, %v3272
      %v3501 = vpack.c.bf16 %v3277, %v3275
      %v3502 = vpack.c.bf16 %v3278, %v3276
      %v3503 = vpack.c.bf16 %v3281, %v3279
      %v3504 = vpack.c.bf16 %v3282, %v3280
      %v3505 = vpack.c.bf16 %v3285, %v3283
      %v3506 = vpack.c.bf16 %v3286, %v3284
      %v3507 = vpack.c.bf16 %v3289, %v3287
      %v3508 = vpack.c.bf16 %v3290, %v3288
      %v3509 = vpack.c.bf16 %v3293, %v3291
      %v3510 = vpack.c.bf16 %v3294, %v3292
      %v3511 = vpack.c.bf16 %v3297, %v3295
      %v3512 = vpack.c.bf16 %v3298, %v3296
      %v3513 = vpack.c.bf16 %v3301, %v3299
      %v3514 = vpack.c.bf16 %v3302, %v3300
      %v3515 = vpack.c.bf16 %v3305, %v3303
      %v3516 = vpack.c.bf16 %v3306, %v3304
      %v3517 = vpack.c.bf16 %v3309, %v3307
      %v3518 = vpack.c.bf16 %v3310, %v3308
      %v3519 = vpack.c.bf16 %v3313, %v3311
      %v3520 = vpack.c.bf16 %v3314, %v3312
      %v3521 = vpack.c.bf16 %v3317, %v3315
      %v3522 = vpack.c.bf16 %v3318, %v3316
      %v3523 = vpack.c.bf16 %v3321, %v3319
      %v3524 = vpack.c.bf16 %v3322, %v3320
      %v3525 = vpack.c.bf16 %v3325, %v3323
      %v3526 = vpack.c.bf16 %v3326, %v3324
      %v3527 = vpack.c.bf16 %v3329, %v3327
      %v3528 = vpack.c.bf16 %v3330, %v3328
      %v3529 = vpack.c.bf16 %v3333, %v3331
      %v3530 = vpack.c.bf16 %v3334, %v3332
      %v3531 = vpack.c.bf16 %v3337, %v3335
      %v3532 = vpack.c.bf16 %v3338, %v3336
      %v3533 = vpack.c.bf16 %v3341, %v3339
      %v3534 = vpack.c.bf16 %v3342, %v3340
      %v3535 = vpack.c.bf16 %v3345, %v3343
      %v3536 = vpack.c.bf16 %v3346, %v3344
      %v3537 = vpack.c.bf16 %v3349, %v3347
      %v3538 = vpack.c.bf16 %v3350, %v3348
      %v3539 = vpack.c.bf16 %v3353, %v3351
      %v3540 = vpack.c.bf16 %v3354, %v3352
      %v3541 = vpack.c.bf16 %v3357, %v3355
      %v3542 = vpack.c.bf16 %v3358, %v3356
      %v3543 = vpack.c.bf16 %v3361, %v3359
      %v3544 = vpack.c.bf16 %v3362, %v3360
      %v3545 = vpack.c.bf16 %v3365, %v3363
      %v3546 = vpack.c.bf16 %v3366, %v3364
      %v3547 = vpack.c.bf16 %v3369, %v3367
      %v3548 = vpack.c.bf16 %v3370, %v3368
      %v3549 = vpack.c.bf16 %v3373, %v3371
      %v3550 = vpack.c.bf16 %v3374, %v3372
      %v3551 = vpack.c.bf16 %v3377, %v3375
      %v3552 = vpack.c.bf16 %v3378, %v3376
      %v3553 = vpack.c.bf16 %v3381, %v3379
      %v3554 = vpack.c.bf16 %v3382, %v3380
      %v3555 = vpack.c.bf16 %v3385, %v3383
      %v3556 = vpack.c.bf16 %v3386, %v3384
      %v3557 = vpack.c.bf16 %v3389, %v3387
      %v3558 = vpack.c.bf16 %v3390, %v3388
      %v3559 = vpack.c.bf16 %v3393, %v3391
      %v3560 = vpack.c.bf16 %v3394, %v3392
      %v3561 = vpack.c.bf16 %v3397, %v3395
      %v3562 = vpack.c.bf16 %v3398, %v3396
      %v3563 = vpack.c.bf16 %v3401, %v3399
      %v3564 = vpack.c.bf16 %v3402, %v3400
      %v3565 = vpack.c.bf16 %v3405, %v3403
      %v3566 = vpack.c.bf16 %v3406, %v3404
      %v3567 = vpack.c.bf16 %v3409, %v3407
      %v3568 = vpack.c.bf16 %v3410, %v3408
      %v3569 = vpack.c.bf16 %v3413, %v3411
      %v3570 = vpack.c.bf16 %v3414, %v3412
      %v3571 = vpack.c.bf16 %v3417, %v3415
      %v3572 = vpack.c.bf16 %v3418, %v3416
      %v3573 = vpack.c.bf16 %v3421, %v3419
      %v3574 = vpack.c.bf16 %v3422, %v3420
      %v3575 = vpack.c.bf16 %v3425, %v3423
      %v3576 = vpack.c.bf16 %v3426, %v3424
      %v3577 = vpack.c.bf16 %v3429, %v3427
      %v3578 = vpack.c.bf16 %v3430, %v3428
      %v3579 = vpack.c.bf16 %v3433, %v3431
      %v3580 = vpack.c.bf16 %v3434, %v3432
      %v3581 = vpack.c.bf16 %v3437, %v3435
      %v3582 = vpack.c.bf16 %v3438, %v3436
      %v3583 = vpack.c.bf16 %v3441, %v3439
      %v3584 = vpack.c.bf16 %v3442, %v3440
      %v3585 = vpack.c.bf16 %v3445, %v3443
      %v3586 = vpack.c.bf16 %v3446, %v3444
      %v3587 = vpack.c.bf16 %v3449, %v3447
      %v3588 = vpack.c.bf16 %v3450, %v3448
      %v3589 = vpack.c.bf16 %v3453, %v3451
      %v3590 = vpack.c.bf16 %v3454, %v3452
      %v3591 = vpack.c.bf16 %v3457, %v3455
      %v3592 = vpack.c.bf16 %v3458, %v3456
      %v3593 = vpack.c.bf16 %v3461, %v3459
      %v3594 = vpack.c.bf16 %v3462, %v3460
      %v3595 = vpack.c.bf16 %v3465, %v3463
      %v3596 = vpack.c.bf16 %v3466, %v3464
      %v3597 = vpack.c.bf16 %v3469, %v3467
      %v3598 = vpack.c.bf16 %v3470, %v3468
      %v3599 = vld [vmem:[%s5] sm:$0xff]
      %v3600 = vld [vmem:[%s5 + $0x8] sm:$0xff]
      %v3601 = vld [vmem:[%s5 + $0x10] sm:$0xff]
      %v3602 = vld [vmem:[%s5 + $0x18] sm:$0xff]
      %v3603 = vld [vmem:[%s5 + $0x20] sm:$0xff]
      %v3604 = vld [vmem:[%s5 + $0x28] sm:$0xff]
      %v3605 = vld [vmem:[%s5 + $0x30] sm:$0xff]
      %v3606 = vld [vmem:[%s5 + $0x38] sm:$0xff]
      %v3607 = vld [vmem:[%s5 + $0x40] sm:$0xff]
      %v3608 = vld [vmem:[%s5 + $0x48] sm:$0xff]
      %v3609 = vld [vmem:[%s5 + $0x50] sm:$0xff]
      %v3610 = vld [vmem:[%s5 + $0x58] sm:$0xff]
      %v3611 = vld [vmem:[%s5 + $0x60] sm:$0xff]
      %v3612 = vld [vmem:[%s5 + $0x68] sm:$0xff]
      %v3613 = vld [vmem:[%s5 + $0x70] sm:$0xff]
      %v3614 = vld [vmem:[%s5 + $0x78] sm:$0xff]
      %v3615 = vld [vmem:[%s5 + $0x80] sm:$0xff]
      %v3616 = vld [vmem:[%s5 + $0x88] sm:$0xff]
      %v3617 = vld [vmem:[%s5 + $0x90] sm:$0xff]
      %v3618 = vld [vmem:[%s5 + $0x98] sm:$0xff]
      %v3619 = vld [vmem:[%s5 + $0xa0] sm:$0xff]
      %v3620 = vld [vmem:[%s5 + $0xa8] sm:$0xff]
      %v3621 = vld [vmem:[%s5 + $0xb0] sm:$0xff]
      %v3622 = vld [vmem:[%s5 + $0xb8] sm:$0xff]
      %v3623 = vld [vmem:[%s5 + $0xc0] sm:$0xff]
      %v3624 = vld [vmem:[%s5 + $0xc8] sm:$0xff]
      %v3625 = vld [vmem:[%s5 + $0xd0] sm:$0xff]
      %v3626 = vld [vmem:[%s5 + $0xd8] sm:$0xff]
      %v3627 = vld [vmem:[%s5 + $0xe0] sm:$0xff]
      %v3628 = vld [vmem:[%s5 + $0xe8] sm:$0xff]
      %v3629 = vld [vmem:[%s5 + $0xf0] sm:$0xff]
      %v3630 = vld [vmem:[%s5 + $0xf8] sm:$0xff]
      %v3631 = vld [vmem:[%s6] sm:$0x3]
      %v3633 = vlaneseq
      %v3634 = vshrl.u32 %v3633, 7
      %v3635 = vsub.s32 0, %v3634
      %v3636 = vrot.slane %v3631, %v3635
      %v3637 = vlaneseq
      %v3638 = vshrl.u32 %v3637, 7
      %v3639 = vsub.s32 1, %v3638
      %v3640 = vrot.slane %v3631, %v3639
      %v3675 = vunpack.c.l.b16 %v3599
      %v3676 = vunpack.c.h.b16 %v3599
      %v3677 = vunpack.c.l.b16 %v3600
      %v3678 = vunpack.c.h.b16 %v3600
      %v3679 = vunpack.c.l.b16 %v3601
      %v3680 = vunpack.c.h.b16 %v3601
      %v3681 = vunpack.c.l.b16 %v3602
      %v3682 = vunpack.c.h.b16 %v3602
      %v3683 = vunpack.c.l.b16 %v3603
      %v3684 = vunpack.c.h.b16 %v3603
      %v3685 = vunpack.c.l.b16 %v3604
      %v3686 = vunpack.c.h.b16 %v3604
      %v3687 = vunpack.c.l.b16 %v3605
      %v3688 = vunpack.c.h.b16 %v3605
      %v3689 = vunpack.c.l.b16 %v3606
      %v3690 = vunpack.c.h.b16 %v3606
      %v3691 = vunpack.c.l.b16 %v3607
      %v3692 = vunpack.c.h.b16 %v3607
      %v3693 = vunpack.c.l.b16 %v3608
      %v3694 = vunpack.c.h.b16 %v3608
      %v3695 = vunpack.c.l.b16 %v3609
      %v3696 = vunpack.c.h.b16 %v3609
      %v3697 = vunpack.c.l.b16 %v3610
      %v3698 = vunpack.c.h.b16 %v3610
      %v3699 = vunpack.c.l.b16 %v3611
      %v3700 = vunpack.c.h.b16 %v3611
      %v3701 = vunpack.c.l.b16 %v3612
      %v3702 = vunpack.c.h.b16 %v3612
      %v3703 = vunpack.c.l.b16 %v3613
      %v3704 = vunpack.c.h.b16 %v3613
      %v3705 = vunpack.c.l.b16 %v3614
      %v3706 = vunpack.c.h.b16 %v3614
      %v3707 = vunpack.c.l.b16 %v3615
      %v3708 = vunpack.c.h.b16 %v3615
      %v3709 = vunpack.c.l.b16 %v3616
      %v3710 = vunpack.c.h.b16 %v3616
      %v3711 = vunpack.c.l.b16 %v3617
      %v3712 = vunpack.c.h.b16 %v3617
      %v3713 = vunpack.c.l.b16 %v3618
      %v3714 = vunpack.c.h.b16 %v3618
      %v3715 = vunpack.c.l.b16 %v3619
      %v3716 = vunpack.c.h.b16 %v3619
      %v3717 = vunpack.c.l.b16 %v3620
      %v3718 = vunpack.c.h.b16 %v3620
      %v3719 = vunpack.c.l.b16 %v3621
      %v3720 = vunpack.c.h.b16 %v3621
      %v3721 = vunpack.c.l.b16 %v3622
      %v3722 = vunpack.c.h.b16 %v3622
      %v3723 = vunpack.c.l.b16 %v3623
      %v3724 = vunpack.c.h.b16 %v3623
      %v3725 = vunpack.c.l.b16 %v3624
      %v3726 = vunpack.c.h.b16 %v3624
      %v3727 = vunpack.c.l.b16 %v3625
      %v3728 = vunpack.c.h.b16 %v3625
      %v3729 = vunpack.c.l.b16 %v3626
      %v3730 = vunpack.c.h.b16 %v3626
      %v3731 = vunpack.c.l.b16 %v3627
      %v3732 = vunpack.c.h.b16 %v3627
      %v3733 = vunpack.c.l.b16 %v3628
      %v3734 = vunpack.c.h.b16 %v3628
      %v3735 = vunpack.c.l.b16 %v3629
      %v3736 = vunpack.c.h.b16 %v3629
      %v3737 = vunpack.c.l.b16 %v3630
      %v3738 = vunpack.c.h.b16 %v3630
      %v3739 = vpack.c.b16 %v3677, %v3675
      %v3740 = vpack.c.b16 %v3678, %v3676
      %v3741 = vpack.c.b16 %v3681, %v3679
      %v3742 = vpack.c.b16 %v3682, %v3680
      %v3743 = vpack.c.b16 %v3685, %v3683
      %v3744 = vpack.c.b16 %v3686, %v3684
      %v3745 = vpack.c.b16 %v3689, %v3687
      %v3746 = vpack.c.b16 %v3690, %v3688
      %v3747 = vpack.c.b16 %v3693, %v3691
      %v3748 = vpack.c.b16 %v3694, %v3692
      %v3749 = vpack.c.b16 %v3697, %v3695
      %v3750 = vpack.c.b16 %v3698, %v3696
      %v3751 = vpack.c.b16 %v3701, %v3699
      %v3752 = vpack.c.b16 %v3702, %v3700
      %v3753 = vpack.c.b16 %v3705, %v3703
      %v3754 = vpack.c.b16 %v3706, %v3704
      %v3755 = vpack.c.b16 %v3709, %v3707
      %v3756 = vpack.c.b16 %v3710, %v3708
      %v3757 = vpack.c.b16 %v3713, %v3711
      %v3758 = vpack.c.b16 %v3714, %v3712
      %v3759 = vpack.c.b16 %v3717, %v3715
      %v3760 = vpack.c.b16 %v3718, %v3716
      %v3761 = vpack.c.b16 %v3721, %v3719
      %v3762 = vpack.c.b16 %v3722, %v3720
      %v3763 = vpack.c.b16 %v3725, %v3723
      %v3764 = vpack.c.b16 %v3726, %v3724
      %v3765 = vpack.c.b16 %v3729, %v3727
      %v3766 = vpack.c.b16 %v3730, %v3728
      %v3767 = vpack.c.b16 %v3733, %v3731
      %v3768 = vpack.c.b16 %v3734, %v3732
      %v3769 = vpack.c.b16 %v3737, %v3735
      %v3770 = vpack.c.b16 %v3738, %v3736
      %3803 = vmatprep.subr.bf16.mxu0 %v3740
      %3804 = vmatpush1.bf16.msra.mxu0 %v3739
      %3805 = vmatprep.subr.bf16.mxu0 %v3742
      %3806 = vmatpush1.bf16.msra.mxu0 %v3741
      %3807 = vmatprep.subr.bf16.mxu0 %v3744
      %3808 = vmatpush1.bf16.msra.mxu0 %v3743
      %3809 = vmatprep.subr.bf16.mxu0 %v3746
      %3810 = vmatpush1.bf16.msra.mxu0 %v3745
      %3811 = vmatprep.subr.bf16.mxu0 %v3748
      %3812 = vmatpush1.bf16.msra.mxu0 %v3747
      %3813 = vmatprep.subr.bf16.mxu0 %v3750
      %3814 = vmatpush1.bf16.msra.mxu0 %v3749
      %3815 = vmatprep.subr.bf16.mxu0 %v3752
      %3816 = vmatpush1.bf16.msra.mxu0 %v3751
      %3817 = vmatprep.subr.bf16.mxu0 %v3754
      %3818 = vmatpush1.bf16.msra.mxu0 %v3753
      %3819 = vmatprep.subr.bf16.mxu0 %v3756
      %3820 = vmatpush1.bf16.msra.mxu0 %v3755
      %3821 = vmatprep.subr.bf16.mxu0 %v3758
      %3822 = vmatpush1.bf16.msra.mxu0 %v3757
      %3823 = vmatprep.subr.bf16.mxu0 %v3760
      %3824 = vmatpush1.bf16.msra.mxu0 %v3759
      %3825 = vmatprep.subr.bf16.mxu0 %v3762
      %3826 = vmatpush1.bf16.msra.mxu0 %v3761
      %3827 = vmatprep.subr.bf16.mxu0 %v3764
      %3828 = vmatpush1.bf16.msra.mxu0 %v3763
      %3829 = vmatprep.subr.bf16.mxu0 %v3766
      %3830 = vmatpush1.bf16.msra.mxu0 %v3765
      %3831 = vmatprep.subr.bf16.mxu0 %v3768
      %3832 = vmatpush1.bf16.msra.mxu0 %v3767
      %3833 = vmatprep.subr.bf16.mxu0 %v3770
      %3834 = vmatpush1.bf16.msra.mxu0 %v3769
      %3835 = vmatprep.mubr.bf16.mxu0 %v3472
      %3836 = vmatmul.mubr.bf16.gmra.mrb[0].mxu0 %v3471
      %v3837 = vpop.f32.mrb[0].mxu0
      %v3838 = vadd.f32 %v3636, %v3837
      %v3839 = vpop.f32.mrb[0].mxu0
      %v3840 = vadd.f32 %v3640, %v3839
      %v3841 = vpop.f32.mrb[0].mxu0
      %v3842 = vadd.f32 %v3636, %v3841
      %v3843 = vpop.f32.mrb[0].mxu0
      %v3844 = vadd.f32 %v3640, %v3843
      %3845 = vmatprep.mubr.bf16.mxu0 %v3474
      %3846 = vmatmul.mubr.bf16.gmra.mrb[0].mxu0 %v3473
      %v3847 = vpop.f32.mrb[0].mxu0
      %v3848 = vadd.f32 %v3636, %v3847
      %v3849 = vpop.f32.mrb[0].mxu0
      %v3850 = vadd.f32 %v3640, %v3849
      %v3851 = vpop.f32.mrb[0].mxu0
      %v3852 = vadd.f32 %v3636, %v3851
      %v3853 = vpop.f32.mrb[0].mxu0
      %v3854 = vadd.f32 %v3640, %v3853
      %3855 = vmatprep.mubr.bf16.mxu0 %v3476
      %3856 = vmatmul.mubr.bf16.gmra.mrb[0].mxu0 %v3475
      %v3857 = vpop.f32.mrb[0].mxu0
      %v3858 = vadd.f32 %v3636, %v3857
      %v3859 = vpop.f32.mrb[0].mxu0
      %v3860 = vadd.f32 %v3640, %v3859
      %v3861 = vpop.f32.mrb[0].mxu0
      %v3862 = vadd.f32 %v3636, %v3861
      %v3863 = vpop.f32.mrb[0].mxu0
      %v3864 = vadd.f32 %v3640, %v3863
      %3865 = vmatprep.mubr.bf16.mxu0 %v3478
      %3866 = vmatmul.mubr.bf16.gmra.mrb[0].mxu0 %v3477
      %v3867 = vpop.f32.mrb[0].mxu0
      %v3868 = vadd.f32 %v3636, %v3867
      %v3869 = vpop.f32.mrb[0].mxu0
      %v3870 = vadd.f32 %v3640, %v3869
      %v3871 = vpop.f32.mrb[0].mxu0
      %v3872 = vadd.f32 %v3636, %v3871
      %v3873 = vpop.f32.mrb[0].mxu0
      %v3874 = vadd.f32 %v3640, %v3873
      %3875 = vmatprep.mubr.bf16.mxu0 %v3480
      %3876 = vmatmul.mubr.bf16.gmra.mrb[0].mxu0 %v3479
      %v3877 = vpop.f32.mrb[0].mxu0
      %v3878 = vadd.f32 %v3636, %v3877
      %v3879 = vpop.f32.mrb[0].mxu0
      %v3880 = vadd.f32 %v3640, %v3879
      %v3881 = vpop.f32.mrb[0].mxu0
      %v3882 = vadd.f32 %v3636, %v3881
      %v3883 = vpop.f32.mrb[0].mxu0
      %v3884 = vadd.f32 %v3640, %v3883
      %3885 = vmatprep.mubr.bf16.mxu0 %v3482
      %3886 = vmatmul.mubr.bf16.gmra.mrb[0].mxu0 %v3481
      %v3887 = vpop.f32.mrb[0].mxu0
      %v3888 = vadd.f32 %v3636, %v3887
      %v3889 = vpop.f32.mrb[0].mxu0
      %v3890 = vadd.f32 %v3640, %v3889
      %v3891 = vpop.f32.mrb[0].mxu0
      %v3892 = vadd.f32 %v3636, %v3891
      %v3893 = vpop.f32.mrb[0].mxu0
      %v3894 = vadd.f32 %v3640, %v3893
      %3895 = vmatprep.mubr.bf16.mxu0 %v3484
      %3896 = vmatmul.mubr.bf16.gmra.mrb[0].mxu0 %v3483
      %v3897 = vpop.f32.mrb[0].mxu0
      %v3898 = vadd.f32 %v3636, %v3897
      %v3899 = vpop.f32.mrb[0].mxu0
      %v3900 = vadd.f32 %v3640, %v3899
      %v3901 = vpop.f32.mrb[0].mxu0
      %v3902 = vadd.f32 %v3636, %v3901
      %v3903 = vpop.f32.mrb[0].mxu0
      %v3904 = vadd.f32 %v3640, %v3903
      %3905 = vmatprep.mubr.bf16.mxu0 %v3486
      %3906 = vmatmul.mubr.bf16.gmra.mrb[0].mxu0 %v3485
      %v3907 = vpop.f32.mrb[0].mxu0
      %v3908 = vadd.f32 %v3636, %v3907
      %v3909 = vpop.f32.mrb[0].mxu0
      %v3910 = vadd.f32 %v3640, %v3909
      %v3911 = vpop.f32.mrb[0].mxu0
      %v3912 = vadd.f32 %v3636, %v3911
      %v3913 = vpop.f32.mrb[0].mxu0
      %v3914 = vadd.f32 %v3640, %v3913
      %3915 = vmatprep.mubr.bf16.mxu0 %v3488
      %3916 = vmatmul.mubr.bf16.gmra.mrb[0].mxu0 %v3487
      %v3917 = vpop.f32.mrb[0].mxu0
      %v3918 = vadd.f32 %v3636, %v3917
      %v3919 = vpop.f32.mrb[0].mxu0
      %v3920 = vadd.f32 %v3640, %v3919
      %v3921 = vpop.f32.mrb[0].mxu0
      %v3922 = vadd.f32 %v3636, %v3921
      %v3923 = vpop.f32.mrb[0].mxu0
      %v3924 = vadd.f32 %v3640, %v3923
      %3925 = vmatprep.mubr.bf16.mxu0 %v3490
      %3926 = vmatmul.mubr.bf16.gmra.mrb[0].mxu0 %v3489
      %v3927 = vpop.f32.mrb[0].mxu0
      %v3928 = vadd.f32 %v3636, %v3927
      %v3929 = vpop.f32.mrb[0].mxu0
      %v3930 = vadd.f32 %v3640, %v3929
      %v3931 = vpop.f32.mrb[0].mxu0
      %v3932 = vadd.f32 %v3636, %v3931
      %v3933 = vpop.f32.mrb[0].mxu0
      %v3934 = vadd.f32 %v3640, %v3933
      %3935 = vmatprep.mubr.bf16.mxu0 %v3492
      %3936 = vmatmul.mubr.bf16.gmra.mrb[0].mxu0 %v3491
      %v3937 = vpop.f32.mrb[0].mxu0
      %v3938 = vadd.f32 %v3636, %v3937
      %v3939 = vpop.f32.mrb[0].mxu0
      %v3940 = vadd.f32 %v3640, %v3939
      %v3941 = vpop.f32.mrb[0].mxu0
      %v3942 = vadd.f32 %v3636, %v3941
      %v3943 = vpop.f32.mrb[0].mxu0
      %v3944 = vadd.f32 %v3640, %v3943
      %3945 = vmatprep.mubr.bf16.mxu0 %v3494
      %3946 = vmatmul.mubr.bf16.gmra.mrb[0].mxu0 %v3493
      %v3947 = vpop.f32.mrb[0].mxu0
      %v3948 = vadd.f32 %v3636, %v3947
      %v3949 = vpop.f32.mrb[0].mxu0
      %v3950 = vadd.f32 %v3640, %v3949
      %v3951 = vpop.f32.mrb[0].mxu0
      %v3952 = vadd.f32 %v3636, %v3951
      %v3953 = vpop.f32.mrb[0].mxu0
      %v3954 = vadd.f32 %v3640, %v3953
      %3955 = vmatprep.mubr.bf16.mxu0 %v3496
      %3956 = vmatmul.mubr.bf16.gmra.mrb[0].mxu0 %v3495
      %v3957 = vpop.f32.mrb[0].mxu0
      %v3958 = vadd.f32 %v3636, %v3957
      %v3959 = vpop.f32.mrb[0].mxu0
      %v3960 = vadd.f32 %v3640, %v3959
      %v3961 = vpop.f32.mrb[0].mxu0
      %v3962 = vadd.f32 %v3636, %v3961
      %v3963 = vpop.f32.mrb[0].mxu0
      %v3964 = vadd.f32 %v3640, %v3963
      %3965 = vmatprep.mubr.bf16.mxu0 %v3498
      %3966 = vmatmul.mubr.bf16.gmra.mrb[0].mxu0 %v3497
      %v3967 = vpop.f32.mrb[0].mxu0
      %v3968 = vadd.f32 %v3636, %v3967
      %v3969 = vpop.f32.mrb[0].mxu0
      %v3970 = vadd.f32 %v3640, %v3969
      %v3971 = vpop.f32.mrb[0].mxu0
      %v3972 = vadd.f32 %v3636, %v3971
      %v3973 = vpop.f32.mrb[0].mxu0
      %v3974 = vadd.f32 %v3640, %v3973
      %3975 = vmatprep.mubr.bf16.mxu0 %v3500
      %3976 = vmatmul.mubr.bf16.gmra.mrb[0].mxu0 %v3499
      %v3977 = vpop.f32.mrb[0].mxu0
      %v3978 = vadd.f32 %v3636, %v3977
      %v3979 = vpop.f32.mrb[0].mxu0
      %v3980 = vadd.f32 %v3640, %v3979
      %v3981 = vpop.f32.mrb[0].mxu0
      %v3982 = vadd.f32 %v3636, %v3981
      %v3983 = vpop.f32.mrb[0].mxu0
      %v3984 = vadd.f32 %v3640, %v3983
      %3985 = vmatprep.mubr.bf16.mxu0 %v3502
      %3986 = vmatmul.mubr.bf16.gmra.mrb[0].mxu0 %v3501
      %v3987 = vpop.f32.mrb[0].mxu0
      %v3988 = vadd.f32 %v3636, %v3987
      %v3989 = vpop.f32.mrb[0].mxu0
      %v3990 = vadd.f32 %v3640, %v3989
      %v3991 = vpop.f32.mrb[0].mxu0
      %v3992 = vadd.f32 %v3636, %v3991
      %v3993 = vpop.f32.mrb[0].mxu0
      %v3994 = vadd.f32 %v3640, %v3993
      %3995 = vmatprep.mubr.bf16.mxu0 %v3504
      %3996 = vmatmul.mubr.bf16.gmra.mrb[0].mxu0 %v3503
      %v3997 = vpop.f32.mrb[0].mxu0
      %v3998 = vadd.f32 %v3636, %v3997
      %v3999 = vpop.f32.mrb[0].mxu0
      %v4000 = vadd.f32 %v3640, %v3999
      %v4001 = vpop.f32.mrb[0].mxu0
      %v4002 = vadd.f32 %v3636, %v4001
      %v4003 = vpop.f32.mrb[0].mxu0
      %v4004 = vadd.f32 %v3640, %v4003
      %4005 = vmatprep.mubr.bf16.mxu0 %v3506
      %4006 = vmatmul.mubr.bf16.gmra.mrb[0].mxu0 %v3505
      %v4007 = vpop.f32.mrb[0].mxu0
      %v4008 = vadd.f32 %v3636, %v4007
      %v4009 = vpop.f32.mrb[0].mxu0
      %v4010 = vadd.f32 %v3640, %v4009
      %v4011 = vpop.f32.mrb[0].mxu0
      %v4012 = vadd.f32 %v3636, %v4011
      %v4013 = vpop.f32.mrb[0].mxu0
      %v4014 = vadd.f32 %v3640, %v4013
      %4015 = vmatprep.mubr.bf16.mxu0 %v3508
      %4016 = vmatmul.mubr.bf16.gmra.mrb[0].mxu0 %v3507
      %v4017 = vpop.f32.mrb[0].mxu0
      %v4018 = vadd.f32 %v3636, %v4017
      %v4019 = vpop.f32.mrb[0].mxu0
      %v4020 = vadd.f32 %v3640, %v4019
      %v4021 = vpop.f32.mrb[0].mxu0
      %v4022 = vadd.f32 %v3636, %v4021
      %v4023 = vpop.f32.mrb[0].mxu0
      %v4024 = vadd.f32 %v3640, %v4023
      %4025 = vmatprep.mubr.bf16.mxu0 %v3510
      %4026 = vmatmul.mubr.bf16.gmra.mrb[0].mxu0 %v3509
      %v4027 = vpop.f32.mrb[0].mxu0
      %v4028 = vadd.f32 %v3636, %v4027
      %v4029 = vpop.f32.mrb[0].mxu0
      %v4030 = vadd.f32 %v3640, %v4029
      %v4031 = vpop.f32.mrb[0].mxu0
      %v4032 = vadd.f32 %v3636, %v4031
      %v4033 = vpop.f32.mrb[0].mxu0
      %v4034 = vadd.f32 %v3640, %v4033
      %4035 = vmatprep.mubr.bf16.mxu0 %v3512
      %4036 = vmatmul.mubr.bf16.gmra.mrb[0].mxu0 %v3511
      %v4037 = vpop.f32.mrb[0].mxu0
      %v4038 = vadd.f32 %v3636, %v4037
      %v4039 = vpop.f32.mrb[0].mxu0
      %v4040 = vadd.f32 %v3640, %v4039
      %v4041 = vpop.f32.mrb[0].mxu0
      %v4042 = vadd.f32 %v3636, %v4041
      %v4043 = vpop.f32.mrb[0].mxu0
      %v4044 = vadd.f32 %v3640, %v4043
      %4045 = vmatprep.mubr.bf16.mxu0 %v3514
      %4046 = vmatmul.mubr.bf16.gmra.mrb[0].mxu0 %v3513
      %v4047 = vpop.f32.mrb[0].mxu0
      %v4048 = vadd.f32 %v3636, %v4047
      %v4049 = vpop.f32.mrb[0].mxu0
      %v4050 = vadd.f32 %v3640, %v4049
      %v4051 = vpop.f32.mrb[0].mxu0
      %v4052 = vadd.f32 %v3636, %v4051
      %v4053 = vpop.f32.mrb[0].mxu0
      %v4054 = vadd.f32 %v3640, %v4053
      %4055 = vmatprep.mubr.bf16.mxu0 %v3516
      %4056 = vmatmul.mubr.bf16.gmra.mrb[0].mxu0 %v3515
      %v4057 = vpop.f32.mrb[0].mxu0
      %v4058 = vadd.f32 %v3636, %v4057
      %v4059 = vpop.f32.mrb[0].mxu0
      %v4060 = vadd.f32 %v3640, %v4059
      %v4061 = vpop.f32.mrb[0].mxu0
      %v4062 = vadd.f32 %v3636, %v4061
      %v4063 = vpop.f32.mrb[0].mxu0
      %v4064 = vadd.f32 %v3640, %v4063
      %4065 = vmatprep.mubr.bf16.mxu0 %v3518
      %4066 = vmatmul.mubr.bf16.gmra.mrb[0].mxu0 %v3517
      %v4067 = vpop.f32.mrb[0].mxu0
      %v4068 = vadd.f32 %v3636, %v4067
      %v4069 = vpop.f32.mrb[0].mxu0
      %v4070 = vadd.f32 %v3640, %v4069
      %v4071 = vpop.f32.mrb[0].mxu0
      %v4072 = vadd.f32 %v3636, %v4071
      %v4073 = vpop.f32.mrb[0].mxu0
      %v4074 = vadd.f32 %v3640, %v4073
      %4075 = vmatprep.mubr.bf16.mxu0 %v3520
      %4076 = vmatmul.mubr.bf16.gmra.mrb[0].mxu0 %v3519
      %v4077 = vpop.f32.mrb[0].mxu0
      %v4078 = vadd.f32 %v3636, %v4077
      %v4079 = vpop.f32.mrb[0].mxu0
      %v4080 = vadd.f32 %v3640, %v4079
      %v4081 = vpop.f32.mrb[0].mxu0
      %v4082 = vadd.f32 %v3636, %v4081
      %v4083 = vpop.f32.mrb[0].mxu0
      %v4084 = vadd.f32 %v3640, %v4083
      %4085 = vmatprep.mubr.bf16.mxu0 %v3522
      %4086 = vmatmul.mubr.bf16.gmra.mrb[0].mxu0 %v3521
      %v4087 = vpop.f32.mrb[0].mxu0
      %v4088 = vadd.f32 %v3636, %v4087
      %v4089 = vpop.f32.mrb[0].mxu0
      %v4090 = vadd.f32 %v3640, %v4089
      %v4091 = vpop.f32.mrb[0].mxu0
      %v4092 = vadd.f32 %v3636, %v4091
      %v4093 = vpop.f32.mrb[0].mxu0
      %v4094 = vadd.f32 %v3640, %v4093
      %4095 = vmatprep.mubr.bf16.mxu0 %v3524
      %4096 = vmatmul.mubr.bf16.gmra.mrb[0].mxu0 %v3523
      %v4097 = vpop.f32.mrb[0].mxu0
      %v4098 = vadd.f32 %v3636, %v4097
      %v4099 = vpop.f32.mrb[0].mxu0
      %v4100 = vadd.f32 %v3640, %v4099
      %v4101 = vpop.f32.mrb[0].mxu0
      %v4102 = vadd.f32 %v3636, %v4101
      %v4103 = vpop.f32.mrb[0].mxu0
      %v4104 = vadd.f32 %v3640, %v4103
      %4105 = vmatprep.mubr.bf16.mxu0 %v3526
      %4106 = vmatmul.mubr.bf16.gmra.mrb[0].mxu0 %v3525
      %v4107 = vpop.f32.mrb[0].mxu0
      %v4108 = vadd.f32 %v3636, %v4107
      %v4109 = vpop.f32.mrb[0].mxu0
      %v4110 = vadd.f32 %v3640, %v4109
      %v4111 = vpop.f32.mrb[0].mxu0
      %v4112 = vadd.f32 %v3636, %v4111
      %v4113 = vpop.f32.mrb[0].mxu0
      %v4114 = vadd.f32 %v3640, %v4113
      %4115 = vmatprep.mubr.bf16.mxu0 %v3528
      %4116 = vmatmul.mubr.bf16.gmra.mrb[0].mxu0 %v3527
      %v4117 = vpop.f32.mrb[0].mxu0
      %v4118 = vadd.f32 %v3636, %v4117
      %v4119 = vpop.f32.mrb[0].mxu0
      %v4120 = vadd.f32 %v3640, %v4119
      %v4121 = vpop.f32.mrb[0].mxu0
      %v4122 = vadd.f32 %v3636, %v4121
      %v4123 = vpop.f32.mrb[0].mxu0
      %v4124 = vadd.f32 %v3640, %v4123
      %4125 = vmatprep.mubr.bf16.mxu0 %v3530
      %4126 = vmatmul.mubr.bf16.gmra.mrb[0].mxu0 %v3529
      %v4127 = vpop.f32.mrb[0].mxu0
      %v4128 = vadd.f32 %v3636, %v4127
      %v4129 = vpop.f32.mrb[0].mxu0
      %v4130 = vadd.f32 %v3640, %v4129
      %v4131 = vpop.f32.mrb[0].mxu0
      %v4132 = vadd.f32 %v3636, %v4131
      %v4133 = vpop.f32.mrb[0].mxu0
      %v4134 = vadd.f32 %v3640, %v4133
      %4135 = vmatprep.mubr.bf16.mxu0 %v3532
      %4136 = vmatmul.mubr.bf16.gmra.mrb[0].mxu0 %v3531
      %v4137 = vpop.f32.mrb[0].mxu0
      %v4138 = vadd.f32 %v3636, %v4137
      %v4139 = vpop.f32.mrb[0].mxu0
      %v4140 = vadd.f32 %v3640, %v4139
      %v4141 = vpop.f32.mrb[0].mxu0
      %v4142 = vadd.f32 %v3636, %v4141
      %v4143 = vpop.f32.mrb[0].mxu0
      %v4144 = vadd.f32 %v3640, %v4143
      %4145 = vmatprep.mubr.bf16.mxu0 %v3534
      %4146 = vmatmul.mubr.bf16.gmra.mrb[0].mxu0 %v3533
      %v4147 = vpop.f32.mrb[0].mxu0
      %v4148 = vadd.f32 %v3636, %v4147
      %v4149 = vpop.f32.mrb[0].mxu0
      %v4150 = vadd.f32 %v3640, %v4149
      %v4151 = vpop.f32.mrb[0].mxu0
      %v4152 = vadd.f32 %v3636, %v4151
      %v4153 = vpop.f32.mrb[0].mxu0
      %v4154 = vadd.f32 %v3640, %v4153
      %4155 = vmatprep.mubr.bf16.mxu0 %v3536
      %4156 = vmatmul.mubr.bf16.gmra.mrb[0].mxu0 %v3535
      %v4157 = vpop.f32.mrb[0].mxu0
      %v4158 = vadd.f32 %v3636, %v4157
      %v4159 = vpop.f32.mrb[0].mxu0
      %v4160 = vadd.f32 %v3640, %v4159
      %v4161 = vpop.f32.mrb[0].mxu0
      %v4162 = vadd.f32 %v3636, %v4161
      %v4163 = vpop.f32.mrb[0].mxu0
      %v4164 = vadd.f32 %v3640, %v4163
      %4165 = vmatprep.mubr.bf16.mxu0 %v3538
      %4166 = vmatmul.mubr.bf16.gmra.mrb[0].mxu0 %v3537
      %v4167 = vpop.f32.mrb[0].mxu0
      %v4168 = vadd.f32 %v3636, %v4167
      %v4169 = vpop.f32.mrb[0].mxu0
      %v4170 = vadd.f32 %v3640, %v4169
      %v4171 = vpop.f32.mrb[0].mxu0
      %v4172 = vadd.f32 %v3636, %v4171
      %v4173 = vpop.f32.mrb[0].mxu0
      %v4174 = vadd.f32 %v3640, %v4173
      %4175 = vmatprep.mubr.bf16.mxu0 %v3540
      %4176 = vmatmul.mubr.bf16.gmra.mrb[0].mxu0 %v3539
      %v4177 = vpop.f32.mrb[0].mxu0
      %v4178 = vadd.f32 %v3636, %v4177
      %v4179 = vpop.f32.mrb[0].mxu0
      %v4180 = vadd.f32 %v3640, %v4179
      %v4181 = vpop.f32.mrb[0].mxu0
      %v4182 = vadd.f32 %v3636, %v4181
      %v4183 = vpop.f32.mrb[0].mxu0
      %v4184 = vadd.f32 %v3640, %v4183
      %4185 = vmatprep.mubr.bf16.mxu0 %v3542
      %4186 = vmatmul.mubr.bf16.gmra.mrb[0].mxu0 %v3541
      %v4187 = vpop.f32.mrb[0].mxu0
      %v4188 = vadd.f32 %v3636, %v4187
      %v4189 = vpop.f32.mrb[0].mxu0
      %v4190 = vadd.f32 %v3640, %v4189
      %v4191 = vpop.f32.mrb[0].mxu0
      %v4192 = vadd.f32 %v3636, %v4191
      %v4193 = vpop.f32.mrb[0].mxu0
      %v4194 = vadd.f32 %v3640, %v4193
      %4195 = vmatprep.mubr.bf16.mxu0 %v3544
      %4196 = vmatmul.mubr.bf16.gmra.mrb[0].mxu0 %v3543
      %v4197 = vpop.f32.mrb[0].mxu0
      %v4198 = vadd.f32 %v3636, %v4197
      %v4199 = vpop.f32.mrb[0].mxu0
      %v4200 = vadd.f32 %v3640, %v4199
      %v4201 = vpop.f32.mrb[0].mxu0
      %v4202 = vadd.f32 %v3636, %v4201
      %v4203 = vpop.f32.mrb[0].mxu0
      %v4204 = vadd.f32 %v3640, %v4203
      %4205 = vmatprep.mubr.bf16.mxu0 %v3546
      %4206 = vmatmul.mubr.bf16.gmra.mrb[0].mxu0 %v3545
      %v4207 = vpop.f32.mrb[0].mxu0
      %v4208 = vadd.f32 %v3636, %v4207
      %v4209 = vpop.f32.mrb[0].mxu0
      %v4210 = vadd.f32 %v3640, %v4209
      %v4211 = vpop.f32.mrb[0].mxu0
      %v4212 = vadd.f32 %v3636, %v4211
      %v4213 = vpop.f32.mrb[0].mxu0
      %v4214 = vadd.f32 %v3640, %v4213
      %4215 = vmatprep.mubr.bf16.mxu0 %v3548
      %4216 = vmatmul.mubr.bf16.gmra.mrb[0].mxu0 %v3547
      %v4217 = vpop.f32.mrb[0].mxu0
      %v4218 = vadd.f32 %v3636, %v4217
      %v4219 = vpop.f32.mrb[0].mxu0
      %v4220 = vadd.f32 %v3640, %v4219
      %v4221 = vpop.f32.mrb[0].mxu0
      %v4222 = vadd.f32 %v3636, %v4221
      %v4223 = vpop.f32.mrb[0].mxu0
      %v4224 = vadd.f32 %v3640, %v4223
      %4225 = vmatprep.mubr.bf16.mxu0 %v3550
      %4226 = vmatmul.mubr.bf16.gmra.mrb[0].mxu0 %v3549
      %v4227 = vpop.f32.mrb[0].mxu0
      %v4228 = vadd.f32 %v3636, %v4227
      %v4229 = vpop.f32.mrb[0].mxu0
      %v4230 = vadd.f32 %v3640, %v4229
      %v4231 = vpop.f32.mrb[0].mxu0
      %v4232 = vadd.f32 %v3636, %v4231
      %v4233 = vpop.f32.mrb[0].mxu0
      %v4234 = vadd.f32 %v3640, %v4233
      %4235 = vmatprep.mubr.bf16.mxu0 %v3552
      %4236 = vmatmul.mubr.bf16.gmra.mrb[0].mxu0 %v3551
      %v4237 = vpop.f32.mrb[0].mxu0
      %v4238 = vadd.f32 %v3636, %v4237
      %v4239 = vpop.f32.mrb[0].mxu0
      %v4240 = vadd.f32 %v3640, %v4239
      %v4241 = vpop.f32.mrb[0].mxu0
      %v4242 = vadd.f32 %v3636, %v4241
      %v4243 = vpop.f32.mrb[0].mxu0
      %v4244 = vadd.f32 %v3640, %v4243
      %4245 = vmatprep.mubr.bf16.mxu0 %v3554
      %4246 = vmatmul.mubr.bf16.gmra.mrb[0].mxu0 %v3553
      %v4247 = vpop.f32.mrb[0].mxu0
      %v4248 = vadd.f32 %v3636, %v4247
      %v4249 = vpop.f32.mrb[0].mxu0
      %v4250 = vadd.f32 %v3640, %v4249
      %v4251 = vpop.f32.mrb[0].mxu0
      %v4252 = vadd.f32 %v3636, %v4251
      %v4253 = vpop.f32.mrb[0].mxu0
      %v4254 = vadd.f32 %v3640, %v4253
      %4255 = vmatprep.mubr.bf16.mxu0 %v3556
      %4256 = vmatmul.mubr.bf16.gmra.mrb[0].mxu0 %v3555
      %v4257 = vpop.f32.mrb[0].mxu0
      %v4258 = vadd.f32 %v3636, %v4257
      %v4259 = vpop.f32.mrb[0].mxu0
      %v4260 = vadd.f32 %v3640, %v4259
      %v4261 = vpop.f32.mrb[0].mxu0
      %v4262 = vadd.f32 %v3636, %v4261
      %v4263 = vpop.f32.mrb[0].mxu0
      %v4264 = vadd.f32 %v3640, %v4263
      %4265 = vmatprep.mubr.bf16.mxu0 %v3558
      %4266 = vmatmul.mubr.bf16.gmra.mrb[0].mxu0 %v3557
      %v4267 = vpop.f32.mrb[0].mxu0
      %v4268 = vadd.f32 %v3636, %v4267
      %v4269 = vpop.f32.mrb[0].mxu0
      %v4270 = vadd.f32 %v3640, %v4269
      %v4271 = vpop.f32.mrb[0].mxu0
      %v4272 = vadd.f32 %v3636, %v4271
      %v4273 = vpop.f32.mrb[0].mxu0
      %v4274 = vadd.f32 %v3640, %v4273
      %4275 = vmatprep.mubr.bf16.mxu0 %v3560
      %4276 = vmatmul.mubr.bf16.gmra.mrb[0].mxu0 %v3559
      %v4277 = vpop.f32.mrb[0].mxu0
      %v4278 = vadd.f32 %v3636, %v4277
      %v4279 = vpop.f32.mrb[0].mxu0
      %v4280 = vadd.f32 %v3640, %v4279
      %v4281 = vpop.f32.mrb[0].mxu0
      %v4282 = vadd.f32 %v3636, %v4281
      %v4283 = vpop.f32.mrb[0].mxu0
      %v4284 = vadd.f32 %v3640, %v4283
      %4285 = vmatprep.mubr.bf16.mxu0 %v3562
      %4286 = vmatmul.mubr.bf16.gmra.mrb[0].mxu0 %v3561
      %v4287 = vpop.f32.mrb[0].mxu0
      %v4288 = vadd.f32 %v3636, %v4287
      %v4289 = vpop.f32.mrb[0].mxu0
      %v4290 = vadd.f32 %v3640, %v4289
      %v4291 = vpop.f32.mrb[0].mxu0
      %v4292 = vadd.f32 %v3636, %v4291
      %v4293 = vpop.f32.mrb[0].mxu0
      %v4294 = vadd.f32 %v3640, %v4293
      %4295 = vmatprep.mubr.bf16.mxu0 %v3564
      %4296 = vmatmul.mubr.bf16.gmra.mrb[0].mxu0 %v3563
      %v4297 = vpop.f32.mrb[0].mxu0
      %v4298 = vadd.f32 %v3636, %v4297
      %v4299 = vpop.f32.mrb[0].mxu0
      %v4300 = vadd.f32 %v3640, %v4299
      %v4301 = vpop.f32.mrb[0].mxu0
      %v4302 = vadd.f32 %v3636, %v4301
      %v4303 = vpop.f32.mrb[0].mxu0
      %v4304 = vadd.f32 %v3640, %v4303
      %4305 = vmatprep.mubr.bf16.mxu0 %v3566
      %4306 = vmatmul.mubr.bf16.gmra.mrb[0].mxu0 %v3565
      %v4307 = vpop.f32.mrb[0].mxu0
      %v4308 = vadd.f32 %v3636, %v4307
      %v4309 = vpop.f32.mrb[0].mxu0
      %v4310 = vadd.f32 %v3640, %v4309
      %v4311 = vpop.f32.mrb[0].mxu0
      %v4312 = vadd.f32 %v3636, %v4311
      %v4313 = vpop.f32.mrb[0].mxu0
      %v4314 = vadd.f32 %v3640, %v4313
      %4315 = vmatprep.mubr.bf16.mxu0 %v3568
      %4316 = vmatmul.mubr.bf16.gmra.mrb[0].mxu0 %v3567
      %v4317 = vpop.f32.mrb[0].mxu0
      %v4318 = vadd.f32 %v3636, %v4317
      %v4319 = vpop.f32.mrb[0].mxu0
      %v4320 = vadd.f32 %v3640, %v4319
      %v4321 = vpop.f32.mrb[0].mxu0
      %v4322 = vadd.f32 %v3636, %v4321
      %v4323 = vpop.f32.mrb[0].mxu0
      %v4324 = vadd.f32 %v3640, %v4323
      %4325 = vmatprep.mubr.bf16.mxu0 %v3570
      %4326 = vmatmul.mubr.bf16.gmra.mrb[0].mxu0 %v3569
      %v4327 = vpop.f32.mrb[0].mxu0
      %v4328 = vadd.f32 %v3636, %v4327
      %v4329 = vpop.f32.mrb[0].mxu0
      %v4330 = vadd.f32 %v3640, %v4329
      %v4331 = vpop.f32.mrb[0].mxu0
      %v4332 = vadd.f32 %v3636, %v4331
      %v4333 = vpop.f32.mrb[0].mxu0
      %v4334 = vadd.f32 %v3640, %v4333
      %4335 = vmatprep.mubr.bf16.mxu0 %v3572
      %4336 = vmatmul.mubr.bf16.gmra.mrb[0].mxu0 %v3571
      %v4337 = vpop.f32.mrb[0].mxu0
      %v4338 = vadd.f32 %v3636, %v4337
      %v4339 = vpop.f32.mrb[0].mxu0
      %v4340 = vadd.f32 %v3640, %v4339
      %v4341 = vpop.f32.mrb[0].mxu0
      %v4342 = vadd.f32 %v3636, %v4341
      %v4343 = vpop.f32.mrb[0].mxu0
      %v4344 = vadd.f32 %v3640, %v4343
      %4345 = vmatprep.mubr.bf16.mxu0 %v3574
      %4346 = vmatmul.mubr.bf16.gmra.mrb[0].mxu0 %v3573
      %v4347 = vpop.f32.mrb[0].mxu0
      %v4348 = vadd.f32 %v3636, %v4347
      %v4349 = vpop.f32.mrb[0].mxu0
      %v4350 = vadd.f32 %v3640, %v4349
      %v4351 = vpop.f32.mrb[0].mxu0
      %v4352 = vadd.f32 %v3636, %v4351
      %v4353 = vpop.f32.mrb[0].mxu0
      %v4354 = vadd.f32 %v3640, %v4353
      %4355 = vmatprep.mubr.bf16.mxu0 %v3576
      %4356 = vmatmul.mubr.bf16.gmra.mrb[0].mxu0 %v3575
      %v4357 = vpop.f32.mrb[0].mxu0
      %v4358 = vadd.f32 %v3636, %v4357
      %v4359 = vpop.f32.mrb[0].mxu0
      %v4360 = vadd.f32 %v3640, %v4359
      %v4361 = vpop.f32.mrb[0].mxu0
      %v4362 = vadd.f32 %v3636, %v4361
      %v4363 = vpop.f32.mrb[0].mxu0
      %v4364 = vadd.f32 %v3640, %v4363
      %4365 = vmatprep.mubr.bf16.mxu0 %v3578
      %4366 = vmatmul.mubr.bf16.gmra.mrb[0].mxu0 %v3577
      %v4367 = vpop.f32.mrb[0].mxu0
      %v4368 = vadd.f32 %v3636, %v4367
      %v4369 = vpop.f32.mrb[0].mxu0
      %v4370 = vadd.f32 %v3640, %v4369
      %v4371 = vpop.f32.mrb[0].mxu0
      %v4372 = vadd.f32 %v3636, %v4371
      %v4373 = vpop.f32.mrb[0].mxu0
      %v4374 = vadd.f32 %v3640, %v4373
      %4375 = vmatprep.mubr.bf16.mxu0 %v3580
      %4376 = vmatmul.mubr.bf16.gmra.mrb[0].mxu0 %v3579
      %v4377 = vpop.f32.mrb[0].mxu0
      %v4378 = vadd.f32 %v3636, %v4377
      %v4379 = vpop.f32.mrb[0].mxu0
      %v4380 = vadd.f32 %v3640, %v4379
      %v4381 = vpop.f32.mrb[0].mxu0
      %v4382 = vadd.f32 %v3636, %v4381
      %v4383 = vpop.f32.mrb[0].mxu0
      %v4384 = vadd.f32 %v3640, %v4383
      %4385 = vmatprep.mubr.bf16.mxu0 %v3582
      %4386 = vmatmul.mubr.bf16.gmra.mrb[0].mxu0 %v3581
      %v4387 = vpop.f32.mrb[0].mxu0
      %v4388 = vadd.f32 %v3636, %v4387
      %v4389 = vpop.f32.mrb[0].mxu0
      %v4390 = vadd.f32 %v3640, %v4389
      %v4391 = vpop.f32.mrb[0].mxu0
      %v4392 = vadd.f32 %v3636, %v4391
      %v4393 = vpop.f32.mrb[0].mxu0
      %v4394 = vadd.f32 %v3640, %v4393
      %4395 = vmatprep.mubr.bf16.mxu0 %v3584
      %4396 = vmatmul.mubr.bf16.gmra.mrb[0].mxu0 %v3583
      %v4397 = vpop.f32.mrb[0].mxu0
      %v4398 = vadd.f32 %v3636, %v4397
      %v4399 = vpop.f32.mrb[0].mxu0
      %v4400 = vadd.f32 %v3640, %v4399
      %v4401 = vpop.f32.mrb[0].mxu0
      %v4402 = vadd.f32 %v3636, %v4401
      %v4403 = vpop.f32.mrb[0].mxu0
      %v4404 = vadd.f32 %v3640, %v4403
      %4405 = vmatprep.mubr.bf16.mxu0 %v3586
      %4406 = vmatmul.mubr.bf16.gmra.mrb[0].mxu0 %v3585
      %v4407 = vpop.f32.mrb[0].mxu0
      %v4408 = vadd.f32 %v3636, %v4407
      %v4409 = vpop.f32.mrb[0].mxu0
      %v4410 = vadd.f32 %v3640, %v4409
      %v4411 = vpop.f32.mrb[0].mxu0
      %v4412 = vadd.f32 %v3636, %v4411
      %v4413 = vpop.f32.mrb[0].mxu0
      %v4414 = vadd.f32 %v3640, %v4413
      %4415 = vmatprep.mubr.bf16.mxu0 %v3588
      %4416 = vmatmul.mubr.bf16.gmra.mrb[0].mxu0 %v3587
      %v4417 = vpop.f32.mrb[0].mxu0
      %v4418 = vadd.f32 %v3636, %v4417
      %v4419 = vpop.f32.mrb[0].mxu0
      %v4420 = vadd.f32 %v3640, %v4419
      %v4421 = vpop.f32.mrb[0].mxu0
      %v4422 = vadd.f32 %v3636, %v4421
      %v4423 = vpop.f32.mrb[0].mxu0
      %v4424 = vadd.f32 %v3640, %v4423
      %4425 = vmatprep.mubr.bf16.mxu0 %v3590
      %4426 = vmatmul.mubr.bf16.gmra.mrb[0].mxu0 %v3589
      %v4427 = vpop.f32.mrb[0].mxu0
      %v4428 = vadd.f32 %v3636, %v4427
      %v4429 = vpop.f32.mrb[0].mxu0
      %v4430 = vadd.f32 %v3640, %v4429
      %v4431 = vpop.f32.mrb[0].mxu0
      %v4432 = vadd.f32 %v3636, %v4431
      %v4433 = vpop.f32.mrb[0].mxu0
      %v4434 = vadd.f32 %v3640, %v4433
      %4435 = vmatprep.mubr.bf16.mxu0 %v3592
      %4436 = vmatmul.mubr.bf16.gmra.mrb[0].mxu0 %v3591
      %v4437 = vpop.f32.mrb[0].mxu0
      %v4438 = vadd.f32 %v3636, %v4437
      %v4439 = vpop.f32.mrb[0].mxu0
      %v4440 = vadd.f32 %v3640, %v4439
      %v4441 = vpop.f32.mrb[0].mxu0
      %v4442 = vadd.f32 %v3636, %v4441
      %v4443 = vpop.f32.mrb[0].mxu0
      %v4444 = vadd.f32 %v3640, %v4443
      %4445 = vmatprep.mubr.bf16.mxu0 %v3594
      %4446 = vmatmul.mubr.bf16.gmra.mrb[0].mxu0 %v3593
      %v4447 = vpop.f32.mrb[0].mxu0
      %v4448 = vadd.f32 %v3636, %v4447
      %v4449 = vpop.f32.mrb[0].mxu0
      %v4450 = vadd.f32 %v3640, %v4449
      %v4451 = vpop.f32.mrb[0].mxu0
      %v4452 = vadd.f32 %v3636, %v4451
      %v4453 = vpop.f32.mrb[0].mxu0
      %v4454 = vadd.f32 %v3640, %v4453
      %4455 = vmatprep.mubr.bf16.mxu0 %v3596
      %4456 = vmatmul.mubr.bf16.gmra.mrb[0].mxu0 %v3595
      %v4457 = vpop.f32.mrb[0].mxu0
      %v4458 = vadd.f32 %v3636, %v4457
      %v4459 = vpop.f32.mrb[0].mxu0
      %v4460 = vadd.f32 %v3640, %v4459
      %v4461 = vpop.f32.mrb[0].mxu0
      %v4462 = vadd.f32 %v3636, %v4461
      %v4463 = vpop.f32.mrb[0].mxu0
      %v4464 = vadd.f32 %v3640, %v4463
      %4465 = vmatprep.mubr.bf16.mxu0 %v3598
      %4466 = vmatmul.mubr.bf16.gmra.mrb[0].mxu0 %v3597
      %v4467 = vpop.f32.mrb[0].mxu0
      %v4468 = vadd.f32 %v3636, %v4467
      %v4469 = vpop.f32.mrb[0].mxu0
      %v4470 = vadd.f32 %v3640, %v4469
      %v4471 = vpop.f32.mrb[0].mxu0
      %v4472 = vadd.f32 %v3636, %v4471
      %v4473 = vpop.f32.mrb[0].mxu0
      %v4474 = vadd.f32 %v3640, %v4473
      %4475 = vdwg.mxu0
      %v4476 = vmax.f32 %v3838, 0.0
      %v4477 = vmax.f32 %v3840, 0.0
      %v4478 = vmax.f32 %v3842, 0.0
      %v4479 = vmax.f32 %v3844, 0.0
      %v4480 = vmax.f32 %v3848, 0.0
      %v4481 = vmax.f32 %v3850, 0.0
      %v4482 = vmax.f32 %v3852, 0.0
      %v4483 = vmax.f32 %v3854, 0.0
      %v4484 = vmax.f32 %v3858, 0.0
      %v4485 = vmax.f32 %v3860, 0.0
      %v4486 = vmax.f32 %v3862, 0.0
      %v4487 = vmax.f32 %v3864, 0.0
      %v4488 = vmax.f32 %v3868, 0.0
      %v4489 = vmax.f32 %v3870, 0.0
      %v4490 = vmax.f32 %v3872, 0.0
      %v4491 = vmax.f32 %v3874, 0.0
      %v4492 = vmax.f32 %v3878, 0.0
      %v4493 = vmax.f32 %v3880, 0.0
      %v4494 = vmax.f32 %v3882, 0.0
      %v4495 = vmax.f32 %v3884, 0.0
      %v4496 = vmax.f32 %v3888, 0.0
      %v4497 = vmax.f32 %v3890, 0.0
      %v4498 = vmax.f32 %v3892, 0.0
      %v4499 = vmax.f32 %v3894, 0.0
      %v4500 = vmax.f32 %v3898, 0.0
      %v4501 = vmax.f32 %v3900, 0.0
      %v4502 = vmax.f32 %v3902, 0.0
      %v4503 = vmax.f32 %v3904, 0.0
      %v4504 = vmax.f32 %v3908, 0.0
      %v4505 = vmax.f32 %v3910, 0.0
      %v4506 = vmax.f32 %v3912, 0.0
      %v4507 = vmax.f32 %v3914, 0.0
      %v4508 = vmax.f32 %v3918, 0.0
      %v4509 = vmax.f32 %v3920, 0.0
      %v4510 = vmax.f32 %v3922, 0.0
      %v4511 = vmax.f32 %v3924, 0.0
      %v4512 = vmax.f32 %v3928, 0.0
      %v4513 = vmax.f32 %v3930, 0.0
      %v4514 = vmax.f32 %v3932, 0.0
      %v4515 = vmax.f32 %v3934, 0.0
      %v4516 = vmax.f32 %v3938, 0.0
      %v4517 = vmax.f32 %v3940, 0.0
      %v4518 = vmax.f32 %v3942, 0.0
      %v4519 = vmax.f32 %v3944, 0.0
      %v4520 = vmax.f32 %v3948, 0.0
      %v4521 = vmax.f32 %v3950, 0.0
      %v4522 = vmax.f32 %v3952, 0.0
      %v4523 = vmax.f32 %v3954, 0.0
      %v4524 = vmax.f32 %v3958, 0.0
      %v4525 = vmax.f32 %v3960, 0.0
      %v4526 = vmax.f32 %v3962, 0.0
      %v4527 = vmax.f32 %v3964, 0.0
      %v4528 = vmax.f32 %v3968, 0.0
      %v4529 = vmax.f32 %v3970, 0.0
      %v4530 = vmax.f32 %v3972, 0.0
      %v4531 = vmax.f32 %v3974, 0.0
      %v4532 = vmax.f32 %v3978, 0.0
      %v4533 = vmax.f32 %v3980, 0.0
      %v4534 = vmax.f32 %v3982, 0.0
      %v4535 = vmax.f32 %v3984, 0.0
      %v4536 = vmax.f32 %v3988, 0.0
      %v4537 = vmax.f32 %v3990, 0.0
      %v4538 = vmax.f32 %v3992, 0.0
      %v4539 = vmax.f32 %v3994, 0.0
      %v4540 = vmax.f32 %v3998, 0.0
      %v4541 = vmax.f32 %v4000, 0.0
      %v4542 = vmax.f32 %v4002, 0.0
      %v4543 = vmax.f32 %v4004, 0.0
      %v4544 = vmax.f32 %v4008, 0.0
      %v4545 = vmax.f32 %v4010, 0.0
      %v4546 = vmax.f32 %v4012, 0.0
      %v4547 = vmax.f32 %v4014, 0.0
      %v4548 = vmax.f32 %v4018, 0.0
      %v4549 = vmax.f32 %v4020, 0.0
      %v4550 = vmax.f32 %v4022, 0.0
      %v4551 = vmax.f32 %v4024, 0.0
      %v4552 = vmax.f32 %v4028, 0.0
      %v4553 = vmax.f32 %v4030, 0.0
      %v4554 = vmax.f32 %v4032, 0.0
      %v4555 = vmax.f32 %v4034, 0.0
      %v4556 = vmax.f32 %v4038, 0.0
      %v4557 = vmax.f32 %v4040, 0.0
      %v4558 = vmax.f32 %v4042, 0.0
      %v4559 = vmax.f32 %v4044, 0.0
      %v4560 = vmax.f32 %v4048, 0.0
      %v4561 = vmax.f32 %v4050, 0.0
      %v4562 = vmax.f32 %v4052, 0.0
      %v4563 = vmax.f32 %v4054, 0.0
      %v4564 = vmax.f32 %v4058, 0.0
      %v4565 = vmax.f32 %v4060, 0.0
      %v4566 = vmax.f32 %v4062, 0.0
      %v4567 = vmax.f32 %v4064, 0.0
      %v4568 = vmax.f32 %v4068, 0.0
      %v4569 = vmax.f32 %v4070, 0.0
      %v4570 = vmax.f32 %v4072, 0.0
      %v4571 = vmax.f32 %v4074, 0.0
      %v4572 = vmax.f32 %v4078, 0.0
      %v4573 = vmax.f32 %v4080, 0.0
      %v4574 = vmax.f32 %v4082, 0.0
      %v4575 = vmax.f32 %v4084, 0.0
      %v4576 = vmax.f32 %v4088, 0.0
      %v4577 = vmax.f32 %v4090, 0.0
      %v4578 = vmax.f32 %v4092, 0.0
      %v4579 = vmax.f32 %v4094, 0.0
      %v4580 = vmax.f32 %v4098, 0.0
      %v4581 = vmax.f32 %v4100, 0.0
      %v4582 = vmax.f32 %v4102, 0.0
      %v4583 = vmax.f32 %v4104, 0.0
      %v4584 = vmax.f32 %v4108, 0.0
      %v4585 = vmax.f32 %v4110, 0.0
      %v4586 = vmax.f32 %v4112, 0.0
      %v4587 = vmax.f32 %v4114, 0.0
      %v4588 = vmax.f32 %v4118, 0.0
      %v4589 = vmax.f32 %v4120, 0.0
      %v4590 = vmax.f32 %v4122, 0.0
      %v4591 = vmax.f32 %v4124, 0.0
      %v4592 = vmax.f32 %v4128, 0.0
      %v4593 = vmax.f32 %v4130, 0.0
      %v4594 = vmax.f32 %v4132, 0.0
      %v4595 = vmax.f32 %v4134, 0.0
      %v4596 = vmax.f32 %v4138, 0.0
      %v4597 = vmax.f32 %v4140, 0.0
      %v4598 = vmax.f32 %v4142, 0.0
      %v4599 = vmax.f32 %v4144, 0.0
      %v4600 = vmax.f32 %v4148, 0.0
      %v4601 = vmax.f32 %v4150, 0.0
      %v4602 = vmax.f32 %v4152, 0.0
      %v4603 = vmax.f32 %v4154, 0.0
      %v4604 = vmax.f32 %v4158, 0.0
      %v4605 = vmax.f32 %v4160, 0.0
      %v4606 = vmax.f32 %v4162, 0.0
      %v4607 = vmax.f32 %v4164, 0.0
      %v4608 = vmax.f32 %v4168, 0.0
      %v4609 = vmax.f32 %v4170, 0.0
      %v4610 = vmax.f32 %v4172, 0.0
      %v4611 = vmax.f32 %v4174, 0.0
      %v4612 = vmax.f32 %v4178, 0.0
      %v4613 = vmax.f32 %v4180, 0.0
      %v4614 = vmax.f32 %v4182, 0.0
      %v4615 = vmax.f32 %v4184, 0.0
      %v4616 = vmax.f32 %v4188, 0.0
      %v4617 = vmax.f32 %v4190, 0.0
      %v4618 = vmax.f32 %v4192, 0.0
      %v4619 = vmax.f32 %v4194, 0.0
      %v4620 = vmax.f32 %v4198, 0.0
      %v4621 = vmax.f32 %v4200, 0.0
      %v4622 = vmax.f32 %v4202, 0.0
      %v4623 = vmax.f32 %v4204, 0.0
      %v4624 = vmax.f32 %v4208, 0.0
      %v4625 = vmax.f32 %v4210, 0.0
      %v4626 = vmax.f32 %v4212, 0.0
      %v4627 = vmax.f32 %v4214, 0.0
      %v4628 = vmax.f32 %v4218, 0.0
      %v4629 = vmax.f32 %v4220, 0.0
      %v4630 = vmax.f32 %v4222, 0.0
      %v4631 = vmax.f32 %v4224, 0.0
      %v4632 = vmax.f32 %v4228, 0.0
      %v4633 = vmax.f32 %v4230, 0.0
      %v4634 = vmax.f32 %v4232, 0.0
      %v4635 = vmax.f32 %v4234, 0.0
      %v4636 = vmax.f32 %v4238, 0.0
      %v4637 = vmax.f32 %v4240, 0.0
      %v4638 = vmax.f32 %v4242, 0.0
      %v4639 = vmax.f32 %v4244, 0.0
      %v4640 = vmax.f32 %v4248, 0.0
      %v4641 = vmax.f32 %v4250, 0.0
      %v4642 = vmax.f32 %v4252, 0.0
      %v4643 = vmax.f32 %v4254, 0.0
      %v4644 = vmax.f32 %v4258, 0.0
      %v4645 = vmax.f32 %v4260, 0.0
      %v4646 = vmax.f32 %v4262, 0.0
      %v4647 = vmax.f32 %v4264, 0.0
      %v4648 = vmax.f32 %v4268, 0.0
      %v4649 = vmax.f32 %v4270, 0.0
      %v4650 = vmax.f32 %v4272, 0.0
      %v4651 = vmax.f32 %v4274, 0.0
      %v4652 = vmax.f32 %v4278, 0.0
      %v4653 = vmax.f32 %v4280, 0.0
      %v4654 = vmax.f32 %v4282, 0.0
      %v4655 = vmax.f32 %v4284, 0.0
      %v4656 = vmax.f32 %v4288, 0.0
      %v4657 = vmax.f32 %v4290, 0.0
      %v4658 = vmax.f32 %v4292, 0.0
      %v4659 = vmax.f32 %v4294, 0.0
      %v4660 = vmax.f32 %v4298, 0.0
      %v4661 = vmax.f32 %v4300, 0.0
      %v4662 = vmax.f32 %v4302, 0.0
      %v4663 = vmax.f32 %v4304, 0.0
      %v4664 = vmax.f32 %v4308, 0.0
      %v4665 = vmax.f32 %v4310, 0.0
      %v4666 = vmax.f32 %v4312, 0.0
      %v4667 = vmax.f32 %v4314, 0.0
      %v4668 = vmax.f32 %v4318, 0.0
      %v4669 = vmax.f32 %v4320, 0.0
      %v4670 = vmax.f32 %v4322, 0.0
      %v4671 = vmax.f32 %v4324, 0.0
      %v4672 = vmax.f32 %v4328, 0.0
      %v4673 = vmax.f32 %v4330, 0.0
      %v4674 = vmax.f32 %v4332, 0.0
      %v4675 = vmax.f32 %v4334, 0.0
      %v4676 = vmax.f32 %v4338, 0.0
      %v4677 = vmax.f32 %v4340, 0.0
      %v4678 = vmax.f32 %v4342, 0.0
      %v4679 = vmax.f32 %v4344, 0.0
      %v4680 = vmax.f32 %v4348, 0.0
      %v4681 = vmax.f32 %v4350, 0.0
      %v4682 = vmax.f32 %v4352, 0.0
      %v4683 = vmax.f32 %v4354, 0.0
      %v4684 = vmax.f32 %v4358, 0.0
      %v4685 = vmax.f32 %v4360, 0.0
      %v4686 = vmax.f32 %v4362, 0.0
      %v4687 = vmax.f32 %v4364, 0.0
      %v4688 = vmax.f32 %v4368, 0.0
      %v4689 = vmax.f32 %v4370, 0.0
      %v4690 = vmax.f32 %v4372, 0.0
      %v4691 = vmax.f32 %v4374, 0.0
      %v4692 = vmax.f32 %v4378, 0.0
      %v4693 = vmax.f32 %v4380, 0.0
      %v4694 = vmax.f32 %v4382, 0.0
      %v4695 = vmax.f32 %v4384, 0.0
      %v4696 = vmax.f32 %v4388, 0.0
      %v4697 = vmax.f32 %v4390, 0.0
      %v4698 = vmax.f32 %v4392, 0.0
      %v4699 = vmax.f32 %v4394, 0.0
      %v4700 = vmax.f32 %v4398, 0.0
      %v4701 = vmax.f32 %v4400, 0.0
      %v4702 = vmax.f32 %v4402, 0.0
      %v4703 = vmax.f32 %v4404, 0.0
      %v4704 = vmax.f32 %v4408, 0.0
      %v4705 = vmax.f32 %v4410, 0.0
      %v4706 = vmax.f32 %v4412, 0.0
      %v4707 = vmax.f32 %v4414, 0.0
      %v4708 = vmax.f32 %v4418, 0.0
      %v4709 = vmax.f32 %v4420, 0.0
      %v4710 = vmax.f32 %v4422, 0.0
      %v4711 = vmax.f32 %v4424, 0.0
      %v4712 = vmax.f32 %v4428, 0.0
      %v4713 = vmax.f32 %v4430, 0.0
      %v4714 = vmax.f32 %v4432, 0.0
      %v4715 = vmax.f32 %v4434, 0.0
      %v4716 = vmax.f32 %v4438, 0.0
      %v4717 = vmax.f32 %v4440, 0.0
      %v4718 = vmax.f32 %v4442, 0.0
      %v4719 = vmax.f32 %v4444, 0.0
      %v4720 = vmax.f32 %v4448, 0.0
      %v4721 = vmax.f32 %v4450, 0.0
      %v4722 = vmax.f32 %v4452, 0.0
      %v4723 = vmax.f32 %v4454, 0.0
      %v4724 = vmax.f32 %v4458, 0.0
      %v4725 = vmax.f32 %v4460, 0.0
      %v4726 = vmax.f32 %v4462, 0.0
      %v4727 = vmax.f32 %v4464, 0.0
      %v4728 = vmax.f32 %v4468, 0.0
      %v4729 = vmax.f32 %v4470, 0.0
      %v4730 = vmax.f32 %v4472, 0.0
      %v4731 = vmax.f32 %v4474, 0.0
      %v4732 = vpack.c.bf16 %v4478, %v4476
      %v4733 = vpack.c.bf16 %v4479, %v4477
      %v4734 = vpack.c.bf16 %v4482, %v4480
      %v4735 = vpack.c.bf16 %v4483, %v4481
      %v4736 = vpack.c.bf16 %v4486, %v4484
      %v4737 = vpack.c.bf16 %v4487, %v4485
      %v4738 = vpack.c.bf16 %v4490, %v4488
      %v4739 = vpack.c.bf16 %v4491, %v4489
      %v4740 = vpack.c.bf16 %v4494, %v4492
      %v4741 = vpack.c.bf16 %v4495, %v4493
      %v4742 = vpack.c.bf16 %v4498, %v4496
      %v4743 = vpack.c.bf16 %v4499, %v4497
      %v4744 = vpack.c.bf16 %v4502, %v4500
      %v4745 = vpack.c.bf16 %v4503, %v4501
      %v4746 = vpack.c.bf16 %v4506, %v4504
      %v4747 = vpack.c.bf16 %v4507, %v4505
      %v4748 = vpack.c.bf16 %v4510, %v4508
      %v4749 = vpack.c.bf16 %v4511, %v4509
      %v4750 = vpack.c.bf16 %v4514, %v4512
      %v4751 = vpack.c.bf16 %v4515, %v4513
      %v4752 = vpack.c.bf16 %v4518, %v4516
      %v4753 = vpack.c.bf16 %v4519, %v4517
      %v4754 = vpack.c.bf16 %v4522, %v4520
      %v4755 = vpack.c.bf16 %v4523, %v4521
      %v4756 = vpack.c.bf16 %v4526, %v4524
      %v4757 = vpack.c.bf16 %v4527, %v4525
      %v4758 = vpack.c.bf16 %v4530, %v4528
      %v4759 = vpack.c.bf16 %v4531, %v4529
      %v4760 = vpack.c.bf16 %v4534, %v4532
      %v4761 = vpack.c.bf16 %v4535, %v4533
      %v4762 = vpack.c.bf16 %v4538, %v4536
      %v4763 = vpack.c.bf16 %v4539, %v4537
      %v4764 = vpack.c.bf16 %v4542, %v4540
      %v4765 = vpack.c.bf16 %v4543, %v4541
      %v4766 = vpack.c.bf16 %v4546, %v4544
      %v4767 = vpack.c.bf16 %v4547, %v4545
      %v4768 = vpack.c.bf16 %v4550, %v4548
      %v4769 = vpack.c.bf16 %v4551, %v4549
      %v4770 = vpack.c.bf16 %v4554, %v4552
      %v4771 = vpack.c.bf16 %v4555, %v4553
      %v4772 = vpack.c.bf16 %v4558, %v4556
      %v4773 = vpack.c.bf16 %v4559, %v4557
      %v4774 = vpack.c.bf16 %v4562, %v4560
      %v4775 = vpack.c.bf16 %v4563, %v4561
      %v4776 = vpack.c.bf16 %v4566, %v4564
      %v4777 = vpack.c.bf16 %v4567, %v4565
      %v4778 = vpack.c.bf16 %v4570, %v4568
      %v4779 = vpack.c.bf16 %v4571, %v4569
      %v4780 = vpack.c.bf16 %v4574, %v4572
      %v4781 = vpack.c.bf16 %v4575, %v4573
      %v4782 = vpack.c.bf16 %v4578, %v4576
      %v4783 = vpack.c.bf16 %v4579, %v4577
      %v4784 = vpack.c.bf16 %v4582, %v4580
      %v4785 = vpack.c.bf16 %v4583, %v4581
      %v4786 = vpack.c.bf16 %v4586, %v4584
      %v4787 = vpack.c.bf16 %v4587, %v4585
      %v4788 = vpack.c.bf16 %v4590, %v4588
      %v4789 = vpack.c.bf16 %v4591, %v4589
      %v4790 = vpack.c.bf16 %v4594, %v4592
      %v4791 = vpack.c.bf16 %v4595, %v4593
      %v4792 = vpack.c.bf16 %v4598, %v4596
      %v4793 = vpack.c.bf16 %v4599, %v4597
      %v4794 = vpack.c.bf16 %v4602, %v4600
      %v4795 = vpack.c.bf16 %v4603, %v4601
      %v4796 = vpack.c.bf16 %v4606, %v4604
      %v4797 = vpack.c.bf16 %v4607, %v4605
      %v4798 = vpack.c.bf16 %v4610, %v4608
      %v4799 = vpack.c.bf16 %v4611, %v4609
      %v4800 = vpack.c.bf16 %v4614, %v4612
      %v4801 = vpack.c.bf16 %v4615, %v4613
      %v4802 = vpack.c.bf16 %v4618, %v4616
      %v4803 = vpack.c.bf16 %v4619, %v4617
      %v4804 = vpack.c.bf16 %v4622, %v4620
      %v4805 = vpack.c.bf16 %v4623, %v4621
      %v4806 = vpack.c.bf16 %v4626, %v4624
      %v4807 = vpack.c.bf16 %v4627, %v4625
      %v4808 = vpack.c.bf16 %v4630, %v4628
      %v4809 = vpack.c.bf16 %v4631, %v4629
      %v4810 = vpack.c.bf16 %v4634, %v4632
      %v4811 = vpack.c.bf16 %v4635, %v4633
      %v4812 = vpack.c.bf16 %v4638, %v4636
      %v4813 = vpack.c.bf16 %v4639, %v4637
      %v4814 = vpack.c.bf16 %v4642, %v4640
      %v4815 = vpack.c.bf16 %v4643, %v4641
      %v4816 = vpack.c.bf16 %v4646, %v4644
      %v4817 = vpack.c.bf16 %v4647, %v4645
      %v4818 = vpack.c.bf16 %v4650, %v4648
      %v4819 = vpack.c.bf16 %v4651, %v4649
      %v4820 = vpack.c.bf16 %v4654, %v4652
      %v4821 = vpack.c.bf16 %v4655, %v4653
      %v4822 = vpack.c.bf16 %v4658, %v4656
      %v4823 = vpack.c.bf16 %v4659, %v4657
      %v4824 = vpack.c.bf16 %v4662, %v4660
      %v4825 = vpack.c.bf16 %v4663, %v4661
      %v4826 = vpack.c.bf16 %v4666, %v4664
      %v4827 = vpack.c.bf16 %v4667, %v4665
      %v4828 = vpack.c.bf16 %v4670, %v4668
      %v4829 = vpack.c.bf16 %v4671, %v4669
      %v4830 = vpack.c.bf16 %v4674, %v4672
      %v4831 = vpack.c.bf16 %v4675, %v4673
      %v4832 = vpack.c.bf16 %v4678, %v4676
      %v4833 = vpack.c.bf16 %v4679, %v4677
      %v4834 = vpack.c.bf16 %v4682, %v4680
      %v4835 = vpack.c.bf16 %v4683, %v4681
      %v4836 = vpack.c.bf16 %v4686, %v4684
      %v4837 = vpack.c.bf16 %v4687, %v4685
      %v4838 = vpack.c.bf16 %v4690, %v4688
      %v4839 = vpack.c.bf16 %v4691, %v4689
      %v4840 = vpack.c.bf16 %v4694, %v4692
      %v4841 = vpack.c.bf16 %v4695, %v4693
      %v4842 = vpack.c.bf16 %v4698, %v4696
      %v4843 = vpack.c.bf16 %v4699, %v4697
      %v4844 = vpack.c.bf16 %v4702, %v4700
      %v4845 = vpack.c.bf16 %v4703, %v4701
      %v4846 = vpack.c.bf16 %v4706, %v4704
      %v4847 = vpack.c.bf16 %v4707, %v4705
      %v4848 = vpack.c.bf16 %v4710, %v4708
      %v4849 = vpack.c.bf16 %v4711, %v4709
      %v4850 = vpack.c.bf16 %v4714, %v4712
      %v4851 = vpack.c.bf16 %v4715, %v4713
      %v4852 = vpack.c.bf16 %v4718, %v4716
      %v4853 = vpack.c.bf16 %v4719, %v4717
      %v4854 = vpack.c.bf16 %v4722, %v4720
      %v4855 = vpack.c.bf16 %v4723, %v4721
      %v4856 = vpack.c.bf16 %v4726, %v4724
      %v4857 = vpack.c.bf16 %v4727, %v4725
      %v4858 = vpack.c.bf16 %v4730, %v4728
      %v4859 = vpack.c.bf16 %v4731, %v4729
      %v4860 = vld [vmem:[%s7] sm:$0xff]
      %v4861 = vld [vmem:[%s7 + $0x8] sm:$0xff]
      %v4862 = vld [vmem:[%s7 + $0x10] sm:$0xff]
      %v4863 = vld [vmem:[%s7 + $0x18] sm:$0xff]
      %v4864 = vld [vmem:[%s7 + $0x20] sm:$0xff]
      %v4865 = vld [vmem:[%s7 + $0x28] sm:$0xff]
      %v4866 = vld [vmem:[%s7 + $0x30] sm:$0xff]
      %v4867 = vld [vmem:[%s7 + $0x38] sm:$0xff]
      %v4868 = vld [vmem:[%s7 + $0x40] sm:$0xff]
      %v4869 = vld [vmem:[%s7 + $0x48] sm:$0xff]
      %v4870 = vld [vmem:[%s7 + $0x50] sm:$0xff]
      %v4871 = vld [vmem:[%s7 + $0x58] sm:$0xff]
      %v4872 = vld [vmem:[%s7 + $0x60] sm:$0xff]
      %v4873 = vld [vmem:[%s7 + $0x68] sm:$0xff]
      %v4874 = vld [vmem:[%s7 + $0x70] sm:$0xff]
      %v4875 = vld [vmem:[%s7 + $0x78] sm:$0xff]
      %v4876 = vld [vmem:[%s7 + $0x80] sm:$0xff]
      %v4877 = vld [vmem:[%s7 + $0x88] sm:$0xff]
      %v4878 = vld [vmem:[%s7 + $0x90] sm:$0xff]
      %v4879 = vld [vmem:[%s7 + $0x98] sm:$0xff]
      %v4880 = vld [vmem:[%s7 + $0xa0] sm:$0xff]
      %v4881 = vld [vmem:[%s7 + $0xa8] sm:$0xff]
      %v4882 = vld [vmem:[%s7 + $0xb0] sm:$0xff]
      %v4883 = vld [vmem:[%s7 + $0xb8] sm:$0xff]
      %v4884 = vld [vmem:[%s7 + $0xc0] sm:$0xff]
      %v4885 = vld [vmem:[%s7 + $0xc8] sm:$0xff]
      %v4886 = vld [vmem:[%s7 + $0xd0] sm:$0xff]
      %v4887 = vld [vmem:[%s7 + $0xd8] sm:$0xff]
      %v4888 = vld [vmem:[%s7 + $0xe0] sm:$0xff]
      %v4889 = vld [vmem:[%s7 + $0xe8] sm:$0xff]
      %v4890 = vld [vmem:[%s7 + $0xf0] sm:$0xff]
      %v4891 = vld [vmem:[%s7 + $0xf8] sm:$0xff]
      %v4892 = vld [vmem:[%s8] sm:$0x3]
      %v4894 = vlaneseq
      %v4895 = vshrl.u32 %v4894, 7
      %v4896 = vsub.s32 0, %v4895
      %v4897 = vrot.slane %v4892, %v4896
      %v4898 = vlaneseq
      %v4899 = vshrl.u32 %v4898, 7
      %v4900 = vsub.s32 1, %v4899
      %v4901 = vrot.slane %v4892, %v4900
      %v4936 = vunpack.c.l.b16 %v4860
      %v4937 = vunpack.c.h.b16 %v4860
      %v4938 = vunpack.c.l.b16 %v4861
      %v4939 = vunpack.c.h.b16 %v4861
      %v4940 = vunpack.c.l.b16 %v4862
      %v4941 = vunpack.c.h.b16 %v4862
      %v4942 = vunpack.c.l.b16 %v4863
      %v4943 = vunpack.c.h.b16 %v4863
      %v4944 = vunpack.c.l.b16 %v4864
      %v4945 = vunpack.c.h.b16 %v4864
      %v4946 = vunpack.c.l.b16 %v4865
      %v4947 = vunpack.c.h.b16 %v4865
      %v4948 = vunpack.c.l.b16 %v4866
      %v4949 = vunpack.c.h.b16 %v4866
      %v4950 = vunpack.c.l.b16 %v4867
      %v4951 = vunpack.c.h.b16 %v4867
      %v4952 = vunpack.c.l.b16 %v4868
      %v4953 = vunpack.c.h.b16 %v4868
      %v4954 = vunpack.c.l.b16 %v4869
      %v4955 = vunpack.c.h.b16 %v4869
      %v4956 = vunpack.c.l.b16 %v4870
      %v4957 = vunpack.c.h.b16 %v4870
      %v4958 = vunpack.c.l.b16 %v4871
      %v4959 = vunpack.c.h.b16 %v4871
      %v4960 = vunpack.c.l.b16 %v4872
      %v4961 = vunpack.c.h.b16 %v4872
      %v4962 = vunpack.c.l.b16 %v4873
      %v4963 = vunpack.c.h.b16 %v4873
      %v4964 = vunpack.c.l.b16 %v4874
      %v4965 = vunpack.c.h.b16 %v4874
      %v4966 = vunpack.c.l.b16 %v4875
      %v4967 = vunpack.c.h.b16 %v4875
      %v4968 = vunpack.c.l.b16 %v4876
      %v4969 = vunpack.c.h.b16 %v4876
      %v4970 = vunpack.c.l.b16 %v4877
      %v4971 = vunpack.c.h.b16 %v4877
      %v4972 = vunpack.c.l.b16 %v4878
      %v4973 = vunpack.c.h.b16 %v4878
      %v4974 = vunpack.c.l.b16 %v4879
      %v4975 = vunpack.c.h.b16 %v4879
      %v4976 = vunpack.c.l.b16 %v4880
      %v4977 = vunpack.c.h.b16 %v4880
      %v4978 = vunpack.c.l.b16 %v4881
      %v4979 = vunpack.c.h.b16 %v4881
      %v4980 = vunpack.c.l.b16 %v4882
      %v4981 = vunpack.c.h.b16 %v4882
      %v4982 = vunpack.c.l.b16 %v4883
      %v4983 = vunpack.c.h.b16 %v4883
      %v4984 = vunpack.c.l.b16 %v4884
      %v4985 = vunpack.c.h.b16 %v4884
      %v4986 = vunpack.c.l.b16 %v4885
      %v4987 = vunpack.c.h.b16 %v4885
      %v4988 = vunpack.c.l.b16 %v4886
      %v4989 = vunpack.c.h.b16 %v4886
      %v4990 = vunpack.c.l.b16 %v4887
      %v4991 = vunpack.c.h.b16 %v4887
      %v4992 = vunpack.c.l.b16 %v4888
      %v4993 = vunpack.c.h.b16 %v4888
      %v4994 = vunpack.c.l.b16 %v4889
      %v4995 = vunpack.c.h.b16 %v4889
      %v4996 = vunpack.c.l.b16 %v4890
      %v4997 = vunpack.c.h.b16 %v4890
      %v4998 = vunpack.c.l.b16 %v4891
      %v4999 = vunpack.c.h.b16 %v4891
      %v5000 = vpack.c.b16 %v4938, %v4936
      %v5001 = vpack.c.b16 %v4939, %v4937
      %v5002 = vpack.c.b16 %v4942, %v4940
      %v5003 = vpack.c.b16 %v4943, %v4941
      %v5004 = vpack.c.b16 %v4946, %v4944
      %v5005 = vpack.c.b16 %v4947, %v4945
      %v5006 = vpack.c.b16 %v4950, %v4948
      %v5007 = vpack.c.b16 %v4951, %v4949
      %v5008 = vpack.c.b16 %v4954, %v4952
      %v5009 = vpack.c.b16 %v4955, %v4953
      %v5010 = vpack.c.b16 %v4958, %v4956
      %v5011 = vpack.c.b16 %v4959, %v4957
      %v5012 = vpack.c.b16 %v4962, %v4960
      %v5013 = vpack.c.b16 %v4963, %v4961
      %v5014 = vpack.c.b16 %v4966, %v4964
      %v5015 = vpack.c.b16 %v4967, %v4965
      %v5016 = vpack.c.b16 %v4970, %v4968
      %v5017 = vpack.c.b16 %v4971, %v4969
      %v5018 = vpack.c.b16 %v4974, %v4972
      %v5019 = vpack.c.b16 %v4975, %v4973
      %v5020 = vpack.c.b16 %v4978, %v4976
      %v5021 = vpack.c.b16 %v4979, %v4977
      %v5022 = vpack.c.b16 %v4982, %v4980
      %v5023 = vpack.c.b16 %v4983, %v4981
      %v5024 = vpack.c.b16 %v4986, %v4984
      %v5025 = vpack.c.b16 %v4987, %v4985
      %v5026 = vpack.c.b16 %v4990, %v4988
      %v5027 = vpack.c.b16 %v4991, %v4989
      %v5028 = vpack.c.b16 %v4994, %v4992
      %v5029 = vpack.c.b16 %v4995, %v4993
      %v5030 = vpack.c.b16 %v4998, %v4996
      %v5031 = vpack.c.b16 %v4999, %v4997
      %5064 = vmatprep.subr.bf16.mxu0 %v5001
      %5065 = vmatpush1.bf16.msra.mxu0 %v5000
      %5066 = vmatprep.subr.bf16.mxu0 %v5003
      %5067 = vmatpush1.bf16.msra.mxu0 %v5002
      %5068 = vmatprep.subr.bf16.mxu0 %v5005
      %5069 = vmatpush1.bf16.msra.mxu0 %v5004
      %5070 = vmatprep.subr.bf16.mxu0 %v5007
      %5071 = vmatpush1.bf16.msra.mxu0 %v5006
      %5072 = vmatprep.subr.bf16.mxu0 %v5009
      %5073 = vmatpush1.bf16.msra.mxu0 %v5008
      %5074 = vmatprep.subr.bf16.mxu0 %v5011
      %5075 = vmatpush1.bf16.msra.mxu0 %v5010
      %5076 = vmatprep.subr.bf16.mxu0 %v5013
      %5077 = vmatpush1.bf16.msra.mxu0 %v5012
      %5078 = vmatprep.subr.bf16.mxu0 %v5015
      %5079 = vmatpush1.bf16.msra.mxu0 %v5014
      %5080 = vmatprep.subr.bf16.mxu0 %v5017
      %5081 = vmatpush1.bf16.msra.mxu0 %v5016
      %5082 = vmatprep.subr.bf16.mxu0 %v5019
      %5083 = vmatpush1.bf16.msra.mxu0 %v5018
      %5084 = vmatprep.subr.bf16.mxu0 %v5021
      %5085 = vmatpush1.bf16.msra.mxu0 %v5020
      %5086 = vmatprep.subr.bf16.mxu0 %v5023
      %5087 = vmatpush1.bf16.msra.mxu0 %v5022
      %5088 = vmatprep.subr.bf16.mxu0 %v5025
      %5089 = vmatpush1.bf16.msra.mxu0 %v5024
      %5090 = vmatprep.subr.bf16.mxu0 %v5027
      %5091 = vmatpush1.bf16.msra.mxu0 %v5026
      %5092 = vmatprep.subr.bf16.mxu0 %v5029
      %5093 = vmatpush1.bf16.msra.mxu0 %v5028
      %5094 = vmatprep.subr.bf16.mxu0 %v5031
      %5095 = vmatpush1.bf16.msra.mxu0 %v5030
      %5096 = vmatprep.mubr.bf16.mxu0 %v4733
      %5097 = vmatmul.mubr.bf16.gmra.mrb[0].mxu0 %v4732
      %v5098 = vpop.f32.mrb[0].mxu0
      %v5099 = vadd.f32 %v4897, %v5098
      %v5100 = vpop.f32.mrb[0].mxu0
      %v5101 = vadd.f32 %v4901, %v5100
      %v5102 = vpop.f32.mrb[0].mxu0
      %v5103 = vadd.f32 %v4897, %v5102
      %v5104 = vpop.f32.mrb[0].mxu0
      %v5105 = vadd.f32 %v4901, %v5104
      %5106 = vmatprep.mubr.bf16.mxu0 %v4735
      %5107 = vmatmul.mubr.bf16.gmra.mrb[0].mxu0 %v4734
      %v5108 = vpop.f32.mrb[0].mxu0
      %v5109 = vadd.f32 %v4897, %v5108
      %v5110 = vpop.f32.mrb[0].mxu0
      %v5111 = vadd.f32 %v4901, %v5110
      %v5112 = vpop.f32.mrb[0].mxu0
      %v5113 = vadd.f32 %v4897, %v5112
      %v5114 = vpop.f32.mrb[0].mxu0
      %v5115 = vadd.f32 %v4901, %v5114
      %5116 = vmatprep.mubr.bf16.mxu0 %v4737
      %5117 = vmatmul.mubr.bf16.gmra.mrb[0].mxu0 %v4736
      %v5118 = vpop.f32.mrb[0].mxu0
      %v5119 = vadd.f32 %v4897, %v5118
      %v5120 = vpop.f32.mrb[0].mxu0
      %v5121 = vadd.f32 %v4901, %v5120
      %v5122 = vpop.f32.mrb[0].mxu0
      %v5123 = vadd.f32 %v4897, %v5122
      %v5124 = vpop.f32.mrb[0].mxu0
      %v5125 = vadd.f32 %v4901, %v5124
      %5126 = vmatprep.mubr.bf16.mxu0 %v4739
      %5127 = vmatmul.mubr.bf16.gmra.mrb[0].mxu0 %v4738
      %v5128 = vpop.f32.mrb[0].mxu0
      %v5129 = vadd.f32 %v4897, %v5128
      %v5130 = vpop.f32.mrb[0].mxu0
      %v5131 = vadd.f32 %v4901, %v5130
      %v5132 = vpop.f32.mrb[0].mxu0
      %v5133 = vadd.f32 %v4897, %v5132
      %v5134 = vpop.f32.mrb[0].mxu0
      %v5135 = vadd.f32 %v4901, %v5134
      %5136 = vmatprep.mubr.bf16.mxu0 %v4741
      %5137 = vmatmul.mubr.bf16.gmra.mrb[0].mxu0 %v4740
      %v5138 = vpop.f32.mrb[0].mxu0
      %v5139 = vadd.f32 %v4897, %v5138
      %v5140 = vpop.f32.mrb[0].mxu0
      %v5141 = vadd.f32 %v4901, %v5140
      %v5142 = vpop.f32.mrb[0].mxu0
      %v5143 = vadd.f32 %v4897, %v5142
      %v5144 = vpop.f32.mrb[0].mxu0
      %v5145 = vadd.f32 %v4901, %v5144
      %5146 = vmatprep.mubr.bf16.mxu0 %v4743
      %5147 = vmatmul.mubr.bf16.gmra.mrb[0].mxu0 %v4742
      %v5148 = vpop.f32.mrb[0].mxu0
      %v5149 = vadd.f32 %v4897, %v5148
      %v5150 = vpop.f32.mrb[0].mxu0
      %v5151 = vadd.f32 %v4901, %v5150
      %v5152 = vpop.f32.mrb[0].mxu0
      %v5153 = vadd.f32 %v4897, %v5152
      %v5154 = vpop.f32.mrb[0].mxu0
      %v5155 = vadd.f32 %v4901, %v5154
      %5156 = vmatprep.mubr.bf16.mxu0 %v4745
      %5157 = vmatmul.mubr.bf16.gmra.mrb[0].mxu0 %v4744
      %v5158 = vpop.f32.mrb[0].mxu0
      %v5159 = vadd.f32 %v4897, %v5158
      %v5160 = vpop.f32.mrb[0].mxu0
      %v5161 = vadd.f32 %v4901, %v5160
      %v5162 = vpop.f32.mrb[0].mxu0
      %v5163 = vadd.f32 %v4897, %v5162
      %v5164 = vpop.f32.mrb[0].mxu0
      %v5165 = vadd.f32 %v4901, %v5164
      %5166 = vmatprep.mubr.bf16.mxu0 %v4747
      %5167 = vmatmul.mubr.bf16.gmra.mrb[0].mxu0 %v4746
      %v5168 = vpop.f32.mrb[0].mxu0
      %v5169 = vadd.f32 %v4897, %v5168
      %v5170 = vpop.f32.mrb[0].mxu0
      %v5171 = vadd.f32 %v4901, %v5170
      %v5172 = vpop.f32.mrb[0].mxu0
      %v5173 = vadd.f32 %v4897, %v5172
      %v5174 = vpop.f32.mrb[0].mxu0
      %v5175 = vadd.f32 %v4901, %v5174
      %5176 = vmatprep.mubr.bf16.mxu0 %v4749
      %5177 = vmatmul.mubr.bf16.gmra.mrb[0].mxu0 %v4748
      %v5178 = vpop.f32.mrb[0].mxu0
      %v5179 = vadd.f32 %v4897, %v5178
      %v5180 = vpop.f32.mrb[0].mxu0
      %v5181 = vadd.f32 %v4901, %v5180
      %v5182 = vpop.f32.mrb[0].mxu0
      %v5183 = vadd.f32 %v4897, %v5182
      %v5184 = vpop.f32.mrb[0].mxu0
      %v5185 = vadd.f32 %v4901, %v5184
      %5186 = vmatprep.mubr.bf16.mxu0 %v4751
      %5187 = vmatmul.mubr.bf16.gmra.mrb[0].mxu0 %v4750
      %v5188 = vpop.f32.mrb[0].mxu0
      %v5189 = vadd.f32 %v4897, %v5188
      %v5190 = vpop.f32.mrb[0].mxu0
      %v5191 = vadd.f32 %v4901, %v5190
      %v5192 = vpop.f32.mrb[0].mxu0
      %v5193 = vadd.f32 %v4897, %v5192
      %v5194 = vpop.f32.mrb[0].mxu0
      %v5195 = vadd.f32 %v4901, %v5194
      %5196 = vmatprep.mubr.bf16.mxu0 %v4753
      %5197 = vmatmul.mubr.bf16.gmra.mrb[0].mxu0 %v4752
      %v5198 = vpop.f32.mrb[0].mxu0
      %v5199 = vadd.f32 %v4897, %v5198
      %v5200 = vpop.f32.mrb[0].mxu0
      %v5201 = vadd.f32 %v4901, %v5200
      %v5202 = vpop.f32.mrb[0].mxu0
      %v5203 = vadd.f32 %v4897, %v5202
      %v5204 = vpop.f32.mrb[0].mxu0
      %v5205 = vadd.f32 %v4901, %v5204
      %5206 = vmatprep.mubr.bf16.mxu0 %v4755
      %5207 = vmatmul.mubr.bf16.gmra.mrb[0].mxu0 %v4754
      %v5208 = vpop.f32.mrb[0].mxu0
      %v5209 = vadd.f32 %v4897, %v5208
      %v5210 = vpop.f32.mrb[0].mxu0
      %v5211 = vadd.f32 %v4901, %v5210
      %v5212 = vpop.f32.mrb[0].mxu0
      %v5213 = vadd.f32 %v4897, %v5212
      %v5214 = vpop.f32.mrb[0].mxu0
      %v5215 = vadd.f32 %v4901, %v5214
      %5216 = vmatprep.mubr.bf16.mxu0 %v4757
      %5217 = vmatmul.mubr.bf16.gmra.mrb[0].mxu0 %v4756
      %v5218 = vpop.f32.mrb[0].mxu0
      %v5219 = vadd.f32 %v4897, %v5218
      %v5220 = vpop.f32.mrb[0].mxu0
      %v5221 = vadd.f32 %v4901, %v5220
      %v5222 = vpop.f32.mrb[0].mxu0
      %v5223 = vadd.f32 %v4897, %v5222
      %v5224 = vpop.f32.mrb[0].mxu0
      %v5225 = vadd.f32 %v4901, %v5224
      %5226 = vmatprep.mubr.bf16.mxu0 %v4759
      %5227 = vmatmul.mubr.bf16.gmra.mrb[0].mxu0 %v4758
      %v5228 = vpop.f32.mrb[0].mxu0
      %v5229 = vadd.f32 %v4897, %v5228
      %v5230 = vpop.f32.mrb[0].mxu0
      %v5231 = vadd.f32 %v4901, %v5230
      %v5232 = vpop.f32.mrb[0].mxu0
      %v5233 = vadd.f32 %v4897, %v5232
      %v5234 = vpop.f32.mrb[0].mxu0
      %v5235 = vadd.f32 %v4901, %v5234
      %5236 = vmatprep.mubr.bf16.mxu0 %v4761
      %5237 = vmatmul.mubr.bf16.gmra.mrb[0].mxu0 %v4760
      %v5238 = vpop.f32.mrb[0].mxu0
      %v5239 = vadd.f32 %v4897, %v5238
      %v5240 = vpop.f32.mrb[0].mxu0
      %v5241 = vadd.f32 %v4901, %v5240
      %v5242 = vpop.f32.mrb[0].mxu0
      %v5243 = vadd.f32 %v4897, %v5242
      %v5244 = vpop.f32.mrb[0].mxu0
      %v5245 = vadd.f32 %v4901, %v5244
      %5246 = vmatprep.mubr.bf16.mxu0 %v4763
      %5247 = vmatmul.mubr.bf16.gmra.mrb[0].mxu0 %v4762
      %v5248 = vpop.f32.mrb[0].mxu0
      %v5249 = vadd.f32 %v4897, %v5248
      %v5250 = vpop.f32.mrb[0].mxu0
      %v5251 = vadd.f32 %v4901, %v5250
      %v5252 = vpop.f32.mrb[0].mxu0
      %v5253 = vadd.f32 %v4897, %v5252
      %v5254 = vpop.f32.mrb[0].mxu0
      %v5255 = vadd.f32 %v4901, %v5254
      %5256 = vmatprep.mubr.bf16.mxu0 %v4765
      %5257 = vmatmul.mubr.bf16.gmra.mrb[0].mxu0 %v4764
      %v5258 = vpop.f32.mrb[0].mxu0
      %v5259 = vadd.f32 %v4897, %v5258
      %v5260 = vpop.f32.mrb[0].mxu0
      %v5261 = vadd.f32 %v4901, %v5260
      %v5262 = vpop.f32.mrb[0].mxu0
      %v5263 = vadd.f32 %v4897, %v5262
      %v5264 = vpop.f32.mrb[0].mxu0
      %v5265 = vadd.f32 %v4901, %v5264
      %5266 = vmatprep.mubr.bf16.mxu0 %v4767
      %5267 = vmatmul.mubr.bf16.gmra.mrb[0].mxu0 %v4766
      %v5268 = vpop.f32.mrb[0].mxu0
      %v5269 = vadd.f32 %v4897, %v5268
      %v5270 = vpop.f32.mrb[0].mxu0
      %v5271 = vadd.f32 %v4901, %v5270
      %v5272 = vpop.f32.mrb[0].mxu0
      %v5273 = vadd.f32 %v4897, %v5272
      %v5274 = vpop.f32.mrb[0].mxu0
      %v5275 = vadd.f32 %v4901, %v5274
      %5276 = vmatprep.mubr.bf16.mxu0 %v4769
      %5277 = vmatmul.mubr.bf16.gmra.mrb[0].mxu0 %v4768
      %v5278 = vpop.f32.mrb[0].mxu0
      %v5279 = vadd.f32 %v4897, %v5278
      %v5280 = vpop.f32.mrb[0].mxu0
      %v5281 = vadd.f32 %v4901, %v5280
      %v5282 = vpop.f32.mrb[0].mxu0
      %v5283 = vadd.f32 %v4897, %v5282
      %v5284 = vpop.f32.mrb[0].mxu0
      %v5285 = vadd.f32 %v4901, %v5284
      %5286 = vmatprep.mubr.bf16.mxu0 %v4771
      %5287 = vmatmul.mubr.bf16.gmra.mrb[0].mxu0 %v4770
      %v5288 = vpop.f32.mrb[0].mxu0
      %v5289 = vadd.f32 %v4897, %v5288
      %v5290 = vpop.f32.mrb[0].mxu0
      %v5291 = vadd.f32 %v4901, %v5290
      %v5292 = vpop.f32.mrb[0].mxu0
      %v5293 = vadd.f32 %v4897, %v5292
      %v5294 = vpop.f32.mrb[0].mxu0
      %v5295 = vadd.f32 %v4901, %v5294
      %5296 = vmatprep.mubr.bf16.mxu0 %v4773
      %5297 = vmatmul.mubr.bf16.gmra.mrb[0].mxu0 %v4772
      %v5298 = vpop.f32.mrb[0].mxu0
      %v5299 = vadd.f32 %v4897, %v5298
      %v5300 = vpop.f32.mrb[0].mxu0
      %v5301 = vadd.f32 %v4901, %v5300
      %v5302 = vpop.f32.mrb[0].mxu0
      %v5303 = vadd.f32 %v4897, %v5302
      %v5304 = vpop.f32.mrb[0].mxu0
      %v5305 = vadd.f32 %v4901, %v5304
      %5306 = vmatprep.mubr.bf16.mxu0 %v4775
      %5307 = vmatmul.mubr.bf16.gmra.mrb[0].mxu0 %v4774
      %v5308 = vpop.f32.mrb[0].mxu0
      %v5309 = vadd.f32 %v4897, %v5308
      %v5310 = vpop.f32.mrb[0].mxu0
      %v5311 = vadd.f32 %v4901, %v5310
      %v5312 = vpop.f32.mrb[0].mxu0
      %v5313 = vadd.f32 %v4897, %v5312
      %v5314 = vpop.f32.mrb[0].mxu0
      %v5315 = vadd.f32 %v4901, %v5314
      %5316 = vmatprep.mubr.bf16.mxu0 %v4777
      %5317 = vmatmul.mubr.bf16.gmra.mrb[0].mxu0 %v4776
      %v5318 = vpop.f32.mrb[0].mxu0
      %v5319 = vadd.f32 %v4897, %v5318
      %v5320 = vpop.f32.mrb[0].mxu0
      %v5321 = vadd.f32 %v4901, %v5320
      %v5322 = vpop.f32.mrb[0].mxu0
      %v5323 = vadd.f32 %v4897, %v5322
      %v5324 = vpop.f32.mrb[0].mxu0
      %v5325 = vadd.f32 %v4901, %v5324
      %5326 = vmatprep.mubr.bf16.mxu0 %v4779
      %5327 = vmatmul.mubr.bf16.gmra.mrb[0].mxu0 %v4778
      %v5328 = vpop.f32.mrb[0].mxu0
      %v5329 = vadd.f32 %v4897, %v5328
      %v5330 = vpop.f32.mrb[0].mxu0
      %v5331 = vadd.f32 %v4901, %v5330
      %v5332 = vpop.f32.mrb[0].mxu0
      %v5333 = vadd.f32 %v4897, %v5332
      %v5334 = vpop.f32.mrb[0].mxu0
      %v5335 = vadd.f32 %v4901, %v5334
      %5336 = vmatprep.mubr.bf16.mxu0 %v4781
      %5337 = vmatmul.mubr.bf16.gmra.mrb[0].mxu0 %v4780
      %v5338 = vpop.f32.mrb[0].mxu0
      %v5339 = vadd.f32 %v4897, %v5338
      %v5340 = vpop.f32.mrb[0].mxu0
      %v5341 = vadd.f32 %v4901, %v5340
      %v5342 = vpop.f32.mrb[0].mxu0
      %v5343 = vadd.f32 %v4897, %v5342
      %v5344 = vpop.f32.mrb[0].mxu0
      %v5345 = vadd.f32 %v4901, %v5344
      %5346 = vmatprep.mubr.bf16.mxu0 %v4783
      %5347 = vmatmul.mubr.bf16.gmra.mrb[0].mxu0 %v4782
      %v5348 = vpop.f32.mrb[0].mxu0
      %v5349 = vadd.f32 %v4897, %v5348
      %v5350 = vpop.f32.mrb[0].mxu0
      %v5351 = vadd.f32 %v4901, %v5350
      %v5352 = vpop.f32.mrb[0].mxu0
      %v5353 = vadd.f32 %v4897, %v5352
      %v5354 = vpop.f32.mrb[0].mxu0
      %v5355 = vadd.f32 %v4901, %v5354
      %5356 = vmatprep.mubr.bf16.mxu0 %v4785
      %5357 = vmatmul.mubr.bf16.gmra.mrb[0].mxu0 %v4784
      %v5358 = vpop.f32.mrb[0].mxu0
      %v5359 = vadd.f32 %v4897, %v5358
      %v5360 = vpop.f32.mrb[0].mxu0
      %v5361 = vadd.f32 %v4901, %v5360
      %v5362 = vpop.f32.mrb[0].mxu0
      %v5363 = vadd.f32 %v4897, %v5362
      %v5364 = vpop.f32.mrb[0].mxu0
      %v5365 = vadd.f32 %v4901, %v5364
      %5366 = vmatprep.mubr.bf16.mxu0 %v4787
      %5367 = vmatmul.mubr.bf16.gmra.mrb[0].mxu0 %v4786
      %v5368 = vpop.f32.mrb[0].mxu0
      %v5369 = vadd.f32 %v4897, %v5368
      %v5370 = vpop.f32.mrb[0].mxu0
      %v5371 = vadd.f32 %v4901, %v5370
      %v5372 = vpop.f32.mrb[0].mxu0
      %v5373 = vadd.f32 %v4897, %v5372
      %v5374 = vpop.f32.mrb[0].mxu0
      %v5375 = vadd.f32 %v4901, %v5374
      %5376 = vmatprep.mubr.bf16.mxu0 %v4789
      %5377 = vmatmul.mubr.bf16.gmra.mrb[0].mxu0 %v4788
      %v5378 = vpop.f32.mrb[0].mxu0
      %v5379 = vadd.f32 %v4897, %v5378
      %v5380 = vpop.f32.mrb[0].mxu0
      %v5381 = vadd.f32 %v4901, %v5380
      %v5382 = vpop.f32.mrb[0].mxu0
      %v5383 = vadd.f32 %v4897, %v5382
      %v5384 = vpop.f32.mrb[0].mxu0
      %v5385 = vadd.f32 %v4901, %v5384
      %5386 = vmatprep.mubr.bf16.mxu0 %v4791
      %5387 = vmatmul.mubr.bf16.gmra.mrb[0].mxu0 %v4790
      %v5388 = vpop.f32.mrb[0].mxu0
      %v5389 = vadd.f32 %v4897, %v5388
      %v5390 = vpop.f32.mrb[0].mxu0
      %v5391 = vadd.f32 %v4901, %v5390
      %v5392 = vpop.f32.mrb[0].mxu0
      %v5393 = vadd.f32 %v4897, %v5392
      %v5394 = vpop.f32.mrb[0].mxu0
      %v5395 = vadd.f32 %v4901, %v5394
      %5396 = vmatprep.mubr.bf16.mxu0 %v4793
      %5397 = vmatmul.mubr.bf16.gmra.mrb[0].mxu0 %v4792
      %v5398 = vpop.f32.mrb[0].mxu0
      %v5399 = vadd.f32 %v4897, %v5398
      %v5400 = vpop.f32.mrb[0].mxu0
      %v5401 = vadd.f32 %v4901, %v5400
      %v5402 = vpop.f32.mrb[0].mxu0
      %v5403 = vadd.f32 %v4897, %v5402
      %v5404 = vpop.f32.mrb[0].mxu0
      %v5405 = vadd.f32 %v4901, %v5404
      %5406 = vmatprep.mubr.bf16.mxu0 %v4795
      %5407 = vmatmul.mubr.bf16.gmra.mrb[0].mxu0 %v4794
      %v5408 = vpop.f32.mrb[0].mxu0
      %v5409 = vadd.f32 %v4897, %v5408
      %v5410 = vpop.f32.mrb[0].mxu0
      %v5411 = vadd.f32 %v4901, %v5410
      %v5412 = vpop.f32.mrb[0].mxu0
      %v5413 = vadd.f32 %v4897, %v5412
      %v5414 = vpop.f32.mrb[0].mxu0
      %v5415 = vadd.f32 %v4901, %v5414
      %5416 = vmatprep.mubr.bf16.mxu0 %v4797
      %5417 = vmatmul.mubr.bf16.gmra.mrb[0].mxu0 %v4796
      %v5418 = vpop.f32.mrb[0].mxu0
      %v5419 = vadd.f32 %v4897, %v5418
      %v5420 = vpop.f32.mrb[0].mxu0
      %v5421 = vadd.f32 %v4901, %v5420
      %v5422 = vpop.f32.mrb[0].mxu0
      %v5423 = vadd.f32 %v4897, %v5422
      %v5424 = vpop.f32.mrb[0].mxu0
      %v5425 = vadd.f32 %v4901, %v5424
      %5426 = vmatprep.mubr.bf16.mxu0 %v4799
      %5427 = vmatmul.mubr.bf16.gmra.mrb[0].mxu0 %v4798
      %v5428 = vpop.f32.mrb[0].mxu0
      %v5429 = vadd.f32 %v4897, %v5428
      %v5430 = vpop.f32.mrb[0].mxu0
      %v5431 = vadd.f32 %v4901, %v5430
      %v5432 = vpop.f32.mrb[0].mxu0
      %v5433 = vadd.f32 %v4897, %v5432
      %v5434 = vpop.f32.mrb[0].mxu0
      %v5435 = vadd.f32 %v4901, %v5434
      %5436 = vmatprep.mubr.bf16.mxu0 %v4801
      %5437 = vmatmul.mubr.bf16.gmra.mrb[0].mxu0 %v4800
      %v5438 = vpop.f32.mrb[0].mxu0
      %v5439 = vadd.f32 %v4897, %v5438
      %v5440 = vpop.f32.mrb[0].mxu0
      %v5441 = vadd.f32 %v4901, %v5440
      %v5442 = vpop.f32.mrb[0].mxu0
      %v5443 = vadd.f32 %v4897, %v5442
      %v5444 = vpop.f32.mrb[0].mxu0
      %v5445 = vadd.f32 %v4901, %v5444
      %5446 = vmatprep.mubr.bf16.mxu0 %v4803
      %5447 = vmatmul.mubr.bf16.gmra.mrb[0].mxu0 %v4802
      %v5448 = vpop.f32.mrb[0].mxu0
      %v5449 = vadd.f32 %v4897, %v5448
      %v5450 = vpop.f32.mrb[0].mxu0
      %v5451 = vadd.f32 %v4901, %v5450
      %v5452 = vpop.f32.mrb[0].mxu0
      %v5453 = vadd.f32 %v4897, %v5452
      %v5454 = vpop.f32.mrb[0].mxu0
      %v5455 = vadd.f32 %v4901, %v5454
      %5456 = vmatprep.mubr.bf16.mxu0 %v4805
      %5457 = vmatmul.mubr.bf16.gmra.mrb[0].mxu0 %v4804
      %v5458 = vpop.f32.mrb[0].mxu0
      %v5459 = vadd.f32 %v4897, %v5458
      %v5460 = vpop.f32.mrb[0].mxu0
      %v5461 = vadd.f32 %v4901, %v5460
      %v5462 = vpop.f32.mrb[0].mxu0
      %v5463 = vadd.f32 %v4897, %v5462
      %v5464 = vpop.f32.mrb[0].mxu0
      %v5465 = vadd.f32 %v4901, %v5464
      %5466 = vmatprep.mubr.bf16.mxu0 %v4807
      %5467 = vmatmul.mubr.bf16.gmra.mrb[0].mxu0 %v4806
      %v5468 = vpop.f32.mrb[0].mxu0
      %v5469 = vadd.f32 %v4897, %v5468
      %v5470 = vpop.f32.mrb[0].mxu0
      %v5471 = vadd.f32 %v4901, %v5470
      %v5472 = vpop.f32.mrb[0].mxu0
      %v5473 = vadd.f32 %v4897, %v5472
      %v5474 = vpop.f32.mrb[0].mxu0
      %v5475 = vadd.f32 %v4901, %v5474
      %5476 = vmatprep.mubr.bf16.mxu0 %v4809
      %5477 = vmatmul.mubr.bf16.gmra.mrb[0].mxu0 %v4808
      %v5478 = vpop.f32.mrb[0].mxu0
      %v5479 = vadd.f32 %v4897, %v5478
      %v5480 = vpop.f32.mrb[0].mxu0
      %v5481 = vadd.f32 %v4901, %v5480
      %v5482 = vpop.f32.mrb[0].mxu0
      %v5483 = vadd.f32 %v4897, %v5482
      %v5484 = vpop.f32.mrb[0].mxu0
      %v5485 = vadd.f32 %v4901, %v5484
      %5486 = vmatprep.mubr.bf16.mxu0 %v4811
      %5487 = vmatmul.mubr.bf16.gmra.mrb[0].mxu0 %v4810
      %v5488 = vpop.f32.mrb[0].mxu0
      %v5489 = vadd.f32 %v4897, %v5488
      %v5490 = vpop.f32.mrb[0].mxu0
      %v5491 = vadd.f32 %v4901, %v5490
      %v5492 = vpop.f32.mrb[0].mxu0
      %v5493 = vadd.f32 %v4897, %v5492
      %v5494 = vpop.f32.mrb[0].mxu0
      %v5495 = vadd.f32 %v4901, %v5494
      %5496 = vmatprep.mubr.bf16.mxu0 %v4813
      %5497 = vmatmul.mubr.bf16.gmra.mrb[0].mxu0 %v4812
      %v5498 = vpop.f32.mrb[0].mxu0
      %v5499 = vadd.f32 %v4897, %v5498
      %v5500 = vpop.f32.mrb[0].mxu0
      %v5501 = vadd.f32 %v4901, %v5500
      %v5502 = vpop.f32.mrb[0].mxu0
      %v5503 = vadd.f32 %v4897, %v5502
      %v5504 = vpop.f32.mrb[0].mxu0
      %v5505 = vadd.f32 %v4901, %v5504
      %5506 = vmatprep.mubr.bf16.mxu0 %v4815
      %5507 = vmatmul.mubr.bf16.gmra.mrb[0].mxu0 %v4814
      %v5508 = vpop.f32.mrb[0].mxu0
      %v5509 = vadd.f32 %v4897, %v5508
      %v5510 = vpop.f32.mrb[0].mxu0
      %v5511 = vadd.f32 %v4901, %v5510
      %v5512 = vpop.f32.mrb[0].mxu0
      %v5513 = vadd.f32 %v4897, %v5512
      %v5514 = vpop.f32.mrb[0].mxu0
      %v5515 = vadd.f32 %v4901, %v5514
      %5516 = vmatprep.mubr.bf16.mxu0 %v4817
      %5517 = vmatmul.mubr.bf16.gmra.mrb[0].mxu0 %v4816
      %v5518 = vpop.f32.mrb[0].mxu0
      %v5519 = vadd.f32 %v4897, %v5518
      %v5520 = vpop.f32.mrb[0].mxu0
      %v5521 = vadd.f32 %v4901, %v5520
      %v5522 = vpop.f32.mrb[0].mxu0
      %v5523 = vadd.f32 %v4897, %v5522
      %v5524 = vpop.f32.mrb[0].mxu0
      %v5525 = vadd.f32 %v4901, %v5524
      %5526 = vmatprep.mubr.bf16.mxu0 %v4819
      %5527 = vmatmul.mubr.bf16.gmra.mrb[0].mxu0 %v4818
      %v5528 = vpop.f32.mrb[0].mxu0
      %v5529 = vadd.f32 %v4897, %v5528
      %v5530 = vpop.f32.mrb[0].mxu0
      %v5531 = vadd.f32 %v4901, %v5530
      %v5532 = vpop.f32.mrb[0].mxu0
      %v5533 = vadd.f32 %v4897, %v5532
      %v5534 = vpop.f32.mrb[0].mxu0
      %v5535 = vadd.f32 %v4901, %v5534
      %5536 = vmatprep.mubr.bf16.mxu0 %v4821
      %5537 = vmatmul.mubr.bf16.gmra.mrb[0].mxu0 %v4820
      %v5538 = vpop.f32.mrb[0].mxu0
      %v5539 = vadd.f32 %v4897, %v5538
      %v5540 = vpop.f32.mrb[0].mxu0
      %v5541 = vadd.f32 %v4901, %v5540
      %v5542 = vpop.f32.mrb[0].mxu0
      %v5543 = vadd.f32 %v4897, %v5542
      %v5544 = vpop.f32.mrb[0].mxu0
      %v5545 = vadd.f32 %v4901, %v5544
      %5546 = vmatprep.mubr.bf16.mxu0 %v4823
      %5547 = vmatmul.mubr.bf16.gmra.mrb[0].mxu0 %v4822
      %v5548 = vpop.f32.mrb[0].mxu0
      %v5549 = vadd.f32 %v4897, %v5548
      %v5550 = vpop.f32.mrb[0].mxu0
      %v5551 = vadd.f32 %v4901, %v5550
      %v5552 = vpop.f32.mrb[0].mxu0
      %v5553 = vadd.f32 %v4897, %v5552
      %v5554 = vpop.f32.mrb[0].mxu0
      %v5555 = vadd.f32 %v4901, %v5554
      %5556 = vmatprep.mubr.bf16.mxu0 %v4825
      %5557 = vmatmul.mubr.bf16.gmra.mrb[0].mxu0 %v4824
      %v5558 = vpop.f32.mrb[0].mxu0
      %v5559 = vadd.f32 %v4897, %v5558
      %v5560 = vpop.f32.mrb[0].mxu0
      %v5561 = vadd.f32 %v4901, %v5560
      %v5562 = vpop.f32.mrb[0].mxu0
      %v5563 = vadd.f32 %v4897, %v5562
      %v5564 = vpop.f32.mrb[0].mxu0
      %v5565 = vadd.f32 %v4901, %v5564
      %5566 = vmatprep.mubr.bf16.mxu0 %v4827
      %5567 = vmatmul.mubr.bf16.gmra.mrb[0].mxu0 %v4826
      %v5568 = vpop.f32.mrb[0].mxu0
      %v5569 = vadd.f32 %v4897, %v5568
      %v5570 = vpop.f32.mrb[0].mxu0
      %v5571 = vadd.f32 %v4901, %v5570
      %v5572 = vpop.f32.mrb[0].mxu0
      %v5573 = vadd.f32 %v4897, %v5572
      %v5574 = vpop.f32.mrb[0].mxu0
      %v5575 = vadd.f32 %v4901, %v5574
      %5576 = vmatprep.mubr.bf16.mxu0 %v4829
      %5577 = vmatmul.mubr.bf16.gmra.mrb[0].mxu0 %v4828
      %v5578 = vpop.f32.mrb[0].mxu0
      %v5579 = vadd.f32 %v4897, %v5578
      %v5580 = vpop.f32.mrb[0].mxu0
      %v5581 = vadd.f32 %v4901, %v5580
      %v5582 = vpop.f32.mrb[0].mxu0
      %v5583 = vadd.f32 %v4897, %v5582
      %v5584 = vpop.f32.mrb[0].mxu0
      %v5585 = vadd.f32 %v4901, %v5584
      %5586 = vmatprep.mubr.bf16.mxu0 %v4831
      %5587 = vmatmul.mubr.bf16.gmra.mrb[0].mxu0 %v4830
      %v5588 = vpop.f32.mrb[0].mxu0
      %v5589 = vadd.f32 %v4897, %v5588
      %v5590 = vpop.f32.mrb[0].mxu0
      %v5591 = vadd.f32 %v4901, %v5590
      %v5592 = vpop.f32.mrb[0].mxu0
      %v5593 = vadd.f32 %v4897, %v5592
      %v5594 = vpop.f32.mrb[0].mxu0
      %v5595 = vadd.f32 %v4901, %v5594
      %5596 = vmatprep.mubr.bf16.mxu0 %v4833
      %5597 = vmatmul.mubr.bf16.gmra.mrb[0].mxu0 %v4832
      %v5598 = vpop.f32.mrb[0].mxu0
      %v5599 = vadd.f32 %v4897, %v5598
      %v5600 = vpop.f32.mrb[0].mxu0
      %v5601 = vadd.f32 %v4901, %v5600
      %v5602 = vpop.f32.mrb[0].mxu0
      %v5603 = vadd.f32 %v4897, %v5602
      %v5604 = vpop.f32.mrb[0].mxu0
      %v5605 = vadd.f32 %v4901, %v5604
      %5606 = vmatprep.mubr.bf16.mxu0 %v4835
      %5607 = vmatmul.mubr.bf16.gmra.mrb[0].mxu0 %v4834
      %v5608 = vpop.f32.mrb[0].mxu0
      %v5609 = vadd.f32 %v4897, %v5608
      %v5610 = vpop.f32.mrb[0].mxu0
      %v5611 = vadd.f32 %v4901, %v5610
      %v5612 = vpop.f32.mrb[0].mxu0
      %v5613 = vadd.f32 %v4897, %v5612
      %v5614 = vpop.f32.mrb[0].mxu0
      %v5615 = vadd.f32 %v4901, %v5614
      %5616 = vmatprep.mubr.bf16.mxu0 %v4837
      %5617 = vmatmul.mubr.bf16.gmra.mrb[0].mxu0 %v4836
      %v5618 = vpop.f32.mrb[0].mxu0
      %v5619 = vadd.f32 %v4897, %v5618
      %v5620 = vpop.f32.mrb[0].mxu0
      %v5621 = vadd.f32 %v4901, %v5620
      %v5622 = vpop.f32.mrb[0].mxu0
      %v5623 = vadd.f32 %v4897, %v5622
      %v5624 = vpop.f32.mrb[0].mxu0
      %v5625 = vadd.f32 %v4901, %v5624
      %5626 = vmatprep.mubr.bf16.mxu0 %v4839
      %5627 = vmatmul.mubr.bf16.gmra.mrb[0].mxu0 %v4838
      %v5628 = vpop.f32.mrb[0].mxu0
      %v5629 = vadd.f32 %v4897, %v5628
      %v5630 = vpop.f32.mrb[0].mxu0
      %v5631 = vadd.f32 %v4901, %v5630
      %v5632 = vpop.f32.mrb[0].mxu0
      %v5633 = vadd.f32 %v4897, %v5632
      %v5634 = vpop.f32.mrb[0].mxu0
      %v5635 = vadd.f32 %v4901, %v5634
      %5636 = vmatprep.mubr.bf16.mxu0 %v4841
      %5637 = vmatmul.mubr.bf16.gmra.mrb[0].mxu0 %v4840
      %v5638 = vpop.f32.mrb[0].mxu0
      %v5639 = vadd.f32 %v4897, %v5638
      %v5640 = vpop.f32.mrb[0].mxu0
      %v5641 = vadd.f32 %v4901, %v5640
      %v5642 = vpop.f32.mrb[0].mxu0
      %v5643 = vadd.f32 %v4897, %v5642
      %v5644 = vpop.f32.mrb[0].mxu0
      %v5645 = vadd.f32 %v4901, %v5644
      %5646 = vmatprep.mubr.bf16.mxu0 %v4843
      %5647 = vmatmul.mubr.bf16.gmra.mrb[0].mxu0 %v4842
      %v5648 = vpop.f32.mrb[0].mxu0
      %v5649 = vadd.f32 %v4897, %v5648
      %v5650 = vpop.f32.mrb[0].mxu0
      %v5651 = vadd.f32 %v4901, %v5650
      %v5652 = vpop.f32.mrb[0].mxu0
      %v5653 = vadd.f32 %v4897, %v5652
      %v5654 = vpop.f32.mrb[0].mxu0
      %v5655 = vadd.f32 %v4901, %v5654
      %5656 = vmatprep.mubr.bf16.mxu0 %v4845
      %5657 = vmatmul.mubr.bf16.gmra.mrb[0].mxu0 %v4844
      %v5658 = vpop.f32.mrb[0].mxu0
      %v5659 = vadd.f32 %v4897, %v5658
      %v5660 = vpop.f32.mrb[0].mxu0
      %v5661 = vadd.f32 %v4901, %v5660
      %v5662 = vpop.f32.mrb[0].mxu0
      %v5663 = vadd.f32 %v4897, %v5662
      %v5664 = vpop.f32.mrb[0].mxu0
      %v5665 = vadd.f32 %v4901, %v5664
      %5666 = vmatprep.mubr.bf16.mxu0 %v4847
      %5667 = vmatmul.mubr.bf16.gmra.mrb[0].mxu0 %v4846
      %v5668 = vpop.f32.mrb[0].mxu0
      %v5669 = vadd.f32 %v4897, %v5668
      %v5670 = vpop.f32.mrb[0].mxu0
      %v5671 = vadd.f32 %v4901, %v5670
      %v5672 = vpop.f32.mrb[0].mxu0
      %v5673 = vadd.f32 %v4897, %v5672
      %v5674 = vpop.f32.mrb[0].mxu0
      %v5675 = vadd.f32 %v4901, %v5674
      %5676 = vmatprep.mubr.bf16.mxu0 %v4849
      %5677 = vmatmul.mubr.bf16.gmra.mrb[0].mxu0 %v4848
      %v5678 = vpop.f32.mrb[0].mxu0
      %v5679 = vadd.f32 %v4897, %v5678
      %v5680 = vpop.f32.mrb[0].mxu0
      %v5681 = vadd.f32 %v4901, %v5680
      %v5682 = vpop.f32.mrb[0].mxu0
      %v5683 = vadd.f32 %v4897, %v5682
      %v5684 = vpop.f32.mrb[0].mxu0
      %v5685 = vadd.f32 %v4901, %v5684
      %5686 = vmatprep.mubr.bf16.mxu0 %v4851
      %5687 = vmatmul.mubr.bf16.gmra.mrb[0].mxu0 %v4850
      %v5688 = vpop.f32.mrb[0].mxu0
      %v5689 = vadd.f32 %v4897, %v5688
      %v5690 = vpop.f32.mrb[0].mxu0
      %v5691 = vadd.f32 %v4901, %v5690
      %v5692 = vpop.f32.mrb[0].mxu0
      %v5693 = vadd.f32 %v4897, %v5692
      %v5694 = vpop.f32.mrb[0].mxu0
      %v5695 = vadd.f32 %v4901, %v5694
      %5696 = vmatprep.mubr.bf16.mxu0 %v4853
      %5697 = vmatmul.mubr.bf16.gmra.mrb[0].mxu0 %v4852
      %v5698 = vpop.f32.mrb[0].mxu0
      %v5699 = vadd.f32 %v4897, %v5698
      %v5700 = vpop.f32.mrb[0].mxu0
      %v5701 = vadd.f32 %v4901, %v5700
      %v5702 = vpop.f32.mrb[0].mxu0
      %v5703 = vadd.f32 %v4897, %v5702
      %v5704 = vpop.f32.mrb[0].mxu0
      %v5705 = vadd.f32 %v4901, %v5704
      %5706 = vmatprep.mubr.bf16.mxu0 %v4855
      %5707 = vmatmul.mubr.bf16.gmra.mrb[0].mxu0 %v4854
      %v5708 = vpop.f32.mrb[0].mxu0
      %v5709 = vadd.f32 %v4897, %v5708
      %v5710 = vpop.f32.mrb[0].mxu0
      %v5711 = vadd.f32 %v4901, %v5710
      %v5712 = vpop.f32.mrb[0].mxu0
      %v5713 = vadd.f32 %v4897, %v5712
      %v5714 = vpop.f32.mrb[0].mxu0
      %v5715 = vadd.f32 %v4901, %v5714
      %5716 = vmatprep.mubr.bf16.mxu0 %v4857
      %5717 = vmatmul.mubr.bf16.gmra.mrb[0].mxu0 %v4856
      %v5718 = vpop.f32.mrb[0].mxu0
      %v5719 = vadd.f32 %v4897, %v5718
      %v5720 = vpop.f32.mrb[0].mxu0
      %v5721 = vadd.f32 %v4901, %v5720
      %v5722 = vpop.f32.mrb[0].mxu0
      %v5723 = vadd.f32 %v4897, %v5722
      %v5724 = vpop.f32.mrb[0].mxu0
      %v5725 = vadd.f32 %v4901, %v5724
      %5726 = vmatprep.mubr.bf16.mxu0 %v4859
      %5727 = vmatmul.mubr.bf16.gmra.mrb[0].mxu0 %v4858
      %v5728 = vpop.f32.mrb[0].mxu0
      %v5729 = vadd.f32 %v4897, %v5728
      %v5730 = vpop.f32.mrb[0].mxu0
      %v5731 = vadd.f32 %v4901, %v5730
      %v5732 = vpop.f32.mrb[0].mxu0
      %v5733 = vadd.f32 %v4897, %v5732
      %v5734 = vpop.f32.mrb[0].mxu0
      %v5735 = vadd.f32 %v4901, %v5734
      %5736 = vdwg.mxu0
      %v5737 = vmax.f32 %v5099, 0.0
      %v5738 = vmax.f32 %v5101, 0.0
      %v5739 = vmax.f32 %v5103, 0.0
      %v5740 = vmax.f32 %v5105, 0.0
      %v5741 = vmax.f32 %v5109, 0.0
      %v5742 = vmax.f32 %v5111, 0.0
      %v5743 = vmax.f32 %v5113, 0.0
      %v5744 = vmax.f32 %v5115, 0.0
      %v5745 = vmax.f32 %v5119, 0.0
      %v5746 = vmax.f32 %v5121, 0.0
      %v5747 = vmax.f32 %v5123, 0.0
      %v5748 = vmax.f32 %v5125, 0.0
      %v5749 = vmax.f32 %v5129, 0.0
      %v5750 = vmax.f32 %v5131, 0.0
      %v5751 = vmax.f32 %v5133, 0.0
      %v5752 = vmax.f32 %v5135, 0.0
      %v5753 = vmax.f32 %v5139, 0.0
      %v5754 = vmax.f32 %v5141, 0.0
      %v5755 = vmax.f32 %v5143, 0.0
      %v5756 = vmax.f32 %v5145, 0.0
      %v5757 = vmax.f32 %v5149, 0.0
      %v5758 = vmax.f32 %v5151, 0.0
      %v5759 = vmax.f32 %v5153, 0.0
      %v5760 = vmax.f32 %v5155, 0.0
      %v5761 = vmax.f32 %v5159, 0.0
      %v5762 = vmax.f32 %v5161, 0.0
      %v5763 = vmax.f32 %v5163, 0.0
      %v5764 = vmax.f32 %v5165, 0.0
      %v5765 = vmax.f32 %v5169, 0.0
      %v5766 = vmax.f32 %v5171, 0.0
      %v5767 = vmax.f32 %v5173, 0.0
      %v5768 = vmax.f32 %v5175, 0.0
      %v5769 = vmax.f32 %v5179, 0.0
      %v5770 = vmax.f32 %v5181, 0.0
      %v5771 = vmax.f32 %v5183, 0.0
      %v5772 = vmax.f32 %v5185, 0.0
      %v5773 = vmax.f32 %v5189, 0.0
      %v5774 = vmax.f32 %v5191, 0.0
      %v5775 = vmax.f32 %v5193, 0.0
      %v5776 = vmax.f32 %v5195, 0.0
      %v5777 = vmax.f32 %v5199, 0.0
      %v5778 = vmax.f32 %v5201, 0.0
      %v5779 = vmax.f32 %v5203, 0.0
      %v5780 = vmax.f32 %v5205, 0.0
      %v5781 = vmax.f32 %v5209, 0.0
      %v5782 = vmax.f32 %v5211, 0.0
      %v5783 = vmax.f32 %v5213, 0.0
      %v5784 = vmax.f32 %v5215, 0.0
      %v5785 = vmax.f32 %v5219, 0.0
      %v5786 = vmax.f32 %v5221, 0.0
      %v5787 = vmax.f32 %v5223, 0.0
      %v5788 = vmax.f32 %v5225, 0.0
      %v5789 = vmax.f32 %v5229, 0.0
      %v5790 = vmax.f32 %v5231, 0.0
      %v5791 = vmax.f32 %v5233, 0.0
      %v5792 = vmax.f32 %v5235, 0.0
      %v5793 = vmax.f32 %v5239, 0.0
      %v5794 = vmax.f32 %v5241, 0.0
      %v5795 = vmax.f32 %v5243, 0.0
      %v5796 = vmax.f32 %v5245, 0.0
      %v5797 = vmax.f32 %v5249, 0.0
      %v5798 = vmax.f32 %v5251, 0.0
      %v5799 = vmax.f32 %v5253, 0.0
      %v5800 = vmax.f32 %v5255, 0.0
      %v5801 = vmax.f32 %v5259, 0.0
      %v5802 = vmax.f32 %v5261, 0.0
      %v5803 = vmax.f32 %v5263, 0.0
      %v5804 = vmax.f32 %v5265, 0.0
      %v5805 = vmax.f32 %v5269, 0.0
      %v5806 = vmax.f32 %v5271, 0.0
      %v5807 = vmax.f32 %v5273, 0.0
      %v5808 = vmax.f32 %v5275, 0.0
      %v5809 = vmax.f32 %v5279, 0.0
      %v5810 = vmax.f32 %v5281, 0.0
      %v5811 = vmax.f32 %v5283, 0.0
      %v5812 = vmax.f32 %v5285, 0.0
      %v5813 = vmax.f32 %v5289, 0.0
      %v5814 = vmax.f32 %v5291, 0.0
      %v5815 = vmax.f32 %v5293, 0.0
      %v5816 = vmax.f32 %v5295, 0.0
      %v5817 = vmax.f32 %v5299, 0.0
      %v5818 = vmax.f32 %v5301, 0.0
      %v5819 = vmax.f32 %v5303, 0.0
      %v5820 = vmax.f32 %v5305, 0.0
      %v5821 = vmax.f32 %v5309, 0.0
      %v5822 = vmax.f32 %v5311, 0.0
      %v5823 = vmax.f32 %v5313, 0.0
      %v5824 = vmax.f32 %v5315, 0.0
      %v5825 = vmax.f32 %v5319, 0.0
      %v5826 = vmax.f32 %v5321, 0.0
      %v5827 = vmax.f32 %v5323, 0.0
      %v5828 = vmax.f32 %v5325, 0.0
      %v5829 = vmax.f32 %v5329, 0.0
      %v5830 = vmax.f32 %v5331, 0.0
      %v5831 = vmax.f32 %v5333, 0.0
      %v5832 = vmax.f32 %v5335, 0.0
      %v5833 = vmax.f32 %v5339, 0.0
      %v5834 = vmax.f32 %v5341, 0.0
      %v5835 = vmax.f32 %v5343, 0.0
      %v5836 = vmax.f32 %v5345, 0.0
      %v5837 = vmax.f32 %v5349, 0.0
      %v5838 = vmax.f32 %v5351, 0.0
      %v5839 = vmax.f32 %v5353, 0.0
      %v5840 = vmax.f32 %v5355, 0.0
      %v5841 = vmax.f32 %v5359, 0.0
      %v5842 = vmax.f32 %v5361, 0.0
      %v5843 = vmax.f32 %v5363, 0.0
      %v5844 = vmax.f32 %v5365, 0.0
      %v5845 = vmax.f32 %v5369, 0.0
      %v5846 = vmax.f32 %v5371, 0.0
      %v5847 = vmax.f32 %v5373, 0.0
      %v5848 = vmax.f32 %v5375, 0.0
      %v5849 = vmax.f32 %v5379, 0.0
      %v5850 = vmax.f32 %v5381, 0.0
      %v5851 = vmax.f32 %v5383, 0.0
      %v5852 = vmax.f32 %v5385, 0.0
      %v5853 = vmax.f32 %v5389, 0.0
      %v5854 = vmax.f32 %v5391, 0.0
      %v5855 = vmax.f32 %v5393, 0.0
      %v5856 = vmax.f32 %v5395, 0.0
      %v5857 = vmax.f32 %v5399, 0.0
      %v5858 = vmax.f32 %v5401, 0.0
      %v5859 = vmax.f32 %v5403, 0.0
      %v5860 = vmax.f32 %v5405, 0.0
      %v5861 = vmax.f32 %v5409, 0.0
      %v5862 = vmax.f32 %v5411, 0.0
      %v5863 = vmax.f32 %v5413, 0.0
      %v5864 = vmax.f32 %v5415, 0.0
      %v5865 = vmax.f32 %v5419, 0.0
      %v5866 = vmax.f32 %v5421, 0.0
      %v5867 = vmax.f32 %v5423, 0.0
      %v5868 = vmax.f32 %v5425, 0.0
      %v5869 = vmax.f32 %v5429, 0.0
      %v5870 = vmax.f32 %v5431, 0.0
      %v5871 = vmax.f32 %v5433, 0.0
      %v5872 = vmax.f32 %v5435, 0.0
      %v5873 = vmax.f32 %v5439, 0.0
      %v5874 = vmax.f32 %v5441, 0.0
      %v5875 = vmax.f32 %v5443, 0.0
      %v5876 = vmax.f32 %v5445, 0.0
      %v5877 = vmax.f32 %v5449, 0.0
      %v5878 = vmax.f32 %v5451, 0.0
      %v5879 = vmax.f32 %v5453, 0.0
      %v5880 = vmax.f32 %v5455, 0.0
      %v5881 = vmax.f32 %v5459, 0.0
      %v5882 = vmax.f32 %v5461, 0.0
      %v5883 = vmax.f32 %v5463, 0.0
      %v5884 = vmax.f32 %v5465, 0.0
      %v5885 = vmax.f32 %v5469, 0.0
      %v5886 = vmax.f32 %v5471, 0.0
      %v5887 = vmax.f32 %v5473, 0.0
      %v5888 = vmax.f32 %v5475, 0.0
      %v5889 = vmax.f32 %v5479, 0.0
      %v5890 = vmax.f32 %v5481, 0.0
      %v5891 = vmax.f32 %v5483, 0.0
      %v5892 = vmax.f32 %v5485, 0.0
      %v5893 = vmax.f32 %v5489, 0.0
      %v5894 = vmax.f32 %v5491, 0.0
      %v5895 = vmax.f32 %v5493, 0.0
      %v5896 = vmax.f32 %v5495, 0.0
      %v5897 = vmax.f32 %v5499, 0.0
      %v5898 = vmax.f32 %v5501, 0.0
      %v5899 = vmax.f32 %v5503, 0.0
      %v5900 = vmax.f32 %v5505, 0.0
      %v5901 = vmax.f32 %v5509, 0.0
      %v5902 = vmax.f32 %v5511, 0.0
      %v5903 = vmax.f32 %v5513, 0.0
      %v5904 = vmax.f32 %v5515, 0.0
      %v5905 = vmax.f32 %v5519, 0.0
      %v5906 = vmax.f32 %v5521, 0.0
      %v5907 = vmax.f32 %v5523, 0.0
      %v5908 = vmax.f32 %v5525, 0.0
      %v5909 = vmax.f32 %v5529, 0.0
      %v5910 = vmax.f32 %v5531, 0.0
      %v5911 = vmax.f32 %v5533, 0.0
      %v5912 = vmax.f32 %v5535, 0.0
      %v5913 = vmax.f32 %v5539, 0.0
      %v5914 = vmax.f32 %v5541, 0.0
      %v5915 = vmax.f32 %v5543, 0.0
      %v5916 = vmax.f32 %v5545, 0.0
      %v5917 = vmax.f32 %v5549, 0.0
      %v5918 = vmax.f32 %v5551, 0.0
      %v5919 = vmax.f32 %v5553, 0.0
      %v5920 = vmax.f32 %v5555, 0.0
      %v5921 = vmax.f32 %v5559, 0.0
      %v5922 = vmax.f32 %v5561, 0.0
      %v5923 = vmax.f32 %v5563, 0.0
      %v5924 = vmax.f32 %v5565, 0.0
      %v5925 = vmax.f32 %v5569, 0.0
      %v5926 = vmax.f32 %v5571, 0.0
      %v5927 = vmax.f32 %v5573, 0.0
      %v5928 = vmax.f32 %v5575, 0.0
      %v5929 = vmax.f32 %v5579, 0.0
      %v5930 = vmax.f32 %v5581, 0.0
      %v5931 = vmax.f32 %v5583, 0.0
      %v5932 = vmax.f32 %v5585, 0.0
      %v5933 = vmax.f32 %v5589, 0.0
      %v5934 = vmax.f32 %v5591, 0.0
      %v5935 = vmax.f32 %v5593, 0.0
      %v5936 = vmax.f32 %v5595, 0.0
      %v5937 = vmax.f32 %v5599, 0.0
      %v5938 = vmax.f32 %v5601, 0.0
      %v5939 = vmax.f32 %v5603, 0.0
      %v5940 = vmax.f32 %v5605, 0.0
      %v5941 = vmax.f32 %v5609, 0.0
      %v5942 = vmax.f32 %v5611, 0.0
      %v5943 = vmax.f32 %v5613, 0.0
      %v5944 = vmax.f32 %v5615, 0.0
      %v5945 = vmax.f32 %v5619, 0.0
      %v5946 = vmax.f32 %v5621, 0.0
      %v5947 = vmax.f32 %v5623, 0.0
      %v5948 = vmax.f32 %v5625, 0.0
      %v5949 = vmax.f32 %v5629, 0.0
      %v5950 = vmax.f32 %v5631, 0.0
      %v5951 = vmax.f32 %v5633, 0.0
      %v5952 = vmax.f32 %v5635, 0.0
      %v5953 = vmax.f32 %v5639, 0.0
      %v5954 = vmax.f32 %v5641, 0.0
      %v5955 = vmax.f32 %v5643, 0.0
      %v5956 = vmax.f32 %v5645, 0.0
      %v5957 = vmax.f32 %v5649, 0.0
      %v5958 = vmax.f32 %v5651, 0.0
      %v5959 = vmax.f32 %v5653, 0.0
      %v5960 = vmax.f32 %v5655, 0.0
      %v5961 = vmax.f32 %v5659, 0.0
      %v5962 = vmax.f32 %v5661, 0.0
      %v5963 = vmax.f32 %v5663, 0.0
      %v5964 = vmax.f32 %v5665, 0.0
      %v5965 = vmax.f32 %v5669, 0.0
      %v5966 = vmax.f32 %v5671, 0.0
      %v5967 = vmax.f32 %v5673, 0.0
      %v5968 = vmax.f32 %v5675, 0.0
      %v5969 = vmax.f32 %v5679, 0.0
      %v5970 = vmax.f32 %v5681, 0.0
      %v5971 = vmax.f32 %v5683, 0.0
      %v5972 = vmax.f32 %v5685, 0.0
      %v5973 = vmax.f32 %v5689, 0.0
      %v5974 = vmax.f32 %v5691, 0.0
      %v5975 = vmax.f32 %v5693, 0.0
      %v5976 = vmax.f32 %v5695, 0.0
      %v5977 = vmax.f32 %v5699, 0.0
      %v5978 = vmax.f32 %v5701, 0.0
      %v5979 = vmax.f32 %v5703, 0.0
      %v5980 = vmax.f32 %v5705, 0.0
      %v5981 = vmax.f32 %v5709, 0.0
      %v5982 = vmax.f32 %v5711, 0.0
      %v5983 = vmax.f32 %v5713, 0.0
      %v5984 = vmax.f32 %v5715, 0.0
      %v5985 = vmax.f32 %v5719, 0.0
      %v5986 = vmax.f32 %v5721, 0.0
      %v5987 = vmax.f32 %v5723, 0.0
      %v5988 = vmax.f32 %v5725, 0.0
      %v5989 = vmax.f32 %v5729, 0.0
      %v5990 = vmax.f32 %v5731, 0.0
      %v5991 = vmax.f32 %v5733, 0.0
      %v5992 = vmax.f32 %v5735, 0.0
      %v5993 = vpack.c.bf16 %v5739, %v5737
      %v5994 = vpack.c.bf16 %v5740, %v5738
      %v5995 = vpack.c.bf16 %v5743, %v5741
      %v5996 = vpack.c.bf16 %v5744, %v5742
      %v5997 = vpack.c.bf16 %v5747, %v5745
      %v5998 = vpack.c.bf16 %v5748, %v5746
      %v5999 = vpack.c.bf16 %v5751, %v5749
      %v6000 = vpack.c.bf16 %v5752, %v5750
      %v6001 = vpack.c.bf16 %v5755, %v5753
      %v6002 = vpack.c.bf16 %v5756, %v5754
      %v6003 = vpack.c.bf16 %v5759, %v5757
      %v6004 = vpack.c.bf16 %v5760, %v5758
      %v6005 = vpack.c.bf16 %v5763, %v5761
      %v6006 = vpack.c.bf16 %v5764, %v5762
      %v6007 = vpack.c.bf16 %v5767, %v5765
      %v6008 = vpack.c.bf16 %v5768, %v5766
      %v6009 = vpack.c.bf16 %v5771, %v5769
      %v6010 = vpack.c.bf16 %v5772, %v5770
      %v6011 = vpack.c.bf16 %v5775, %v5773
      %v6012 = vpack.c.bf16 %v5776, %v5774
      %v6013 = vpack.c.bf16 %v5779, %v5777
      %v6014 = vpack.c.bf16 %v5780, %v5778
      %v6015 = vpack.c.bf16 %v5783, %v5781
      %v6016 = vpack.c.bf16 %v5784, %v5782
      %v6017 = vpack.c.bf16 %v5787, %v5785
      %v6018 = vpack.c.bf16 %v5788, %v5786
      %v6019 = vpack.c.bf16 %v5791, %v5789
      %v6020 = vpack.c.bf16 %v5792, %v5790
      %v6021 = vpack.c.bf16 %v5795, %v5793
      %v6022 = vpack.c.bf16 %v5796, %v5794
      %v6023 = vpack.c.bf16 %v5799, %v5797
      %v6024 = vpack.c.bf16 %v5800, %v5798
      %v6025 = vpack.c.bf16 %v5803, %v5801
      %v6026 = vpack.c.bf16 %v5804, %v5802
      %v6027 = vpack.c.bf16 %v5807, %v5805
      %v6028 = vpack.c.bf16 %v5808, %v5806
      %v6029 = vpack.c.bf16 %v5811, %v5809
      %v6030 = vpack.c.bf16 %v5812, %v5810
      %v6031 = vpack.c.bf16 %v5815, %v5813
      %v6032 = vpack.c.bf16 %v5816, %v5814
      %v6033 = vpack.c.bf16 %v5819, %v5817
      %v6034 = vpack.c.bf16 %v5820, %v5818
      %v6035 = vpack.c.bf16 %v5823, %v5821
      %v6036 = vpack.c.bf16 %v5824, %v5822
      %v6037 = vpack.c.bf16 %v5827, %v5825
      %v6038 = vpack.c.bf16 %v5828, %v5826
      %v6039 = vpack.c.bf16 %v5831, %v5829
      %v6040 = vpack.c.bf16 %v5832, %v5830
      %v6041 = vpack.c.bf16 %v5835, %v5833
      %v6042 = vpack.c.bf16 %v5836, %v5834
      %v6043 = vpack.c.bf16 %v5839, %v5837
      %v6044 = vpack.c.bf16 %v5840, %v5838
      %v6045 = vpack.c.bf16 %v5843, %v5841
      %v6046 = vpack.c.bf16 %v5844, %v5842
      %v6047 = vpack.c.bf16 %v5847, %v5845
      %v6048 = vpack.c.bf16 %v5848, %v5846
      %v6049 = vpack.c.bf16 %v5851, %v5849
      %v6050 = vpack.c.bf16 %v5852, %v5850
      %v6051 = vpack.c.bf16 %v5855, %v5853
      %v6052 = vpack.c.bf16 %v5856, %v5854
      %v6053 = vpack.c.bf16 %v5859, %v5857
      %v6054 = vpack.c.bf16 %v5860, %v5858
      %v6055 = vpack.c.bf16 %v5863, %v5861
      %v6056 = vpack.c.bf16 %v5864, %v5862
      %v6057 = vpack.c.bf16 %v5867, %v5865
      %v6058 = vpack.c.bf16 %v5868, %v5866
      %v6059 = vpack.c.bf16 %v5871, %v5869
      %v6060 = vpack.c.bf16 %v5872, %v5870
      %v6061 = vpack.c.bf16 %v5875, %v5873
      %v6062 = vpack.c.bf16 %v5876, %v5874
      %v6063 = vpack.c.bf16 %v5879, %v5877
      %v6064 = vpack.c.bf16 %v5880, %v5878
      %v6065 = vpack.c.bf16 %v5883, %v5881
      %v6066 = vpack.c.bf16 %v5884, %v5882
      %v6067 = vpack.c.bf16 %v5887, %v5885
      %v6068 = vpack.c.bf16 %v5888, %v5886
      %v6069 = vpack.c.bf16 %v5891, %v5889
      %v6070 = vpack.c.bf16 %v5892, %v5890
      %v6071 = vpack.c.bf16 %v5895, %v5893
      %v6072 = vpack.c.bf16 %v5896, %v5894
      %v6073 = vpack.c.bf16 %v5899, %v5897
      %v6074 = vpack.c.bf16 %v5900, %v5898
      %v6075 = vpack.c.bf16 %v5903, %v5901
      %v6076 = vpack.c.bf16 %v5904, %v5902
      %v6077 = vpack.c.bf16 %v5907, %v5905
      %v6078 = vpack.c.bf16 %v5908, %v5906
      %v6079 = vpack.c.bf16 %v5911, %v5909
      %v6080 = vpack.c.bf16 %v5912, %v5910
      %v6081 = vpack.c.bf16 %v5915, %v5913
      %v6082 = vpack.c.bf16 %v5916, %v5914
      %v6083 = vpack.c.bf16 %v5919, %v5917
      %v6084 = vpack.c.bf16 %v5920, %v5918
      %v6085 = vpack.c.bf16 %v5923, %v5921
      %v6086 = vpack.c.bf16 %v5924, %v5922
      %v6087 = vpack.c.bf16 %v5927, %v5925
      %v6088 = vpack.c.bf16 %v5928, %v5926
      %v6089 = vpack.c.bf16 %v5931, %v5929
      %v6090 = vpack.c.bf16 %v5932, %v5930
      %v6091 = vpack.c.bf16 %v5935, %v5933
      %v6092 = vpack.c.bf16 %v5936, %v5934
      %v6093 = vpack.c.bf16 %v5939, %v5937
      %v6094 = vpack.c.bf16 %v5940, %v5938
      %v6095 = vpack.c.bf16 %v5943, %v5941
      %v6096 = vpack.c.bf16 %v5944, %v5942
      %v6097 = vpack.c.bf16 %v5947, %v5945
      %v6098 = vpack.c.bf16 %v5948, %v5946
      %v6099 = vpack.c.bf16 %v5951, %v5949
      %v6100 = vpack.c.bf16 %v5952, %v5950
      %v6101 = vpack.c.bf16 %v5955, %v5953
      %v6102 = vpack.c.bf16 %v5956, %v5954
      %v6103 = vpack.c.bf16 %v5959, %v5957
      %v6104 = vpack.c.bf16 %v5960, %v5958
      %v6105 = vpack.c.bf16 %v5963, %v5961
      %v6106 = vpack.c.bf16 %v5964, %v5962
      %v6107 = vpack.c.bf16 %v5967, %v5965
      %v6108 = vpack.c.bf16 %v5968, %v5966
      %v6109 = vpack.c.bf16 %v5971, %v5969
      %v6110 = vpack.c.bf16 %v5972, %v5970
      %v6111 = vpack.c.bf16 %v5975, %v5973
      %v6112 = vpack.c.bf16 %v5976, %v5974
      %v6113 = vpack.c.bf16 %v5979, %v5977
      %v6114 = vpack.c.bf16 %v5980, %v5978
      %v6115 = vpack.c.bf16 %v5983, %v5981
      %v6116 = vpack.c.bf16 %v5984, %v5982
      %v6117 = vpack.c.bf16 %v5987, %v5985
      %v6118 = vpack.c.bf16 %v5988, %v5986
      %v6119 = vpack.c.bf16 %v5991, %v5989
      %v6120 = vpack.c.bf16 %v5992, %v5990
      %v6121 = vld [vmem:[%s9] sm:$0xff]
      %v6122 = vld [vmem:[%s9 + $0x8] sm:$0xff]
      %v6123 = vld [vmem:[%s9 + $0x10] sm:$0xff]
      %v6124 = vld [vmem:[%s9 + $0x18] sm:$0xff]
      %v6125 = vld [vmem:[%s9 + $0x20] sm:$0xff]
      %v6126 = vld [vmem:[%s9 + $0x28] sm:$0xff]
      %v6127 = vld [vmem:[%s9 + $0x30] sm:$0xff]
      %v6128 = vld [vmem:[%s9 + $0x38] sm:$0xff]
      %v6129 = vld [vmem:[%s9 + $0x40] sm:$0xff]
      %v6130 = vld [vmem:[%s9 + $0x48] sm:$0xff]
      %v6131 = vld [vmem:[%s9 + $0x50] sm:$0xff]
      %v6132 = vld [vmem:[%s9 + $0x58] sm:$0xff]
      %v6133 = vld [vmem:[%s9 + $0x60] sm:$0xff]
      %v6134 = vld [vmem:[%s9 + $0x68] sm:$0xff]
      %v6135 = vld [vmem:[%s9 + $0x70] sm:$0xff]
      %v6136 = vld [vmem:[%s9 + $0x78] sm:$0xff]
      %v6137 = vld [vmem:[%s9 + $0x80] sm:$0xff]
      %v6138 = vld [vmem:[%s9 + $0x88] sm:$0xff]
      %v6139 = vld [vmem:[%s9 + $0x90] sm:$0xff]
      %v6140 = vld [vmem:[%s9 + $0x98] sm:$0xff]
      %v6141 = vld [vmem:[%s9 + $0xa0] sm:$0xff]
      %v6142 = vld [vmem:[%s9 + $0xa8] sm:$0xff]
      %v6143 = vld [vmem:[%s9 + $0xb0] sm:$0xff]
      %v6144 = vld [vmem:[%s9 + $0xb8] sm:$0xff]
      %v6145 = vld [vmem:[%s9 + $0xc0] sm:$0xff]
      %v6146 = vld [vmem:[%s9 + $0xc8] sm:$0xff]
      %v6147 = vld [vmem:[%s9 + $0xd0] sm:$0xff]
      %v6148 = vld [vmem:[%s9 + $0xd8] sm:$0xff]
      %v6149 = vld [vmem:[%s9 + $0xe0] sm:$0xff]
      %v6150 = vld [vmem:[%s9 + $0xe8] sm:$0xff]
      %v6151 = vld [vmem:[%s9 + $0xf0] sm:$0xff]
      %v6152 = vld [vmem:[%s9 + $0xf8] sm:$0xff]
      %v6153 = vld [vmem:[%s10] sm:$0xff]
      %v6154 = vld [vmem:[%s10 + $0x8] sm:$0xff]
      %v6155 = vld [vmem:[%s10 + $0x10] sm:$0xff]
      %v6156 = vld [vmem:[%s10 + $0x18] sm:$0xff]
      %v6157 = vld [vmem:[%s10 + $0x20] sm:$0xff]
      %v6158 = vld [vmem:[%s10 + $0x28] sm:$0xff]
      %v6159 = vld [vmem:[%s10 + $0x30] sm:$0xff]
      %v6160 = vld [vmem:[%s10 + $0x38] sm:$0xff]
      %v6169 = vunpack.c.l.b16 %v6153
      %v6170 = vunpack.c.h.b16 %v6153
      %v6171 = vunpack.c.l.b16 %v6154
      %v6172 = vunpack.c.h.b16 %v6154
      %v6173 = vunpack.c.l.b16 %v6155
      %v6174 = vunpack.c.h.b16 %v6155
      %v6175 = vunpack.c.l.b16 %v6156
      %v6176 = vunpack.c.h.b16 %v6156
      %v6177 = vunpack.c.l.b16 %v6157
      %v6178 = vunpack.c.h.b16 %v6157
      %v6179 = vunpack.c.l.b16 %v6158
      %v6180 = vunpack.c.h.b16 %v6158
      %v6181 = vunpack.c.l.b16 %v6159
      %v6182 = vunpack.c.h.b16 %v6159
      %v6183 = vunpack.c.l.b16 %v6160
      %v6184 = vunpack.c.h.b16 %v6160
      %v6185 = vpack.c.b16 %v6171, %v6169
      %v6186 = vpack.c.b16 %v6172, %v6170
      %v6187 = vpack.c.b16 %v6175, %v6173
      %v6188 = vpack.c.b16 %v6176, %v6174
      %v6189 = vpack.c.b16 %v6179, %v6177
      %v6190 = vpack.c.b16 %v6180, %v6178
      %v6191 = vpack.c.b16 %v6183, %v6181
      %v6192 = vpack.c.b16 %v6184, %v6182
      %6201 = vmatprep.subr.bf16.mxu0 %v6186
      %6202 = vmatpush1.bf16.msra.mxu0 %v6185
      %6203 = vmatprep.subr.bf16.mxu0 %v6188
      %6204 = vmatpush1.bf16.msra.mxu0 %v6187
      %6205 = vmatprep.subr.bf16.mxu0 %v6190
      %6206 = vmatpush1.bf16.msra.mxu0 %v6189
      %6207 = vmatprep.subr.bf16.mxu0 %v6192
      %6208 = vmatpush1.bf16.msra.mxu0 %v6191
      %6209 = vmatprep.subr.bf16.mxu0 0
      %6210 = vmatpush1.bf16.msra.mxu0 0
      %6211 = vmatprep.subr.bf16.mxu0 0
      %6212 = vmatpush1.bf16.msra.mxu0 0
      %6213 = vmatprep.subr.bf16.mxu0 0
      %6214 = vmatpush1.bf16.msra.mxu0 0
      %6215 = vmatprep.subr.bf16.mxu0 0
      %6216 = vmatpush1.bf16.msra.mxu0 0
      %6217 = vmatprep.subr.bf16.mxu0 0
      %6218 = vmatpush1.bf16.msra.mxu0 0
      %6219 = vmatprep.subr.bf16.mxu0 0
      %6220 = vmatpush1.bf16.msra.mxu0 0
      %6221 = vmatprep.subr.bf16.mxu0 0
      %6222 = vmatpush1.bf16.msra.mxu0 0
      %6223 = vmatprep.subr.bf16.mxu0 0
      %6224 = vmatpush1.bf16.msra.mxu0 0
      %6225 = vmatprep.subr.bf16.mxu0 0
      %6226 = vmatpush1.bf16.msra.mxu0 0
      %6227 = vmatprep.subr.bf16.mxu0 0
      %6228 = vmatpush1.bf16.msra.mxu0 0
      %6229 = vmatprep.subr.bf16.mxu0 0
      %6230 = vmatpush1.bf16.msra.mxu0 0
      %6231 = vmatprep.subr.bf16.mxu0 0
      %6232 = vmatpush1.bf16.msra.mxu0 0
      %6233 = vmatprep.mubr.bf16.mxu0 0
      %6234 = vmatmul.mubr.bf16.gmra.mrb[0].mxu0 %v1090
      %v6235 = vpop.f32.mrb[0].mxu0
      %v6236 = vadd.f32 0.0, %v6235
      %v6237 = vpop.f32.mrb[0].mxu0
      %v6238 = vadd.f32 0.0, %v6237
      %v6239 = vpop.f32.mrb[0].mxu0
      %v6240 = vadd.f32 0.0, %v6239
      %v6241 = vpop.f32.mrb[0].mxu0
      %v6242 = vadd.f32 0.0, %v6241
      %6243 = vmatprep.mubr.bf16.mxu0 0
      %6244 = vmatmul.mubr.bf16.gmra.mrb[0].mxu0 %v1093
      %v6245 = vpop.f32.mrb[0].mxu0
      %v6246 = vadd.f32 0.0, %v6245
      %v6247 = vpop.f32.mrb[0].mxu0
      %v6248 = vadd.f32 0.0, %v6247
      %v6249 = vpop.f32.mrb[0].mxu0
      %v6250 = vadd.f32 0.0, %v6249
      %v6251 = vpop.f32.mrb[0].mxu0
      %v6252 = vadd.f32 0.0, %v6251
      %6253 = vmatprep.mubr.bf16.mxu0 0
      %6254 = vmatmul.mubr.bf16.gmra.mrb[0].mxu0 %v1096
      %v6255 = vpop.f32.mrb[0].mxu0
      %v6256 = vadd.f32 0.0, %v6255
      %v6257 = vpop.f32.mrb[0].mxu0
      %v6258 = vadd.f32 0.0, %v6257
      %v6259 = vpop.f32.mrb[0].mxu0
      %v6260 = vadd.f32 0.0, %v6259
      %v6261 = vpop.f32.mrb[0].mxu0
      %v6262 = vadd.f32 0.0, %v6261
      %6263 = vmatprep.mubr.bf16.mxu0 0
      %6264 = vmatmul.mubr.bf16.gmra.mrb[0].mxu0 %v1099
      %v6265 = vpop.f32.mrb[0].mxu0
      %v6266 = vadd.f32 0.0, %v6265
      %v6267 = vpop.f32.mrb[0].mxu0
      %v6268 = vadd.f32 0.0, %v6267
      %v6269 = vpop.f32.mrb[0].mxu0
      %v6270 = vadd.f32 0.0, %v6269
      %v6271 = vpop.f32.mrb[0].mxu0
      %v6272 = vadd.f32 0.0, %v6271
      %6273 = vmatprep.mubr.bf16.mxu0 0
      %6274 = vmatmul.mubr.bf16.gmra.mrb[0].mxu0 %v1102
      %v6275 = vpop.f32.mrb[0].mxu0
      %v6276 = vadd.f32 0.0, %v6275
      %v6277 = vpop.f32.mrb[0].mxu0
      %v6278 = vadd.f32 0.0, %v6277
      %v6279 = vpop.f32.mrb[0].mxu0
      %v6280 = vadd.f32 0.0, %v6279
      %v6281 = vpop.f32.mrb[0].mxu0
      %v6282 = vadd.f32 0.0, %v6281
      %6283 = vmatprep.mubr.bf16.mxu0 0
      %6284 = vmatmul.mubr.bf16.gmra.mrb[0].mxu0 %v1105
      %v6285 = vpop.f32.mrb[0].mxu0
      %v6286 = vadd.f32 0.0, %v6285
      %v6287 = vpop.f32.mrb[0].mxu0
      %v6288 = vadd.f32 0.0, %v6287
      %v6289 = vpop.f32.mrb[0].mxu0
      %v6290 = vadd.f32 0.0, %v6289
      %v6291 = vpop.f32.mrb[0].mxu0
      %v6292 = vadd.f32 0.0, %v6291
      %6293 = vmatprep.mubr.bf16.mxu0 0
      %6294 = vmatmul.mubr.bf16.gmra.mrb[0].mxu0 %v1108
      %v6295 = vpop.f32.mrb[0].mxu0
      %v6296 = vadd.f32 0.0, %v6295
      %v6297 = vpop.f32.mrb[0].mxu0
      %v6298 = vadd.f32 0.0, %v6297
      %v6299 = vpop.f32.mrb[0].mxu0
      %v6300 = vadd.f32 0.0, %v6299
      %v6301 = vpop.f32.mrb[0].mxu0
      %v6302 = vadd.f32 0.0, %v6301
      %6303 = vmatprep.mubr.bf16.mxu0 0
      %6304 = vmatmul.mubr.bf16.gmra.mrb[0].mxu0 %v1111
      %v6305 = vpop.f32.mrb[0].mxu0
      %v6306 = vadd.f32 0.0, %v6305
      %v6307 = vpop.f32.mrb[0].mxu0
      %v6308 = vadd.f32 0.0, %v6307
      %v6309 = vpop.f32.mrb[0].mxu0
      %v6310 = vadd.f32 0.0, %v6309
      %v6311 = vpop.f32.mrb[0].mxu0
      %v6312 = vadd.f32 0.0, %v6311
      %6313 = vmatprep.mubr.bf16.mxu0 0
      %6314 = vmatmul.mubr.bf16.gmra.mrb[0].mxu0 %v1114
      %v6315 = vpop.f32.mrb[0].mxu0
      %v6316 = vadd.f32 0.0, %v6315
      %v6317 = vpop.f32.mrb[0].mxu0
      %v6318 = vadd.f32 0.0, %v6317
      %v6319 = vpop.f32.mrb[0].mxu0
      %v6320 = vadd.f32 0.0, %v6319
      %v6321 = vpop.f32.mrb[0].mxu0
      %v6322 = vadd.f32 0.0, %v6321
      %6323 = vmatprep.mubr.bf16.mxu0 0
      %6324 = vmatmul.mubr.bf16.gmra.mrb[0].mxu0 %v1117
      %v6325 = vpop.f32.mrb[0].mxu0
      %v6326 = vadd.f32 0.0, %v6325
      %v6327 = vpop.f32.mrb[0].mxu0
      %v6328 = vadd.f32 0.0, %v6327
      %v6329 = vpop.f32.mrb[0].mxu0
      %v6330 = vadd.f32 0.0, %v6329
      %v6331 = vpop.f32.mrb[0].mxu0
      %v6332 = vadd.f32 0.0, %v6331
      %6333 = vmatprep.mubr.bf16.mxu0 0
      %6334 = vmatmul.mubr.bf16.gmra.mrb[0].mxu0 %v1120
      %v6335 = vpop.f32.mrb[0].mxu0
      %v6336 = vadd.f32 0.0, %v6335
      %v6337 = vpop.f32.mrb[0].mxu0
      %v6338 = vadd.f32 0.0, %v6337
      %v6339 = vpop.f32.mrb[0].mxu0
      %v6340 = vadd.f32 0.0, %v6339
      %v6341 = vpop.f32.mrb[0].mxu0
      %v6342 = vadd.f32 0.0, %v6341
      %6343 = vmatprep.mubr.bf16.mxu0 0
      %6344 = vmatmul.mubr.bf16.gmra.mrb[0].mxu0 %v1123
      %v6345 = vpop.f32.mrb[0].mxu0
      %v6346 = vadd.f32 0.0, %v6345
      %v6347 = vpop.f32.mrb[0].mxu0
      %v6348 = vadd.f32 0.0, %v6347
      %v6349 = vpop.f32.mrb[0].mxu0
      %v6350 = vadd.f32 0.0, %v6349
      %v6351 = vpop.f32.mrb[0].mxu0
      %v6352 = vadd.f32 0.0, %v6351
      %6353 = vmatprep.mubr.bf16.mxu0 0
      %6354 = vmatmul.mubr.bf16.gmra.mrb[0].mxu0 %v1126
      %v6355 = vpop.f32.mrb[0].mxu0
      %v6356 = vadd.f32 0.0, %v6355
      %v6357 = vpop.f32.mrb[0].mxu0
      %v6358 = vadd.f32 0.0, %v6357
      %v6359 = vpop.f32.mrb[0].mxu0
      %v6360 = vadd.f32 0.0, %v6359
      %v6361 = vpop.f32.mrb[0].mxu0
      %v6362 = vadd.f32 0.0, %v6361
      %6363 = vmatprep.mubr.bf16.mxu0 0
      %6364 = vmatmul.mubr.bf16.gmra.mrb[0].mxu0 %v1129
      %v6365 = vpop.f32.mrb[0].mxu0
      %v6366 = vadd.f32 0.0, %v6365
      %v6367 = vpop.f32.mrb[0].mxu0
      %v6368 = vadd.f32 0.0, %v6367
      %v6369 = vpop.f32.mrb[0].mxu0
      %v6370 = vadd.f32 0.0, %v6369
      %v6371 = vpop.f32.mrb[0].mxu0
      %v6372 = vadd.f32 0.0, %v6371
      %6373 = vmatprep.mubr.bf16.mxu0 0
      %6374 = vmatmul.mubr.bf16.gmra.mrb[0].mxu0 %v1132
      %v6375 = vpop.f32.mrb[0].mxu0
      %v6376 = vadd.f32 0.0, %v6375
      %v6377 = vpop.f32.mrb[0].mxu0
      %v6378 = vadd.f32 0.0, %v6377
      %v6379 = vpop.f32.mrb[0].mxu0
      %v6380 = vadd.f32 0.0, %v6379
      %v6381 = vpop.f32.mrb[0].mxu0
      %v6382 = vadd.f32 0.0, %v6381
      %6383 = vmatprep.mubr.bf16.mxu0 0
      %6384 = vmatmul.mubr.bf16.gmra.mrb[0].mxu0 %v1135
      %v6385 = vpop.f32.mrb[0].mxu0
      %v6386 = vadd.f32 0.0, %v6385
      %v6387 = vpop.f32.mrb[0].mxu0
      %v6388 = vadd.f32 0.0, %v6387
      %v6389 = vpop.f32.mrb[0].mxu0
      %v6390 = vadd.f32 0.0, %v6389
      %v6391 = vpop.f32.mrb[0].mxu0
      %v6392 = vadd.f32 0.0, %v6391
      %6393 = vmatprep.mubr.bf16.mxu0 0
      %6394 = vmatmul.mubr.bf16.gmra.mrb[0].mxu0 %v1138
      %v6395 = vpop.f32.mrb[0].mxu0
      %v6396 = vadd.f32 0.0, %v6395
      %v6397 = vpop.f32.mrb[0].mxu0
      %v6398 = vadd.f32 0.0, %v6397
      %v6399 = vpop.f32.mrb[0].mxu0
      %v6400 = vadd.f32 0.0, %v6399
      %v6401 = vpop.f32.mrb[0].mxu0
      %v6402 = vadd.f32 0.0, %v6401
      %6403 = vmatprep.mubr.bf16.mxu0 0
      %6404 = vmatmul.mubr.bf16.gmra.mrb[0].mxu0 %v1141
      %v6405 = vpop.f32.mrb[0].mxu0
      %v6406 = vadd.f32 0.0, %v6405
      %v6407 = vpop.f32.mrb[0].mxu0
      %v6408 = vadd.f32 0.0, %v6407
      %v6409 = vpop.f32.mrb[0].mxu0
      %v6410 = vadd.f32 0.0, %v6409
      %v6411 = vpop.f32.mrb[0].mxu0
      %v6412 = vadd.f32 0.0, %v6411
      %6413 = vmatprep.mubr.bf16.mxu0 0
      %6414 = vmatmul.mubr.bf16.gmra.mrb[0].mxu0 %v1144
      %v6415 = vpop.f32.mrb[0].mxu0
      %v6416 = vadd.f32 0.0, %v6415
      %v6417 = vpop.f32.mrb[0].mxu0
      %v6418 = vadd.f32 0.0, %v6417
      %v6419 = vpop.f32.mrb[0].mxu0
      %v6420 = vadd.f32 0.0, %v6419
      %v6421 = vpop.f32.mrb[0].mxu0
      %v6422 = vadd.f32 0.0, %v6421
      %6423 = vmatprep.mubr.bf16.mxu0 0
      %6424 = vmatmul.mubr.bf16.gmra.mrb[0].mxu0 %v1147
      %v6425 = vpop.f32.mrb[0].mxu0
      %v6426 = vadd.f32 0.0, %v6425
      %v6427 = vpop.f32.mrb[0].mxu0
      %v6428 = vadd.f32 0.0, %v6427
      %v6429 = vpop.f32.mrb[0].mxu0
      %v6430 = vadd.f32 0.0, %v6429
      %v6431 = vpop.f32.mrb[0].mxu0
      %v6432 = vadd.f32 0.0, %v6431
      %6433 = vmatprep.mubr.bf16.mxu0 0
      %6434 = vmatmul.mubr.bf16.gmra.mrb[0].mxu0 %v1150
      %v6435 = vpop.f32.mrb[0].mxu0
      %v6436 = vadd.f32 0.0, %v6435
      %v6437 = vpop.f32.mrb[0].mxu0
      %v6438 = vadd.f32 0.0, %v6437
      %v6439 = vpop.f32.mrb[0].mxu0
      %v6440 = vadd.f32 0.0, %v6439
      %v6441 = vpop.f32.mrb[0].mxu0
      %v6442 = vadd.f32 0.0, %v6441
      %6443 = vmatprep.mubr.bf16.mxu0 0
      %6444 = vmatmul.mubr.bf16.gmra.mrb[0].mxu0 %v1153
      %v6445 = vpop.f32.mrb[0].mxu0
      %v6446 = vadd.f32 0.0, %v6445
      %v6447 = vpop.f32.mrb[0].mxu0
      %v6448 = vadd.f32 0.0, %v6447
      %v6449 = vpop.f32.mrb[0].mxu0
      %v6450 = vadd.f32 0.0, %v6449
      %v6451 = vpop.f32.mrb[0].mxu0
      %v6452 = vadd.f32 0.0, %v6451
      %6453 = vmatprep.mubr.bf16.mxu0 0
      %6454 = vmatmul.mubr.bf16.gmra.mrb[0].mxu0 %v1156
      %v6455 = vpop.f32.mrb[0].mxu0
      %v6456 = vadd.f32 0.0, %v6455
      %v6457 = vpop.f32.mrb[0].mxu0
      %v6458 = vadd.f32 0.0, %v6457
      %v6459 = vpop.f32.mrb[0].mxu0
      %v6460 = vadd.f32 0.0, %v6459
      %v6461 = vpop.f32.mrb[0].mxu0
      %v6462 = vadd.f32 0.0, %v6461
      %6463 = vmatprep.mubr.bf16.mxu0 0
      %6464 = vmatmul.mubr.bf16.gmra.mrb[0].mxu0 %v1159
      %v6465 = vpop.f32.mrb[0].mxu0
      %v6466 = vadd.f32 0.0, %v6465
      %v6467 = vpop.f32.mrb[0].mxu0
      %v6468 = vadd.f32 0.0, %v6467
      %v6469 = vpop.f32.mrb[0].mxu0
      %v6470 = vadd.f32 0.0, %v6469
      %v6471 = vpop.f32.mrb[0].mxu0
      %v6472 = vadd.f32 0.0, %v6471
      %6473 = vmatprep.mubr.bf16.mxu0 0
      %6474 = vmatmul.mubr.bf16.gmra.mrb[0].mxu0 %v1162
      %v6475 = vpop.f32.mrb[0].mxu0
      %v6476 = vadd.f32 0.0, %v6475
      %v6477 = vpop.f32.mrb[0].mxu0
      %v6478 = vadd.f32 0.0, %v6477
      %v6479 = vpop.f32.mrb[0].mxu0
      %v6480 = vadd.f32 0.0, %v6479
      %v6481 = vpop.f32.mrb[0].mxu0
      %v6482 = vadd.f32 0.0, %v6481
      %6483 = vmatprep.mubr.bf16.mxu0 0
      %6484 = vmatmul.mubr.bf16.gmra.mrb[0].mxu0 %v1165
      %v6485 = vpop.f32.mrb[0].mxu0
      %v6486 = vadd.f32 0.0, %v6485
      %v6487 = vpop.f32.mrb[0].mxu0
      %v6488 = vadd.f32 0.0, %v6487
      %v6489 = vpop.f32.mrb[0].mxu0
      %v6490 = vadd.f32 0.0, %v6489
      %v6491 = vpop.f32.mrb[0].mxu0
      %v6492 = vadd.f32 0.0, %v6491
      %6493 = vmatprep.mubr.bf16.mxu0 0
      %6494 = vmatmul.mubr.bf16.gmra.mrb[0].mxu0 %v1168
      %v6495 = vpop.f32.mrb[0].mxu0
      %v6496 = vadd.f32 0.0, %v6495
      %v6497 = vpop.f32.mrb[0].mxu0
      %v6498 = vadd.f32 0.0, %v6497
      %v6499 = vpop.f32.mrb[0].mxu0
      %v6500 = vadd.f32 0.0, %v6499
      %v6501 = vpop.f32.mrb[0].mxu0
      %v6502 = vadd.f32 0.0, %v6501
      %6503 = vmatprep.mubr.bf16.mxu0 0
      %6504 = vmatmul.mubr.bf16.gmra.mrb[0].mxu0 %v1171
      %v6505 = vpop.f32.mrb[0].mxu0
      %v6506 = vadd.f32 0.0, %v6505
      %v6507 = vpop.f32.mrb[0].mxu0
      %v6508 = vadd.f32 0.0, %v6507
      %v6509 = vpop.f32.mrb[0].mxu0
      %v6510 = vadd.f32 0.0, %v6509
      %v6511 = vpop.f32.mrb[0].mxu0
      %v6512 = vadd.f32 0.0, %v6511
      %6513 = vmatprep.mubr.bf16.mxu0 0
      %6514 = vmatmul.mubr.bf16.gmra.mrb[0].mxu0 %v1174
      %v6515 = vpop.f32.mrb[0].mxu0
      %v6516 = vadd.f32 0.0, %v6515
      %v6517 = vpop.f32.mrb[0].mxu0
      %v6518 = vadd.f32 0.0, %v6517
      %v6519 = vpop.f32.mrb[0].mxu0
      %v6520 = vadd.f32 0.0, %v6519
      %v6521 = vpop.f32.mrb[0].mxu0
      %v6522 = vadd.f32 0.0, %v6521
      %6523 = vmatprep.mubr.bf16.mxu0 0
      %6524 = vmatmul.mubr.bf16.gmra.mrb[0].mxu0 %v1177
      %v6525 = vpop.f32.mrb[0].mxu0
      %v6526 = vadd.f32 0.0, %v6525
      %v6527 = vpop.f32.mrb[0].mxu0
      %v6528 = vadd.f32 0.0, %v6527
      %v6529 = vpop.f32.mrb[0].mxu0
      %v6530 = vadd.f32 0.0, %v6529
      %v6531 = vpop.f32.mrb[0].mxu0
      %v6532 = vadd.f32 0.0, %v6531
      %6533 = vmatprep.mubr.bf16.mxu0 0
      %6534 = vmatmul.mubr.bf16.gmra.mrb[0].mxu0 %v1180
      %v6535 = vpop.f32.mrb[0].mxu0
      %v6536 = vadd.f32 0.0, %v6535
      %v6537 = vpop.f32.mrb[0].mxu0
      %v6538 = vadd.f32 0.0, %v6537
      %v6539 = vpop.f32.mrb[0].mxu0
      %v6540 = vadd.f32 0.0, %v6539
      %v6541 = vpop.f32.mrb[0].mxu0
      %v6542 = vadd.f32 0.0, %v6541
      %6543 = vmatprep.mubr.bf16.mxu0 0
      %6544 = vmatmul.mubr.bf16.gmra.mrb[0].mxu0 %v1183
      %v6545 = vpop.f32.mrb[0].mxu0
      %v6546 = vadd.f32 0.0, %v6545
      %v6547 = vpop.f32.mrb[0].mxu0
      %v6548 = vadd.f32 0.0, %v6547
      %v6549 = vpop.f32.mrb[0].mxu0
      %v6550 = vadd.f32 0.0, %v6549
      %v6551 = vpop.f32.mrb[0].mxu0
      %v6552 = vadd.f32 0.0, %v6551
      %6553 = vmatprep.mubr.bf16.mxu0 0
      %6554 = vmatmul.mubr.bf16.gmra.mrb[0].mxu0 %v1186
      %v6555 = vpop.f32.mrb[0].mxu0
      %v6556 = vadd.f32 0.0, %v6555
      %v6557 = vpop.f32.mrb[0].mxu0
      %v6558 = vadd.f32 0.0, %v6557
      %v6559 = vpop.f32.mrb[0].mxu0
      %v6560 = vadd.f32 0.0, %v6559
      %v6561 = vpop.f32.mrb[0].mxu0
      %v6562 = vadd.f32 0.0, %v6561
      %6563 = vmatprep.mubr.bf16.mxu0 0
      %6564 = vmatmul.mubr.bf16.gmra.mrb[0].mxu0 %v1189
      %v6565 = vpop.f32.mrb[0].mxu0
      %v6566 = vadd.f32 0.0, %v6565
      %v6567 = vpop.f32.mrb[0].mxu0
      %v6568 = vadd.f32 0.0, %v6567
      %v6569 = vpop.f32.mrb[0].mxu0
      %v6570 = vadd.f32 0.0, %v6569
      %v6571 = vpop.f32.mrb[0].mxu0
      %v6572 = vadd.f32 0.0, %v6571
      %6573 = vmatprep.mubr.bf16.mxu0 0
      %6574 = vmatmul.mubr.bf16.gmra.mrb[0].mxu0 %v1192
      %v6575 = vpop.f32.mrb[0].mxu0
      %v6576 = vadd.f32 0.0, %v6575
      %v6577 = vpop.f32.mrb[0].mxu0
      %v6578 = vadd.f32 0.0, %v6577
      %v6579 = vpop.f32.mrb[0].mxu0
      %v6580 = vadd.f32 0.0, %v6579
      %v6581 = vpop.f32.mrb[0].mxu0
      %v6582 = vadd.f32 0.0, %v6581
      %6583 = vmatprep.mubr.bf16.mxu0 0
      %6584 = vmatmul.mubr.bf16.gmra.mrb[0].mxu0 %v1195
      %v6585 = vpop.f32.mrb[0].mxu0
      %v6586 = vadd.f32 0.0, %v6585
      %v6587 = vpop.f32.mrb[0].mxu0
      %v6588 = vadd.f32 0.0, %v6587
      %v6589 = vpop.f32.mrb[0].mxu0
      %v6590 = vadd.f32 0.0, %v6589
      %v6591 = vpop.f32.mrb[0].mxu0
      %v6592 = vadd.f32 0.0, %v6591
      %6593 = vmatprep.mubr.bf16.mxu0 0
      %6594 = vmatmul.mubr.bf16.gmra.mrb[0].mxu0 %v1198
      %v6595 = vpop.f32.mrb[0].mxu0
      %v6596 = vadd.f32 0.0, %v6595
      %v6597 = vpop.f32.mrb[0].mxu0
      %v6598 = vadd.f32 0.0, %v6597
      %v6599 = vpop.f32.mrb[0].mxu0
      %v6600 = vadd.f32 0.0, %v6599
      %v6601 = vpop.f32.mrb[0].mxu0
      %v6602 = vadd.f32 0.0, %v6601
      %6603 = vmatprep.mubr.bf16.mxu0 0
      %6604 = vmatmul.mubr.bf16.gmra.mrb[0].mxu0 %v1201
      %v6605 = vpop.f32.mrb[0].mxu0
      %v6606 = vadd.f32 0.0, %v6605
      %v6607 = vpop.f32.mrb[0].mxu0
      %v6608 = vadd.f32 0.0, %v6607
      %v6609 = vpop.f32.mrb[0].mxu0
      %v6610 = vadd.f32 0.0, %v6609
      %v6611 = vpop.f32.mrb[0].mxu0
      %v6612 = vadd.f32 0.0, %v6611
      %6613 = vmatprep.mubr.bf16.mxu0 0
      %6614 = vmatmul.mubr.bf16.gmra.mrb[0].mxu0 %v1204
      %v6615 = vpop.f32.mrb[0].mxu0
      %v6616 = vadd.f32 0.0, %v6615
      %v6617 = vpop.f32.mrb[0].mxu0
      %v6618 = vadd.f32 0.0, %v6617
      %v6619 = vpop.f32.mrb[0].mxu0
      %v6620 = vadd.f32 0.0, %v6619
      %v6621 = vpop.f32.mrb[0].mxu0
      %v6622 = vadd.f32 0.0, %v6621
      %6623 = vmatprep.mubr.bf16.mxu0 0
      %6624 = vmatmul.mubr.bf16.gmra.mrb[0].mxu0 %v1207
      %v6625 = vpop.f32.mrb[0].mxu0
      %v6626 = vadd.f32 0.0, %v6625
      %v6627 = vpop.f32.mrb[0].mxu0
      %v6628 = vadd.f32 0.0, %v6627
      %v6629 = vpop.f32.mrb[0].mxu0
      %v6630 = vadd.f32 0.0, %v6629
      %v6631 = vpop.f32.mrb[0].mxu0
      %v6632 = vadd.f32 0.0, %v6631
      %6633 = vmatprep.mubr.bf16.mxu0 0
      %6634 = vmatmul.mubr.bf16.gmra.mrb[0].mxu0 %v1210
      %v6635 = vpop.f32.mrb[0].mxu0
      %v6636 = vadd.f32 0.0, %v6635
      %v6637 = vpop.f32.mrb[0].mxu0
      %v6638 = vadd.f32 0.0, %v6637
      %v6639 = vpop.f32.mrb[0].mxu0
      %v6640 = vadd.f32 0.0, %v6639
      %v6641 = vpop.f32.mrb[0].mxu0
      %v6642 = vadd.f32 0.0, %v6641
      %6643 = vmatprep.mubr.bf16.mxu0 0
      %6644 = vmatmul.mubr.bf16.gmra.mrb[0].mxu0 %v1213
      %v6645 = vpop.f32.mrb[0].mxu0
      %v6646 = vadd.f32 0.0, %v6645
      %v6647 = vpop.f32.mrb[0].mxu0
      %v6648 = vadd.f32 0.0, %v6647
      %v6649 = vpop.f32.mrb[0].mxu0
      %v6650 = vadd.f32 0.0, %v6649
      %v6651 = vpop.f32.mrb[0].mxu0
      %v6652 = vadd.f32 0.0, %v6651
      %6653 = vmatprep.mubr.bf16.mxu0 0
      %6654 = vmatmul.mubr.bf16.gmra.mrb[0].mxu0 %v1216
      %v6655 = vpop.f32.mrb[0].mxu0
      %v6656 = vadd.f32 0.0, %v6655
      %v6657 = vpop.f32.mrb[0].mxu0
      %v6658 = vadd.f32 0.0, %v6657
      %v6659 = vpop.f32.mrb[0].mxu0
      %v6660 = vadd.f32 0.0, %v6659
      %v6661 = vpop.f32.mrb[0].mxu0
      %v6662 = vadd.f32 0.0, %v6661
      %6663 = vmatprep.mubr.bf16.mxu0 0
      %6664 = vmatmul.mubr.bf16.gmra.mrb[0].mxu0 %v1219
      %v6665 = vpop.f32.mrb[0].mxu0
      %v6666 = vadd.f32 0.0, %v6665
      %v6667 = vpop.f32.mrb[0].mxu0
      %v6668 = vadd.f32 0.0, %v6667
      %v6669 = vpop.f32.mrb[0].mxu0
      %v6670 = vadd.f32 0.0, %v6669
      %v6671 = vpop.f32.mrb[0].mxu0
      %v6672 = vadd.f32 0.0, %v6671
      %6673 = vmatprep.mubr.bf16.mxu0 0
      %6674 = vmatmul.mubr.bf16.gmra.mrb[0].mxu0 %v1222
      %v6675 = vpop.f32.mrb[0].mxu0
      %v6676 = vadd.f32 0.0, %v6675
      %v6677 = vpop.f32.mrb[0].mxu0
      %v6678 = vadd.f32 0.0, %v6677
      %v6679 = vpop.f32.mrb[0].mxu0
      %v6680 = vadd.f32 0.0, %v6679
      %v6681 = vpop.f32.mrb[0].mxu0
      %v6682 = vadd.f32 0.0, %v6681
      %6683 = vmatprep.mubr.bf16.mxu0 0
      %6684 = vmatmul.mubr.bf16.gmra.mrb[0].mxu0 %v1225
      %v6685 = vpop.f32.mrb[0].mxu0
      %v6686 = vadd.f32 0.0, %v6685
      %v6687 = vpop.f32.mrb[0].mxu0
      %v6688 = vadd.f32 0.0, %v6687
      %v6689 = vpop.f32.mrb[0].mxu0
      %v6690 = vadd.f32 0.0, %v6689
      %v6691 = vpop.f32.mrb[0].mxu0
      %v6692 = vadd.f32 0.0, %v6691
      %6693 = vmatprep.mubr.bf16.mxu0 0
      %6694 = vmatmul.mubr.bf16.gmra.mrb[0].mxu0 %v1228
      %v6695 = vpop.f32.mrb[0].mxu0
      %v6696 = vadd.f32 0.0, %v6695
      %v6697 = vpop.f32.mrb[0].mxu0
      %v6698 = vadd.f32 0.0, %v6697
      %v6699 = vpop.f32.mrb[0].mxu0
      %v6700 = vadd.f32 0.0, %v6699
      %v6701 = vpop.f32.mrb[0].mxu0
      %v6702 = vadd.f32 0.0, %v6701
      %6703 = vmatprep.mubr.bf16.mxu0 0
      %6704 = vmatmul.mubr.bf16.gmra.mrb[0].mxu0 %v1231
      %v6705 = vpop.f32.mrb[0].mxu0
      %v6706 = vadd.f32 0.0, %v6705
      %v6707 = vpop.f32.mrb[0].mxu0
      %v6708 = vadd.f32 0.0, %v6707
      %v6709 = vpop.f32.mrb[0].mxu0
      %v6710 = vadd.f32 0.0, %v6709
      %v6711 = vpop.f32.mrb[0].mxu0
      %v6712 = vadd.f32 0.0, %v6711
      %6713 = vmatprep.mubr.bf16.mxu0 0
      %6714 = vmatmul.mubr.bf16.gmra.mrb[0].mxu0 %v1234
      %v6715 = vpop.f32.mrb[0].mxu0
      %v6716 = vadd.f32 0.0, %v6715
      %v6717 = vpop.f32.mrb[0].mxu0
      %v6718 = vadd.f32 0.0, %v6717
      %v6719 = vpop.f32.mrb[0].mxu0
      %v6720 = vadd.f32 0.0, %v6719
      %v6721 = vpop.f32.mrb[0].mxu0
      %v6722 = vadd.f32 0.0, %v6721
      %6723 = vmatprep.mubr.bf16.mxu0 0
      %6724 = vmatmul.mubr.bf16.gmra.mrb[0].mxu0 %v1237
      %v6725 = vpop.f32.mrb[0].mxu0
      %v6726 = vadd.f32 0.0, %v6725
      %v6727 = vpop.f32.mrb[0].mxu0
      %v6728 = vadd.f32 0.0, %v6727
      %v6729 = vpop.f32.mrb[0].mxu0
      %v6730 = vadd.f32 0.0, %v6729
      %v6731 = vpop.f32.mrb[0].mxu0
      %v6732 = vadd.f32 0.0, %v6731
      %6733 = vmatprep.mubr.bf16.mxu0 0
      %6734 = vmatmul.mubr.bf16.gmra.mrb[0].mxu0 %v1240
      %v6735 = vpop.f32.mrb[0].mxu0
      %v6736 = vadd.f32 0.0, %v6735
      %v6737 = vpop.f32.mrb[0].mxu0
      %v6738 = vadd.f32 0.0, %v6737
      %v6739 = vpop.f32.mrb[0].mxu0
      %v6740 = vadd.f32 0.0, %v6739
      %v6741 = vpop.f32.mrb[0].mxu0
      %v6742 = vadd.f32 0.0, %v6741
      %6743 = vmatprep.mubr.bf16.mxu0 0
      %6744 = vmatmul.mubr.bf16.gmra.mrb[0].mxu0 %v1243
      %v6745 = vpop.f32.mrb[0].mxu0
      %v6746 = vadd.f32 0.0, %v6745
      %v6747 = vpop.f32.mrb[0].mxu0
      %v6748 = vadd.f32 0.0, %v6747
      %v6749 = vpop.f32.mrb[0].mxu0
      %v6750 = vadd.f32 0.0, %v6749
      %v6751 = vpop.f32.mrb[0].mxu0
      %v6752 = vadd.f32 0.0, %v6751
      %6753 = vmatprep.mubr.bf16.mxu0 0
      %6754 = vmatmul.mubr.bf16.gmra.mrb[0].mxu0 %v1246
      %v6755 = vpop.f32.mrb[0].mxu0
      %v6756 = vadd.f32 0.0, %v6755
      %v6757 = vpop.f32.mrb[0].mxu0
      %v6758 = vadd.f32 0.0, %v6757
      %v6759 = vpop.f32.mrb[0].mxu0
      %v6760 = vadd.f32 0.0, %v6759
      %v6761 = vpop.f32.mrb[0].mxu0
      %v6762 = vadd.f32 0.0, %v6761
      %6763 = vmatprep.mubr.bf16.mxu0 0
      %6764 = vmatmul.mubr.bf16.gmra.mrb[0].mxu0 %v1249
      %v6765 = vpop.f32.mrb[0].mxu0
      %v6766 = vadd.f32 0.0, %v6765
      %v6767 = vpop.f32.mrb[0].mxu0
      %v6768 = vadd.f32 0.0, %v6767
      %v6769 = vpop.f32.mrb[0].mxu0
      %v6770 = vadd.f32 0.0, %v6769
      %v6771 = vpop.f32.mrb[0].mxu0
      %v6772 = vadd.f32 0.0, %v6771
      %6773 = vmatprep.mubr.bf16.mxu0 0
      %6774 = vmatmul.mubr.bf16.gmra.mrb[0].mxu0 %v1252
      %v6775 = vpop.f32.mrb[0].mxu0
      %v6776 = vadd.f32 0.0, %v6775
      %v6777 = vpop.f32.mrb[0].mxu0
      %v6778 = vadd.f32 0.0, %v6777
      %v6779 = vpop.f32.mrb[0].mxu0
      %v6780 = vadd.f32 0.0, %v6779
      %v6781 = vpop.f32.mrb[0].mxu0
      %v6782 = vadd.f32 0.0, %v6781
      %6783 = vmatprep.mubr.bf16.mxu0 0
      %6784 = vmatmul.mubr.bf16.gmra.mrb[0].mxu0 %v1255
      %v6785 = vpop.f32.mrb[0].mxu0
      %v6786 = vadd.f32 0.0, %v6785
      %v6787 = vpop.f32.mrb[0].mxu0
      %v6788 = vadd.f32 0.0, %v6787
      %v6789 = vpop.f32.mrb[0].mxu0
      %v6790 = vadd.f32 0.0, %v6789
      %v6791 = vpop.f32.mrb[0].mxu0
      %v6792 = vadd.f32 0.0, %v6791
      %6793 = vmatprep.mubr.bf16.mxu0 0
      %6794 = vmatmul.mubr.bf16.gmra.mrb[0].mxu0 %v1258
      %v6795 = vpop.f32.mrb[0].mxu0
      %v6796 = vadd.f32 0.0, %v6795
      %v6797 = vpop.f32.mrb[0].mxu0
      %v6798 = vadd.f32 0.0, %v6797
      %v6799 = vpop.f32.mrb[0].mxu0
      %v6800 = vadd.f32 0.0, %v6799
      %v6801 = vpop.f32.mrb[0].mxu0
      %v6802 = vadd.f32 0.0, %v6801
      %6803 = vmatprep.mubr.bf16.mxu0 0
      %6804 = vmatmul.mubr.bf16.gmra.mrb[0].mxu0 %v1261
      %v6805 = vpop.f32.mrb[0].mxu0
      %v6806 = vadd.f32 0.0, %v6805
      %v6807 = vpop.f32.mrb[0].mxu0
      %v6808 = vadd.f32 0.0, %v6807
      %v6809 = vpop.f32.mrb[0].mxu0
      %v6810 = vadd.f32 0.0, %v6809
      %v6811 = vpop.f32.mrb[0].mxu0
      %v6812 = vadd.f32 0.0, %v6811
      %6813 = vmatprep.mubr.bf16.mxu0 0
      %6814 = vmatmul.mubr.bf16.gmra.mrb[0].mxu0 %v1264
      %v6815 = vpop.f32.mrb[0].mxu0
      %v6816 = vadd.f32 0.0, %v6815
      %v6817 = vpop.f32.mrb[0].mxu0
      %v6818 = vadd.f32 0.0, %v6817
      %v6819 = vpop.f32.mrb[0].mxu0
      %v6820 = vadd.f32 0.0, %v6819
      %v6821 = vpop.f32.mrb[0].mxu0
      %v6822 = vadd.f32 0.0, %v6821
      %6823 = vmatprep.mubr.bf16.mxu0 0
      %6824 = vmatmul.mubr.bf16.gmra.mrb[0].mxu0 %v1267
      %v6825 = vpop.f32.mrb[0].mxu0
      %v6826 = vadd.f32 0.0, %v6825
      %v6827 = vpop.f32.mrb[0].mxu0
      %v6828 = vadd.f32 0.0, %v6827
      %v6829 = vpop.f32.mrb[0].mxu0
      %v6830 = vadd.f32 0.0, %v6829
      %v6831 = vpop.f32.mrb[0].mxu0
      %v6832 = vadd.f32 0.0, %v6831
      %6833 = vmatprep.mubr.bf16.mxu0 0
      %6834 = vmatmul.mubr.bf16.gmra.mrb[0].mxu0 %v1270
      %v6835 = vpop.f32.mrb[0].mxu0
      %v6836 = vadd.f32 0.0, %v6835
      %v6837 = vpop.f32.mrb[0].mxu0
      %v6838 = vadd.f32 0.0, %v6837
      %v6839 = vpop.f32.mrb[0].mxu0
      %v6840 = vadd.f32 0.0, %v6839
      %v6841 = vpop.f32.mrb[0].mxu0
      %v6842 = vadd.f32 0.0, %v6841
      %6843 = vmatprep.mubr.bf16.mxu0 0
      %6844 = vmatmul.mubr.bf16.gmra.mrb[0].mxu0 %v1273
      %v6845 = vpop.f32.mrb[0].mxu0
      %v6846 = vadd.f32 0.0, %v6845
      %v6847 = vpop.f32.mrb[0].mxu0
      %v6848 = vadd.f32 0.0, %v6847
      %v6849 = vpop.f32.mrb[0].mxu0
      %v6850 = vadd.f32 0.0, %v6849
      %v6851 = vpop.f32.mrb[0].mxu0
      %v6852 = vadd.f32 0.0, %v6851
      %6853 = vmatprep.mubr.bf16.mxu0 0
      %6854 = vmatmul.mubr.bf16.gmra.mrb[0].mxu0 %v1276
      %v6855 = vpop.f32.mrb[0].mxu0
      %v6856 = vadd.f32 0.0, %v6855
      %v6857 = vpop.f32.mrb[0].mxu0
      %v6858 = vadd.f32 0.0, %v6857
      %v6859 = vpop.f32.mrb[0].mxu0
      %v6860 = vadd.f32 0.0, %v6859
      %v6861 = vpop.f32.mrb[0].mxu0
      %v6862 = vadd.f32 0.0, %v6861
      %6863 = vmatprep.mubr.bf16.mxu0 0
      %6864 = vmatmul.mubr.bf16.gmra.mrb[0].mxu0 %v1279
      %v6865 = vpop.f32.mrb[0].mxu0
      %v6866 = vadd.f32 0.0, %v6865
      %v6867 = vpop.f32.mrb[0].mxu0
      %v6868 = vadd.f32 0.0, %v6867
      %v6869 = vpop.f32.mrb[0].mxu0
      %v6870 = vadd.f32 0.0, %v6869
      %v6871 = vpop.f32.mrb[0].mxu0
      %v6872 = vadd.f32 0.0, %v6871
      %6873 = vdwg.mxu0
      %v6906 = vunpack.c.l.b16 %v6121
      %v6907 = vunpack.c.h.b16 %v6121
      %v6908 = vunpack.c.l.b16 %v6122
      %v6909 = vunpack.c.h.b16 %v6122
      %v6910 = vunpack.c.l.b16 %v6123
      %v6911 = vunpack.c.h.b16 %v6123
      %v6912 = vunpack.c.l.b16 %v6124
      %v6913 = vunpack.c.h.b16 %v6124
      %v6914 = vunpack.c.l.b16 %v6125
      %v6915 = vunpack.c.h.b16 %v6125
      %v6916 = vunpack.c.l.b16 %v6126
      %v6917 = vunpack.c.h.b16 %v6126
      %v6918 = vunpack.c.l.b16 %v6127
      %v6919 = vunpack.c.h.b16 %v6127
      %v6920 = vunpack.c.l.b16 %v6128
      %v6921 = vunpack.c.h.b16 %v6128
      %v6922 = vunpack.c.l.b16 %v6129
      %v6923 = vunpack.c.h.b16 %v6129
      %v6924 = vunpack.c.l.b16 %v6130
      %v6925 = vunpack.c.h.b16 %v6130
      %v6926 = vunpack.c.l.b16 %v6131
      %v6927 = vunpack.c.h.b16 %v6131
      %v6928 = vunpack.c.l.b16 %v6132
      %v6929 = vunpack.c.h.b16 %v6132
      %v6930 = vunpack.c.l.b16 %v6133
      %v6931 = vunpack.c.h.b16 %v6133
      %v6932 = vunpack.c.l.b16 %v6134
      %v6933 = vunpack.c.h.b16 %v6134
      %v6934 = vunpack.c.l.b16 %v6135
      %v6935 = vunpack.c.h.b16 %v6135
      %v6936 = vunpack.c.l.b16 %v6136
      %v6937 = vunpack.c.h.b16 %v6136
      %v6938 = vunpack.c.l.b16 %v6137
      %v6939 = vunpack.c.h.b16 %v6137
      %v6940 = vunpack.c.l.b16 %v6138
      %v6941 = vunpack.c.h.b16 %v6138
      %v6942 = vunpack.c.l.b16 %v6139
      %v6943 = vunpack.c.h.b16 %v6139
      %v6944 = vunpack.c.l.b16 %v6140
      %v6945 = vunpack.c.h.b16 %v6140
      %v6946 = vunpack.c.l.b16 %v6141
      %v6947 = vunpack.c.h.b16 %v6141
      %v6948 = vunpack.c.l.b16 %v6142
      %v6949 = vunpack.c.h.b16 %v6142
      %v6950 = vunpack.c.l.b16 %v6143
      %v6951 = vunpack.c.h.b16 %v6143
      %v6952 = vunpack.c.l.b16 %v6144
      %v6953 = vunpack.c.h.b16 %v6144
      %v6954 = vunpack.c.l.b16 %v6145
      %v6955 = vunpack.c.h.b16 %v6145
      %v6956 = vunpack.c.l.b16 %v6146
      %v6957 = vunpack.c.h.b16 %v6146
      %v6958 = vunpack.c.l.b16 %v6147
      %v6959 = vunpack.c.h.b16 %v6147
      %v6960 = vunpack.c.l.b16 %v6148
      %v6961 = vunpack.c.h.b16 %v6148
      %v6962 = vunpack.c.l.b16 %v6149
      %v6963 = vunpack.c.h.b16 %v6149
      %v6964 = vunpack.c.l.b16 %v6150
      %v6965 = vunpack.c.h.b16 %v6150
      %v6966 = vunpack.c.l.b16 %v6151
      %v6967 = vunpack.c.h.b16 %v6151
      %v6968 = vunpack.c.l.b16 %v6152
      %v6969 = vunpack.c.h.b16 %v6152
      %v6970 = vpack.c.b16 %v6908, %v6906
      %v6971 = vpack.c.b16 %v6909, %v6907
      %v6972 = vpack.c.b16 %v6912, %v6910
      %v6973 = vpack.c.b16 %v6913, %v6911
      %v6974 = vpack.c.b16 %v6916, %v6914
      %v6975 = vpack.c.b16 %v6917, %v6915
      %v6976 = vpack.c.b16 %v6920, %v6918
      %v6977 = vpack.c.b16 %v6921, %v6919
      %v6978 = vpack.c.b16 %v6924, %v6922
      %v6979 = vpack.c.b16 %v6925, %v6923
      %v6980 = vpack.c.b16 %v6928, %v6926
      %v6981 = vpack.c.b16 %v6929, %v6927
      %v6982 = vpack.c.b16 %v6932, %v6930
      %v6983 = vpack.c.b16 %v6933, %v6931
      %v6984 = vpack.c.b16 %v6936, %v6934
      %v6985 = vpack.c.b16 %v6937, %v6935
      %v6986 = vpack.c.b16 %v6940, %v6938
      %v6987 = vpack.c.b16 %v6941, %v6939
      %v6988 = vpack.c.b16 %v6944, %v6942
      %v6989 = vpack.c.b16 %v6945, %v6943
      %v6990 = vpack.c.b16 %v6948, %v6946
      %v6991 = vpack.c.b16 %v6949, %v6947
      %v6992 = vpack.c.b16 %v6952, %v6950
      %v6993 = vpack.c.b16 %v6953, %v6951
      %v6994 = vpack.c.b16 %v6956, %v6954
      %v6995 = vpack.c.b16 %v6957, %v6955
      %v6996 = vpack.c.b16 %v6960, %v6958
      %v6997 = vpack.c.b16 %v6961, %v6959
      %v6998 = vpack.c.b16 %v6964, %v6962
      %v6999 = vpack.c.b16 %v6965, %v6963
      %v7000 = vpack.c.b16 %v6968, %v6966
      %v7001 = vpack.c.b16 %v6969, %v6967
      %7034 = vmatprep.subr.bf16.mxu0 %v6971
      %7035 = vmatpush1.bf16.msra.mxu0 %v6970
      %7036 = vmatprep.subr.bf16.mxu0 %v6973
      %7037 = vmatpush1.bf16.msra.mxu0 %v6972
      %7038 = vmatprep.subr.bf16.mxu0 %v6975
      %7039 = vmatpush1.bf16.msra.mxu0 %v6974
      %7040 = vmatprep.subr.bf16.mxu0 %v6977
      %7041 = vmatpush1.bf16.msra.mxu0 %v6976
      %7042 = vmatprep.subr.bf16.mxu0 %v6979
      %7043 = vmatpush1.bf16.msra.mxu0 %v6978
      %7044 = vmatprep.subr.bf16.mxu0 %v6981
      %7045 = vmatpush1.bf16.msra.mxu0 %v6980
      %7046 = vmatprep.subr.bf16.mxu0 %v6983
      %7047 = vmatpush1.bf16.msra.mxu0 %v6982
      %7048 = vmatprep.subr.bf16.mxu0 %v6985
      %7049 = vmatpush1.bf16.msra.mxu0 %v6984
      %7050 = vmatprep.subr.bf16.mxu0 %v6987
      %7051 = vmatpush1.bf16.msra.mxu0 %v6986
      %7052 = vmatprep.subr.bf16.mxu0 %v6989
      %7053 = vmatpush1.bf16.msra.mxu0 %v6988
      %7054 = vmatprep.subr.bf16.mxu0 %v6991
      %7055 = vmatpush1.bf16.msra.mxu0 %v6990
      %7056 = vmatprep.subr.bf16.mxu0 %v6993
      %7057 = vmatpush1.bf16.msra.mxu0 %v6992
      %7058 = vmatprep.subr.bf16.mxu0 %v6995
      %7059 = vmatpush1.bf16.msra.mxu0 %v6994
      %7060 = vmatprep.subr.bf16.mxu0 %v6997
      %7061 = vmatpush1.bf16.msra.mxu0 %v6996
      %7062 = vmatprep.subr.bf16.mxu0 %v6999
      %7063 = vmatpush1.bf16.msra.mxu0 %v6998
      %7064 = vmatprep.subr.bf16.mxu0 %v7001
      %7065 = vmatpush1.bf16.msra.mxu0 %v7000
      %7066 = vmatprep.mubr.bf16.mxu0 %v5994
      %7067 = vmatmul.mubr.bf16.gmra.mrb[0].mxu0 %v5993
      %v7068 = vpop.f32.mrb[0].mxu0
      %v7069 = vadd.f32 %v6236, %v7068
      %v7070 = vpop.f32.mrb[0].mxu0
      %v7071 = vadd.f32 %v6238, %v7070
      %v7072 = vpop.f32.mrb[0].mxu0
      %v7073 = vadd.f32 %v6240, %v7072
      %v7074 = vpop.f32.mrb[0].mxu0
      %v7075 = vadd.f32 %v6242, %v7074
      %7076 = vmatprep.mubr.bf16.mxu0 %v5996
      %7077 = vmatmul.mubr.bf16.gmra.mrb[0].mxu0 %v5995
      %v7078 = vpop.f32.mrb[0].mxu0
      %v7079 = vadd.f32 %v6246, %v7078
      %v7080 = vpop.f32.mrb[0].mxu0
      %v7081 = vadd.f32 %v6248, %v7080
      %v7082 = vpop.f32.mrb[0].mxu0
      %v7083 = vadd.f32 %v6250, %v7082
      %v7084 = vpop.f32.mrb[0].mxu0
      %v7085 = vadd.f32 %v6252, %v7084
      %7086 = vmatprep.mubr.bf16.mxu0 %v5998
      %7087 = vmatmul.mubr.bf16.gmra.mrb[0].mxu0 %v5997
      %v7088 = vpop.f32.mrb[0].mxu0
      %v7089 = vadd.f32 %v6256, %v7088
      %v7090 = vpop.f32.mrb[0].mxu0
      %v7091 = vadd.f32 %v6258, %v7090
      %v7092 = vpop.f32.mrb[0].mxu0
      %v7093 = vadd.f32 %v6260, %v7092
      %v7094 = vpop.f32.mrb[0].mxu0
      %v7095 = vadd.f32 %v6262, %v7094
      %7096 = vmatprep.mubr.bf16.mxu0 %v6000
      %7097 = vmatmul.mubr.bf16.gmra.mrb[0].mxu0 %v5999
      %v7098 = vpop.f32.mrb[0].mxu0
      %v7099 = vadd.f32 %v6266, %v7098
      %v7100 = vpop.f32.mrb[0].mxu0
      %v7101 = vadd.f32 %v6268, %v7100
      %v7102 = vpop.f32.mrb[0].mxu0
      %v7103 = vadd.f32 %v6270, %v7102
      %v7104 = vpop.f32.mrb[0].mxu0
      %v7105 = vadd.f32 %v6272, %v7104
      %7106 = vmatprep.mubr.bf16.mxu0 %v6002
      %7107 = vmatmul.mubr.bf16.gmra.mrb[0].mxu0 %v6001
      %v7108 = vpop.f32.mrb[0].mxu0
      %v7109 = vadd.f32 %v6276, %v7108
      %v7110 = vpop.f32.mrb[0].mxu0
      %v7111 = vadd.f32 %v6278, %v7110
      %v7112 = vpop.f32.mrb[0].mxu0
      %v7113 = vadd.f32 %v6280, %v7112
      %v7114 = vpop.f32.mrb[0].mxu0
      %v7115 = vadd.f32 %v6282, %v7114
      %7116 = vmatprep.mubr.bf16.mxu0 %v6004
      %7117 = vmatmul.mubr.bf16.gmra.mrb[0].mxu0 %v6003
      %v7118 = vpop.f32.mrb[0].mxu0
      %v7119 = vadd.f32 %v6286, %v7118
      %v7120 = vpop.f32.mrb[0].mxu0
      %v7121 = vadd.f32 %v6288, %v7120
      %v7122 = vpop.f32.mrb[0].mxu0
      %v7123 = vadd.f32 %v6290, %v7122
      %v7124 = vpop.f32.mrb[0].mxu0
      %v7125 = vadd.f32 %v6292, %v7124
      %7126 = vmatprep.mubr.bf16.mxu0 %v6006
      %7127 = vmatmul.mubr.bf16.gmra.mrb[0].mxu0 %v6005
      %v7128 = vpop.f32.mrb[0].mxu0
      %v7129 = vadd.f32 %v6296, %v7128
      %v7130 = vpop.f32.mrb[0].mxu0
      %v7131 = vadd.f32 %v6298, %v7130
      %v7132 = vpop.f32.mrb[0].mxu0
      %v7133 = vadd.f32 %v6300, %v7132
      %v7134 = vpop.f32.mrb[0].mxu0
      %v7135 = vadd.f32 %v6302, %v7134
      %7136 = vmatprep.mubr.bf16.mxu0 %v6008
      %7137 = vmatmul.mubr.bf16.gmra.mrb[0].mxu0 %v6007
      %v7138 = vpop.f32.mrb[0].mxu0
      %v7139 = vadd.f32 %v6306, %v7138
      %v7140 = vpop.f32.mrb[0].mxu0
      %v7141 = vadd.f32 %v6308, %v7140
      %v7142 = vpop.f32.mrb[0].mxu0
      %v7143 = vadd.f32 %v6310, %v7142
      %v7144 = vpop.f32.mrb[0].mxu0
      %v7145 = vadd.f32 %v6312, %v7144
      %7146 = vmatprep.mubr.bf16.mxu0 %v6010
      %7147 = vmatmul.mubr.bf16.gmra.mrb[0].mxu0 %v6009
      %v7148 = vpop.f32.mrb[0].mxu0
      %v7149 = vadd.f32 %v6316, %v7148
      %v7150 = vpop.f32.mrb[0].mxu0
      %v7151 = vadd.f32 %v6318, %v7150
      %v7152 = vpop.f32.mrb[0].mxu0
      %v7153 = vadd.f32 %v6320, %v7152
      %v7154 = vpop.f32.mrb[0].mxu0
      %v7155 = vadd.f32 %v6322, %v7154
      %7156 = vmatprep.mubr.bf16.mxu0 %v6012
      %7157 = vmatmul.mubr.bf16.gmra.mrb[0].mxu0 %v6011
      %v7158 = vpop.f32.mrb[0].mxu0
      %v7159 = vadd.f32 %v6326, %v7158
      %v7160 = vpop.f32.mrb[0].mxu0
      %v7161 = vadd.f32 %v6328, %v7160
      %v7162 = vpop.f32.mrb[0].mxu0
      %v7163 = vadd.f32 %v6330, %v7162
      %v7164 = vpop.f32.mrb[0].mxu0
      %v7165 = vadd.f32 %v6332, %v7164
      %7166 = vmatprep.mubr.bf16.mxu0 %v6014
      %7167 = vmatmul.mubr.bf16.gmra.mrb[0].mxu0 %v6013
      %v7168 = vpop.f32.mrb[0].mxu0
      %v7169 = vadd.f32 %v6336, %v7168
      %v7170 = vpop.f32.mrb[0].mxu0
      %v7171 = vadd.f32 %v6338, %v7170
      %v7172 = vpop.f32.mrb[0].mxu0
      %v7173 = vadd.f32 %v6340, %v7172
      %v7174 = vpop.f32.mrb[0].mxu0
      %v7175 = vadd.f32 %v6342, %v7174
      %7176 = vmatprep.mubr.bf16.mxu0 %v6016
      %7177 = vmatmul.mubr.bf16.gmra.mrb[0].mxu0 %v6015
      %v7178 = vpop.f32.mrb[0].mxu0
      %v7179 = vadd.f32 %v6346, %v7178
      %v7180 = vpop.f32.mrb[0].mxu0
      %v7181 = vadd.f32 %v6348, %v7180
      %v7182 = vpop.f32.mrb[0].mxu0
      %v7183 = vadd.f32 %v6350, %v7182
      %v7184 = vpop.f32.mrb[0].mxu0
      %v7185 = vadd.f32 %v6352, %v7184
      %7186 = vmatprep.mubr.bf16.mxu0 %v6018
      %7187 = vmatmul.mubr.bf16.gmra.mrb[0].mxu0 %v6017
      %v7188 = vpop.f32.mrb[0].mxu0
      %v7189 = vadd.f32 %v6356, %v7188
      %v7190 = vpop.f32.mrb[0].mxu0
      %v7191 = vadd.f32 %v6358, %v7190
      %v7192 = vpop.f32.mrb[0].mxu0
      %v7193 = vadd.f32 %v6360, %v7192
      %v7194 = vpop.f32.mrb[0].mxu0
      %v7195 = vadd.f32 %v6362, %v7194
      %7196 = vmatprep.mubr.bf16.mxu0 %v6020
      %7197 = vmatmul.mubr.bf16.gmra.mrb[0].mxu0 %v6019
      %v7198 = vpop.f32.mrb[0].mxu0
      %v7199 = vadd.f32 %v6366, %v7198
      %v7200 = vpop.f32.mrb[0].mxu0
      %v7201 = vadd.f32 %v6368, %v7200
      %v7202 = vpop.f32.mrb[0].mxu0
      %v7203 = vadd.f32 %v6370, %v7202
      %v7204 = vpop.f32.mrb[0].mxu0
      %v7205 = vadd.f32 %v6372, %v7204
      %7206 = vmatprep.mubr.bf16.mxu0 %v6022
      %7207 = vmatmul.mubr.bf16.gmra.mrb[0].mxu0 %v6021
      %v7208 = vpop.f32.mrb[0].mxu0
      %v7209 = vadd.f32 %v6376, %v7208
      %v7210 = vpop.f32.mrb[0].mxu0
      %v7211 = vadd.f32 %v6378, %v7210
      %v7212 = vpop.f32.mrb[0].mxu0
      %v7213 = vadd.f32 %v6380, %v7212
      %v7214 = vpop.f32.mrb[0].mxu0
      %v7215 = vadd.f32 %v6382, %v7214
      %7216 = vmatprep.mubr.bf16.mxu0 %v6024
      %7217 = vmatmul.mubr.bf16.gmra.mrb[0].mxu0 %v6023
      %v7218 = vpop.f32.mrb[0].mxu0
      %v7219 = vadd.f32 %v6386, %v7218
      %v7220 = vpop.f32.mrb[0].mxu0
      %v7221 = vadd.f32 %v6388, %v7220
      %v7222 = vpop.f32.mrb[0].mxu0
      %v7223 = vadd.f32 %v6390, %v7222
      %v7224 = vpop.f32.mrb[0].mxu0
      %v7225 = vadd.f32 %v6392, %v7224
      %7226 = vmatprep.mubr.bf16.mxu0 %v6026
      %7227 = vmatmul.mubr.bf16.gmra.mrb[0].mxu0 %v6025
      %v7228 = vpop.f32.mrb[0].mxu0
      %v7229 = vadd.f32 %v6396, %v7228
      %v7230 = vpop.f32.mrb[0].mxu0
      %v7231 = vadd.f32 %v6398, %v7230
      %v7232 = vpop.f32.mrb[0].mxu0
      %v7233 = vadd.f32 %v6400, %v7232
      %v7234 = vpop.f32.mrb[0].mxu0
      %v7235 = vadd.f32 %v6402, %v7234
      %7236 = vmatprep.mubr.bf16.mxu0 %v6028
      %7237 = vmatmul.mubr.bf16.gmra.mrb[0].mxu0 %v6027
      %v7238 = vpop.f32.mrb[0].mxu0
      %v7239 = vadd.f32 %v6406, %v7238
      %v7240 = vpop.f32.mrb[0].mxu0
      %v7241 = vadd.f32 %v6408, %v7240
      %v7242 = vpop.f32.mrb[0].mxu0
      %v7243 = vadd.f32 %v6410, %v7242
      %v7244 = vpop.f32.mrb[0].mxu0
      %v7245 = vadd.f32 %v6412, %v7244
      %7246 = vmatprep.mubr.bf16.mxu0 %v6030
      %7247 = vmatmul.mubr.bf16.gmra.mrb[0].mxu0 %v6029
      %v7248 = vpop.f32.mrb[0].mxu0
      %v7249 = vadd.f32 %v6416, %v7248
      %v7250 = vpop.f32.mrb[0].mxu0
      %v7251 = vadd.f32 %v6418, %v7250
      %v7252 = vpop.f32.mrb[0].mxu0
      %v7253 = vadd.f32 %v6420, %v7252
      %v7254 = vpop.f32.mrb[0].mxu0
      %v7255 = vadd.f32 %v6422, %v7254
      %7256 = vmatprep.mubr.bf16.mxu0 %v6032
      %7257 = vmatmul.mubr.bf16.gmra.mrb[0].mxu0 %v6031
      %v7258 = vpop.f32.mrb[0].mxu0
      %v7259 = vadd.f32 %v6426, %v7258
      %v7260 = vpop.f32.mrb[0].mxu0
      %v7261 = vadd.f32 %v6428, %v7260
      %v7262 = vpop.f32.mrb[0].mxu0
      %v7263 = vadd.f32 %v6430, %v7262
      %v7264 = vpop.f32.mrb[0].mxu0
      %v7265 = vadd.f32 %v6432, %v7264
      %7266 = vmatprep.mubr.bf16.mxu0 %v6034
      %7267 = vmatmul.mubr.bf16.gmra.mrb[0].mxu0 %v6033
      %v7268 = vpop.f32.mrb[0].mxu0
      %v7269 = vadd.f32 %v6436, %v7268
      %v7270 = vpop.f32.mrb[0].mxu0
      %v7271 = vadd.f32 %v6438, %v7270
      %v7272 = vpop.f32.mrb[0].mxu0
      %v7273 = vadd.f32 %v6440, %v7272
      %v7274 = vpop.f32.mrb[0].mxu0
      %v7275 = vadd.f32 %v6442, %v7274
      %7276 = vmatprep.mubr.bf16.mxu0 %v6036
      %7277 = vmatmul.mubr.bf16.gmra.mrb[0].mxu0 %v6035
      %v7278 = vpop.f32.mrb[0].mxu0
      %v7279 = vadd.f32 %v6446, %v7278
      %v7280 = vpop.f32.mrb[0].mxu0
      %v7281 = vadd.f32 %v6448, %v7280
      %v7282 = vpop.f32.mrb[0].mxu0
      %v7283 = vadd.f32 %v6450, %v7282
      %v7284 = vpop.f32.mrb[0].mxu0
      %v7285 = vadd.f32 %v6452, %v7284
      %7286 = vmatprep.mubr.bf16.mxu0 %v6038
      %7287 = vmatmul.mubr.bf16.gmra.mrb[0].mxu0 %v6037
      %v7288 = vpop.f32.mrb[0].mxu0
      %v7289 = vadd.f32 %v6456, %v7288
      %v7290 = vpop.f32.mrb[0].mxu0
      %v7291 = vadd.f32 %v6458, %v7290
      %v7292 = vpop.f32.mrb[0].mxu0
      %v7293 = vadd.f32 %v6460, %v7292
      %v7294 = vpop.f32.mrb[0].mxu0
      %v7295 = vadd.f32 %v6462, %v7294
      %7296 = vmatprep.mubr.bf16.mxu0 %v6040
      %7297 = vmatmul.mubr.bf16.gmra.mrb[0].mxu0 %v6039
      %v7298 = vpop.f32.mrb[0].mxu0
      %v7299 = vadd.f32 %v6466, %v7298
      %v7300 = vpop.f32.mrb[0].mxu0
      %v7301 = vadd.f32 %v6468, %v7300
      %v7302 = vpop.f32.mrb[0].mxu0
      %v7303 = vadd.f32 %v6470, %v7302
      %v7304 = vpop.f32.mrb[0].mxu0
      %v7305 = vadd.f32 %v6472, %v7304
      %7306 = vmatprep.mubr.bf16.mxu0 %v6042
      %7307 = vmatmul.mubr.bf16.gmra.mrb[0].mxu0 %v6041
      %v7308 = vpop.f32.mrb[0].mxu0
      %v7309 = vadd.f32 %v6476, %v7308
      %v7310 = vpop.f32.mrb[0].mxu0
      %v7311 = vadd.f32 %v6478, %v7310
      %v7312 = vpop.f32.mrb[0].mxu0
      %v7313 = vadd.f32 %v6480, %v7312
      %v7314 = vpop.f32.mrb[0].mxu0
      %v7315 = vadd.f32 %v6482, %v7314
      %7316 = vmatprep.mubr.bf16.mxu0 %v6044
      %7317 = vmatmul.mubr.bf16.gmra.mrb[0].mxu0 %v6043
      %v7318 = vpop.f32.mrb[0].mxu0
      %v7319 = vadd.f32 %v6486, %v7318
      %v7320 = vpop.f32.mrb[0].mxu0
      %v7321 = vadd.f32 %v6488, %v7320
      %v7322 = vpop.f32.mrb[0].mxu0
      %v7323 = vadd.f32 %v6490, %v7322
      %v7324 = vpop.f32.mrb[0].mxu0
      %v7325 = vadd.f32 %v6492, %v7324
      %7326 = vmatprep.mubr.bf16.mxu0 %v6046
      %7327 = vmatmul.mubr.bf16.gmra.mrb[0].mxu0 %v6045
      %v7328 = vpop.f32.mrb[0].mxu0
      %v7329 = vadd.f32 %v6496, %v7328
      %v7330 = vpop.f32.mrb[0].mxu0
      %v7331 = vadd.f32 %v6498, %v7330
      %v7332 = vpop.f32.mrb[0].mxu0
      %v7333 = vadd.f32 %v6500, %v7332
      %v7334 = vpop.f32.mrb[0].mxu0
      %v7335 = vadd.f32 %v6502, %v7334
      %7336 = vmatprep.mubr.bf16.mxu0 %v6048
      %7337 = vmatmul.mubr.bf16.gmra.mrb[0].mxu0 %v6047
      %v7338 = vpop.f32.mrb[0].mxu0
      %v7339 = vadd.f32 %v6506, %v7338
      %v7340 = vpop.f32.mrb[0].mxu0
      %v7341 = vadd.f32 %v6508, %v7340
      %v7342 = vpop.f32.mrb[0].mxu0
      %v7343 = vadd.f32 %v6510, %v7342
      %v7344 = vpop.f32.mrb[0].mxu0
      %v7345 = vadd.f32 %v6512, %v7344
      %7346 = vmatprep.mubr.bf16.mxu0 %v6050
      %7347 = vmatmul.mubr.bf16.gmra.mrb[0].mxu0 %v6049
      %v7348 = vpop.f32.mrb[0].mxu0
      %v7349 = vadd.f32 %v6516, %v7348
      %v7350 = vpop.f32.mrb[0].mxu0
      %v7351 = vadd.f32 %v6518, %v7350
      %v7352 = vpop.f32.mrb[0].mxu0
      %v7353 = vadd.f32 %v6520, %v7352
      %v7354 = vpop.f32.mrb[0].mxu0
      %v7355 = vadd.f32 %v6522, %v7354
      %7356 = vmatprep.mubr.bf16.mxu0 %v6052
      %7357 = vmatmul.mubr.bf16.gmra.mrb[0].mxu0 %v6051
      %v7358 = vpop.f32.mrb[0].mxu0
      %v7359 = vadd.f32 %v6526, %v7358
      %v7360 = vpop.f32.mrb[0].mxu0
      %v7361 = vadd.f32 %v6528, %v7360
      %v7362 = vpop.f32.mrb[0].mxu0
      %v7363 = vadd.f32 %v6530, %v7362
      %v7364 = vpop.f32.mrb[0].mxu0
      %v7365 = vadd.f32 %v6532, %v7364
      %7366 = vmatprep.mubr.bf16.mxu0 %v6054
      %7367 = vmatmul.mubr.bf16.gmra.mrb[0].mxu0 %v6053
      %v7368 = vpop.f32.mrb[0].mxu0
      %v7369 = vadd.f32 %v6536, %v7368
      %v7370 = vpop.f32.mrb[0].mxu0
      %v7371 = vadd.f32 %v6538, %v7370
      %v7372 = vpop.f32.mrb[0].mxu0
      %v7373 = vadd.f32 %v6540, %v7372
      %v7374 = vpop.f32.mrb[0].mxu0
      %v7375 = vadd.f32 %v6542, %v7374
      %7376 = vmatprep.mubr.bf16.mxu0 %v6056
      %7377 = vmatmul.mubr.bf16.gmra.mrb[0].mxu0 %v6055
      %v7378 = vpop.f32.mrb[0].mxu0
      %v7379 = vadd.f32 %v6546, %v7378
      %v7380 = vpop.f32.mrb[0].mxu0
      %v7381 = vadd.f32 %v6548, %v7380
      %v7382 = vpop.f32.mrb[0].mxu0
      %v7383 = vadd.f32 %v6550, %v7382
      %v7384 = vpop.f32.mrb[0].mxu0
      %v7385 = vadd.f32 %v6552, %v7384
      %7386 = vmatprep.mubr.bf16.mxu0 %v6058
      %7387 = vmatmul.mubr.bf16.gmra.mrb[0].mxu0 %v6057
      %v7388 = vpop.f32.mrb[0].mxu0
      %v7389 = vadd.f32 %v6556, %v7388
      %v7390 = vpop.f32.mrb[0].mxu0
      %v7391 = vadd.f32 %v6558, %v7390
      %v7392 = vpop.f32.mrb[0].mxu0
      %v7393 = vadd.f32 %v6560, %v7392
      %v7394 = vpop.f32.mrb[0].mxu0
      %v7395 = vadd.f32 %v6562, %v7394
      %7396 = vmatprep.mubr.bf16.mxu0 %v6060
      %7397 = vmatmul.mubr.bf16.gmra.mrb[0].mxu0 %v6059
      %v7398 = vpop.f32.mrb[0].mxu0
      %v7399 = vadd.f32 %v6566, %v7398
      %v7400 = vpop.f32.mrb[0].mxu0
      %v7401 = vadd.f32 %v6568, %v7400
      %v7402 = vpop.f32.mrb[0].mxu0
      %v7403 = vadd.f32 %v6570, %v7402
      %v7404 = vpop.f32.mrb[0].mxu0
      %v7405 = vadd.f32 %v6572, %v7404
      %7406 = vmatprep.mubr.bf16.mxu0 %v6062
      %7407 = vmatmul.mubr.bf16.gmra.mrb[0].mxu0 %v6061
      %v7408 = vpop.f32.mrb[0].mxu0
      %v7409 = vadd.f32 %v6576, %v7408
      %v7410 = vpop.f32.mrb[0].mxu0
      %v7411 = vadd.f32 %v6578, %v7410
      %v7412 = vpop.f32.mrb[0].mxu0
      %v7413 = vadd.f32 %v6580, %v7412
      %v7414 = vpop.f32.mrb[0].mxu0
      %v7415 = vadd.f32 %v6582, %v7414
      %7416 = vmatprep.mubr.bf16.mxu0 %v6064
      %7417 = vmatmul.mubr.bf16.gmra.mrb[0].mxu0 %v6063
      %v7418 = vpop.f32.mrb[0].mxu0
      %v7419 = vadd.f32 %v6586, %v7418
      %v7420 = vpop.f32.mrb[0].mxu0
      %v7421 = vadd.f32 %v6588, %v7420
      %v7422 = vpop.f32.mrb[0].mxu0
      %v7423 = vadd.f32 %v6590, %v7422
      %v7424 = vpop.f32.mrb[0].mxu0
      %v7425 = vadd.f32 %v6592, %v7424
      %7426 = vmatprep.mubr.bf16.mxu0 %v6066
      %7427 = vmatmul.mubr.bf16.gmra.mrb[0].mxu0 %v6065
      %v7428 = vpop.f32.mrb[0].mxu0
      %v7429 = vadd.f32 %v6596, %v7428
      %v7430 = vpop.f32.mrb[0].mxu0
      %v7431 = vadd.f32 %v6598, %v7430
      %v7432 = vpop.f32.mrb[0].mxu0
      %v7433 = vadd.f32 %v6600, %v7432
      %v7434 = vpop.f32.mrb[0].mxu0
      %v7435 = vadd.f32 %v6602, %v7434
      %7436 = vmatprep.mubr.bf16.mxu0 %v6068
      %7437 = vmatmul.mubr.bf16.gmra.mrb[0].mxu0 %v6067
      %v7438 = vpop.f32.mrb[0].mxu0
      %v7439 = vadd.f32 %v6606, %v7438
      %v7440 = vpop.f32.mrb[0].mxu0
      %v7441 = vadd.f32 %v6608, %v7440
      %v7442 = vpop.f32.mrb[0].mxu0
      %v7443 = vadd.f32 %v6610, %v7442
      %v7444 = vpop.f32.mrb[0].mxu0
      %v7445 = vadd.f32 %v6612, %v7444
      %7446 = vmatprep.mubr.bf16.mxu0 %v6070
      %7447 = vmatmul.mubr.bf16.gmra.mrb[0].mxu0 %v6069
      %v7448 = vpop.f32.mrb[0].mxu0
      %v7449 = vadd.f32 %v6616, %v7448
      %v7450 = vpop.f32.mrb[0].mxu0
      %v7451 = vadd.f32 %v6618, %v7450
      %v7452 = vpop.f32.mrb[0].mxu0
      %v7453 = vadd.f32 %v6620, %v7452
      %v7454 = vpop.f32.mrb[0].mxu0
      %v7455 = vadd.f32 %v6622, %v7454
      %7456 = vmatprep.mubr.bf16.mxu0 %v6072
      %7457 = vmatmul.mubr.bf16.gmra.mrb[0].mxu0 %v6071
      %v7458 = vpop.f32.mrb[0].mxu0
      %v7459 = vadd.f32 %v6626, %v7458
      %v7460 = vpop.f32.mrb[0].mxu0
      %v7461 = vadd.f32 %v6628, %v7460
      %v7462 = vpop.f32.mrb[0].mxu0
      %v7463 = vadd.f32 %v6630, %v7462
      %v7464 = vpop.f32.mrb[0].mxu0
      %v7465 = vadd.f32 %v6632, %v7464
      %7466 = vmatprep.mubr.bf16.mxu0 %v6074
      %7467 = vmatmul.mubr.bf16.gmra.mrb[0].mxu0 %v6073
      %v7468 = vpop.f32.mrb[0].mxu0
      %v7469 = vadd.f32 %v6636, %v7468
      %v7470 = vpop.f32.mrb[0].mxu0
      %v7471 = vadd.f32 %v6638, %v7470
      %v7472 = vpop.f32.mrb[0].mxu0
      %v7473 = vadd.f32 %v6640, %v7472
      %v7474 = vpop.f32.mrb[0].mxu0
      %v7475 = vadd.f32 %v6642, %v7474
      %7476 = vmatprep.mubr.bf16.mxu0 %v6076
      %7477 = vmatmul.mubr.bf16.gmra.mrb[0].mxu0 %v6075
      %v7478 = vpop.f32.mrb[0].mxu0
      %v7479 = vadd.f32 %v6646, %v7478
      %v7480 = vpop.f32.mrb[0].mxu0
      %v7481 = vadd.f32 %v6648, %v7480
      %v7482 = vpop.f32.mrb[0].mxu0
      %v7483 = vadd.f32 %v6650, %v7482
      %v7484 = vpop.f32.mrb[0].mxu0
      %v7485 = vadd.f32 %v6652, %v7484
      %7486 = vmatprep.mubr.bf16.mxu0 %v6078
      %7487 = vmatmul.mubr.bf16.gmra.mrb[0].mxu0 %v6077
      %v7488 = vpop.f32.mrb[0].mxu0
      %v7489 = vadd.f32 %v6656, %v7488
      %v7490 = vpop.f32.mrb[0].mxu0
      %v7491 = vadd.f32 %v6658, %v7490
      %v7492 = vpop.f32.mrb[0].mxu0
      %v7493 = vadd.f32 %v6660, %v7492
      %v7494 = vpop.f32.mrb[0].mxu0
      %v7495 = vadd.f32 %v6662, %v7494
      %7496 = vmatprep.mubr.bf16.mxu0 %v6080
      %7497 = vmatmul.mubr.bf16.gmra.mrb[0].mxu0 %v6079
      %v7498 = vpop.f32.mrb[0].mxu0
      %v7499 = vadd.f32 %v6666, %v7498
      %v7500 = vpop.f32.mrb[0].mxu0
      %v7501 = vadd.f32 %v6668, %v7500
      %v7502 = vpop.f32.mrb[0].mxu0
      %v7503 = vadd.f32 %v6670, %v7502
      %v7504 = vpop.f32.mrb[0].mxu0
      %v7505 = vadd.f32 %v6672, %v7504
      %7506 = vmatprep.mubr.bf16.mxu0 %v6082
      %7507 = vmatmul.mubr.bf16.gmra.mrb[0].mxu0 %v6081
      %v7508 = vpop.f32.mrb[0].mxu0
      %v7509 = vadd.f32 %v6676, %v7508
      %v7510 = vpop.f32.mrb[0].mxu0
      %v7511 = vadd.f32 %v6678, %v7510
      %v7512 = vpop.f32.mrb[0].mxu0
      %v7513 = vadd.f32 %v6680, %v7512
      %v7514 = vpop.f32.mrb[0].mxu0
      %v7515 = vadd.f32 %v6682, %v7514
      %7516 = vmatprep.mubr.bf16.mxu0 %v6084
      %7517 = vmatmul.mubr.bf16.gmra.mrb[0].mxu0 %v6083
      %v7518 = vpop.f32.mrb[0].mxu0
      %v7519 = vadd.f32 %v6686, %v7518
      %v7520 = vpop.f32.mrb[0].mxu0
      %v7521 = vadd.f32 %v6688, %v7520
      %v7522 = vpop.f32.mrb[0].mxu0
      %v7523 = vadd.f32 %v6690, %v7522
      %v7524 = vpop.f32.mrb[0].mxu0
      %v7525 = vadd.f32 %v6692, %v7524
      %7526 = vmatprep.mubr.bf16.mxu0 %v6086
      %7527 = vmatmul.mubr.bf16.gmra.mrb[0].mxu0 %v6085
      %v7528 = vpop.f32.mrb[0].mxu0
      %v7529 = vadd.f32 %v6696, %v7528
      %v7530 = vpop.f32.mrb[0].mxu0
      %v7531 = vadd.f32 %v6698, %v7530
      %v7532 = vpop.f32.mrb[0].mxu0
      %v7533 = vadd.f32 %v6700, %v7532
      %v7534 = vpop.f32.mrb[0].mxu0
      %v7535 = vadd.f32 %v6702, %v7534
      %7536 = vmatprep.mubr.bf16.mxu0 %v6088
      %7537 = vmatmul.mubr.bf16.gmra.mrb[0].mxu0 %v6087
      %v7538 = vpop.f32.mrb[0].mxu0
      %v7539 = vadd.f32 %v6706, %v7538
      %v7540 = vpop.f32.mrb[0].mxu0
      %v7541 = vadd.f32 %v6708, %v7540
      %v7542 = vpop.f32.mrb[0].mxu0
      %v7543 = vadd.f32 %v6710, %v7542
      %v7544 = vpop.f32.mrb[0].mxu0
      %v7545 = vadd.f32 %v6712, %v7544
      %7546 = vmatprep.mubr.bf16.mxu0 %v6090
      %7547 = vmatmul.mubr.bf16.gmra.mrb[0].mxu0 %v6089
      %v7548 = vpop.f32.mrb[0].mxu0
      %v7549 = vadd.f32 %v6716, %v7548
      %v7550 = vpop.f32.mrb[0].mxu0
      %v7551 = vadd.f32 %v6718, %v7550
      %v7552 = vpop.f32.mrb[0].mxu0
      %v7553 = vadd.f32 %v6720, %v7552
      %v7554 = vpop.f32.mrb[0].mxu0
      %v7555 = vadd.f32 %v6722, %v7554
      %7556 = vmatprep.mubr.bf16.mxu0 %v6092
      %7557 = vmatmul.mubr.bf16.gmra.mrb[0].mxu0 %v6091
      %v7558 = vpop.f32.mrb[0].mxu0
      %v7559 = vadd.f32 %v6726, %v7558
      %v7560 = vpop.f32.mrb[0].mxu0
      %v7561 = vadd.f32 %v6728, %v7560
      %v7562 = vpop.f32.mrb[0].mxu0
      %v7563 = vadd.f32 %v6730, %v7562
      %v7564 = vpop.f32.mrb[0].mxu0
      %v7565 = vadd.f32 %v6732, %v7564
      %7566 = vmatprep.mubr.bf16.mxu0 %v6094
      %7567 = vmatmul.mubr.bf16.gmra.mrb[0].mxu0 %v6093
      %v7568 = vpop.f32.mrb[0].mxu0
      %v7569 = vadd.f32 %v6736, %v7568
      %v7570 = vpop.f32.mrb[0].mxu0
      %v7571 = vadd.f32 %v6738, %v7570
      %v7572 = vpop.f32.mrb[0].mxu0
      %v7573 = vadd.f32 %v6740, %v7572
      %v7574 = vpop.f32.mrb[0].mxu0
      %v7575 = vadd.f32 %v6742, %v7574
      %7576 = vmatprep.mubr.bf16.mxu0 %v6096
      %7577 = vmatmul.mubr.bf16.gmra.mrb[0].mxu0 %v6095
      %v7578 = vpop.f32.mrb[0].mxu0
      %v7579 = vadd.f32 %v6746, %v7578
      %v7580 = vpop.f32.mrb[0].mxu0
      %v7581 = vadd.f32 %v6748, %v7580
      %v7582 = vpop.f32.mrb[0].mxu0
      %v7583 = vadd.f32 %v6750, %v7582
      %v7584 = vpop.f32.mrb[0].mxu0
      %v7585 = vadd.f32 %v6752, %v7584
      %7586 = vmatprep.mubr.bf16.mxu0 %v6098
      %7587 = vmatmul.mubr.bf16.gmra.mrb[0].mxu0 %v6097
      %v7588 = vpop.f32.mrb[0].mxu0
      %v7589 = vadd.f32 %v6756, %v7588
      %v7590 = vpop.f32.mrb[0].mxu0
      %v7591 = vadd.f32 %v6758, %v7590
      %v7592 = vpop.f32.mrb[0].mxu0
      %v7593 = vadd.f32 %v6760, %v7592
      %v7594 = vpop.f32.mrb[0].mxu0
      %v7595 = vadd.f32 %v6762, %v7594
      %7596 = vmatprep.mubr.bf16.mxu0 %v6100
      %7597 = vmatmul.mubr.bf16.gmra.mrb[0].mxu0 %v6099
      %v7598 = vpop.f32.mrb[0].mxu0
      %v7599 = vadd.f32 %v6766, %v7598
      %v7600 = vpop.f32.mrb[0].mxu0
      %v7601 = vadd.f32 %v6768, %v7600
      %v7602 = vpop.f32.mrb[0].mxu0
      %v7603 = vadd.f32 %v6770, %v7602
      %v7604 = vpop.f32.mrb[0].mxu0
      %v7605 = vadd.f32 %v6772, %v7604
      %7606 = vmatprep.mubr.bf16.mxu0 %v6102
      %7607 = vmatmul.mubr.bf16.gmra.mrb[0].mxu0 %v6101
      %v7608 = vpop.f32.mrb[0].mxu0
      %v7609 = vadd.f32 %v6776, %v7608
      %v7610 = vpop.f32.mrb[0].mxu0
      %v7611 = vadd.f32 %v6778, %v7610
      %v7612 = vpop.f32.mrb[0].mxu0
      %v7613 = vadd.f32 %v6780, %v7612
      %v7614 = vpop.f32.mrb[0].mxu0
      %v7615 = vadd.f32 %v6782, %v7614
      %7616 = vmatprep.mubr.bf16.mxu0 %v6104
      %7617 = vmatmul.mubr.bf16.gmra.mrb[0].mxu0 %v6103
      %v7618 = vpop.f32.mrb[0].mxu0
      %v7619 = vadd.f32 %v6786, %v7618
      %v7620 = vpop.f32.mrb[0].mxu0
      %v7621 = vadd.f32 %v6788, %v7620
      %v7622 = vpop.f32.mrb[0].mxu0
      %v7623 = vadd.f32 %v6790, %v7622
      %v7624 = vpop.f32.mrb[0].mxu0
      %v7625 = vadd.f32 %v6792, %v7624
      %7626 = vmatprep.mubr.bf16.mxu0 %v6106
      %7627 = vmatmul.mubr.bf16.gmra.mrb[0].mxu0 %v6105
      %v7628 = vpop.f32.mrb[0].mxu0
      %v7629 = vadd.f32 %v6796, %v7628
      %v7630 = vpop.f32.mrb[0].mxu0
      %v7631 = vadd.f32 %v6798, %v7630
      %v7632 = vpop.f32.mrb[0].mxu0
      %v7633 = vadd.f32 %v6800, %v7632
      %v7634 = vpop.f32.mrb[0].mxu0
      %v7635 = vadd.f32 %v6802, %v7634
      %7636 = vmatprep.mubr.bf16.mxu0 %v6108
      %7637 = vmatmul.mubr.bf16.gmra.mrb[0].mxu0 %v6107
      %v7638 = vpop.f32.mrb[0].mxu0
      %v7639 = vadd.f32 %v6806, %v7638
      %v7640 = vpop.f32.mrb[0].mxu0
      %v7641 = vadd.f32 %v6808, %v7640
      %v7642 = vpop.f32.mrb[0].mxu0
      %v7643 = vadd.f32 %v6810, %v7642
      %v7644 = vpop.f32.mrb[0].mxu0
      %v7645 = vadd.f32 %v6812, %v7644
      %7646 = vmatprep.mubr.bf16.mxu0 %v6110
      %7647 = vmatmul.mubr.bf16.gmra.mrb[0].mxu0 %v6109
      %v7648 = vpop.f32.mrb[0].mxu0
      %v7649 = vadd.f32 %v6816, %v7648
      %v7650 = vpop.f32.mrb[0].mxu0
      %v7651 = vadd.f32 %v6818, %v7650
      %v7652 = vpop.f32.mrb[0].mxu0
      %v7653 = vadd.f32 %v6820, %v7652
      %v7654 = vpop.f32.mrb[0].mxu0
      %v7655 = vadd.f32 %v6822, %v7654
      %7656 = vmatprep.mubr.bf16.mxu0 %v6112
      %7657 = vmatmul.mubr.bf16.gmra.mrb[0].mxu0 %v6111
      %v7658 = vpop.f32.mrb[0].mxu0
      %v7659 = vadd.f32 %v6826, %v7658
      %v7660 = vpop.f32.mrb[0].mxu0
      %v7661 = vadd.f32 %v6828, %v7660
      %v7662 = vpop.f32.mrb[0].mxu0
      %v7663 = vadd.f32 %v6830, %v7662
      %v7664 = vpop.f32.mrb[0].mxu0
      %v7665 = vadd.f32 %v6832, %v7664
      %7666 = vmatprep.mubr.bf16.mxu0 %v6114
      %7667 = vmatmul.mubr.bf16.gmra.mrb[0].mxu0 %v6113
      %v7668 = vpop.f32.mrb[0].mxu0
      %v7669 = vadd.f32 %v6836, %v7668
      %v7670 = vpop.f32.mrb[0].mxu0
      %v7671 = vadd.f32 %v6838, %v7670
      %v7672 = vpop.f32.mrb[0].mxu0
      %v7673 = vadd.f32 %v6840, %v7672
      %v7674 = vpop.f32.mrb[0].mxu0
      %v7675 = vadd.f32 %v6842, %v7674
      %7676 = vmatprep.mubr.bf16.mxu0 %v6116
      %7677 = vmatmul.mubr.bf16.gmra.mrb[0].mxu0 %v6115
      %v7678 = vpop.f32.mrb[0].mxu0
      %v7679 = vadd.f32 %v6846, %v7678
      %v7680 = vpop.f32.mrb[0].mxu0
      %v7681 = vadd.f32 %v6848, %v7680
      %v7682 = vpop.f32.mrb[0].mxu0
      %v7683 = vadd.f32 %v6850, %v7682
      %v7684 = vpop.f32.mrb[0].mxu0
      %v7685 = vadd.f32 %v6852, %v7684
      %7686 = vmatprep.mubr.bf16.mxu0 %v6118
      %7687 = vmatmul.mubr.bf16.gmra.mrb[0].mxu0 %v6117
      %v7688 = vpop.f32.mrb[0].mxu0
      %v7689 = vadd.f32 %v6856, %v7688
      %v7690 = vpop.f32.mrb[0].mxu0
      %v7691 = vadd.f32 %v6858, %v7690
      %v7692 = vpop.f32.mrb[0].mxu0
      %v7693 = vadd.f32 %v6860, %v7692
      %v7694 = vpop.f32.mrb[0].mxu0
      %v7695 = vadd.f32 %v6862, %v7694
      %7696 = vmatprep.mubr.bf16.mxu0 %v6120
      %7697 = vmatmul.mubr.bf16.gmra.mrb[0].mxu0 %v6119
      %v7698 = vpop.f32.mrb[0].mxu0
      %v7699 = vadd.f32 %v6866, %v7698
      %v7700 = vpop.f32.mrb[0].mxu0
      %v7701 = vadd.f32 %v6868, %v7700
      %v7702 = vpop.f32.mrb[0].mxu0
      %v7703 = vadd.f32 %v6870, %v7702
      %v7704 = vpop.f32.mrb[0].mxu0
      %v7705 = vadd.f32 %v6872, %v7704
      %7706 = vdwg.mxu0
      %v7707 = vld [vmem:[%s11] sm:$0x3]
      %v7709 = vlaneseq
      %v7710 = vshrl.u32 %v7709, 7
      %v7711 = vsub.s32 0, %v7710
      %v7712 = vrot.slane %v7707, %v7711
      %v7713 = vlaneseq
      %v7714 = vshrl.u32 %v7713, 7
      %v7715 = vsub.s32 1, %v7714
      %v7716 = vrot.slane %v7707, %v7715
      %v7719 = vadd.f32 %v7069, %v7712
      %v7720 = vadd.f32 %v7071, %v7716
      %v7721 = vadd.f32 %v7073, %v7712
      %v7722 = vadd.f32 %v7075, %v7716
      %v7723 = vadd.f32 %v7079, %v7712
      %v7724 = vadd.f32 %v7081, %v7716
      %v7725 = vadd.f32 %v7083, %v7712
      %v7726 = vadd.f32 %v7085, %v7716
      %v7727 = vadd.f32 %v7089, %v7712
      %v7728 = vadd.f32 %v7091, %v7716
      %v7729 = vadd.f32 %v7093, %v7712
      %v7730 = vadd.f32 %v7095, %v7716
      %v7731 = vadd.f32 %v7099, %v7712
      %v7732 = vadd.f32 %v7101, %v7716
      %v7733 = vadd.f32 %v7103, %v7712
      %v7734 = vadd.f32 %v7105, %v7716
      %v7735 = vadd.f32 %v7109, %v7712
      %v7736 = vadd.f32 %v7111, %v7716
      %v7737 = vadd.f32 %v7113, %v7712
      %v7738 = vadd.f32 %v7115, %v7716
      %v7739 = vadd.f32 %v7119, %v7712
      %v7740 = vadd.f32 %v7121, %v7716
      %v7741 = vadd.f32 %v7123, %v7712
      %v7742 = vadd.f32 %v7125, %v7716
      %v7743 = vadd.f32 %v7129, %v7712
      %v7744 = vadd.f32 %v7131, %v7716
      %v7745 = vadd.f32 %v7133, %v7712
      %v7746 = vadd.f32 %v7135, %v7716
      %v7747 = vadd.f32 %v7139, %v7712
      %v7748 = vadd.f32 %v7141, %v7716
      %v7749 = vadd.f32 %v7143, %v7712
      %v7750 = vadd.f32 %v7145, %v7716
      %v7751 = vadd.f32 %v7149, %v7712
      %v7752 = vadd.f32 %v7151, %v7716
      %v7753 = vadd.f32 %v7153, %v7712
      %v7754 = vadd.f32 %v7155, %v7716
      %v7755 = vadd.f32 %v7159, %v7712
      %v7756 = vadd.f32 %v7161, %v7716
      %v7757 = vadd.f32 %v7163, %v7712
      %v7758 = vadd.f32 %v7165, %v7716
      %v7759 = vadd.f32 %v7169, %v7712
      %v7760 = vadd.f32 %v7171, %v7716
      %v7761 = vadd.f32 %v7173, %v7712
      %v7762 = vadd.f32 %v7175, %v7716
      %v7763 = vadd.f32 %v7179, %v7712
      %v7764 = vadd.f32 %v7181, %v7716
      %v7765 = vadd.f32 %v7183, %v7712
      %v7766 = vadd.f32 %v7185, %v7716
      %v7767 = vadd.f32 %v7189, %v7712
      %v7768 = vadd.f32 %v7191, %v7716
      %v7769 = vadd.f32 %v7193, %v7712
      %v7770 = vadd.f32 %v7195, %v7716
      %v7771 = vadd.f32 %v7199, %v7712
      %v7772 = vadd.f32 %v7201, %v7716
      %v7773 = vadd.f32 %v7203, %v7712
      %v7774 = vadd.f32 %v7205, %v7716
      %v7775 = vadd.f32 %v7209, %v7712
      %v7776 = vadd.f32 %v7211, %v7716
      %v7777 = vadd.f32 %v7213, %v7712
      %v7778 = vadd.f32 %v7215, %v7716
      %v7779 = vadd.f32 %v7219, %v7712
      %v7780 = vadd.f32 %v7221, %v7716
      %v7781 = vadd.f32 %v7223, %v7712
      %v7782 = vadd.f32 %v7225, %v7716
      %v7783 = vadd.f32 %v7229, %v7712
      %v7784 = vadd.f32 %v7231, %v7716
      %v7785 = vadd.f32 %v7233, %v7712
      %v7786 = vadd.f32 %v7235, %v7716
      %v7787 = vadd.f32 %v7239, %v7712
      %v7788 = vadd.f32 %v7241, %v7716
      %v7789 = vadd.f32 %v7243, %v7712
      %v7790 = vadd.f32 %v7245, %v7716
      %v7791 = vadd.f32 %v7249, %v7712
      %v7792 = vadd.f32 %v7251, %v7716
      %v7793 = vadd.f32 %v7253, %v7712
      %v7794 = vadd.f32 %v7255, %v7716
      %v7795 = vadd.f32 %v7259, %v7712
      %v7796 = vadd.f32 %v7261, %v7716
      %v7797 = vadd.f32 %v7263, %v7712
      %v7798 = vadd.f32 %v7265, %v7716
      %v7799 = vadd.f32 %v7269, %v7712
      %v7800 = vadd.f32 %v7271, %v7716
      %v7801 = vadd.f32 %v7273, %v7712
      %v7802 = vadd.f32 %v7275, %v7716
      %v7803 = vadd.f32 %v7279, %v7712
      %v7804 = vadd.f32 %v7281, %v7716
      %v7805 = vadd.f32 %v7283, %v7712
      %v7806 = vadd.f32 %v7285, %v7716
      %v7807 = vadd.f32 %v7289, %v7712
      %v7808 = vadd.f32 %v7291, %v7716
      %v7809 = vadd.f32 %v7293, %v7712
      %v7810 = vadd.f32 %v7295, %v7716
      %v7811 = vadd.f32 %v7299, %v7712
      %v7812 = vadd.f32 %v7301, %v7716
      %v7813 = vadd.f32 %v7303, %v7712
      %v7814 = vadd.f32 %v7305, %v7716
      %v7815 = vadd.f32 %v7309, %v7712
      %v7816 = vadd.f32 %v7311, %v7716
      %v7817 = vadd.f32 %v7313, %v7712
      %v7818 = vadd.f32 %v7315, %v7716
      %v7819 = vadd.f32 %v7319, %v7712
      %v7820 = vadd.f32 %v7321, %v7716
      %v7821 = vadd.f32 %v7323, %v7712
      %v7822 = vadd.f32 %v7325, %v7716
      %v7823 = vadd.f32 %v7329, %v7712
      %v7824 = vadd.f32 %v7331, %v7716
      %v7825 = vadd.f32 %v7333, %v7712
      %v7826 = vadd.f32 %v7335, %v7716
      %v7827 = vadd.f32 %v7339, %v7712
      %v7828 = vadd.f32 %v7341, %v7716
      %v7829 = vadd.f32 %v7343, %v7712
      %v7830 = vadd.f32 %v7345, %v7716
      %v7831 = vadd.f32 %v7349, %v7712
      %v7832 = vadd.f32 %v7351, %v7716
      %v7833 = vadd.f32 %v7353, %v7712
      %v7834 = vadd.f32 %v7355, %v7716
      %v7835 = vadd.f32 %v7359, %v7712
      %v7836 = vadd.f32 %v7361, %v7716
      %v7837 = vadd.f32 %v7363, %v7712
      %v7838 = vadd.f32 %v7365, %v7716
      %v7839 = vadd.f32 %v7369, %v7712
      %v7840 = vadd.f32 %v7371, %v7716
      %v7841 = vadd.f32 %v7373, %v7712
      %v7842 = vadd.f32 %v7375, %v7716
      %v7843 = vadd.f32 %v7379, %v7712
      %v7844 = vadd.f32 %v7381, %v7716
      %v7845 = vadd.f32 %v7383, %v7712
      %v7846 = vadd.f32 %v7385, %v7716
      %v7847 = vadd.f32 %v7389, %v7712
      %v7848 = vadd.f32 %v7391, %v7716
      %v7849 = vadd.f32 %v7393, %v7712
      %v7850 = vadd.f32 %v7395, %v7716
      %v7851 = vadd.f32 %v7399, %v7712
      %v7852 = vadd.f32 %v7401, %v7716
      %v7853 = vadd.f32 %v7403, %v7712
      %v7854 = vadd.f32 %v7405, %v7716
      %v7855 = vadd.f32 %v7409, %v7712
      %v7856 = vadd.f32 %v7411, %v7716
      %v7857 = vadd.f32 %v7413, %v7712
      %v7858 = vadd.f32 %v7415, %v7716
      %v7859 = vadd.f32 %v7419, %v7712
      %v7860 = vadd.f32 %v7421, %v7716
      %v7861 = vadd.f32 %v7423, %v7712
      %v7862 = vadd.f32 %v7425, %v7716
      %v7863 = vadd.f32 %v7429, %v7712
      %v7864 = vadd.f32 %v7431, %v7716
      %v7865 = vadd.f32 %v7433, %v7712
      %v7866 = vadd.f32 %v7435, %v7716
      %v7867 = vadd.f32 %v7439, %v7712
      %v7868 = vadd.f32 %v7441, %v7716
      %v7869 = vadd.f32 %v7443, %v7712
      %v7870 = vadd.f32 %v7445, %v7716
      %v7871 = vadd.f32 %v7449, %v7712
      %v7872 = vadd.f32 %v7451, %v7716
      %v7873 = vadd.f32 %v7453, %v7712
      %v7874 = vadd.f32 %v7455, %v7716
      %v7875 = vadd.f32 %v7459, %v7712
      %v7876 = vadd.f32 %v7461, %v7716
      %v7877 = vadd.f32 %v7463, %v7712
      %v7878 = vadd.f32 %v7465, %v7716
      %v7879 = vadd.f32 %v7469, %v7712
      %v7880 = vadd.f32 %v7471, %v7716
      %v7881 = vadd.f32 %v7473, %v7712
      %v7882 = vadd.f32 %v7475, %v7716
      %v7883 = vadd.f32 %v7479, %v7712
      %v7884 = vadd.f32 %v7481, %v7716
      %v7885 = vadd.f32 %v7483, %v7712
      %v7886 = vadd.f32 %v7485, %v7716
      %v7887 = vadd.f32 %v7489, %v7712
      %v7888 = vadd.f32 %v7491, %v7716
      %v7889 = vadd.f32 %v7493, %v7712
      %v7890 = vadd.f32 %v7495, %v7716
      %v7891 = vadd.f32 %v7499, %v7712
      %v7892 = vadd.f32 %v7501, %v7716
      %v7893 = vadd.f32 %v7503, %v7712
      %v7894 = vadd.f32 %v7505, %v7716
      %v7895 = vadd.f32 %v7509, %v7712
      %v7896 = vadd.f32 %v7511, %v7716
      %v7897 = vadd.f32 %v7513, %v7712
      %v7898 = vadd.f32 %v7515, %v7716
      %v7899 = vadd.f32 %v7519, %v7712
      %v7900 = vadd.f32 %v7521, %v7716
      %v7901 = vadd.f32 %v7523, %v7712
      %v7902 = vadd.f32 %v7525, %v7716
      %v7903 = vadd.f32 %v7529, %v7712
      %v7904 = vadd.f32 %v7531, %v7716
      %v7905 = vadd.f32 %v7533, %v7712
      %v7906 = vadd.f32 %v7535, %v7716
      %v7907 = vadd.f32 %v7539, %v7712
      %v7908 = vadd.f32 %v7541, %v7716
      %v7909 = vadd.f32 %v7543, %v7712
      %v7910 = vadd.f32 %v7545, %v7716
      %v7911 = vadd.f32 %v7549, %v7712
      %v7912 = vadd.f32 %v7551, %v7716
      %v7913 = vadd.f32 %v7553, %v7712
      %v7914 = vadd.f32 %v7555, %v7716
      %v7915 = vadd.f32 %v7559, %v7712
      %v7916 = vadd.f32 %v7561, %v7716
      %v7917 = vadd.f32 %v7563, %v7712
      %v7918 = vadd.f32 %v7565, %v7716
      %v7919 = vadd.f32 %v7569, %v7712
      %v7920 = vadd.f32 %v7571, %v7716
      %v7921 = vadd.f32 %v7573, %v7712
      %v7922 = vadd.f32 %v7575, %v7716
      %v7923 = vadd.f32 %v7579, %v7712
      %v7924 = vadd.f32 %v7581, %v7716
      %v7925 = vadd.f32 %v7583, %v7712
      %v7926 = vadd.f32 %v7585, %v7716
      %v7927 = vadd.f32 %v7589, %v7712
      %v7928 = vadd.f32 %v7591, %v7716
      %v7929 = vadd.f32 %v7593, %v7712
      %v7930 = vadd.f32 %v7595, %v7716
      %v7931 = vadd.f32 %v7599, %v7712
      %v7932 = vadd.f32 %v7601, %v7716
      %v7933 = vadd.f32 %v7603, %v7712
      %v7934 = vadd.f32 %v7605, %v7716
      %v7935 = vadd.f32 %v7609, %v7712
      %v7936 = vadd.f32 %v7611, %v7716
      %v7937 = vadd.f32 %v7613, %v7712
      %v7938 = vadd.f32 %v7615, %v7716
      %v7939 = vadd.f32 %v7619, %v7712
      %v7940 = vadd.f32 %v7621, %v7716
      %v7941 = vadd.f32 %v7623, %v7712
      %v7942 = vadd.f32 %v7625, %v7716
      %v7943 = vadd.f32 %v7629, %v7712
      %v7944 = vadd.f32 %v7631, %v7716
      %v7945 = vadd.f32 %v7633, %v7712
      %v7946 = vadd.f32 %v7635, %v7716
      %v7947 = vadd.f32 %v7639, %v7712
      %v7948 = vadd.f32 %v7641, %v7716
      %v7949 = vadd.f32 %v7643, %v7712
      %v7950 = vadd.f32 %v7645, %v7716
      %v7951 = vadd.f32 %v7649, %v7712
      %v7952 = vadd.f32 %v7651, %v7716
      %v7953 = vadd.f32 %v7653, %v7712
      %v7954 = vadd.f32 %v7655, %v7716
      %v7955 = vadd.f32 %v7659, %v7712
      %v7956 = vadd.f32 %v7661, %v7716
      %v7957 = vadd.f32 %v7663, %v7712
      %v7958 = vadd.f32 %v7665, %v7716
      %v7959 = vadd.f32 %v7669, %v7712
      %v7960 = vadd.f32 %v7671, %v7716
      %v7961 = vadd.f32 %v7673, %v7712
      %v7962 = vadd.f32 %v7675, %v7716
      %v7963 = vadd.f32 %v7679, %v7712
      %v7964 = vadd.f32 %v7681, %v7716
      %v7965 = vadd.f32 %v7683, %v7712
      %v7966 = vadd.f32 %v7685, %v7716
      %v7967 = vadd.f32 %v7689, %v7712
      %v7968 = vadd.f32 %v7691, %v7716
      %v7969 = vadd.f32 %v7693, %v7712
      %v7970 = vadd.f32 %v7695, %v7716
      %v7971 = vadd.f32 %v7699, %v7712
      %v7972 = vadd.f32 %v7701, %v7716
      %v7973 = vadd.f32 %v7703, %v7712
      %v7974 = vadd.f32 %v7705, %v7716
      %v7975 = vmax.f32 %v7719, 0.0
      %v7976 = vmax.f32 %v7720, 0.0
      %v7977 = vmax.f32 %v7721, 0.0
      %v7978 = vmax.f32 %v7722, 0.0
      %v7979 = vmax.f32 %v7723, 0.0
      %v7980 = vmax.f32 %v7724, 0.0
      %v7981 = vmax.f32 %v7725, 0.0
      %v7982 = vmax.f32 %v7726, 0.0
      %v7983 = vmax.f32 %v7727, 0.0
      %v7984 = vmax.f32 %v7728, 0.0
      %v7985 = vmax.f32 %v7729, 0.0
      %v7986 = vmax.f32 %v7730, 0.0
      %v7987 = vmax.f32 %v7731, 0.0
      %v7988 = vmax.f32 %v7732, 0.0
      %v7989 = vmax.f32 %v7733, 0.0
      %v7990 = vmax.f32 %v7734, 0.0
      %v7991 = vmax.f32 %v7735, 0.0
      %v7992 = vmax.f32 %v7736, 0.0
      %v7993 = vmax.f32 %v7737, 0.0
      %v7994 = vmax.f32 %v7738, 0.0
      %v7995 = vmax.f32 %v7739, 0.0
      %v7996 = vmax.f32 %v7740, 0.0
      %v7997 = vmax.f32 %v7741, 0.0
      %v7998 = vmax.f32 %v7742, 0.0
      %v7999 = vmax.f32 %v7743, 0.0
      %v8000 = vmax.f32 %v7744, 0.0
      %v8001 = vmax.f32 %v7745, 0.0
      %v8002 = vmax.f32 %v7746, 0.0
      %v8003 = vmax.f32 %v7747, 0.0
      %v8004 = vmax.f32 %v7748, 0.0
      %v8005 = vmax.f32 %v7749, 0.0
      %v8006 = vmax.f32 %v7750, 0.0
      %v8007 = vmax.f32 %v7751, 0.0
      %v8008 = vmax.f32 %v7752, 0.0
      %v8009 = vmax.f32 %v7753, 0.0
      %v8010 = vmax.f32 %v7754, 0.0
      %v8011 = vmax.f32 %v7755, 0.0
      %v8012 = vmax.f32 %v7756, 0.0
      %v8013 = vmax.f32 %v7757, 0.0
      %v8014 = vmax.f32 %v7758, 0.0
      %v8015 = vmax.f32 %v7759, 0.0
      %v8016 = vmax.f32 %v7760, 0.0
      %v8017 = vmax.f32 %v7761, 0.0
      %v8018 = vmax.f32 %v7762, 0.0
      %v8019 = vmax.f32 %v7763, 0.0
      %v8020 = vmax.f32 %v7764, 0.0
      %v8021 = vmax.f32 %v7765, 0.0
      %v8022 = vmax.f32 %v7766, 0.0
      %v8023 = vmax.f32 %v7767, 0.0
      %v8024 = vmax.f32 %v7768, 0.0
      %v8025 = vmax.f32 %v7769, 0.0
      %v8026 = vmax.f32 %v7770, 0.0
      %v8027 = vmax.f32 %v7771, 0.0
      %v8028 = vmax.f32 %v7772, 0.0
      %v8029 = vmax.f32 %v7773, 0.0
      %v8030 = vmax.f32 %v7774, 0.0
      %v8031 = vmax.f32 %v7775, 0.0
      %v8032 = vmax.f32 %v7776, 0.0
      %v8033 = vmax.f32 %v7777, 0.0
      %v8034 = vmax.f32 %v7778, 0.0
      %v8035 = vmax.f32 %v7779, 0.0
      %v8036 = vmax.f32 %v7780, 0.0
      %v8037 = vmax.f32 %v7781, 0.0
      %v8038 = vmax.f32 %v7782, 0.0
      %v8039 = vmax.f32 %v7783, 0.0
      %v8040 = vmax.f32 %v7784, 0.0
      %v8041 = vmax.f32 %v7785, 0.0
      %v8042 = vmax.f32 %v7786, 0.0
      %v8043 = vmax.f32 %v7787, 0.0
      %v8044 = vmax.f32 %v7788, 0.0
      %v8045 = vmax.f32 %v7789, 0.0
      %v8046 = vmax.f32 %v7790, 0.0
      %v8047 = vmax.f32 %v7791, 0.0
      %v8048 = vmax.f32 %v7792, 0.0
      %v8049 = vmax.f32 %v7793, 0.0
      %v8050 = vmax.f32 %v7794, 0.0
      %v8051 = vmax.f32 %v7795, 0.0
      %v8052 = vmax.f32 %v7796, 0.0
      %v8053 = vmax.f32 %v7797, 0.0
      %v8054 = vmax.f32 %v7798, 0.0
      %v8055 = vmax.f32 %v7799, 0.0
      %v8056 = vmax.f32 %v7800, 0.0
      %v8057 = vmax.f32 %v7801, 0.0
      %v8058 = vmax.f32 %v7802, 0.0
      %v8059 = vmax.f32 %v7803, 0.0
      %v8060 = vmax.f32 %v7804, 0.0
      %v8061 = vmax.f32 %v7805, 0.0
      %v8062 = vmax.f32 %v7806, 0.0
      %v8063 = vmax.f32 %v7807, 0.0
      %v8064 = vmax.f32 %v7808, 0.0
      %v8065 = vmax.f32 %v7809, 0.0
      %v8066 = vmax.f32 %v7810, 0.0
      %v8067 = vmax.f32 %v7811, 0.0
      %v8068 = vmax.f32 %v7812, 0.0
      %v8069 = vmax.f32 %v7813, 0.0
      %v8070 = vmax.f32 %v7814, 0.0
      %v8071 = vmax.f32 %v7815, 0.0
      %v8072 = vmax.f32 %v7816, 0.0
      %v8073 = vmax.f32 %v7817, 0.0
      %v8074 = vmax.f32 %v7818, 0.0
      %v8075 = vmax.f32 %v7819, 0.0
      %v8076 = vmax.f32 %v7820, 0.0
      %v8077 = vmax.f32 %v7821, 0.0
      %v8078 = vmax.f32 %v7822, 0.0
      %v8079 = vmax.f32 %v7823, 0.0
      %v8080 = vmax.f32 %v7824, 0.0
      %v8081 = vmax.f32 %v7825, 0.0
      %v8082 = vmax.f32 %v7826, 0.0
      %v8083 = vmax.f32 %v7827, 0.0
      %v8084 = vmax.f32 %v7828, 0.0
      %v8085 = vmax.f32 %v7829, 0.0
      %v8086 = vmax.f32 %v7830, 0.0
      %v8087 = vmax.f32 %v7831, 0.0
      %v8088 = vmax.f32 %v7832, 0.0
      %v8089 = vmax.f32 %v7833, 0.0
      %v8090 = vmax.f32 %v7834, 0.0
      %v8091 = vmax.f32 %v7835, 0.0
      %v8092 = vmax.f32 %v7836, 0.0
      %v8093 = vmax.f32 %v7837, 0.0
      %v8094 = vmax.f32 %v7838, 0.0
      %v8095 = vmax.f32 %v7839, 0.0
      %v8096 = vmax.f32 %v7840, 0.0
      %v8097 = vmax.f32 %v7841, 0.0
      %v8098 = vmax.f32 %v7842, 0.0
      %v8099 = vmax.f32 %v7843, 0.0
      %v8100 = vmax.f32 %v7844, 0.0
      %v8101 = vmax.f32 %v7845, 0.0
      %v8102 = vmax.f32 %v7846, 0.0
      %v8103 = vmax.f32 %v7847, 0.0
      %v8104 = vmax.f32 %v7848, 0.0
      %v8105 = vmax.f32 %v7849, 0.0
      %v8106 = vmax.f32 %v7850, 0.0
      %v8107 = vmax.f32 %v7851, 0.0
      %v8108 = vmax.f32 %v7852, 0.0
      %v8109 = vmax.f32 %v7853, 0.0
      %v8110 = vmax.f32 %v7854, 0.0
      %v8111 = vmax.f32 %v7855, 0.0
      %v8112 = vmax.f32 %v7856, 0.0
      %v8113 = vmax.f32 %v7857, 0.0
      %v8114 = vmax.f32 %v7858, 0.0
      %v8115 = vmax.f32 %v7859, 0.0
      %v8116 = vmax.f32 %v7860, 0.0
      %v8117 = vmax.f32 %v7861, 0.0
      %v8118 = vmax.f32 %v7862, 0.0
      %v8119 = vmax.f32 %v7863, 0.0
      %v8120 = vmax.f32 %v7864, 0.0
      %v8121 = vmax.f32 %v7865, 0.0
      %v8122 = vmax.f32 %v7866, 0.0
      %v8123 = vmax.f32 %v7867, 0.0
      %v8124 = vmax.f32 %v7868, 0.0
      %v8125 = vmax.f32 %v7869, 0.0
      %v8126 = vmax.f32 %v7870, 0.0
      %v8127 = vmax.f32 %v7871, 0.0
      %v8128 = vmax.f32 %v7872, 0.0
      %v8129 = vmax.f32 %v7873, 0.0
      %v8130 = vmax.f32 %v7874, 0.0
      %v8131 = vmax.f32 %v7875, 0.0
      %v8132 = vmax.f32 %v7876, 0.0
      %v8133 = vmax.f32 %v7877, 0.0
      %v8134 = vmax.f32 %v7878, 0.0
      %v8135 = vmax.f32 %v7879, 0.0
      %v8136 = vmax.f32 %v7880, 0.0
      %v8137 = vmax.f32 %v7881, 0.0
      %v8138 = vmax.f32 %v7882, 0.0
      %v8139 = vmax.f32 %v7883, 0.0
      %v8140 = vmax.f32 %v7884, 0.0
      %v8141 = vmax.f32 %v7885, 0.0
      %v8142 = vmax.f32 %v7886, 0.0
      %v8143 = vmax.f32 %v7887, 0.0
      %v8144 = vmax.f32 %v7888, 0.0
      %v8145 = vmax.f32 %v7889, 0.0
      %v8146 = vmax.f32 %v7890, 0.0
      %v8147 = vmax.f32 %v7891, 0.0
      %v8148 = vmax.f32 %v7892, 0.0
      %v8149 = vmax.f32 %v7893, 0.0
      %v8150 = vmax.f32 %v7894, 0.0
      %v8151 = vmax.f32 %v7895, 0.0
      %v8152 = vmax.f32 %v7896, 0.0
      %v8153 = vmax.f32 %v7897, 0.0
      %v8154 = vmax.f32 %v7898, 0.0
      %v8155 = vmax.f32 %v7899, 0.0
      %v8156 = vmax.f32 %v7900, 0.0
      %v8157 = vmax.f32 %v7901, 0.0
      %v8158 = vmax.f32 %v7902, 0.0
      %v8159 = vmax.f32 %v7903, 0.0
      %v8160 = vmax.f32 %v7904, 0.0
      %v8161 = vmax.f32 %v7905, 0.0
      %v8162 = vmax.f32 %v7906, 0.0
      %v8163 = vmax.f32 %v7907, 0.0
      %v8164 = vmax.f32 %v7908, 0.0
      %v8165 = vmax.f32 %v7909, 0.0
      %v8166 = vmax.f32 %v7910, 0.0
      %v8167 = vmax.f32 %v7911, 0.0
      %v8168 = vmax.f32 %v7912, 0.0
      %v8169 = vmax.f32 %v7913, 0.0
      %v8170 = vmax.f32 %v7914, 0.0
      %v8171 = vmax.f32 %v7915, 0.0
      %v8172 = vmax.f32 %v7916, 0.0
      %v8173 = vmax.f32 %v7917, 0.0
      %v8174 = vmax.f32 %v7918, 0.0
      %v8175 = vmax.f32 %v7919, 0.0
      %v8176 = vmax.f32 %v7920, 0.0
      %v8177 = vmax.f32 %v7921, 0.0
      %v8178 = vmax.f32 %v7922, 0.0
      %v8179 = vmax.f32 %v7923, 0.0
      %v8180 = vmax.f32 %v7924, 0.0
      %v8181 = vmax.f32 %v7925, 0.0
      %v8182 = vmax.f32 %v7926, 0.0
      %v8183 = vmax.f32 %v7927, 0.0
      %v8184 = vmax.f32 %v7928, 0.0
      %v8185 = vmax.f32 %v7929, 0.0
      %v8186 = vmax.f32 %v7930, 0.0
      %v8187 = vmax.f32 %v7931, 0.0
      %v8188 = vmax.f32 %v7932, 0.0
      %v8189 = vmax.f32 %v7933, 0.0
      %v8190 = vmax.f32 %v7934, 0.0
      %v8191 = vmax.f32 %v7935, 0.0
      %v8192 = vmax.f32 %v7936, 0.0
      %v8193 = vmax.f32 %v7937, 0.0
      %v8194 = vmax.f32 %v7938, 0.0
      %v8195 = vmax.f32 %v7939, 0.0
      %v8196 = vmax.f32 %v7940, 0.0
      %v8197 = vmax.f32 %v7941, 0.0
      %v8198 = vmax.f32 %v7942, 0.0
      %v8199 = vmax.f32 %v7943, 0.0
      %v8200 = vmax.f32 %v7944, 0.0
      %v8201 = vmax.f32 %v7945, 0.0
      %v8202 = vmax.f32 %v7946, 0.0
      %v8203 = vmax.f32 %v7947, 0.0
      %v8204 = vmax.f32 %v7948, 0.0
      %v8205 = vmax.f32 %v7949, 0.0
      %v8206 = vmax.f32 %v7950, 0.0
      %v8207 = vmax.f32 %v7951, 0.0
      %v8208 = vmax.f32 %v7952, 0.0
      %v8209 = vmax.f32 %v7953, 0.0
      %v8210 = vmax.f32 %v7954, 0.0
      %v8211 = vmax.f32 %v7955, 0.0
      %v8212 = vmax.f32 %v7956, 0.0
      %v8213 = vmax.f32 %v7957, 0.0
      %v8214 = vmax.f32 %v7958, 0.0
      %v8215 = vmax.f32 %v7959, 0.0
      %v8216 = vmax.f32 %v7960, 0.0
      %v8217 = vmax.f32 %v7961, 0.0
      %v8218 = vmax.f32 %v7962, 0.0
      %v8219 = vmax.f32 %v7963, 0.0
      %v8220 = vmax.f32 %v7964, 0.0
      %v8221 = vmax.f32 %v7965, 0.0
      %v8222 = vmax.f32 %v7966, 0.0
      %v8223 = vmax.f32 %v7967, 0.0
      %v8224 = vmax.f32 %v7968, 0.0
      %v8225 = vmax.f32 %v7969, 0.0
      %v8226 = vmax.f32 %v7970, 0.0
      %v8227 = vmax.f32 %v7971, 0.0
      %v8228 = vmax.f32 %v7972, 0.0
      %v8229 = vmax.f32 %v7973, 0.0
      %v8230 = vmax.f32 %v7974, 0.0
      %v8231 = vpack.c.bf16 %v7977, %v7975
      %v8232 = vpack.c.bf16 %v7978, %v7976
      %v8233 = vpack.c.bf16 %v7981, %v7979
      %v8234 = vpack.c.bf16 %v7982, %v7980
      %v8235 = vpack.c.bf16 %v7985, %v7983
      %v8236 = vpack.c.bf16 %v7986, %v7984
      %v8237 = vpack.c.bf16 %v7989, %v7987
      %v8238 = vpack.c.bf16 %v7990, %v7988
      %v8239 = vpack.c.bf16 %v7993, %v7991
      %v8240 = vpack.c.bf16 %v7994, %v7992
      %v8241 = vpack.c.bf16 %v7997, %v7995
      %v8242 = vpack.c.bf16 %v7998, %v7996
      %v8243 = vpack.c.bf16 %v8001, %v7999
      %v8244 = vpack.c.bf16 %v8002, %v8000
      %v8245 = vpack.c.bf16 %v8005, %v8003
      %v8246 = vpack.c.bf16 %v8006, %v8004
      %v8247 = vpack.c.bf16 %v8009, %v8007
      %v8248 = vpack.c.bf16 %v8010, %v8008
      %v8249 = vpack.c.bf16 %v8013, %v8011
      %v8250 = vpack.c.bf16 %v8014, %v8012
      %v8251 = vpack.c.bf16 %v8017, %v8015
      %v8252 = vpack.c.bf16 %v8018, %v8016
      %v8253 = vpack.c.bf16 %v8021, %v8019
      %v8254 = vpack.c.bf16 %v8022, %v8020
      %v8255 = vpack.c.bf16 %v8025, %v8023
      %v8256 = vpack.c.bf16 %v8026, %v8024
      %v8257 = vpack.c.bf16 %v8029, %v8027
      %v8258 = vpack.c.bf16 %v8030, %v8028
      %v8259 = vpack.c.bf16 %v8033, %v8031
      %v8260 = vpack.c.bf16 %v8034, %v8032
      %v8261 = vpack.c.bf16 %v8037, %v8035
      %v8262 = vpack.c.bf16 %v8038, %v8036
      %v8263 = vpack.c.bf16 %v8041, %v8039
      %v8264 = vpack.c.bf16 %v8042, %v8040
      %v8265 = vpack.c.bf16 %v8045, %v8043
      %v8266 = vpack.c.bf16 %v8046, %v8044
      %v8267 = vpack.c.bf16 %v8049, %v8047
      %v8268 = vpack.c.bf16 %v8050, %v8048
      %v8269 = vpack.c.bf16 %v8053, %v8051
      %v8270 = vpack.c.bf16 %v8054, %v8052
      %v8271 = vpack.c.bf16 %v8057, %v8055
      %v8272 = vpack.c.bf16 %v8058, %v8056
      %v8273 = vpack.c.bf16 %v8061, %v8059
      %v8274 = vpack.c.bf16 %v8062, %v8060
      %v8275 = vpack.c.bf16 %v8065, %v8063
      %v8276 = vpack.c.bf16 %v8066, %v8064
      %v8277 = vpack.c.bf16 %v8069, %v8067
      %v8278 = vpack.c.bf16 %v8070, %v8068
      %v8279 = vpack.c.bf16 %v8073, %v8071
      %v8280 = vpack.c.bf16 %v8074, %v8072
      %v8281 = vpack.c.bf16 %v8077, %v8075
      %v8282 = vpack.c.bf16 %v8078, %v8076
      %v8283 = vpack.c.bf16 %v8081, %v8079
      %v8284 = vpack.c.bf16 %v8082, %v8080
      %v8285 = vpack.c.bf16 %v8085, %v8083
      %v8286 = vpack.c.bf16 %v8086, %v8084
      %v8287 = vpack.c.bf16 %v8089, %v8087
      %v8288 = vpack.c.bf16 %v8090, %v8088
      %v8289 = vpack.c.bf16 %v8093, %v8091
      %v8290 = vpack.c.bf16 %v8094, %v8092
      %v8291 = vpack.c.bf16 %v8097, %v8095
      %v8292 = vpack.c.bf16 %v8098, %v8096
      %v8293 = vpack.c.bf16 %v8101, %v8099
      %v8294 = vpack.c.bf16 %v8102, %v8100
      %v8295 = vpack.c.bf16 %v8105, %v8103
      %v8296 = vpack.c.bf16 %v8106, %v8104
      %v8297 = vpack.c.bf16 %v8109, %v8107
      %v8298 = vpack.c.bf16 %v8110, %v8108
      %v8299 = vpack.c.bf16 %v8113, %v8111
      %v8300 = vpack.c.bf16 %v8114, %v8112
      %v8301 = vpack.c.bf16 %v8117, %v8115
      %v8302 = vpack.c.bf16 %v8118, %v8116
      %v8303 = vpack.c.bf16 %v8121, %v8119
      %v8304 = vpack.c.bf16 %v8122, %v8120
      %v8305 = vpack.c.bf16 %v8125, %v8123
      %v8306 = vpack.c.bf16 %v8126, %v8124
      %v8307 = vpack.c.bf16 %v8129, %v8127
      %v8308 = vpack.c.bf16 %v8130, %v8128
      %v8309 = vpack.c.bf16 %v8133, %v8131
      %v8310 = vpack.c.bf16 %v8134, %v8132
      %v8311 = vpack.c.bf16 %v8137, %v8135
      %v8312 = vpack.c.bf16 %v8138, %v8136
      %v8313 = vpack.c.bf16 %v8141, %v8139
      %v8314 = vpack.c.bf16 %v8142, %v8140
      %v8315 = vpack.c.bf16 %v8145, %v8143
      %v8316 = vpack.c.bf16 %v8146, %v8144
      %v8317 = vpack.c.bf16 %v8149, %v8147
      %v8318 = vpack.c.bf16 %v8150, %v8148
      %v8319 = vpack.c.bf16 %v8153, %v8151
      %v8320 = vpack.c.bf16 %v8154, %v8152
      %v8321 = vpack.c.bf16 %v8157, %v8155
      %v8322 = vpack.c.bf16 %v8158, %v8156
      %v8323 = vpack.c.bf16 %v8161, %v8159
      %v8324 = vpack.c.bf16 %v8162, %v8160
      %v8325 = vpack.c.bf16 %v8165, %v8163
      %v8326 = vpack.c.bf16 %v8166, %v8164
      %v8327 = vpack.c.bf16 %v8169, %v8167
      %v8328 = vpack.c.bf16 %v8170, %v8168
      %v8329 = vpack.c.bf16 %v8173, %v8171
      %v8330 = vpack.c.bf16 %v8174, %v8172
      %v8331 = vpack.c.bf16 %v8177, %v8175
      %v8332 = vpack.c.bf16 %v8178, %v8176
      %v8333 = vpack.c.bf16 %v8181, %v8179
      %v8334 = vpack.c.bf16 %v8182, %v8180
      %v8335 = vpack.c.bf16 %v8185, %v8183
      %v8336 = vpack.c.bf16 %v8186, %v8184
      %v8337 = vpack.c.bf16 %v8189, %v8187
      %v8338 = vpack.c.bf16 %v8190, %v8188
      %v8339 = vpack.c.bf16 %v8193, %v8191
      %v8340 = vpack.c.bf16 %v8194, %v8192
      %v8341 = vpack.c.bf16 %v8197, %v8195
      %v8342 = vpack.c.bf16 %v8198, %v8196
      %v8343 = vpack.c.bf16 %v8201, %v8199
      %v8344 = vpack.c.bf16 %v8202, %v8200
      %v8345 = vpack.c.bf16 %v8205, %v8203
      %v8346 = vpack.c.bf16 %v8206, %v8204
      %v8347 = vpack.c.bf16 %v8209, %v8207
      %v8348 = vpack.c.bf16 %v8210, %v8208
      %v8349 = vpack.c.bf16 %v8213, %v8211
      %v8350 = vpack.c.bf16 %v8214, %v8212
      %v8351 = vpack.c.bf16 %v8217, %v8215
      %v8352 = vpack.c.bf16 %v8218, %v8216
      %v8353 = vpack.c.bf16 %v8221, %v8219
      %v8354 = vpack.c.bf16 %v8222, %v8220
      %v8355 = vpack.c.bf16 %v8225, %v8223
      %v8356 = vpack.c.bf16 %v8226, %v8224
      %v8357 = vpack.c.bf16 %v8229, %v8227
      %v8358 = vpack.c.bf16 %v8230, %v8228
      %v8359 = vld [vmem:[%s12] sm:$0xff]
      %v8360 = vld [vmem:[%s12 + $0x8] sm:$0xff]
      %v8361 = vld [vmem:[%s12 + $0x10] sm:$0xff]
      %v8362 = vld [vmem:[%s12 + $0x18] sm:$0xff]
      %v8363 = vld [vmem:[%s12 + $0x20] sm:$0xff]
      %v8364 = vld [vmem:[%s12 + $0x28] sm:$0xff]
      %v8365 = vld [vmem:[%s12 + $0x30] sm:$0xff]
      %v8366 = vld [vmem:[%s12 + $0x38] sm:$0xff]
      %v8367 = vld [vmem:[%s12 + $0x40] sm:$0xff]
      %v8368 = vld [vmem:[%s12 + $0x48] sm:$0xff]
      %v8369 = vld [vmem:[%s12 + $0x50] sm:$0xff]
      %v8370 = vld [vmem:[%s12 + $0x58] sm:$0xff]
      %v8371 = vld [vmem:[%s12 + $0x60] sm:$0xff]
      %v8372 = vld [vmem:[%s12 + $0x68] sm:$0xff]
      %v8373 = vld [vmem:[%s12 + $0x70] sm:$0xff]
      %v8374 = vld [vmem:[%s12 + $0x78] sm:$0xff]
      %v8375 = vld [vmem:[%s12 + $0x80] sm:$0xff]
      %v8376 = vld [vmem:[%s12 + $0x88] sm:$0xff]
      %v8377 = vld [vmem:[%s12 + $0x90] sm:$0xff]
      %v8378 = vld [vmem:[%s12 + $0x98] sm:$0xff]
      %v8379 = vld [vmem:[%s12 + $0xa0] sm:$0xff]
      %v8380 = vld [vmem:[%s12 + $0xa8] sm:$0xff]
      %v8381 = vld [vmem:[%s12 + $0xb0] sm:$0xff]
      %v8382 = vld [vmem:[%s12 + $0xb8] sm:$0xff]
      %v8383 = vld [vmem:[%s12 + $0xc0] sm:$0xff]
      %v8384 = vld [vmem:[%s12 + $0xc8] sm:$0xff]
      %v8385 = vld [vmem:[%s12 + $0xd0] sm:$0xff]
      %v8386 = vld [vmem:[%s12 + $0xd8] sm:$0xff]
      %v8387 = vld [vmem:[%s12 + $0xe0] sm:$0xff]
      %v8388 = vld [vmem:[%s12 + $0xe8] sm:$0xff]
      %v8389 = vld [vmem:[%s12 + $0xf0] sm:$0xff]
      %v8390 = vld [vmem:[%s12 + $0xf8] sm:$0xff]
      %v8391 = vld [vmem:[%s13] sm:$0x3]
      %v8393 = vlaneseq
      %v8394 = vshrl.u32 %v8393, 7
      %v8395 = vsub.s32 0, %v8394
      %v8396 = vrot.slane %v8391, %v8395
      %v8397 = vlaneseq
      %v8398 = vshrl.u32 %v8397, 7
      %v8399 = vsub.s32 1, %v8398
      %v8400 = vrot.slane %v8391, %v8399
      %v8435 = vunpack.c.l.b16 %v8359
      %v8436 = vunpack.c.h.b16 %v8359
      %v8437 = vunpack.c.l.b16 %v8360
      %v8438 = vunpack.c.h.b16 %v8360
      %v8439 = vunpack.c.l.b16 %v8361
      %v8440 = vunpack.c.h.b16 %v8361
      %v8441 = vunpack.c.l.b16 %v8362
      %v8442 = vunpack.c.h.b16 %v8362
      %v8443 = vunpack.c.l.b16 %v8363
      %v8444 = vunpack.c.h.b16 %v8363
      %v8445 = vunpack.c.l.b16 %v8364
      %v8446 = vunpack.c.h.b16 %v8364
      %v8447 = vunpack.c.l.b16 %v8365
      %v8448 = vunpack.c.h.b16 %v8365
      %v8449 = vunpack.c.l.b16 %v8366
      %v8450 = vunpack.c.h.b16 %v8366
      %v8451 = vunpack.c.l.b16 %v8367
      %v8452 = vunpack.c.h.b16 %v8367
      %v8453 = vunpack.c.l.b16 %v8368
      %v8454 = vunpack.c.h.b16 %v8368
      %v8455 = vunpack.c.l.b16 %v8369
      %v8456 = vunpack.c.h.b16 %v8369
      %v8457 = vunpack.c.l.b16 %v8370
      %v8458 = vunpack.c.h.b16 %v8370
      %v8459 = vunpack.c.l.b16 %v8371
      %v8460 = vunpack.c.h.b16 %v8371
      %v8461 = vunpack.c.l.b16 %v8372
      %v8462 = vunpack.c.h.b16 %v8372
      %v8463 = vunpack.c.l.b16 %v8373
      %v8464 = vunpack.c.h.b16 %v8373
      %v8465 = vunpack.c.l.b16 %v8374
      %v8466 = vunpack.c.h.b16 %v8374
      %v8467 = vunpack.c.l.b16 %v8375
      %v8468 = vunpack.c.h.b16 %v8375
      %v8469 = vunpack.c.l.b16 %v8376
      %v8470 = vunpack.c.h.b16 %v8376
      %v8471 = vunpack.c.l.b16 %v8377
      %v8472 = vunpack.c.h.b16 %v8377
      %v8473 = vunpack.c.l.b16 %v8378
      %v8474 = vunpack.c.h.b16 %v8378
      %v8475 = vunpack.c.l.b16 %v8379
      %v8476 = vunpack.c.h.b16 %v8379
      %v8477 = vunpack.c.l.b16 %v8380
      %v8478 = vunpack.c.h.b16 %v8380
      %v8479 = vunpack.c.l.b16 %v8381
      %v8480 = vunpack.c.h.b16 %v8381
      %v8481 = vunpack.c.l.b16 %v8382
      %v8482 = vunpack.c.h.b16 %v8382
      %v8483 = vunpack.c.l.b16 %v8383
      %v8484 = vunpack.c.h.b16 %v8383
      %v8485 = vunpack.c.l.b16 %v8384
      %v8486 = vunpack.c.h.b16 %v8384
      %v8487 = vunpack.c.l.b16 %v8385
      %v8488 = vunpack.c.h.b16 %v8385
      %v8489 = vunpack.c.l.b16 %v8386
      %v8490 = vunpack.c.h.b16 %v8386
      %v8491 = vunpack.c.l.b16 %v8387
      %v8492 = vunpack.c.h.b16 %v8387
      %v8493 = vunpack.c.l.b16 %v8388
      %v8494 = vunpack.c.h.b16 %v8388
      %v8495 = vunpack.c.l.b16 %v8389
      %v8496 = vunpack.c.h.b16 %v8389
      %v8497 = vunpack.c.l.b16 %v8390
      %v8498 = vunpack.c.h.b16 %v8390
      %v8499 = vpack.c.b16 %v8437, %v8435
      %v8500 = vpack.c.b16 %v8438, %v8436
      %v8501 = vpack.c.b16 %v8441, %v8439
      %v8502 = vpack.c.b16 %v8442, %v8440
      %v8503 = vpack.c.b16 %v8445, %v8443
      %v8504 = vpack.c.b16 %v8446, %v8444
      %v8505 = vpack.c.b16 %v8449, %v8447
      %v8506 = vpack.c.b16 %v8450, %v8448
      %v8507 = vpack.c.b16 %v8453, %v8451
      %v8508 = vpack.c.b16 %v8454, %v8452
      %v8509 = vpack.c.b16 %v8457, %v8455
      %v8510 = vpack.c.b16 %v8458, %v8456
      %v8511 = vpack.c.b16 %v8461, %v8459
      %v8512 = vpack.c.b16 %v8462, %v8460
      %v8513 = vpack.c.b16 %v8465, %v8463
      %v8514 = vpack.c.b16 %v8466, %v8464
      %v8515 = vpack.c.b16 %v8469, %v8467
      %v8516 = vpack.c.b16 %v8470, %v8468
      %v8517 = vpack.c.b16 %v8473, %v8471
      %v8518 = vpack.c.b16 %v8474, %v8472
      %v8519 = vpack.c.b16 %v8477, %v8475
      %v8520 = vpack.c.b16 %v8478, %v8476
      %v8521 = vpack.c.b16 %v8481, %v8479
      %v8522 = vpack.c.b16 %v8482, %v8480
      %v8523 = vpack.c.b16 %v8485, %v8483
      %v8524 = vpack.c.b16 %v8486, %v8484
      %v8525 = vpack.c.b16 %v8489, %v8487
      %v8526 = vpack.c.b16 %v8490, %v8488
      %v8527 = vpack.c.b16 %v8493, %v8491
      %v8528 = vpack.c.b16 %v8494, %v8492
      %v8529 = vpack.c.b16 %v8497, %v8495
      %v8530 = vpack.c.b16 %v8498, %v8496
      %8563 = vmatprep.subr.bf16.mxu0 %v8500
      %8564 = vmatpush1.bf16.msra.mxu0 %v8499
      %8565 = vmatprep.subr.bf16.mxu0 %v8502
      %8566 = vmatpush1.bf16.msra.mxu0 %v8501
      %8567 = vmatprep.subr.bf16.mxu0 %v8504
      %8568 = vmatpush1.bf16.msra.mxu0 %v8503
      %8569 = vmatprep.subr.bf16.mxu0 %v8506
      %8570 = vmatpush1.bf16.msra.mxu0 %v8505
      %8571 = vmatprep.subr.bf16.mxu0 %v8508
      %8572 = vmatpush1.bf16.msra.mxu0 %v8507
      %8573 = vmatprep.subr.bf16.mxu0 %v8510
      %8574 = vmatpush1.bf16.msra.mxu0 %v8509
      %8575 = vmatprep.subr.bf16.mxu0 %v8512
      %8576 = vmatpush1.bf16.msra.mxu0 %v8511
      %8577 = vmatprep.subr.bf16.mxu0 %v8514
      %8578 = vmatpush1.bf16.msra.mxu0 %v8513
      %8579 = vmatprep.subr.bf16.mxu0 %v8516
      %8580 = vmatpush1.bf16.msra.mxu0 %v8515
      %8581 = vmatprep.subr.bf16.mxu0 %v8518
      %8582 = vmatpush1.bf16.msra.mxu0 %v8517
      %8583 = vmatprep.subr.bf16.mxu0 %v8520
      %8584 = vmatpush1.bf16.msra.mxu0 %v8519
      %8585 = vmatprep.subr.bf16.mxu0 %v8522
      %8586 = vmatpush1.bf16.msra.mxu0 %v8521
      %8587 = vmatprep.subr.bf16.mxu0 %v8524
      %8588 = vmatpush1.bf16.msra.mxu0 %v8523
      %8589 = vmatprep.subr.bf16.mxu0 %v8526
      %8590 = vmatpush1.bf16.msra.mxu0 %v8525
      %8591 = vmatprep.subr.bf16.mxu0 %v8528
      %8592 = vmatpush1.bf16.msra.mxu0 %v8527
      %8593 = vmatprep.subr.bf16.mxu0 %v8530
      %8594 = vmatpush1.bf16.msra.mxu0 %v8529
      %8595 = vmatprep.mubr.bf16.mxu0 %v8232
      %8596 = vmatmul.mubr.bf16.gmra.mrb[0].mxu0 %v8231
      %v8597 = vpop.f32.mrb[0].mxu0
      %v8598 = vadd.f32 %v8396, %v8597
      %v8599 = vpop.f32.mrb[0].mxu0
      %v8600 = vadd.f32 %v8400, %v8599
      %v8601 = vpop.f32.mrb[0].mxu0
      %v8602 = vadd.f32 %v8396, %v8601
      %v8603 = vpop.f32.mrb[0].mxu0
      %v8604 = vadd.f32 %v8400, %v8603
      %8605 = vmatprep.mubr.bf16.mxu0 %v8234
      %8606 = vmatmul.mubr.bf16.gmra.mrb[0].mxu0 %v8233
      %v8607 = vpop.f32.mrb[0].mxu0
      %v8608 = vadd.f32 %v8396, %v8607
      %v8609 = vpop.f32.mrb[0].mxu0
      %v8610 = vadd.f32 %v8400, %v8609
      %v8611 = vpop.f32.mrb[0].mxu0
      %v8612 = vadd.f32 %v8396, %v8611
      %v8613 = vpop.f32.mrb[0].mxu0
      %v8614 = vadd.f32 %v8400, %v8613
      %8615 = vmatprep.mubr.bf16.mxu0 %v8236
      %8616 = vmatmul.mubr.bf16.gmra.mrb[0].mxu0 %v8235
      %v8617 = vpop.f32.mrb[0].mxu0
      %v8618 = vadd.f32 %v8396, %v8617
      %v8619 = vpop.f32.mrb[0].mxu0
      %v8620 = vadd.f32 %v8400, %v8619
      %v8621 = vpop.f32.mrb[0].mxu0
      %v8622 = vadd.f32 %v8396, %v8621
      %v8623 = vpop.f32.mrb[0].mxu0
      %v8624 = vadd.f32 %v8400, %v8623
      %8625 = vmatprep.mubr.bf16.mxu0 %v8238
      %8626 = vmatmul.mubr.bf16.gmra.mrb[0].mxu0 %v8237
      %v8627 = vpop.f32.mrb[0].mxu0
      %v8628 = vadd.f32 %v8396, %v8627
      %v8629 = vpop.f32.mrb[0].mxu0
      %v8630 = vadd.f32 %v8400, %v8629
      %v8631 = vpop.f32.mrb[0].mxu0
      %v8632 = vadd.f32 %v8396, %v8631
      %v8633 = vpop.f32.mrb[0].mxu0
      %v8634 = vadd.f32 %v8400, %v8633
      %8635 = vmatprep.mubr.bf16.mxu0 %v8240
      %8636 = vmatmul.mubr.bf16.gmra.mrb[0].mxu0 %v8239
      %v8637 = vpop.f32.mrb[0].mxu0
      %v8638 = vadd.f32 %v8396, %v8637
      %v8639 = vpop.f32.mrb[0].mxu0
      %v8640 = vadd.f32 %v8400, %v8639
      %v8641 = vpop.f32.mrb[0].mxu0
      %v8642 = vadd.f32 %v8396, %v8641
      %v8643 = vpop.f32.mrb[0].mxu0
      %v8644 = vadd.f32 %v8400, %v8643
      %8645 = vmatprep.mubr.bf16.mxu0 %v8242
      %8646 = vmatmul.mubr.bf16.gmra.mrb[0].mxu0 %v8241
      %v8647 = vpop.f32.mrb[0].mxu0
      %v8648 = vadd.f32 %v8396, %v8647
      %v8649 = vpop.f32.mrb[0].mxu0
      %v8650 = vadd.f32 %v8400, %v8649
      %v8651 = vpop.f32.mrb[0].mxu0
      %v8652 = vadd.f32 %v8396, %v8651
      %v8653 = vpop.f32.mrb[0].mxu0
      %v8654 = vadd.f32 %v8400, %v8653
      %8655 = vmatprep.mubr.bf16.mxu0 %v8244
      %8656 = vmatmul.mubr.bf16.gmra.mrb[0].mxu0 %v8243
      %v8657 = vpop.f32.mrb[0].mxu0
      %v8658 = vadd.f32 %v8396, %v8657
      %v8659 = vpop.f32.mrb[0].mxu0
      %v8660 = vadd.f32 %v8400, %v8659
      %v8661 = vpop.f32.mrb[0].mxu0
      %v8662 = vadd.f32 %v8396, %v8661
      %v8663 = vpop.f32.mrb[0].mxu0
      %v8664 = vadd.f32 %v8400, %v8663
      %8665 = vmatprep.mubr.bf16.mxu0 %v8246
      %8666 = vmatmul.mubr.bf16.gmra.mrb[0].mxu0 %v8245
      %v8667 = vpop.f32.mrb[0].mxu0
      %v8668 = vadd.f32 %v8396, %v8667
      %v8669 = vpop.f32.mrb[0].mxu0
      %v8670 = vadd.f32 %v8400, %v8669
      %v8671 = vpop.f32.mrb[0].mxu0
      %v8672 = vadd.f32 %v8396, %v8671
      %v8673 = vpop.f32.mrb[0].mxu0
      %v8674 = vadd.f32 %v8400, %v8673
      %8675 = vmatprep.mubr.bf16.mxu0 %v8248
      %8676 = vmatmul.mubr.bf16.gmra.mrb[0].mxu0 %v8247
      %v8677 = vpop.f32.mrb[0].mxu0
      %v8678 = vadd.f32 %v8396, %v8677
      %v8679 = vpop.f32.mrb[0].mxu0
      %v8680 = vadd.f32 %v8400, %v8679
      %v8681 = vpop.f32.mrb[0].mxu0
      %v8682 = vadd.f32 %v8396, %v8681
      %v8683 = vpop.f32.mrb[0].mxu0
      %v8684 = vadd.f32 %v8400, %v8683
      %8685 = vmatprep.mubr.bf16.mxu0 %v8250
      %8686 = vmatmul.mubr.bf16.gmra.mrb[0].mxu0 %v8249
      %v8687 = vpop.f32.mrb[0].mxu0
      %v8688 = vadd.f32 %v8396, %v8687
      %v8689 = vpop.f32.mrb[0].mxu0
      %v8690 = vadd.f32 %v8400, %v8689
      %v8691 = vpop.f32.mrb[0].mxu0
      %v8692 = vadd.f32 %v8396, %v8691
      %v8693 = vpop.f32.mrb[0].mxu0
      %v8694 = vadd.f32 %v8400, %v8693
      %8695 = vmatprep.mubr.bf16.mxu0 %v8252
      %8696 = vmatmul.mubr.bf16.gmra.mrb[0].mxu0 %v8251
      %v8697 = vpop.f32.mrb[0].mxu0
      %v8698 = vadd.f32 %v8396, %v8697
      %v8699 = vpop.f32.mrb[0].mxu0
      %v8700 = vadd.f32 %v8400, %v8699
      %v8701 = vpop.f32.mrb[0].mxu0
      %v8702 = vadd.f32 %v8396, %v8701
      %v8703 = vpop.f32.mrb[0].mxu0
      %v8704 = vadd.f32 %v8400, %v8703
      %8705 = vmatprep.mubr.bf16.mxu0 %v8254
      %8706 = vmatmul.mubr.bf16.gmra.mrb[0].mxu0 %v8253
      %v8707 = vpop.f32.mrb[0].mxu0
      %v8708 = vadd.f32 %v8396, %v8707
      %v8709 = vpop.f32.mrb[0].mxu0
      %v8710 = vadd.f32 %v8400, %v8709
      %v8711 = vpop.f32.mrb[0].mxu0
      %v8712 = vadd.f32 %v8396, %v8711
      %v8713 = vpop.f32.mrb[0].mxu0
      %v8714 = vadd.f32 %v8400, %v8713
      %8715 = vmatprep.mubr.bf16.mxu0 %v8256
      %8716 = vmatmul.mubr.bf16.gmra.mrb[0].mxu0 %v8255
      %v8717 = vpop.f32.mrb[0].mxu0
      %v8718 = vadd.f32 %v8396, %v8717
      %v8719 = vpop.f32.mrb[0].mxu0
      %v8720 = vadd.f32 %v8400, %v8719
      %v8721 = vpop.f32.mrb[0].mxu0
      %v8722 = vadd.f32 %v8396, %v8721
      %v8723 = vpop.f32.mrb[0].mxu0
      %v8724 = vadd.f32 %v8400, %v8723
      %8725 = vmatprep.mubr.bf16.mxu0 %v8258
      %8726 = vmatmul.mubr.bf16.gmra.mrb[0].mxu0 %v8257
      %v8727 = vpop.f32.mrb[0].mxu0
      %v8728 = vadd.f32 %v8396, %v8727
      %v8729 = vpop.f32.mrb[0].mxu0
      %v8730 = vadd.f32 %v8400, %v8729
      %v8731 = vpop.f32.mrb[0].mxu0
      %v8732 = vadd.f32 %v8396, %v8731
      %v8733 = vpop.f32.mrb[0].mxu0
      %v8734 = vadd.f32 %v8400, %v8733
      %8735 = vmatprep.mubr.bf16.mxu0 %v8260
      %8736 = vmatmul.mubr.bf16.gmra.mrb[0].mxu0 %v8259
      %v8737 = vpop.f32.mrb[0].mxu0
      %v8738 = vadd.f32 %v8396, %v8737
      %v8739 = vpop.f32.mrb[0].mxu0
      %v8740 = vadd.f32 %v8400, %v8739
      %v8741 = vpop.f32.mrb[0].mxu0
      %v8742 = vadd.f32 %v8396, %v8741
      %v8743 = vpop.f32.mrb[0].mxu0
      %v8744 = vadd.f32 %v8400, %v8743
      %8745 = vmatprep.mubr.bf16.mxu0 %v8262
      %8746 = vmatmul.mubr.bf16.gmra.mrb[0].mxu0 %v8261
      %v8747 = vpop.f32.mrb[0].mxu0
      %v8748 = vadd.f32 %v8396, %v8747
      %v8749 = vpop.f32.mrb[0].mxu0
      %v8750 = vadd.f32 %v8400, %v8749
      %v8751 = vpop.f32.mrb[0].mxu0
      %v8752 = vadd.f32 %v8396, %v8751
      %v8753 = vpop.f32.mrb[0].mxu0
      %v8754 = vadd.f32 %v8400, %v8753
      %8755 = vmatprep.mubr.bf16.mxu0 %v8264
      %8756 = vmatmul.mubr.bf16.gmra.mrb[0].mxu0 %v8263
      %v8757 = vpop.f32.mrb[0].mxu0
      %v8758 = vadd.f32 %v8396, %v8757
      %v8759 = vpop.f32.mrb[0].mxu0
      %v8760 = vadd.f32 %v8400, %v8759
      %v8761 = vpop.f32.mrb[0].mxu0
      %v8762 = vadd.f32 %v8396, %v8761
      %v8763 = vpop.f32.mrb[0].mxu0
      %v8764 = vadd.f32 %v8400, %v8763
      %8765 = vmatprep.mubr.bf16.mxu0 %v8266
      %8766 = vmatmul.mubr.bf16.gmra.mrb[0].mxu0 %v8265
      %v8767 = vpop.f32.mrb[0].mxu0
      %v8768 = vadd.f32 %v8396, %v8767
      %v8769 = vpop.f32.mrb[0].mxu0
      %v8770 = vadd.f32 %v8400, %v8769
      %v8771 = vpop.f32.mrb[0].mxu0
      %v8772 = vadd.f32 %v8396, %v8771
      %v8773 = vpop.f32.mrb[0].mxu0
      %v8774 = vadd.f32 %v8400, %v8773
      %8775 = vmatprep.mubr.bf16.mxu0 %v8268
      %8776 = vmatmul.mubr.bf16.gmra.mrb[0].mxu0 %v8267
      %v8777 = vpop.f32.mrb[0].mxu0
      %v8778 = vadd.f32 %v8396, %v8777
      %v8779 = vpop.f32.mrb[0].mxu0
      %v8780 = vadd.f32 %v8400, %v8779
      %v8781 = vpop.f32.mrb[0].mxu0
      %v8782 = vadd.f32 %v8396, %v8781
      %v8783 = vpop.f32.mrb[0].mxu0
      %v8784 = vadd.f32 %v8400, %v8783
      %8785 = vmatprep.mubr.bf16.mxu0 %v8270
      %8786 = vmatmul.mubr.bf16.gmra.mrb[0].mxu0 %v8269
      %v8787 = vpop.f32.mrb[0].mxu0
      %v8788 = vadd.f32 %v8396, %v8787
      %v8789 = vpop.f32.mrb[0].mxu0
      %v8790 = vadd.f32 %v8400, %v8789
      %v8791 = vpop.f32.mrb[0].mxu0
      %v8792 = vadd.f32 %v8396, %v8791
      %v8793 = vpop.f32.mrb[0].mxu0
      %v8794 = vadd.f32 %v8400, %v8793
      %8795 = vmatprep.mubr.bf16.mxu0 %v8272
      %8796 = vmatmul.mubr.bf16.gmra.mrb[0].mxu0 %v8271
      %v8797 = vpop.f32.mrb[0].mxu0
      %v8798 = vadd.f32 %v8396, %v8797
      %v8799 = vpop.f32.mrb[0].mxu0
      %v8800 = vadd.f32 %v8400, %v8799
      %v8801 = vpop.f32.mrb[0].mxu0
      %v8802 = vadd.f32 %v8396, %v8801
      %v8803 = vpop.f32.mrb[0].mxu0
      %v8804 = vadd.f32 %v8400, %v8803
      %8805 = vmatprep.mubr.bf16.mxu0 %v8274
      %8806 = vmatmul.mubr.bf16.gmra.mrb[0].mxu0 %v8273
      %v8807 = vpop.f32.mrb[0].mxu0
      %v8808 = vadd.f32 %v8396, %v8807
      %v8809 = vpop.f32.mrb[0].mxu0
      %v8810 = vadd.f32 %v8400, %v8809
      %v8811 = vpop.f32.mrb[0].mxu0
      %v8812 = vadd.f32 %v8396, %v8811
      %v8813 = vpop.f32.mrb[0].mxu0
      %v8814 = vadd.f32 %v8400, %v8813
      %8815 = vmatprep.mubr.bf16.mxu0 %v8276
      %8816 = vmatmul.mubr.bf16.gmra.mrb[0].mxu0 %v8275
      %v8817 = vpop.f32.mrb[0].mxu0
      %v8818 = vadd.f32 %v8396, %v8817
      %v8819 = vpop.f32.mrb[0].mxu0
      %v8820 = vadd.f32 %v8400, %v8819
      %v8821 = vpop.f32.mrb[0].mxu0
      %v8822 = vadd.f32 %v8396, %v8821
      %v8823 = vpop.f32.mrb[0].mxu0
      %v8824 = vadd.f32 %v8400, %v8823
      %8825 = vmatprep.mubr.bf16.mxu0 %v8278
      %8826 = vmatmul.mubr.bf16.gmra.mrb[0].mxu0 %v8277
      %v8827 = vpop.f32.mrb[0].mxu0
      %v8828 = vadd.f32 %v8396, %v8827
      %v8829 = vpop.f32.mrb[0].mxu0
      %v8830 = vadd.f32 %v8400, %v8829
      %v8831 = vpop.f32.mrb[0].mxu0
      %v8832 = vadd.f32 %v8396, %v8831
      %v8833 = vpop.f32.mrb[0].mxu0
      %v8834 = vadd.f32 %v8400, %v8833
      %8835 = vmatprep.mubr.bf16.mxu0 %v8280
      %8836 = vmatmul.mubr.bf16.gmra.mrb[0].mxu0 %v8279
      %v8837 = vpop.f32.mrb[0].mxu0
      %v8838 = vadd.f32 %v8396, %v8837
      %v8839 = vpop.f32.mrb[0].mxu0
      %v8840 = vadd.f32 %v8400, %v8839
      %v8841 = vpop.f32.mrb[0].mxu0
      %v8842 = vadd.f32 %v8396, %v8841
      %v8843 = vpop.f32.mrb[0].mxu0
      %v8844 = vadd.f32 %v8400, %v8843
      %8845 = vmatprep.mubr.bf16.mxu0 %v8282
      %8846 = vmatmul.mubr.bf16.gmra.mrb[0].mxu0 %v8281
      %v8847 = vpop.f32.mrb[0].mxu0
      %v8848 = vadd.f32 %v8396, %v8847
      %v8849 = vpop.f32.mrb[0].mxu0
      %v8850 = vadd.f32 %v8400, %v8849
      %v8851 = vpop.f32.mrb[0].mxu0
      %v8852 = vadd.f32 %v8396, %v8851
      %v8853 = vpop.f32.mrb[0].mxu0
      %v8854 = vadd.f32 %v8400, %v8853
      %8855 = vmatprep.mubr.bf16.mxu0 %v8284
      %8856 = vmatmul.mubr.bf16.gmra.mrb[0].mxu0 %v8283
      %v8857 = vpop.f32.mrb[0].mxu0
      %v8858 = vadd.f32 %v8396, %v8857
      %v8859 = vpop.f32.mrb[0].mxu0
      %v8860 = vadd.f32 %v8400, %v8859
      %v8861 = vpop.f32.mrb[0].mxu0
      %v8862 = vadd.f32 %v8396, %v8861
      %v8863 = vpop.f32.mrb[0].mxu0
      %v8864 = vadd.f32 %v8400, %v8863
      %8865 = vmatprep.mubr.bf16.mxu0 %v8286
      %8866 = vmatmul.mubr.bf16.gmra.mrb[0].mxu0 %v8285
      %v8867 = vpop.f32.mrb[0].mxu0
      %v8868 = vadd.f32 %v8396, %v8867
      %v8869 = vpop.f32.mrb[0].mxu0
      %v8870 = vadd.f32 %v8400, %v8869
      %v8871 = vpop.f32.mrb[0].mxu0
      %v8872 = vadd.f32 %v8396, %v8871
      %v8873 = vpop.f32.mrb[0].mxu0
      %v8874 = vadd.f32 %v8400, %v8873
      %8875 = vmatprep.mubr.bf16.mxu0 %v8288
      %8876 = vmatmul.mubr.bf16.gmra.mrb[0].mxu0 %v8287
      %v8877 = vpop.f32.mrb[0].mxu0
      %v8878 = vadd.f32 %v8396, %v8877
      %v8879 = vpop.f32.mrb[0].mxu0
      %v8880 = vadd.f32 %v8400, %v8879
      %v8881 = vpop.f32.mrb[0].mxu0
      %v8882 = vadd.f32 %v8396, %v8881
      %v8883 = vpop.f32.mrb[0].mxu0
      %v8884 = vadd.f32 %v8400, %v8883
      %8885 = vmatprep.mubr.bf16.mxu0 %v8290
      %8886 = vmatmul.mubr.bf16.gmra.mrb[0].mxu0 %v8289
      %v8887 = vpop.f32.mrb[0].mxu0
      %v8888 = vadd.f32 %v8396, %v8887
      %v8889 = vpop.f32.mrb[0].mxu0
      %v8890 = vadd.f32 %v8400, %v8889
      %v8891 = vpop.f32.mrb[0].mxu0
      %v8892 = vadd.f32 %v8396, %v8891
      %v8893 = vpop.f32.mrb[0].mxu0
      %v8894 = vadd.f32 %v8400, %v8893
      %8895 = vmatprep.mubr.bf16.mxu0 %v8292
      %8896 = vmatmul.mubr.bf16.gmra.mrb[0].mxu0 %v8291
      %v8897 = vpop.f32.mrb[0].mxu0
      %v8898 = vadd.f32 %v8396, %v8897
      %v8899 = vpop.f32.mrb[0].mxu0
      %v8900 = vadd.f32 %v8400, %v8899
      %v8901 = vpop.f32.mrb[0].mxu0
      %v8902 = vadd.f32 %v8396, %v8901
      %v8903 = vpop.f32.mrb[0].mxu0
      %v8904 = vadd.f32 %v8400, %v8903
      %8905 = vmatprep.mubr.bf16.mxu0 %v8294
      %8906 = vmatmul.mubr.bf16.gmra.mrb[0].mxu0 %v8293
      %v8907 = vpop.f32.mrb[0].mxu0
      %v8908 = vadd.f32 %v8396, %v8907
      %v8909 = vpop.f32.mrb[0].mxu0
      %v8910 = vadd.f32 %v8400, %v8909
      %v8911 = vpop.f32.mrb[0].mxu0
      %v8912 = vadd.f32 %v8396, %v8911
      %v8913 = vpop.f32.mrb[0].mxu0
      %v8914 = vadd.f32 %v8400, %v8913
      %8915 = vmatprep.mubr.bf16.mxu0 %v8296
      %8916 = vmatmul.mubr.bf16.gmra.mrb[0].mxu0 %v8295
      %v8917 = vpop.f32.mrb[0].mxu0
      %v8918 = vadd.f32 %v8396, %v8917
      %v8919 = vpop.f32.mrb[0].mxu0
      %v8920 = vadd.f32 %v8400, %v8919
      %v8921 = vpop.f32.mrb[0].mxu0
      %v8922 = vadd.f32 %v8396, %v8921
      %v8923 = vpop.f32.mrb[0].mxu0
      %v8924 = vadd.f32 %v8400, %v8923
      %8925 = vmatprep.mubr.bf16.mxu0 %v8298
      %8926 = vmatmul.mubr.bf16.gmra.mrb[0].mxu0 %v8297
      %v8927 = vpop.f32.mrb[0].mxu0
      %v8928 = vadd.f32 %v8396, %v8927
      %v8929 = vpop.f32.mrb[0].mxu0
      %v8930 = vadd.f32 %v8400, %v8929
      %v8931 = vpop.f32.mrb[0].mxu0
      %v8932 = vadd.f32 %v8396, %v8931
      %v8933 = vpop.f32.mrb[0].mxu0
      %v8934 = vadd.f32 %v8400, %v8933
      %8935 = vmatprep.mubr.bf16.mxu0 %v8300
      %8936 = vmatmul.mubr.bf16.gmra.mrb[0].mxu0 %v8299
      %v8937 = vpop.f32.mrb[0].mxu0
      %v8938 = vadd.f32 %v8396, %v8937
      %v8939 = vpop.f32.mrb[0].mxu0
      %v8940 = vadd.f32 %v8400, %v8939
      %v8941 = vpop.f32.mrb[0].mxu0
      %v8942 = vadd.f32 %v8396, %v8941
      %v8943 = vpop.f32.mrb[0].mxu0
      %v8944 = vadd.f32 %v8400, %v8943
      %8945 = vmatprep.mubr.bf16.mxu0 %v8302
      %8946 = vmatmul.mubr.bf16.gmra.mrb[0].mxu0 %v8301
      %v8947 = vpop.f32.mrb[0].mxu0
      %v8948 = vadd.f32 %v8396, %v8947
      %v8949 = vpop.f32.mrb[0].mxu0
      %v8950 = vadd.f32 %v8400, %v8949
      %v8951 = vpop.f32.mrb[0].mxu0
      %v8952 = vadd.f32 %v8396, %v8951
      %v8953 = vpop.f32.mrb[0].mxu0
      %v8954 = vadd.f32 %v8400, %v8953
      %8955 = vmatprep.mubr.bf16.mxu0 %v8304
      %8956 = vmatmul.mubr.bf16.gmra.mrb[0].mxu0 %v8303
      %v8957 = vpop.f32.mrb[0].mxu0
      %v8958 = vadd.f32 %v8396, %v8957
      %v8959 = vpop.f32.mrb[0].mxu0
      %v8960 = vadd.f32 %v8400, %v8959
      %v8961 = vpop.f32.mrb[0].mxu0
      %v8962 = vadd.f32 %v8396, %v8961
      %v8963 = vpop.f32.mrb[0].mxu0
      %v8964 = vadd.f32 %v8400, %v8963
      %8965 = vmatprep.mubr.bf16.mxu0 %v8306
      %8966 = vmatmul.mubr.bf16.gmra.mrb[0].mxu0 %v8305
      %v8967 = vpop.f32.mrb[0].mxu0
      %v8968 = vadd.f32 %v8396, %v8967
      %v8969 = vpop.f32.mrb[0].mxu0
      %v8970 = vadd.f32 %v8400, %v8969
      %v8971 = vpop.f32.mrb[0].mxu0
      %v8972 = vadd.f32 %v8396, %v8971
      %v8973 = vpop.f32.mrb[0].mxu0
      %v8974 = vadd.f32 %v8400, %v8973
      %8975 = vmatprep.mubr.bf16.mxu0 %v8308
      %8976 = vmatmul.mubr.bf16.gmra.mrb[0].mxu0 %v8307
      %v8977 = vpop.f32.mrb[0].mxu0
      %v8978 = vadd.f32 %v8396, %v8977
      %v8979 = vpop.f32.mrb[0].mxu0
      %v8980 = vadd.f32 %v8400, %v8979
      %v8981 = vpop.f32.mrb[0].mxu0
      %v8982 = vadd.f32 %v8396, %v8981
      %v8983 = vpop.f32.mrb[0].mxu0
      %v8984 = vadd.f32 %v8400, %v8983
      %8985 = vmatprep.mubr.bf16.mxu0 %v8310
      %8986 = vmatmul.mubr.bf16.gmra.mrb[0].mxu0 %v8309
      %v8987 = vpop.f32.mrb[0].mxu0
      %v8988 = vadd.f32 %v8396, %v8987
      %v8989 = vpop.f32.mrb[0].mxu0
      %v8990 = vadd.f32 %v8400, %v8989
      %v8991 = vpop.f32.mrb[0].mxu0
      %v8992 = vadd.f32 %v8396, %v8991
      %v8993 = vpop.f32.mrb[0].mxu0
      %v8994 = vadd.f32 %v8400, %v8993
      %8995 = vmatprep.mubr.bf16.mxu0 %v8312
      %8996 = vmatmul.mubr.bf16.gmra.mrb[0].mxu0 %v8311
      %v8997 = vpop.f32.mrb[0].mxu0
      %v8998 = vadd.f32 %v8396, %v8997
      %v8999 = vpop.f32.mrb[0].mxu0
      %v9000 = vadd.f32 %v8400, %v8999
      %v9001 = vpop.f32.mrb[0].mxu0
      %v9002 = vadd.f32 %v8396, %v9001
      %v9003 = vpop.f32.mrb[0].mxu0
      %v9004 = vadd.f32 %v8400, %v9003
      %9005 = vmatprep.mubr.bf16.mxu0 %v8314
      %9006 = vmatmul.mubr.bf16.gmra.mrb[0].mxu0 %v8313
      %v9007 = vpop.f32.mrb[0].mxu0
      %v9008 = vadd.f32 %v8396, %v9007
      %v9009 = vpop.f32.mrb[0].mxu0
      %v9010 = vadd.f32 %v8400, %v9009
      %v9011 = vpop.f32.mrb[0].mxu0
      %v9012 = vadd.f32 %v8396, %v9011
      %v9013 = vpop.f32.mrb[0].mxu0
      %v9014 = vadd.f32 %v8400, %v9013
      %9015 = vmatprep.mubr.bf16.mxu0 %v8316
      %9016 = vmatmul.mubr.bf16.gmra.mrb[0].mxu0 %v8315
      %v9017 = vpop.f32.mrb[0].mxu0
      %v9018 = vadd.f32 %v8396, %v9017
      %v9019 = vpop.f32.mrb[0].mxu0
      %v9020 = vadd.f32 %v8400, %v9019
      %v9021 = vpop.f32.mrb[0].mxu0
      %v9022 = vadd.f32 %v8396, %v9021
      %v9023 = vpop.f32.mrb[0].mxu0
      %v9024 = vadd.f32 %v8400, %v9023
      %9025 = vmatprep.mubr.bf16.mxu0 %v8318
      %9026 = vmatmul.mubr.bf16.gmra.mrb[0].mxu0 %v8317
      %v9027 = vpop.f32.mrb[0].mxu0
      %v9028 = vadd.f32 %v8396, %v9027
      %v9029 = vpop.f32.mrb[0].mxu0
      %v9030 = vadd.f32 %v8400, %v9029
      %v9031 = vpop.f32.mrb[0].mxu0
      %v9032 = vadd.f32 %v8396, %v9031
      %v9033 = vpop.f32.mrb[0].mxu0
      %v9034 = vadd.f32 %v8400, %v9033
      %9035 = vmatprep.mubr.bf16.mxu0 %v8320
      %9036 = vmatmul.mubr.bf16.gmra.mrb[0].mxu0 %v8319
      %v9037 = vpop.f32.mrb[0].mxu0
      %v9038 = vadd.f32 %v8396, %v9037
      %v9039 = vpop.f32.mrb[0].mxu0
      %v9040 = vadd.f32 %v8400, %v9039
      %v9041 = vpop.f32.mrb[0].mxu0
      %v9042 = vadd.f32 %v8396, %v9041
      %v9043 = vpop.f32.mrb[0].mxu0
      %v9044 = vadd.f32 %v8400, %v9043
      %9045 = vmatprep.mubr.bf16.mxu0 %v8322
      %9046 = vmatmul.mubr.bf16.gmra.mrb[0].mxu0 %v8321
      %v9047 = vpop.f32.mrb[0].mxu0
      %v9048 = vadd.f32 %v8396, %v9047
      %v9049 = vpop.f32.mrb[0].mxu0
      %v9050 = vadd.f32 %v8400, %v9049
      %v9051 = vpop.f32.mrb[0].mxu0
      %v9052 = vadd.f32 %v8396, %v9051
      %v9053 = vpop.f32.mrb[0].mxu0
      %v9054 = vadd.f32 %v8400, %v9053
      %9055 = vmatprep.mubr.bf16.mxu0 %v8324
      %9056 = vmatmul.mubr.bf16.gmra.mrb[0].mxu0 %v8323
      %v9057 = vpop.f32.mrb[0].mxu0
      %v9058 = vadd.f32 %v8396, %v9057
      %v9059 = vpop.f32.mrb[0].mxu0
      %v9060 = vadd.f32 %v8400, %v9059
      %v9061 = vpop.f32.mrb[0].mxu0
      %v9062 = vadd.f32 %v8396, %v9061
      %v9063 = vpop.f32.mrb[0].mxu0
      %v9064 = vadd.f32 %v8400, %v9063
      %9065 = vmatprep.mubr.bf16.mxu0 %v8326
      %9066 = vmatmul.mubr.bf16.gmra.mrb[0].mxu0 %v8325
      %v9067 = vpop.f32.mrb[0].mxu0
      %v9068 = vadd.f32 %v8396, %v9067
      %v9069 = vpop.f32.mrb[0].mxu0
      %v9070 = vadd.f32 %v8400, %v9069
      %v9071 = vpop.f32.mrb[0].mxu0
      %v9072 = vadd.f32 %v8396, %v9071
      %v9073 = vpop.f32.mrb[0].mxu0
      %v9074 = vadd.f32 %v8400, %v9073
      %9075 = vmatprep.mubr.bf16.mxu0 %v8328
      %9076 = vmatmul.mubr.bf16.gmra.mrb[0].mxu0 %v8327
      %v9077 = vpop.f32.mrb[0].mxu0
      %v9078 = vadd.f32 %v8396, %v9077
      %v9079 = vpop.f32.mrb[0].mxu0
      %v9080 = vadd.f32 %v8400, %v9079
      %v9081 = vpop.f32.mrb[0].mxu0
      %v9082 = vadd.f32 %v8396, %v9081
      %v9083 = vpop.f32.mrb[0].mxu0
      %v9084 = vadd.f32 %v8400, %v9083
      %9085 = vmatprep.mubr.bf16.mxu0 %v8330
      %9086 = vmatmul.mubr.bf16.gmra.mrb[0].mxu0 %v8329
      %v9087 = vpop.f32.mrb[0].mxu0
      %v9088 = vadd.f32 %v8396, %v9087
      %v9089 = vpop.f32.mrb[0].mxu0
      %v9090 = vadd.f32 %v8400, %v9089
      %v9091 = vpop.f32.mrb[0].mxu0
      %v9092 = vadd.f32 %v8396, %v9091
      %v9093 = vpop.f32.mrb[0].mxu0
      %v9094 = vadd.f32 %v8400, %v9093
      %9095 = vmatprep.mubr.bf16.mxu0 %v8332
      %9096 = vmatmul.mubr.bf16.gmra.mrb[0].mxu0 %v8331
      %v9097 = vpop.f32.mrb[0].mxu0
      %v9098 = vadd.f32 %v8396, %v9097
      %v9099 = vpop.f32.mrb[0].mxu0
      %v9100 = vadd.f32 %v8400, %v9099
      %v9101 = vpop.f32.mrb[0].mxu0
      %v9102 = vadd.f32 %v8396, %v9101
      %v9103 = vpop.f32.mrb[0].mxu0
      %v9104 = vadd.f32 %v8400, %v9103
      %9105 = vmatprep.mubr.bf16.mxu0 %v8334
      %9106 = vmatmul.mubr.bf16.gmra.mrb[0].mxu0 %v8333
      %v9107 = vpop.f32.mrb[0].mxu0
      %v9108 = vadd.f32 %v8396, %v9107
      %v9109 = vpop.f32.mrb[0].mxu0
      %v9110 = vadd.f32 %v8400, %v9109
      %v9111 = vpop.f32.mrb[0].mxu0
      %v9112 = vadd.f32 %v8396, %v9111
      %v9113 = vpop.f32.mrb[0].mxu0
      %v9114 = vadd.f32 %v8400, %v9113
      %9115 = vmatprep.mubr.bf16.mxu0 %v8336
      %9116 = vmatmul.mubr.bf16.gmra.mrb[0].mxu0 %v8335
      %v9117 = vpop.f32.mrb[0].mxu0
      %v9118 = vadd.f32 %v8396, %v9117
      %v9119 = vpop.f32.mrb[0].mxu0
      %v9120 = vadd.f32 %v8400, %v9119
      %v9121 = vpop.f32.mrb[0].mxu0
      %v9122 = vadd.f32 %v8396, %v9121
      %v9123 = vpop.f32.mrb[0].mxu0
      %v9124 = vadd.f32 %v8400, %v9123
      %9125 = vmatprep.mubr.bf16.mxu0 %v8338
      %9126 = vmatmul.mubr.bf16.gmra.mrb[0].mxu0 %v8337
      %v9127 = vpop.f32.mrb[0].mxu0
      %v9128 = vadd.f32 %v8396, %v9127
      %v9129 = vpop.f32.mrb[0].mxu0
      %v9130 = vadd.f32 %v8400, %v9129
      %v9131 = vpop.f32.mrb[0].mxu0
      %v9132 = vadd.f32 %v8396, %v9131
      %v9133 = vpop.f32.mrb[0].mxu0
      %v9134 = vadd.f32 %v8400, %v9133
      %9135 = vmatprep.mubr.bf16.mxu0 %v8340
      %9136 = vmatmul.mubr.bf16.gmra.mrb[0].mxu0 %v8339
      %v9137 = vpop.f32.mrb[0].mxu0
      %v9138 = vadd.f32 %v8396, %v9137
      %v9139 = vpop.f32.mrb[0].mxu0
      %v9140 = vadd.f32 %v8400, %v9139
      %v9141 = vpop.f32.mrb[0].mxu0
      %v9142 = vadd.f32 %v8396, %v9141
      %v9143 = vpop.f32.mrb[0].mxu0
      %v9144 = vadd.f32 %v8400, %v9143
      %9145 = vmatprep.mubr.bf16.mxu0 %v8342
      %9146 = vmatmul.mubr.bf16.gmra.mrb[0].mxu0 %v8341
      %v9147 = vpop.f32.mrb[0].mxu0
      %v9148 = vadd.f32 %v8396, %v9147
      %v9149 = vpop.f32.mrb[0].mxu0
      %v9150 = vadd.f32 %v8400, %v9149
      %v9151 = vpop.f32.mrb[0].mxu0
      %v9152 = vadd.f32 %v8396, %v9151
      %v9153 = vpop.f32.mrb[0].mxu0
      %v9154 = vadd.f32 %v8400, %v9153
      %9155 = vmatprep.mubr.bf16.mxu0 %v8344
      %9156 = vmatmul.mubr.bf16.gmra.mrb[0].mxu0 %v8343
      %v9157 = vpop.f32.mrb[0].mxu0
      %v9158 = vadd.f32 %v8396, %v9157
      %v9159 = vpop.f32.mrb[0].mxu0
      %v9160 = vadd.f32 %v8400, %v9159
      %v9161 = vpop.f32.mrb[0].mxu0
      %v9162 = vadd.f32 %v8396, %v9161
      %v9163 = vpop.f32.mrb[0].mxu0
      %v9164 = vadd.f32 %v8400, %v9163
      %9165 = vmatprep.mubr.bf16.mxu0 %v8346
      %9166 = vmatmul.mubr.bf16.gmra.mrb[0].mxu0 %v8345
      %v9167 = vpop.f32.mrb[0].mxu0
      %v9168 = vadd.f32 %v8396, %v9167
      %v9169 = vpop.f32.mrb[0].mxu0
      %v9170 = vadd.f32 %v8400, %v9169
      %v9171 = vpop.f32.mrb[0].mxu0
      %v9172 = vadd.f32 %v8396, %v9171
      %v9173 = vpop.f32.mrb[0].mxu0
      %v9174 = vadd.f32 %v8400, %v9173
      %9175 = vmatprep.mubr.bf16.mxu0 %v8348
      %9176 = vmatmul.mubr.bf16.gmra.mrb[0].mxu0 %v8347
      %v9177 = vpop.f32.mrb[0].mxu0
      %v9178 = vadd.f32 %v8396, %v9177
      %v9179 = vpop.f32.mrb[0].mxu0
      %v9180 = vadd.f32 %v8400, %v9179
      %v9181 = vpop.f32.mrb[0].mxu0
      %v9182 = vadd.f32 %v8396, %v9181
      %v9183 = vpop.f32.mrb[0].mxu0
      %v9184 = vadd.f32 %v8400, %v9183
      %9185 = vmatprep.mubr.bf16.mxu0 %v8350
      %9186 = vmatmul.mubr.bf16.gmra.mrb[0].mxu0 %v8349
      %v9187 = vpop.f32.mrb[0].mxu0
      %v9188 = vadd.f32 %v8396, %v9187
      %v9189 = vpop.f32.mrb[0].mxu0
      %v9190 = vadd.f32 %v8400, %v9189
      %v9191 = vpop.f32.mrb[0].mxu0
      %v9192 = vadd.f32 %v8396, %v9191
      %v9193 = vpop.f32.mrb[0].mxu0
      %v9194 = vadd.f32 %v8400, %v9193
      %9195 = vmatprep.mubr.bf16.mxu0 %v8352
      %9196 = vmatmul.mubr.bf16.gmra.mrb[0].mxu0 %v8351
      %v9197 = vpop.f32.mrb[0].mxu0
      %v9198 = vadd.f32 %v8396, %v9197
      %v9199 = vpop.f32.mrb[0].mxu0
      %v9200 = vadd.f32 %v8400, %v9199
      %v9201 = vpop.f32.mrb[0].mxu0
      %v9202 = vadd.f32 %v8396, %v9201
      %v9203 = vpop.f32.mrb[0].mxu0
      %v9204 = vadd.f32 %v8400, %v9203
      %9205 = vmatprep.mubr.bf16.mxu0 %v8354
      %9206 = vmatmul.mubr.bf16.gmra.mrb[0].mxu0 %v8353
      %v9207 = vpop.f32.mrb[0].mxu0
      %v9208 = vadd.f32 %v8396, %v9207
      %v9209 = vpop.f32.mrb[0].mxu0
      %v9210 = vadd.f32 %v8400, %v9209
      %v9211 = vpop.f32.mrb[0].mxu0
      %v9212 = vadd.f32 %v8396, %v9211
      %v9213 = vpop.f32.mrb[0].mxu0
      %v9214 = vadd.f32 %v8400, %v9213
      %9215 = vmatprep.mubr.bf16.mxu0 %v8356
      %9216 = vmatmul.mubr.bf16.gmra.mrb[0].mxu0 %v8355
      %v9217 = vpop.f32.mrb[0].mxu0
      %v9218 = vadd.f32 %v8396, %v9217
      %v9219 = vpop.f32.mrb[0].mxu0
      %v9220 = vadd.f32 %v8400, %v9219
      %v9221 = vpop.f32.mrb[0].mxu0
      %v9222 = vadd.f32 %v8396, %v9221
      %v9223 = vpop.f32.mrb[0].mxu0
      %v9224 = vadd.f32 %v8400, %v9223
      %9225 = vmatprep.mubr.bf16.mxu0 %v8358
      %9226 = vmatmul.mubr.bf16.gmra.mrb[0].mxu0 %v8357
      %v9227 = vpop.f32.mrb[0].mxu0
      %v9228 = vadd.f32 %v8396, %v9227
      %v9229 = vpop.f32.mrb[0].mxu0
      %v9230 = vadd.f32 %v8400, %v9229
      %v9231 = vpop.f32.mrb[0].mxu0
      %v9232 = vadd.f32 %v8396, %v9231
      %v9233 = vpop.f32.mrb[0].mxu0
      %v9234 = vadd.f32 %v8400, %v9233
      %9235 = vdwg.mxu0
      %v9236 = vmax.f32 %v8598, 0.0
      %v9237 = vmax.f32 %v8600, 0.0
      %v9238 = vmax.f32 %v8602, 0.0
      %v9239 = vmax.f32 %v8604, 0.0
      %v9240 = vmax.f32 %v8608, 0.0
      %v9241 = vmax.f32 %v8610, 0.0
      %v9242 = vmax.f32 %v8612, 0.0
      %v9243 = vmax.f32 %v8614, 0.0
      %v9244 = vmax.f32 %v8618, 0.0
      %v9245 = vmax.f32 %v8620, 0.0
      %v9246 = vmax.f32 %v8622, 0.0
      %v9247 = vmax.f32 %v8624, 0.0
      %v9248 = vmax.f32 %v8628, 0.0
      %v9249 = vmax.f32 %v8630, 0.0
      %v9250 = vmax.f32 %v8632, 0.0
      %v9251 = vmax.f32 %v8634, 0.0
      %v9252 = vmax.f32 %v8638, 0.0
      %v9253 = vmax.f32 %v8640, 0.0
      %v9254 = vmax.f32 %v8642, 0.0
      %v9255 = vmax.f32 %v8644, 0.0
      %v9256 = vmax.f32 %v8648, 0.0
      %v9257 = vmax.f32 %v8650, 0.0
      %v9258 = vmax.f32 %v8652, 0.0
      %v9259 = vmax.f32 %v8654, 0.0
      %v9260 = vmax.f32 %v8658, 0.0
      %v9261 = vmax.f32 %v8660, 0.0
      %v9262 = vmax.f32 %v8662, 0.0
      %v9263 = vmax.f32 %v8664, 0.0
      %v9264 = vmax.f32 %v8668, 0.0
      %v9265 = vmax.f32 %v8670, 0.0
      %v9266 = vmax.f32 %v8672, 0.0
      %v9267 = vmax.f32 %v8674, 0.0
      %v9268 = vmax.f32 %v8678, 0.0
      %v9269 = vmax.f32 %v8680, 0.0
      %v9270 = vmax.f32 %v8682, 0.0
      %v9271 = vmax.f32 %v8684, 0.0
      %v9272 = vmax.f32 %v8688, 0.0
      %v9273 = vmax.f32 %v8690, 0.0
      %v9274 = vmax.f32 %v8692, 0.0
      %v9275 = vmax.f32 %v8694, 0.0
      %v9276 = vmax.f32 %v8698, 0.0
      %v9277 = vmax.f32 %v8700, 0.0
      %v9278 = vmax.f32 %v8702, 0.0
      %v9279 = vmax.f32 %v8704, 0.0
      %v9280 = vmax.f32 %v8708, 0.0
      %v9281 = vmax.f32 %v8710, 0.0
      %v9282 = vmax.f32 %v8712, 0.0
      %v9283 = vmax.f32 %v8714, 0.0
      %v9284 = vmax.f32 %v8718, 0.0
      %v9285 = vmax.f32 %v8720, 0.0
      %v9286 = vmax.f32 %v8722, 0.0
      %v9287 = vmax.f32 %v8724, 0.0
      %v9288 = vmax.f32 %v8728, 0.0
      %v9289 = vmax.f32 %v8730, 0.0
      %v9290 = vmax.f32 %v8732, 0.0
      %v9291 = vmax.f32 %v8734, 0.0
      %v9292 = vmax.f32 %v8738, 0.0
      %v9293 = vmax.f32 %v8740, 0.0
      %v9294 = vmax.f32 %v8742, 0.0
      %v9295 = vmax.f32 %v8744, 0.0
      %v9296 = vmax.f32 %v8748, 0.0
      %v9297 = vmax.f32 %v8750, 0.0
      %v9298 = vmax.f32 %v8752, 0.0
      %v9299 = vmax.f32 %v8754, 0.0
      %v9300 = vmax.f32 %v8758, 0.0
      %v9301 = vmax.f32 %v8760, 0.0
      %v9302 = vmax.f32 %v8762, 0.0
      %v9303 = vmax.f32 %v8764, 0.0
      %v9304 = vmax.f32 %v8768, 0.0
      %v9305 = vmax.f32 %v8770, 0.0
      %v9306 = vmax.f32 %v8772, 0.0
      %v9307 = vmax.f32 %v8774, 0.0
      %v9308 = vmax.f32 %v8778, 0.0
      %v9309 = vmax.f32 %v8780, 0.0
      %v9310 = vmax.f32 %v8782, 0.0
      %v9311 = vmax.f32 %v8784, 0.0
      %v9312 = vmax.f32 %v8788, 0.0
      %v9313 = vmax.f32 %v8790, 0.0
      %v9314 = vmax.f32 %v8792, 0.0
      %v9315 = vmax.f32 %v8794, 0.0
      %v9316 = vmax.f32 %v8798, 0.0
      %v9317 = vmax.f32 %v8800, 0.0
      %v9318 = vmax.f32 %v8802, 0.0
      %v9319 = vmax.f32 %v8804, 0.0
      %v9320 = vmax.f32 %v8808, 0.0
      %v9321 = vmax.f32 %v8810, 0.0
      %v9322 = vmax.f32 %v8812, 0.0
      %v9323 = vmax.f32 %v8814, 0.0
      %v9324 = vmax.f32 %v8818, 0.0
      %v9325 = vmax.f32 %v8820, 0.0
      %v9326 = vmax.f32 %v8822, 0.0
      %v9327 = vmax.f32 %v8824, 0.0
      %v9328 = vmax.f32 %v8828, 0.0
      %v9329 = vmax.f32 %v8830, 0.0
      %v9330 = vmax.f32 %v8832, 0.0
      %v9331 = vmax.f32 %v8834, 0.0
      %v9332 = vmax.f32 %v8838, 0.0
      %v9333 = vmax.f32 %v8840, 0.0
      %v9334 = vmax.f32 %v8842, 0.0
      %v9335 = vmax.f32 %v8844, 0.0
      %v9336 = vmax.f32 %v8848, 0.0
      %v9337 = vmax.f32 %v8850, 0.0
      %v9338 = vmax.f32 %v8852, 0.0
      %v9339 = vmax.f32 %v8854, 0.0
      %v9340 = vmax.f32 %v8858, 0.0
      %v9341 = vmax.f32 %v8860, 0.0
      %v9342 = vmax.f32 %v8862, 0.0
      %v9343 = vmax.f32 %v8864, 0.0
      %v9344 = vmax.f32 %v8868, 0.0
      %v9345 = vmax.f32 %v8870, 0.0
      %v9346 = vmax.f32 %v8872, 0.0
      %v9347 = vmax.f32 %v8874, 0.0
      %v9348 = vmax.f32 %v8878, 0.0
      %v9349 = vmax.f32 %v8880, 0.0
      %v9350 = vmax.f32 %v8882, 0.0
      %v9351 = vmax.f32 %v8884, 0.0
      %v9352 = vmax.f32 %v8888, 0.0
      %v9353 = vmax.f32 %v8890, 0.0
      %v9354 = vmax.f32 %v8892, 0.0
      %v9355 = vmax.f32 %v8894, 0.0
      %v9356 = vmax.f32 %v8898, 0.0
      %v9357 = vmax.f32 %v8900, 0.0
      %v9358 = vmax.f32 %v8902, 0.0
      %v9359 = vmax.f32 %v8904, 0.0
      %v9360 = vmax.f32 %v8908, 0.0
      %v9361 = vmax.f32 %v8910, 0.0
      %v9362 = vmax.f32 %v8912, 0.0
      %v9363 = vmax.f32 %v8914, 0.0
      %v9364 = vmax.f32 %v8918, 0.0
      %v9365 = vmax.f32 %v8920, 0.0
      %v9366 = vmax.f32 %v8922, 0.0
      %v9367 = vmax.f32 %v8924, 0.0
      %v9368 = vmax.f32 %v8928, 0.0
      %v9369 = vmax.f32 %v8930, 0.0
      %v9370 = vmax.f32 %v8932, 0.0
      %v9371 = vmax.f32 %v8934, 0.0
      %v9372 = vmax.f32 %v8938, 0.0
      %v9373 = vmax.f32 %v8940, 0.0
      %v9374 = vmax.f32 %v8942, 0.0
      %v9375 = vmax.f32 %v8944, 0.0
      %v9376 = vmax.f32 %v8948, 0.0
      %v9377 = vmax.f32 %v8950, 0.0
      %v9378 = vmax.f32 %v8952, 0.0
      %v9379 = vmax.f32 %v8954, 0.0
      %v9380 = vmax.f32 %v8958, 0.0
      %v9381 = vmax.f32 %v8960, 0.0
      %v9382 = vmax.f32 %v8962, 0.0
      %v9383 = vmax.f32 %v8964, 0.0
      %v9384 = vmax.f32 %v8968, 0.0
      %v9385 = vmax.f32 %v8970, 0.0
      %v9386 = vmax.f32 %v8972, 0.0
      %v9387 = vmax.f32 %v8974, 0.0
      %v9388 = vmax.f32 %v8978, 0.0
      %v9389 = vmax.f32 %v8980, 0.0
      %v9390 = vmax.f32 %v8982, 0.0
      %v9391 = vmax.f32 %v8984, 0.0
      %v9392 = vmax.f32 %v8988, 0.0
      %v9393 = vmax.f32 %v8990, 0.0
      %v9394 = vmax.f32 %v8992, 0.0
      %v9395 = vmax.f32 %v8994, 0.0
      %v9396 = vmax.f32 %v8998, 0.0
      %v9397 = vmax.f32 %v9000, 0.0
      %v9398 = vmax.f32 %v9002, 0.0
      %v9399 = vmax.f32 %v9004, 0.0
      %v9400 = vmax.f32 %v9008, 0.0
      %v9401 = vmax.f32 %v9010, 0.0
      %v9402 = vmax.f32 %v9012, 0.0
      %v9403 = vmax.f32 %v9014, 0.0
      %v9404 = vmax.f32 %v9018, 0.0
      %v9405 = vmax.f32 %v9020, 0.0
      %v9406 = vmax.f32 %v9022, 0.0
      %v9407 = vmax.f32 %v9024, 0.0
      %v9408 = vmax.f32 %v9028, 0.0
      %v9409 = vmax.f32 %v9030, 0.0
      %v9410 = vmax.f32 %v9032, 0.0
      %v9411 = vmax.f32 %v9034, 0.0
      %v9412 = vmax.f32 %v9038, 0.0
      %v9413 = vmax.f32 %v9040, 0.0
      %v9414 = vmax.f32 %v9042, 0.0
      %v9415 = vmax.f32 %v9044, 0.0
      %v9416 = vmax.f32 %v9048, 0.0
      %v9417 = vmax.f32 %v9050, 0.0
      %v9418 = vmax.f32 %v9052, 0.0
      %v9419 = vmax.f32 %v9054, 0.0
      %v9420 = vmax.f32 %v9058, 0.0
      %v9421 = vmax.f32 %v9060, 0.0
      %v9422 = vmax.f32 %v9062, 0.0
      %v9423 = vmax.f32 %v9064, 0.0
      %v9424 = vmax.f32 %v9068, 0.0
      %v9425 = vmax.f32 %v9070, 0.0
      %v9426 = vmax.f32 %v9072, 0.0
      %v9427 = vmax.f32 %v9074, 0.0
      %v9428 = vmax.f32 %v9078, 0.0
      %v9429 = vmax.f32 %v9080, 0.0
      %v9430 = vmax.f32 %v9082, 0.0
      %v9431 = vmax.f32 %v9084, 0.0
      %v9432 = vmax.f32 %v9088, 0.0
      %v9433 = vmax.f32 %v9090, 0.0
      %v9434 = vmax.f32 %v9092, 0.0
      %v9435 = vmax.f32 %v9094, 0.0
      %v9436 = vmax.f32 %v9098, 0.0
      %v9437 = vmax.f32 %v9100, 0.0
      %v9438 = vmax.f32 %v9102, 0.0
      %v9439 = vmax.f32 %v9104, 0.0
      %v9440 = vmax.f32 %v9108, 0.0
      %v9441 = vmax.f32 %v9110, 0.0
      %v9442 = vmax.f32 %v9112, 0.0
      %v9443 = vmax.f32 %v9114, 0.0
      %v9444 = vmax.f32 %v9118, 0.0
      %v9445 = vmax.f32 %v9120, 0.0
      %v9446 = vmax.f32 %v9122, 0.0
      %v9447 = vmax.f32 %v9124, 0.0
      %v9448 = vmax.f32 %v9128, 0.0
      %v9449 = vmax.f32 %v9130, 0.0
      %v9450 = vmax.f32 %v9132, 0.0
      %v9451 = vmax.f32 %v9134, 0.0
      %v9452 = vmax.f32 %v9138, 0.0
      %v9453 = vmax.f32 %v9140, 0.0
      %v9454 = vmax.f32 %v9142, 0.0
      %v9455 = vmax.f32 %v9144, 0.0
      %v9456 = vmax.f32 %v9148, 0.0
      %v9457 = vmax.f32 %v9150, 0.0
      %v9458 = vmax.f32 %v9152, 0.0
      %v9459 = vmax.f32 %v9154, 0.0
      %v9460 = vmax.f32 %v9158, 0.0
      %v9461 = vmax.f32 %v9160, 0.0
      %v9462 = vmax.f32 %v9162, 0.0
      %v9463 = vmax.f32 %v9164, 0.0
      %v9464 = vmax.f32 %v9168, 0.0
      %v9465 = vmax.f32 %v9170, 0.0
      %v9466 = vmax.f32 %v9172, 0.0
      %v9467 = vmax.f32 %v9174, 0.0
      %v9468 = vmax.f32 %v9178, 0.0
      %v9469 = vmax.f32 %v9180, 0.0
      %v9470 = vmax.f32 %v9182, 0.0
      %v9471 = vmax.f32 %v9184, 0.0
      %v9472 = vmax.f32 %v9188, 0.0
      %v9473 = vmax.f32 %v9190, 0.0
      %v9474 = vmax.f32 %v9192, 0.0
      %v9475 = vmax.f32 %v9194, 0.0
      %v9476 = vmax.f32 %v9198, 0.0
      %v9477 = vmax.f32 %v9200, 0.0
      %v9478 = vmax.f32 %v9202, 0.0
      %v9479 = vmax.f32 %v9204, 0.0
      %v9480 = vmax.f32 %v9208, 0.0
      %v9481 = vmax.f32 %v9210, 0.0
      %v9482 = vmax.f32 %v9212, 0.0
      %v9483 = vmax.f32 %v9214, 0.0
      %v9484 = vmax.f32 %v9218, 0.0
      %v9485 = vmax.f32 %v9220, 0.0
      %v9486 = vmax.f32 %v9222, 0.0
      %v9487 = vmax.f32 %v9224, 0.0
      %v9488 = vmax.f32 %v9228, 0.0
      %v9489 = vmax.f32 %v9230, 0.0
      %v9490 = vmax.f32 %v9232, 0.0
      %v9491 = vmax.f32 %v9234, 0.0
      %v9492 = vpack.c.bf16 %v9238, %v9236
      %v9493 = vpack.c.bf16 %v9239, %v9237
      %v9494 = vpack.c.bf16 %v9242, %v9240
      %v9495 = vpack.c.bf16 %v9243, %v9241
      %v9496 = vpack.c.bf16 %v9246, %v9244
      %v9497 = vpack.c.bf16 %v9247, %v9245
      %v9498 = vpack.c.bf16 %v9250, %v9248
      %v9499 = vpack.c.bf16 %v9251, %v9249
      %v9500 = vpack.c.bf16 %v9254, %v9252
      %v9501 = vpack.c.bf16 %v9255, %v9253
      %v9502 = vpack.c.bf16 %v9258, %v9256
      %v9503 = vpack.c.bf16 %v9259, %v9257
      %v9504 = vpack.c.bf16 %v9262, %v9260
      %v9505 = vpack.c.bf16 %v9263, %v9261
      %v9506 = vpack.c.bf16 %v9266, %v9264
      %v9507 = vpack.c.bf16 %v9267, %v9265
      %v9508 = vpack.c.bf16 %v9270, %v9268
      %v9509 = vpack.c.bf16 %v9271, %v9269
      %v9510 = vpack.c.bf16 %v9274, %v9272
      %v9511 = vpack.c.bf16 %v9275, %v9273
      %v9512 = vpack.c.bf16 %v9278, %v9276
      %v9513 = vpack.c.bf16 %v9279, %v9277
      %v9514 = vpack.c.bf16 %v9282, %v9280
      %v9515 = vpack.c.bf16 %v9283, %v9281
      %v9516 = vpack.c.bf16 %v9286, %v9284
      %v9517 = vpack.c.bf16 %v9287, %v9285
      %v9518 = vpack.c.bf16 %v9290, %v9288
      %v9519 = vpack.c.bf16 %v9291, %v9289
      %v9520 = vpack.c.bf16 %v9294, %v9292
      %v9521 = vpack.c.bf16 %v9295, %v9293
      %v9522 = vpack.c.bf16 %v9298, %v9296
      %v9523 = vpack.c.bf16 %v9299, %v9297
      %v9524 = vpack.c.bf16 %v9302, %v9300
      %v9525 = vpack.c.bf16 %v9303, %v9301
      %v9526 = vpack.c.bf16 %v9306, %v9304
      %v9527 = vpack.c.bf16 %v9307, %v9305
      %v9528 = vpack.c.bf16 %v9310, %v9308
      %v9529 = vpack.c.bf16 %v9311, %v9309
      %v9530 = vpack.c.bf16 %v9314, %v9312
      %v9531 = vpack.c.bf16 %v9315, %v9313
      %v9532 = vpack.c.bf16 %v9318, %v9316
      %v9533 = vpack.c.bf16 %v9319, %v9317
      %v9534 = vpack.c.bf16 %v9322, %v9320
      %v9535 = vpack.c.bf16 %v9323, %v9321
      %v9536 = vpack.c.bf16 %v9326, %v9324
      %v9537 = vpack.c.bf16 %v9327, %v9325
      %v9538 = vpack.c.bf16 %v9330, %v9328
      %v9539 = vpack.c.bf16 %v9331, %v9329
      %v9540 = vpack.c.bf16 %v9334, %v9332
      %v9541 = vpack.c.bf16 %v9335, %v9333
      %v9542 = vpack.c.bf16 %v9338, %v9336
      %v9543 = vpack.c.bf16 %v9339, %v9337
      %v9544 = vpack.c.bf16 %v9342, %v9340
      %v9545 = vpack.c.bf16 %v9343, %v9341
      %v9546 = vpack.c.bf16 %v9346, %v9344
      %v9547 = vpack.c.bf16 %v9347, %v9345
      %v9548 = vpack.c.bf16 %v9350, %v9348
      %v9549 = vpack.c.bf16 %v9351, %v9349
      %v9550 = vpack.c.bf16 %v9354, %v9352
      %v9551 = vpack.c.bf16 %v9355, %v9353
      %v9552 = vpack.c.bf16 %v9358, %v9356
      %v9553 = vpack.c.bf16 %v9359, %v9357
      %v9554 = vpack.c.bf16 %v9362, %v9360
      %v9555 = vpack.c.bf16 %v9363, %v9361
      %v9556 = vpack.c.bf16 %v9366, %v9364
      %v9557 = vpack.c.bf16 %v9367, %v9365
      %v9558 = vpack.c.bf16 %v9370, %v9368
      %v9559 = vpack.c.bf16 %v9371, %v9369
      %v9560 = vpack.c.bf16 %v9374, %v9372
      %v9561 = vpack.c.bf16 %v9375, %v9373
      %v9562 = vpack.c.bf16 %v9378, %v9376
      %v9563 = vpack.c.bf16 %v9379, %v9377
      %v9564 = vpack.c.bf16 %v9382, %v9380
      %v9565 = vpack.c.bf16 %v9383, %v9381
      %v9566 = vpack.c.bf16 %v9386, %v9384
      %v9567 = vpack.c.bf16 %v9387, %v9385
      %v9568 = vpack.c.bf16 %v9390, %v9388
      %v9569 = vpack.c.bf16 %v9391, %v9389
      %v9570 = vpack.c.bf16 %v9394, %v9392
      %v9571 = vpack.c.bf16 %v9395, %v9393
      %v9572 = vpack.c.bf16 %v9398, %v9396
      %v9573 = vpack.c.bf16 %v9399, %v9397
      %v9574 = vpack.c.bf16 %v9402, %v9400
      %v9575 = vpack.c.bf16 %v9403, %v9401
      %v9576 = vpack.c.bf16 %v9406, %v9404
      %v9577 = vpack.c.bf16 %v9407, %v9405
      %v9578 = vpack.c.bf16 %v9410, %v9408
      %v9579 = vpack.c.bf16 %v9411, %v9409
      %v9580 = vpack.c.bf16 %v9414, %v9412
      %v9581 = vpack.c.bf16 %v9415, %v9413
      %v9582 = vpack.c.bf16 %v9418, %v9416
      %v9583 = vpack.c.bf16 %v9419, %v9417
      %v9584 = vpack.c.bf16 %v9422, %v9420
      %v9585 = vpack.c.bf16 %v9423, %v9421
      %v9586 = vpack.c.bf16 %v9426, %v9424
      %v9587 = vpack.c.bf16 %v9427, %v9425
      %v9588 = vpack.c.bf16 %v9430, %v9428
      %v9589 = vpack.c.bf16 %v9431, %v9429
      %v9590 = vpack.c.bf16 %v9434, %v9432
      %v9591 = vpack.c.bf16 %v9435, %v9433
      %v9592 = vpack.c.bf16 %v9438, %v9436
      %v9593 = vpack.c.bf16 %v9439, %v9437
      %v9594 = vpack.c.bf16 %v9442, %v9440
      %v9595 = vpack.c.bf16 %v9443, %v9441
      %v9596 = vpack.c.bf16 %v9446, %v9444
      %v9597 = vpack.c.bf16 %v9447, %v9445
      %v9598 = vpack.c.bf16 %v9450, %v9448
      %v9599 = vpack.c.bf16 %v9451, %v9449
      %v9600 = vpack.c.bf16 %v9454, %v9452
      %v9601 = vpack.c.bf16 %v9455, %v9453
      %v9602 = vpack.c.bf16 %v9458, %v9456
      %v9603 = vpack.c.bf16 %v9459, %v9457
      %v9604 = vpack.c.bf16 %v9462, %v9460
      %v9605 = vpack.c.bf16 %v9463, %v9461
      %v9606 = vpack.c.bf16 %v9466, %v9464
      %v9607 = vpack.c.bf16 %v9467, %v9465
      %v9608 = vpack.c.bf16 %v9470, %v9468
      %v9609 = vpack.c.bf16 %v9471, %v9469
      %v9610 = vpack.c.bf16 %v9474, %v9472
      %v9611 = vpack.c.bf16 %v9475, %v9473
      %v9612 = vpack.c.bf16 %v9478, %v9476
      %v9613 = vpack.c.bf16 %v9479, %v9477
      %v9614 = vpack.c.bf16 %v9482, %v9480
      %v9615 = vpack.c.bf16 %v9483, %v9481
      %v9616 = vpack.c.bf16 %v9486, %v9484
      %v9617 = vpack.c.bf16 %v9487, %v9485
      %v9618 = vpack.c.bf16 %v9490, %v9488
      %v9619 = vpack.c.bf16 %v9491, %v9489
      %v9620 = vld [vmem:[%s14] sm:$0xff]
      %v9621 = vld [vmem:[%s14 + $0x8] sm:$0xff]
      %v9622 = vld [vmem:[%s14 + $0x10] sm:$0xff]
      %v9623 = vld [vmem:[%s14 + $0x18] sm:$0xff]
      %v9624 = vld [vmem:[%s14 + $0x20] sm:$0xff]
      %v9625 = vld [vmem:[%s14 + $0x28] sm:$0xff]
      %v9626 = vld [vmem:[%s14 + $0x30] sm:$0xff]
      %v9627 = vld [vmem:[%s14 + $0x38] sm:$0xff]
      %v9628 = vld [vmem:[%s14 + $0x40] sm:$0xff]
      %v9629 = vld [vmem:[%s14 + $0x48] sm:$0xff]
      %v9630 = vld [vmem:[%s14 + $0x50] sm:$0xff]
      %v9631 = vld [vmem:[%s14 + $0x58] sm:$0xff]
      %v9632 = vld [vmem:[%s14 + $0x60] sm:$0xff]
      %v9633 = vld [vmem:[%s14 + $0x68] sm:$0xff]
      %v9634 = vld [vmem:[%s14 + $0x70] sm:$0xff]
      %v9635 = vld [vmem:[%s14 + $0x78] sm:$0xff]
      %v9636 = vld [vmem:[%s14 + $0x80] sm:$0xff]
      %v9637 = vld [vmem:[%s14 + $0x88] sm:$0xff]
      %v9638 = vld [vmem:[%s14 + $0x90] sm:$0xff]
      %v9639 = vld [vmem:[%s14 + $0x98] sm:$0xff]
      %v9640 = vld [vmem:[%s14 + $0xa0] sm:$0xff]
      %v9641 = vld [vmem:[%s14 + $0xa8] sm:$0xff]
      %v9642 = vld [vmem:[%s14 + $0xb0] sm:$0xff]
      %v9643 = vld [vmem:[%s14 + $0xb8] sm:$0xff]
      %v9644 = vld [vmem:[%s14 + $0xc0] sm:$0xff]
      %v9645 = vld [vmem:[%s14 + $0xc8] sm:$0xff]
      %v9646 = vld [vmem:[%s14 + $0xd0] sm:$0xff]
      %v9647 = vld [vmem:[%s14 + $0xd8] sm:$0xff]
      %v9648 = vld [vmem:[%s14 + $0xe0] sm:$0xff]
      %v9649 = vld [vmem:[%s14 + $0xe8] sm:$0xff]
      %v9650 = vld [vmem:[%s14 + $0xf0] sm:$0xff]
      %v9651 = vld [vmem:[%s14 + $0xf8] sm:$0xff]
      %v9652 = vld [vmem:[%s15] sm:$0x3]
      %v9654 = vlaneseq
      %v9655 = vshrl.u32 %v9654, 7
      %v9656 = vsub.s32 0, %v9655
      %v9657 = vrot.slane %v9652, %v9656
      %v9658 = vlaneseq
      %v9659 = vshrl.u32 %v9658, 7
      %v9660 = vsub.s32 1, %v9659
      %v9661 = vrot.slane %v9652, %v9660
      %v9696 = vunpack.c.l.b16 %v9620
      %v9697 = vunpack.c.h.b16 %v9620
      %v9698 = vunpack.c.l.b16 %v9621
      %v9699 = vunpack.c.h.b16 %v9621
      %v9700 = vunpack.c.l.b16 %v9622
      %v9701 = vunpack.c.h.b16 %v9622
      %v9702 = vunpack.c.l.b16 %v9623
      %v9703 = vunpack.c.h.b16 %v9623
      %v9704 = vunpack.c.l.b16 %v9624
      %v9705 = vunpack.c.h.b16 %v9624
      %v9706 = vunpack.c.l.b16 %v9625
      %v9707 = vunpack.c.h.b16 %v9625
      %v9708 = vunpack.c.l.b16 %v9626
      %v9709 = vunpack.c.h.b16 %v9626
      %v9710 = vunpack.c.l.b16 %v9627
      %v9711 = vunpack.c.h.b16 %v9627
      %v9712 = vunpack.c.l.b16 %v9628
      %v9713 = vunpack.c.h.b16 %v9628
      %v9714 = vunpack.c.l.b16 %v9629
      %v9715 = vunpack.c.h.b16 %v9629
      %v9716 = vunpack.c.l.b16 %v9630
      %v9717 = vunpack.c.h.b16 %v9630
      %v9718 = vunpack.c.l.b16 %v9631
      %v9719 = vunpack.c.h.b16 %v9631
      %v9720 = vunpack.c.l.b16 %v9632
      %v9721 = vunpack.c.h.b16 %v9632
      %v9722 = vunpack.c.l.b16 %v9633
      %v9723 = vunpack.c.h.b16 %v9633
      %v9724 = vunpack.c.l.b16 %v9634
      %v9725 = vunpack.c.h.b16 %v9634
      %v9726 = vunpack.c.l.b16 %v9635
      %v9727 = vunpack.c.h.b16 %v9635
      %v9728 = vunpack.c.l.b16 %v9636
      %v9729 = vunpack.c.h.b16 %v9636
      %v9730 = vunpack.c.l.b16 %v9637
      %v9731 = vunpack.c.h.b16 %v9637
      %v9732 = vunpack.c.l.b16 %v9638
      %v9733 = vunpack.c.h.b16 %v9638
      %v9734 = vunpack.c.l.b16 %v9639
      %v9735 = vunpack.c.h.b16 %v9639
      %v9736 = vunpack.c.l.b16 %v9640
      %v9737 = vunpack.c.h.b16 %v9640
      %v9738 = vunpack.c.l.b16 %v9641
      %v9739 = vunpack.c.h.b16 %v9641
      %v9740 = vunpack.c.l.b16 %v9642
      %v9741 = vunpack.c.h.b16 %v9642
      %v9742 = vunpack.c.l.b16 %v9643
      %v9743 = vunpack.c.h.b16 %v9643
      %v9744 = vunpack.c.l.b16 %v9644
      %v9745 = vunpack.c.h.b16 %v9644
      %v9746 = vunpack.c.l.b16 %v9645
      %v9747 = vunpack.c.h.b16 %v9645
      %v9748 = vunpack.c.l.b16 %v9646
      %v9749 = vunpack.c.h.b16 %v9646
      %v9750 = vunpack.c.l.b16 %v9647
      %v9751 = vunpack.c.h.b16 %v9647
      %v9752 = vunpack.c.l.b16 %v9648
      %v9753 = vunpack.c.h.b16 %v9648
      %v9754 = vunpack.c.l.b16 %v9649
      %v9755 = vunpack.c.h.b16 %v9649
      %v9756 = vunpack.c.l.b16 %v9650
      %v9757 = vunpack.c.h.b16 %v9650
      %v9758 = vunpack.c.l.b16 %v9651
      %v9759 = vunpack.c.h.b16 %v9651
      %v9760 = vpack.c.b16 %v9698, %v9696
      %v9761 = vpack.c.b16 %v9699, %v9697
      %v9762 = vpack.c.b16 %v9702, %v9700
      %v9763 = vpack.c.b16 %v9703, %v9701
      %v9764 = vpack.c.b16 %v9706, %v9704
      %v9765 = vpack.c.b16 %v9707, %v9705
      %v9766 = vpack.c.b16 %v9710, %v9708
      %v9767 = vpack.c.b16 %v9711, %v9709
      %v9768 = vpack.c.b16 %v9714, %v9712
      %v9769 = vpack.c.b16 %v9715, %v9713
      %v9770 = vpack.c.b16 %v9718, %v9716
      %v9771 = vpack.c.b16 %v9719, %v9717
      %v9772 = vpack.c.b16 %v9722, %v9720
      %v9773 = vpack.c.b16 %v9723, %v9721
      %v9774 = vpack.c.b16 %v9726, %v9724
      %v9775 = vpack.c.b16 %v9727, %v9725
      %v9776 = vpack.c.b16 %v9730, %v9728
      %v9777 = vpack.c.b16 %v9731, %v9729
      %v9778 = vpack.c.b16 %v9734, %v9732
      %v9779 = vpack.c.b16 %v9735, %v9733
      %v9780 = vpack.c.b16 %v9738, %v9736
      %v9781 = vpack.c.b16 %v9739, %v9737
      %v9782 = vpack.c.b16 %v9742, %v9740
      %v9783 = vpack.c.b16 %v9743, %v9741
      %v9784 = vpack.c.b16 %v9746, %v9744
      %v9785 = vpack.c.b16 %v9747, %v9745
      %v9786 = vpack.c.b16 %v9750, %v9748
      %v9787 = vpack.c.b16 %v9751, %v9749
      %v9788 = vpack.c.b16 %v9754, %v9752
      %v9789 = vpack.c.b16 %v9755, %v9753
      %v9790 = vpack.c.b16 %v9758, %v9756
      %v9791 = vpack.c.b16 %v9759, %v9757
      %9824 = vmatprep.subr.bf16.mxu0 %v9761
      %9825 = vmatpush1.bf16.msra.mxu0 %v9760
      %9826 = vmatprep.subr.bf16.mxu0 %v9763
      %9827 = vmatpush1.bf16.msra.mxu0 %v9762
      %9828 = vmatprep.subr.bf16.mxu0 %v9765
      %9829 = vmatpush1.bf16.msra.mxu0 %v9764
      %9830 = vmatprep.subr.bf16.mxu0 %v9767
      %9831 = vmatpush1.bf16.msra.mxu0 %v9766
      %9832 = vmatprep.subr.bf16.mxu0 %v9769
      %9833 = vmatpush1.bf16.msra.mxu0 %v9768
      %9834 = vmatprep.subr.bf16.mxu0 %v9771
      %9835 = vmatpush1.bf16.msra.mxu0 %v9770
      %9836 = vmatprep.subr.bf16.mxu0 %v9773
      %9837 = vmatpush1.bf16.msra.mxu0 %v9772
      %9838 = vmatprep.subr.bf16.mxu0 %v9775
      %9839 = vmatpush1.bf16.msra.mxu0 %v9774
      %9840 = vmatprep.subr.bf16.mxu0 %v9777
      %9841 = vmatpush1.bf16.msra.mxu0 %v9776
      %9842 = vmatprep.subr.bf16.mxu0 %v9779
      %9843 = vmatpush1.bf16.msra.mxu0 %v9778
      %9844 = vmatprep.subr.bf16.mxu0 %v9781
      %9845 = vmatpush1.bf16.msra.mxu0 %v9780
      %9846 = vmatprep.subr.bf16.mxu0 %v9783
      %9847 = vmatpush1.bf16.msra.mxu0 %v9782
      %9848 = vmatprep.subr.bf16.mxu0 %v9785
      %9849 = vmatpush1.bf16.msra.mxu0 %v9784
      %9850 = vmatprep.subr.bf16.mxu0 %v9787
      %9851 = vmatpush1.bf16.msra.mxu0 %v9786
      %9852 = vmatprep.subr.bf16.mxu0 %v9789
      %9853 = vmatpush1.bf16.msra.mxu0 %v9788
      %9854 = vmatprep.subr.bf16.mxu0 %v9791
      %9855 = vmatpush1.bf16.msra.mxu0 %v9790
      %9856 = vmatprep.mubr.bf16.mxu0 %v9493
      %9857 = vmatmul.mubr.bf16.gmra.mrb[0].mxu0 %v9492
      %v9858 = vpop.f32.mrb[0].mxu0
      %v9859 = vadd.f32 %v9657, %v9858
      %v9860 = vpop.f32.mrb[0].mxu0
      %v9861 = vadd.f32 %v9661, %v9860
      %v9862 = vpop.f32.mrb[0].mxu0
      %v9863 = vadd.f32 %v9657, %v9862
      %v9864 = vpop.f32.mrb[0].mxu0
      %v9865 = vadd.f32 %v9661, %v9864
      %9866 = vmatprep.mubr.bf16.mxu0 %v9495
      %9867 = vmatmul.mubr.bf16.gmra.mrb[0].mxu0 %v9494
      %v9868 = vpop.f32.mrb[0].mxu0
      %v9869 = vadd.f32 %v9657, %v9868
      %v9870 = vpop.f32.mrb[0].mxu0
      %v9871 = vadd.f32 %v9661, %v9870
      %v9872 = vpop.f32.mrb[0].mxu0
      %v9873 = vadd.f32 %v9657, %v9872
      %v9874 = vpop.f32.mrb[0].mxu0
      %v9875 = vadd.f32 %v9661, %v9874
      %9876 = vmatprep.mubr.bf16.mxu0 %v9497
      %9877 = vmatmul.mubr.bf16.gmra.mrb[0].mxu0 %v9496
      %v9878 = vpop.f32.mrb[0].mxu0
      %v9879 = vadd.f32 %v9657, %v9878
      %v9880 = vpop.f32.mrb[0].mxu0
      %v9881 = vadd.f32 %v9661, %v9880
      %v9882 = vpop.f32.mrb[0].mxu0
      %v9883 = vadd.f32 %v9657, %v9882
      %v9884 = vpop.f32.mrb[0].mxu0
      %v9885 = vadd.f32 %v9661, %v9884
      %9886 = vmatprep.mubr.bf16.mxu0 %v9499
      %9887 = vmatmul.mubr.bf16.gmra.mrb[0].mxu0 %v9498
      %v9888 = vpop.f32.mrb[0].mxu0
      %v9889 = vadd.f32 %v9657, %v9888
      %v9890 = vpop.f32.mrb[0].mxu0
      %v9891 = vadd.f32 %v9661, %v9890
      %v9892 = vpop.f32.mrb[0].mxu0
      %v9893 = vadd.f32 %v9657, %v9892
      %v9894 = vpop.f32.mrb[0].mxu0
      %v9895 = vadd.f32 %v9661, %v9894
      %9896 = vmatprep.mubr.bf16.mxu0 %v9501
      %9897 = vmatmul.mubr.bf16.gmra.mrb[0].mxu0 %v9500
      %v9898 = vpop.f32.mrb[0].mxu0
      %v9899 = vadd.f32 %v9657, %v9898
      %v9900 = vpop.f32.mrb[0].mxu0
      %v9901 = vadd.f32 %v9661, %v9900
      %v9902 = vpop.f32.mrb[0].mxu0
      %v9903 = vadd.f32 %v9657, %v9902
      %v9904 = vpop.f32.mrb[0].mxu0
      %v9905 = vadd.f32 %v9661, %v9904
      %9906 = vmatprep.mubr.bf16.mxu0 %v9503
      %9907 = vmatmul.mubr.bf16.gmra.mrb[0].mxu0 %v9502
      %v9908 = vpop.f32.mrb[0].mxu0
      %v9909 = vadd.f32 %v9657, %v9908
      %v9910 = vpop.f32.mrb[0].mxu0
      %v9911 = vadd.f32 %v9661, %v9910
      %v9912 = vpop.f32.mrb[0].mxu0
      %v9913 = vadd.f32 %v9657, %v9912
      %v9914 = vpop.f32.mrb[0].mxu0
      %v9915 = vadd.f32 %v9661, %v9914
      %9916 = vmatprep.mubr.bf16.mxu0 %v9505
      %9917 = vmatmul.mubr.bf16.gmra.mrb[0].mxu0 %v9504
      %v9918 = vpop.f32.mrb[0].mxu0
      %v9919 = vadd.f32 %v9657, %v9918
      %v9920 = vpop.f32.mrb[0].mxu0
      %v9921 = vadd.f32 %v9661, %v9920
      %v9922 = vpop.f32.mrb[0].mxu0
      %v9923 = vadd.f32 %v9657, %v9922
      %v9924 = vpop.f32.mrb[0].mxu0
      %v9925 = vadd.f32 %v9661, %v9924
      %9926 = vmatprep.mubr.bf16.mxu0 %v9507
      %9927 = vmatmul.mubr.bf16.gmra.mrb[0].mxu0 %v9506
      %v9928 = vpop.f32.mrb[0].mxu0
      %v9929 = vadd.f32 %v9657, %v9928
      %v9930 = vpop.f32.mrb[0].mxu0
      %v9931 = vadd.f32 %v9661, %v9930
      %v9932 = vpop.f32.mrb[0].mxu0
      %v9933 = vadd.f32 %v9657, %v9932
      %v9934 = vpop.f32.mrb[0].mxu0
      %v9935 = vadd.f32 %v9661, %v9934
      %9936 = vmatprep.mubr.bf16.mxu0 %v9509
      %9937 = vmatmul.mubr.bf16.gmra.mrb[0].mxu0 %v9508
      %v9938 = vpop.f32.mrb[0].mxu0
      %v9939 = vadd.f32 %v9657, %v9938
      %v9940 = vpop.f32.mrb[0].mxu0
      %v9941 = vadd.f32 %v9661, %v9940
      %v9942 = vpop.f32.mrb[0].mxu0
      %v9943 = vadd.f32 %v9657, %v9942
      %v9944 = vpop.f32.mrb[0].mxu0
      %v9945 = vadd.f32 %v9661, %v9944
      %9946 = vmatprep.mubr.bf16.mxu0 %v9511
      %9947 = vmatmul.mubr.bf16.gmra.mrb[0].mxu0 %v9510
      %v9948 = vpop.f32.mrb[0].mxu0
      %v9949 = vadd.f32 %v9657, %v9948
      %v9950 = vpop.f32.mrb[0].mxu0
      %v9951 = vadd.f32 %v9661, %v9950
      %v9952 = vpop.f32.mrb[0].mxu0
      %v9953 = vadd.f32 %v9657, %v9952
      %v9954 = vpop.f32.mrb[0].mxu0
      %v9955 = vadd.f32 %v9661, %v9954
      %9956 = vmatprep.mubr.bf16.mxu0 %v9513
      %9957 = vmatmul.mubr.bf16.gmra.mrb[0].mxu0 %v9512
      %v9958 = vpop.f32.mrb[0].mxu0
      %v9959 = vadd.f32 %v9657, %v9958
      %v9960 = vpop.f32.mrb[0].mxu0
      %v9961 = vadd.f32 %v9661, %v9960
      %v9962 = vpop.f32.mrb[0].mxu0
      %v9963 = vadd.f32 %v9657, %v9962
      %v9964 = vpop.f32.mrb[0].mxu0
      %v9965 = vadd.f32 %v9661, %v9964
      %9966 = vmatprep.mubr.bf16.mxu0 %v9515
      %9967 = vmatmul.mubr.bf16.gmra.mrb[0].mxu0 %v9514
      %v9968 = vpop.f32.mrb[0].mxu0
      %v9969 = vadd.f32 %v9657, %v9968
      %v9970 = vpop.f32.mrb[0].mxu0
      %v9971 = vadd.f32 %v9661, %v9970
      %v9972 = vpop.f32.mrb[0].mxu0
      %v9973 = vadd.f32 %v9657, %v9972
      %v9974 = vpop.f32.mrb[0].mxu0
      %v9975 = vadd.f32 %v9661, %v9974
      %9976 = vmatprep.mubr.bf16.mxu0 %v9517
      %9977 = vmatmul.mubr.bf16.gmra.mrb[0].mxu0 %v9516
      %v9978 = vpop.f32.mrb[0].mxu0
      %v9979 = vadd.f32 %v9657, %v9978
      %v9980 = vpop.f32.mrb[0].mxu0
      %v9981 = vadd.f32 %v9661, %v9980
      %v9982 = vpop.f32.mrb[0].mxu0
      %v9983 = vadd.f32 %v9657, %v9982
      %v9984 = vpop.f32.mrb[0].mxu0
      %v9985 = vadd.f32 %v9661, %v9984
      %9986 = vmatprep.mubr.bf16.mxu0 %v9519
      %9987 = vmatmul.mubr.bf16.gmra.mrb[0].mxu0 %v9518
      %v9988 = vpop.f32.mrb[0].mxu0
      %v9989 = vadd.f32 %v9657, %v9988
      %v9990 = vpop.f32.mrb[0].mxu0
      %v9991 = vadd.f32 %v9661, %v9990
      %v9992 = vpop.f32.mrb[0].mxu0
      %v9993 = vadd.f32 %v9657, %v9992
      %v9994 = vpop.f32.mrb[0].mxu0
      %v9995 = vadd.f32 %v9661, %v9994
      %9996 = vmatprep.mubr.bf16.mxu0 %v9521
      %9997 = vmatmul.mubr.bf16.gmra.mrb[0].mxu0 %v9520
      %v9998 = vpop.f32.mrb[0].mxu0
      %v9999 = vadd.f32 %v9657, %v9998
      %v10000 = vpop.f32.mrb[0].mxu0
      %v10001 = vadd.f32 %v9661, %v10000
      %v10002 = vpop.f32.mrb[0].mxu0
      %v10003 = vadd.f32 %v9657, %v10002
      %v10004 = vpop.f32.mrb[0].mxu0
      %v10005 = vadd.f32 %v9661, %v10004
      %10006 = vmatprep.mubr.bf16.mxu0 %v9523
      %10007 = vmatmul.mubr.bf16.gmra.mrb[0].mxu0 %v9522
      %v10008 = vpop.f32.mrb[0].mxu0
      %v10009 = vadd.f32 %v9657, %v10008
      %v10010 = vpop.f32.mrb[0].mxu0
      %v10011 = vadd.f32 %v9661, %v10010
      %v10012 = vpop.f32.mrb[0].mxu0
      %v10013 = vadd.f32 %v9657, %v10012
      %v10014 = vpop.f32.mrb[0].mxu0
      %v10015 = vadd.f32 %v9661, %v10014
      %10016 = vmatprep.mubr.bf16.mxu0 %v9525
      %10017 = vmatmul.mubr.bf16.gmra.mrb[0].mxu0 %v9524
      %v10018 = vpop.f32.mrb[0].mxu0
      %v10019 = vadd.f32 %v9657, %v10018
      %v10020 = vpop.f32.mrb[0].mxu0
      %v10021 = vadd.f32 %v9661, %v10020
      %v10022 = vpop.f32.mrb[0].mxu0
      %v10023 = vadd.f32 %v9657, %v10022
      %v10024 = vpop.f32.mrb[0].mxu0
      %v10025 = vadd.f32 %v9661, %v10024
      %10026 = vmatprep.mubr.bf16.mxu0 %v9527
      %10027 = vmatmul.mubr.bf16.gmra.mrb[0].mxu0 %v9526
      %v10028 = vpop.f32.mrb[0].mxu0
      %v10029 = vadd.f32 %v9657, %v10028
      %v10030 = vpop.f32.mrb[0].mxu0
      %v10031 = vadd.f32 %v9661, %v10030
      %v10032 = vpop.f32.mrb[0].mxu0
      %v10033 = vadd.f32 %v9657, %v10032
      %v10034 = vpop.f32.mrb[0].mxu0
      %v10035 = vadd.f32 %v9661, %v10034
      %10036 = vmatprep.mubr.bf16.mxu0 %v9529
      %10037 = vmatmul.mubr.bf16.gmra.mrb[0].mxu0 %v9528
      %v10038 = vpop.f32.mrb[0].mxu0
      %v10039 = vadd.f32 %v9657, %v10038
      %v10040 = vpop.f32.mrb[0].mxu0
      %v10041 = vadd.f32 %v9661, %v10040
      %v10042 = vpop.f32.mrb[0].mxu0
      %v10043 = vadd.f32 %v9657, %v10042
      %v10044 = vpop.f32.mrb[0].mxu0
      %v10045 = vadd.f32 %v9661, %v10044
      %10046 = vmatprep.mubr.bf16.mxu0 %v9531
      %10047 = vmatmul.mubr.bf16.gmra.mrb[0].mxu0 %v9530
      %v10048 = vpop.f32.mrb[0].mxu0
      %v10049 = vadd.f32 %v9657, %v10048
      %v10050 = vpop.f32.mrb[0].mxu0
      %v10051 = vadd.f32 %v9661, %v10050
      %v10052 = vpop.f32.mrb[0].mxu0
      %v10053 = vadd.f32 %v9657, %v10052
      %v10054 = vpop.f32.mrb[0].mxu0
      %v10055 = vadd.f32 %v9661, %v10054
      %10056 = vmatprep.mubr.bf16.mxu0 %v9533
      %10057 = vmatmul.mubr.bf16.gmra.mrb[0].mxu0 %v9532
      %v10058 = vpop.f32.mrb[0].mxu0
      %v10059 = vadd.f32 %v9657, %v10058
      %v10060 = vpop.f32.mrb[0].mxu0
      %v10061 = vadd.f32 %v9661, %v10060
      %v10062 = vpop.f32.mrb[0].mxu0
      %v10063 = vadd.f32 %v9657, %v10062
      %v10064 = vpop.f32.mrb[0].mxu0
      %v10065 = vadd.f32 %v9661, %v10064
      %10066 = vmatprep.mubr.bf16.mxu0 %v9535
      %10067 = vmatmul.mubr.bf16.gmra.mrb[0].mxu0 %v9534
      %v10068 = vpop.f32.mrb[0].mxu0
      %v10069 = vadd.f32 %v9657, %v10068
      %v10070 = vpop.f32.mrb[0].mxu0
      %v10071 = vadd.f32 %v9661, %v10070
      %v10072 = vpop.f32.mrb[0].mxu0
      %v10073 = vadd.f32 %v9657, %v10072
      %v10074 = vpop.f32.mrb[0].mxu0
      %v10075 = vadd.f32 %v9661, %v10074
      %10076 = vmatprep.mubr.bf16.mxu0 %v9537
      %10077 = vmatmul.mubr.bf16.gmra.mrb[0].mxu0 %v9536
      %v10078 = vpop.f32.mrb[0].mxu0
      %v10079 = vadd.f32 %v9657, %v10078
      %v10080 = vpop.f32.mrb[0].mxu0
      %v10081 = vadd.f32 %v9661, %v10080
      %v10082 = vpop.f32.mrb[0].mxu0
      %v10083 = vadd.f32 %v9657, %v10082
      %v10084 = vpop.f32.mrb[0].mxu0
      %v10085 = vadd.f32 %v9661, %v10084
      %10086 = vmatprep.mubr.bf16.mxu0 %v9539
      %10087 = vmatmul.mubr.bf16.gmra.mrb[0].mxu0 %v9538
      %v10088 = vpop.f32.mrb[0].mxu0
      %v10089 = vadd.f32 %v9657, %v10088
      %v10090 = vpop.f32.mrb[0].mxu0
      %v10091 = vadd.f32 %v9661, %v10090
      %v10092 = vpop.f32.mrb[0].mxu0
      %v10093 = vadd.f32 %v9657, %v10092
      %v10094 = vpop.f32.mrb[0].mxu0
      %v10095 = vadd.f32 %v9661, %v10094
      %10096 = vmatprep.mubr.bf16.mxu0 %v9541
      %10097 = vmatmul.mubr.bf16.gmra.mrb[0].mxu0 %v9540
      %v10098 = vpop.f32.mrb[0].mxu0
      %v10099 = vadd.f32 %v9657, %v10098
      %v10100 = vpop.f32.mrb[0].mxu0
      %v10101 = vadd.f32 %v9661, %v10100
      %v10102 = vpop.f32.mrb[0].mxu0
      %v10103 = vadd.f32 %v9657, %v10102
      %v10104 = vpop.f32.mrb[0].mxu0
      %v10105 = vadd.f32 %v9661, %v10104
      %10106 = vmatprep.mubr.bf16.mxu0 %v9543
      %10107 = vmatmul.mubr.bf16.gmra.mrb[0].mxu0 %v9542
      %v10108 = vpop.f32.mrb[0].mxu0
      %v10109 = vadd.f32 %v9657, %v10108
      %v10110 = vpop.f32.mrb[0].mxu0
      %v10111 = vadd.f32 %v9661, %v10110
      %v10112 = vpop.f32.mrb[0].mxu0
      %v10113 = vadd.f32 %v9657, %v10112
      %v10114 = vpop.f32.mrb[0].mxu0
      %v10115 = vadd.f32 %v9661, %v10114
      %10116 = vmatprep.mubr.bf16.mxu0 %v9545
      %10117 = vmatmul.mubr.bf16.gmra.mrb[0].mxu0 %v9544
      %v10118 = vpop.f32.mrb[0].mxu0
      %v10119 = vadd.f32 %v9657, %v10118
      %v10120 = vpop.f32.mrb[0].mxu0
      %v10121 = vadd.f32 %v9661, %v10120
      %v10122 = vpop.f32.mrb[0].mxu0
      %v10123 = vadd.f32 %v9657, %v10122
      %v10124 = vpop.f32.mrb[0].mxu0
      %v10125 = vadd.f32 %v9661, %v10124
      %10126 = vmatprep.mubr.bf16.mxu0 %v9547
      %10127 = vmatmul.mubr.bf16.gmra.mrb[0].mxu0 %v9546
      %v10128 = vpop.f32.mrb[0].mxu0
      %v10129 = vadd.f32 %v9657, %v10128
      %v10130 = vpop.f32.mrb[0].mxu0
      %v10131 = vadd.f32 %v9661, %v10130
      %v10132 = vpop.f32.mrb[0].mxu0
      %v10133 = vadd.f32 %v9657, %v10132
      %v10134 = vpop.f32.mrb[0].mxu0
      %v10135 = vadd.f32 %v9661, %v10134
      %10136 = vmatprep.mubr.bf16.mxu0 %v9549
      %10137 = vmatmul.mubr.bf16.gmra.mrb[0].mxu0 %v9548
      %v10138 = vpop.f32.mrb[0].mxu0
      %v10139 = vadd.f32 %v9657, %v10138
      %v10140 = vpop.f32.mrb[0].mxu0
      %v10141 = vadd.f32 %v9661, %v10140
      %v10142 = vpop.f32.mrb[0].mxu0
      %v10143 = vadd.f32 %v9657, %v10142
      %v10144 = vpop.f32.mrb[0].mxu0
      %v10145 = vadd.f32 %v9661, %v10144
      %10146 = vmatprep.mubr.bf16.mxu0 %v9551
      %10147 = vmatmul.mubr.bf16.gmra.mrb[0].mxu0 %v9550
      %v10148 = vpop.f32.mrb[0].mxu0
      %v10149 = vadd.f32 %v9657, %v10148
      %v10150 = vpop.f32.mrb[0].mxu0
      %v10151 = vadd.f32 %v9661, %v10150
      %v10152 = vpop.f32.mrb[0].mxu0
      %v10153 = vadd.f32 %v9657, %v10152
      %v10154 = vpop.f32.mrb[0].mxu0
      %v10155 = vadd.f32 %v9661, %v10154
      %10156 = vmatprep.mubr.bf16.mxu0 %v9553
      %10157 = vmatmul.mubr.bf16.gmra.mrb[0].mxu0 %v9552
      %v10158 = vpop.f32.mrb[0].mxu0
      %v10159 = vadd.f32 %v9657, %v10158
      %v10160 = vpop.f32.mrb[0].mxu0
      %v10161 = vadd.f32 %v9661, %v10160
      %v10162 = vpop.f32.mrb[0].mxu0
      %v10163 = vadd.f32 %v9657, %v10162
      %v10164 = vpop.f32.mrb[0].mxu0
      %v10165 = vadd.f32 %v9661, %v10164
      %10166 = vmatprep.mubr.bf16.mxu0 %v9555
      %10167 = vmatmul.mubr.bf16.gmra.mrb[0].mxu0 %v9554
      %v10168 = vpop.f32.mrb[0].mxu0
      %v10169 = vadd.f32 %v9657, %v10168
      %v10170 = vpop.f32.mrb[0].mxu0
      %v10171 = vadd.f32 %v9661, %v10170
      %v10172 = vpop.f32.mrb[0].mxu0
      %v10173 = vadd.f32 %v9657, %v10172
      %v10174 = vpop.f32.mrb[0].mxu0
      %v10175 = vadd.f32 %v9661, %v10174
      %10176 = vmatprep.mubr.bf16.mxu0 %v9557
      %10177 = vmatmul.mubr.bf16.gmra.mrb[0].mxu0 %v9556
      %v10178 = vpop.f32.mrb[0].mxu0
      %v10179 = vadd.f32 %v9657, %v10178
      %v10180 = vpop.f32.mrb[0].mxu0
      %v10181 = vadd.f32 %v9661, %v10180
      %v10182 = vpop.f32.mrb[0].mxu0
      %v10183 = vadd.f32 %v9657, %v10182
      %v10184 = vpop.f32.mrb[0].mxu0
      %v10185 = vadd.f32 %v9661, %v10184
      %10186 = vmatprep.mubr.bf16.mxu0 %v9559
      %10187 = vmatmul.mubr.bf16.gmra.mrb[0].mxu0 %v9558
      %v10188 = vpop.f32.mrb[0].mxu0
      %v10189 = vadd.f32 %v9657, %v10188
      %v10190 = vpop.f32.mrb[0].mxu0
      %v10191 = vadd.f32 %v9661, %v10190
      %v10192 = vpop.f32.mrb[0].mxu0
      %v10193 = vadd.f32 %v9657, %v10192
      %v10194 = vpop.f32.mrb[0].mxu0
      %v10195 = vadd.f32 %v9661, %v10194
      %10196 = vmatprep.mubr.bf16.mxu0 %v9561
      %10197 = vmatmul.mubr.bf16.gmra.mrb[0].mxu0 %v9560
      %v10198 = vpop.f32.mrb[0].mxu0
      %v10199 = vadd.f32 %v9657, %v10198
      %v10200 = vpop.f32.mrb[0].mxu0
      %v10201 = vadd.f32 %v9661, %v10200
      %v10202 = vpop.f32.mrb[0].mxu0
      %v10203 = vadd.f32 %v9657, %v10202
      %v10204 = vpop.f32.mrb[0].mxu0
      %v10205 = vadd.f32 %v9661, %v10204
      %10206 = vmatprep.mubr.bf16.mxu0 %v9563
      %10207 = vmatmul.mubr.bf16.gmra.mrb[0].mxu0 %v9562
      %v10208 = vpop.f32.mrb[0].mxu0
      %v10209 = vadd.f32 %v9657, %v10208
      %v10210 = vpop.f32.mrb[0].mxu0
      %v10211 = vadd.f32 %v9661, %v10210
      %v10212 = vpop.f32.mrb[0].mxu0
      %v10213 = vadd.f32 %v9657, %v10212
      %v10214 = vpop.f32.mrb[0].mxu0
      %v10215 = vadd.f32 %v9661, %v10214
      %10216 = vmatprep.mubr.bf16.mxu0 %v9565
      %10217 = vmatmul.mubr.bf16.gmra.mrb[0].mxu0 %v9564
      %v10218 = vpop.f32.mrb[0].mxu0
      %v10219 = vadd.f32 %v9657, %v10218
      %v10220 = vpop.f32.mrb[0].mxu0
      %v10221 = vadd.f32 %v9661, %v10220
      %v10222 = vpop.f32.mrb[0].mxu0
      %v10223 = vadd.f32 %v9657, %v10222
      %v10224 = vpop.f32.mrb[0].mxu0
      %v10225 = vadd.f32 %v9661, %v10224
      %10226 = vmatprep.mubr.bf16.mxu0 %v9567
      %10227 = vmatmul.mubr.bf16.gmra.mrb[0].mxu0 %v9566
      %v10228 = vpop.f32.mrb[0].mxu0
      %v10229 = vadd.f32 %v9657, %v10228
      %v10230 = vpop.f32.mrb[0].mxu0
      %v10231 = vadd.f32 %v9661, %v10230
      %v10232 = vpop.f32.mrb[0].mxu0
      %v10233 = vadd.f32 %v9657, %v10232
      %v10234 = vpop.f32.mrb[0].mxu0
      %v10235 = vadd.f32 %v9661, %v10234
      %10236 = vmatprep.mubr.bf16.mxu0 %v9569
      %10237 = vmatmul.mubr.bf16.gmra.mrb[0].mxu0 %v9568
      %v10238 = vpop.f32.mrb[0].mxu0
      %v10239 = vadd.f32 %v9657, %v10238
      %v10240 = vpop.f32.mrb[0].mxu0
      %v10241 = vadd.f32 %v9661, %v10240
      %v10242 = vpop.f32.mrb[0].mxu0
      %v10243 = vadd.f32 %v9657, %v10242
      %v10244 = vpop.f32.mrb[0].mxu0
      %v10245 = vadd.f32 %v9661, %v10244
      %10246 = vmatprep.mubr.bf16.mxu0 %v9571
      %10247 = vmatmul.mubr.bf16.gmra.mrb[0].mxu0 %v9570
      %v10248 = vpop.f32.mrb[0].mxu0
      %v10249 = vadd.f32 %v9657, %v10248
      %v10250 = vpop.f32.mrb[0].mxu0
      %v10251 = vadd.f32 %v9661, %v10250
      %v10252 = vpop.f32.mrb[0].mxu0
      %v10253 = vadd.f32 %v9657, %v10252
      %v10254 = vpop.f32.mrb[0].mxu0
      %v10255 = vadd.f32 %v9661, %v10254
      %10256 = vmatprep.mubr.bf16.mxu0 %v9573
      %10257 = vmatmul.mubr.bf16.gmra.mrb[0].mxu0 %v9572
      %v10258 = vpop.f32.mrb[0].mxu0
      %v10259 = vadd.f32 %v9657, %v10258
      %v10260 = vpop.f32.mrb[0].mxu0
      %v10261 = vadd.f32 %v9661, %v10260
      %v10262 = vpop.f32.mrb[0].mxu0
      %v10263 = vadd.f32 %v9657, %v10262
      %v10264 = vpop.f32.mrb[0].mxu0
      %v10265 = vadd.f32 %v9661, %v10264
      %10266 = vmatprep.mubr.bf16.mxu0 %v9575
      %10267 = vmatmul.mubr.bf16.gmra.mrb[0].mxu0 %v9574
      %v10268 = vpop.f32.mrb[0].mxu0
      %v10269 = vadd.f32 %v9657, %v10268
      %v10270 = vpop.f32.mrb[0].mxu0
      %v10271 = vadd.f32 %v9661, %v10270
      %v10272 = vpop.f32.mrb[0].mxu0
      %v10273 = vadd.f32 %v9657, %v10272
      %v10274 = vpop.f32.mrb[0].mxu0
      %v10275 = vadd.f32 %v9661, %v10274
      %10276 = vmatprep.mubr.bf16.mxu0 %v9577
      %10277 = vmatmul.mubr.bf16.gmra.mrb[0].mxu0 %v9576
      %v10278 = vpop.f32.mrb[0].mxu0
      %v10279 = vadd.f32 %v9657, %v10278
      %v10280 = vpop.f32.mrb[0].mxu0
      %v10281 = vadd.f32 %v9661, %v10280
      %v10282 = vpop.f32.mrb[0].mxu0
      %v10283 = vadd.f32 %v9657, %v10282
      %v10284 = vpop.f32.mrb[0].mxu0
      %v10285 = vadd.f32 %v9661, %v10284
      %10286 = vmatprep.mubr.bf16.mxu0 %v9579
      %10287 = vmatmul.mubr.bf16.gmra.mrb[0].mxu0 %v9578
      %v10288 = vpop.f32.mrb[0].mxu0
      %v10289 = vadd.f32 %v9657, %v10288
      %v10290 = vpop.f32.mrb[0].mxu0
      %v10291 = vadd.f32 %v9661, %v10290
      %v10292 = vpop.f32.mrb[0].mxu0
      %v10293 = vadd.f32 %v9657, %v10292
      %v10294 = vpop.f32.mrb[0].mxu0
      %v10295 = vadd.f32 %v9661, %v10294
      %10296 = vmatprep.mubr.bf16.mxu0 %v9581
      %10297 = vmatmul.mubr.bf16.gmra.mrb[0].mxu0 %v9580
      %v10298 = vpop.f32.mrb[0].mxu0
      %v10299 = vadd.f32 %v9657, %v10298
      %v10300 = vpop.f32.mrb[0].mxu0
      %v10301 = vadd.f32 %v9661, %v10300
      %v10302 = vpop.f32.mrb[0].mxu0
      %v10303 = vadd.f32 %v9657, %v10302
      %v10304 = vpop.f32.mrb[0].mxu0
      %v10305 = vadd.f32 %v9661, %v10304
      %10306 = vmatprep.mubr.bf16.mxu0 %v9583
      %10307 = vmatmul.mubr.bf16.gmra.mrb[0].mxu0 %v9582
      %v10308 = vpop.f32.mrb[0].mxu0
      %v10309 = vadd.f32 %v9657, %v10308
      %v10310 = vpop.f32.mrb[0].mxu0
      %v10311 = vadd.f32 %v9661, %v10310
      %v10312 = vpop.f32.mrb[0].mxu0
      %v10313 = vadd.f32 %v9657, %v10312
      %v10314 = vpop.f32.mrb[0].mxu0
      %v10315 = vadd.f32 %v9661, %v10314
      %10316 = vmatprep.mubr.bf16.mxu0 %v9585
      %10317 = vmatmul.mubr.bf16.gmra.mrb[0].mxu0 %v9584
      %v10318 = vpop.f32.mrb[0].mxu0
      %v10319 = vadd.f32 %v9657, %v10318
      %v10320 = vpop.f32.mrb[0].mxu0
      %v10321 = vadd.f32 %v9661, %v10320
      %v10322 = vpop.f32.mrb[0].mxu0
      %v10323 = vadd.f32 %v9657, %v10322
      %v10324 = vpop.f32.mrb[0].mxu0
      %v10325 = vadd.f32 %v9661, %v10324
      %10326 = vmatprep.mubr.bf16.mxu0 %v9587
      %10327 = vmatmul.mubr.bf16.gmra.mrb[0].mxu0 %v9586
      %v10328 = vpop.f32.mrb[0].mxu0
      %v10329 = vadd.f32 %v9657, %v10328
      %v10330 = vpop.f32.mrb[0].mxu0
      %v10331 = vadd.f32 %v9661, %v10330
      %v10332 = vpop.f32.mrb[0].mxu0
      %v10333 = vadd.f32 %v9657, %v10332
      %v10334 = vpop.f32.mrb[0].mxu0
      %v10335 = vadd.f32 %v9661, %v10334
      %10336 = vmatprep.mubr.bf16.mxu0 %v9589
      %10337 = vmatmul.mubr.bf16.gmra.mrb[0].mxu0 %v9588
      %v10338 = vpop.f32.mrb[0].mxu0
      %v10339 = vadd.f32 %v9657, %v10338
      %v10340 = vpop.f32.mrb[0].mxu0
      %v10341 = vadd.f32 %v9661, %v10340
      %v10342 = vpop.f32.mrb[0].mxu0
      %v10343 = vadd.f32 %v9657, %v10342
      %v10344 = vpop.f32.mrb[0].mxu0
      %v10345 = vadd.f32 %v9661, %v10344
      %10346 = vmatprep.mubr.bf16.mxu0 %v9591
      %10347 = vmatmul.mubr.bf16.gmra.mrb[0].mxu0 %v9590
      %v10348 = vpop.f32.mrb[0].mxu0
      %v10349 = vadd.f32 %v9657, %v10348
      %v10350 = vpop.f32.mrb[0].mxu0
      %v10351 = vadd.f32 %v9661, %v10350
      %v10352 = vpop.f32.mrb[0].mxu0
      %v10353 = vadd.f32 %v9657, %v10352
      %v10354 = vpop.f32.mrb[0].mxu0
      %v10355 = vadd.f32 %v9661, %v10354
      %10356 = vmatprep.mubr.bf16.mxu0 %v9593
      %10357 = vmatmul.mubr.bf16.gmra.mrb[0].mxu0 %v9592
      %v10358 = vpop.f32.mrb[0].mxu0
      %v10359 = vadd.f32 %v9657, %v10358
      %v10360 = vpop.f32.mrb[0].mxu0
      %v10361 = vadd.f32 %v9661, %v10360
      %v10362 = vpop.f32.mrb[0].mxu0
      %v10363 = vadd.f32 %v9657, %v10362
      %v10364 = vpop.f32.mrb[0].mxu0
      %v10365 = vadd.f32 %v9661, %v10364
      %10366 = vmatprep.mubr.bf16.mxu0 %v9595
      %10367 = vmatmul.mubr.bf16.gmra.mrb[0].mxu0 %v9594
      %v10368 = vpop.f32.mrb[0].mxu0
      %v10369 = vadd.f32 %v9657, %v10368
      %v10370 = vpop.f32.mrb[0].mxu0
      %v10371 = vadd.f32 %v9661, %v10370
      %v10372 = vpop.f32.mrb[0].mxu0
      %v10373 = vadd.f32 %v9657, %v10372
      %v10374 = vpop.f32.mrb[0].mxu0
      %v10375 = vadd.f32 %v9661, %v10374
      %10376 = vmatprep.mubr.bf16.mxu0 %v9597
      %10377 = vmatmul.mubr.bf16.gmra.mrb[0].mxu0 %v9596
      %v10378 = vpop.f32.mrb[0].mxu0
      %v10379 = vadd.f32 %v9657, %v10378
      %v10380 = vpop.f32.mrb[0].mxu0
      %v10381 = vadd.f32 %v9661, %v10380
      %v10382 = vpop.f32.mrb[0].mxu0
      %v10383 = vadd.f32 %v9657, %v10382
      %v10384 = vpop.f32.mrb[0].mxu0
      %v10385 = vadd.f32 %v9661, %v10384
      %10386 = vmatprep.mubr.bf16.mxu0 %v9599
      %10387 = vmatmul.mubr.bf16.gmra.mrb[0].mxu0 %v9598
      %v10388 = vpop.f32.mrb[0].mxu0
      %v10389 = vadd.f32 %v9657, %v10388
      %v10390 = vpop.f32.mrb[0].mxu0
      %v10391 = vadd.f32 %v9661, %v10390
      %v10392 = vpop.f32.mrb[0].mxu0
      %v10393 = vadd.f32 %v9657, %v10392
      %v10394 = vpop.f32.mrb[0].mxu0
      %v10395 = vadd.f32 %v9661, %v10394
      %10396 = vmatprep.mubr.bf16.mxu0 %v9601
      %10397 = vmatmul.mubr.bf16.gmra.mrb[0].mxu0 %v9600
      %v10398 = vpop.f32.mrb[0].mxu0
      %v10399 = vadd.f32 %v9657, %v10398
      %v10400 = vpop.f32.mrb[0].mxu0
      %v10401 = vadd.f32 %v9661, %v10400
      %v10402 = vpop.f32.mrb[0].mxu0
      %v10403 = vadd.f32 %v9657, %v10402
      %v10404 = vpop.f32.mrb[0].mxu0
      %v10405 = vadd.f32 %v9661, %v10404
      %10406 = vmatprep.mubr.bf16.mxu0 %v9603
      %10407 = vmatmul.mubr.bf16.gmra.mrb[0].mxu0 %v9602
      %v10408 = vpop.f32.mrb[0].mxu0
      %v10409 = vadd.f32 %v9657, %v10408
      %v10410 = vpop.f32.mrb[0].mxu0
      %v10411 = vadd.f32 %v9661, %v10410
      %v10412 = vpop.f32.mrb[0].mxu0
      %v10413 = vadd.f32 %v9657, %v10412
      %v10414 = vpop.f32.mrb[0].mxu0
      %v10415 = vadd.f32 %v9661, %v10414
      %10416 = vmatprep.mubr.bf16.mxu0 %v9605
      %10417 = vmatmul.mubr.bf16.gmra.mrb[0].mxu0 %v9604
      %v10418 = vpop.f32.mrb[0].mxu0
      %v10419 = vadd.f32 %v9657, %v10418
      %v10420 = vpop.f32.mrb[0].mxu0
      %v10421 = vadd.f32 %v9661, %v10420
      %v10422 = vpop.f32.mrb[0].mxu0
      %v10423 = vadd.f32 %v9657, %v10422
      %v10424 = vpop.f32.mrb[0].mxu0
      %v10425 = vadd.f32 %v9661, %v10424
      %10426 = vmatprep.mubr.bf16.mxu0 %v9607
      %10427 = vmatmul.mubr.bf16.gmra.mrb[0].mxu0 %v9606
      %v10428 = vpop.f32.mrb[0].mxu0
      %v10429 = vadd.f32 %v9657, %v10428
      %v10430 = vpop.f32.mrb[0].mxu0
      %v10431 = vadd.f32 %v9661, %v10430
      %v10432 = vpop.f32.mrb[0].mxu0
      %v10433 = vadd.f32 %v9657, %v10432
      %v10434 = vpop.f32.mrb[0].mxu0
      %v10435 = vadd.f32 %v9661, %v10434
      %10436 = vmatprep.mubr.bf16.mxu0 %v9609
      %10437 = vmatmul.mubr.bf16.gmra.mrb[0].mxu0 %v9608
      %v10438 = vpop.f32.mrb[0].mxu0
      %v10439 = vadd.f32 %v9657, %v10438
      %v10440 = vpop.f32.mrb[0].mxu0
      %v10441 = vadd.f32 %v9661, %v10440
      %v10442 = vpop.f32.mrb[0].mxu0
      %v10443 = vadd.f32 %v9657, %v10442
      %v10444 = vpop.f32.mrb[0].mxu0
      %v10445 = vadd.f32 %v9661, %v10444
      %10446 = vmatprep.mubr.bf16.mxu0 %v9611
      %10447 = vmatmul.mubr.bf16.gmra.mrb[0].mxu0 %v9610
      %v10448 = vpop.f32.mrb[0].mxu0
      %v10449 = vadd.f32 %v9657, %v10448
      %v10450 = vpop.f32.mrb[0].mxu0
      %v10451 = vadd.f32 %v9661, %v10450
      %v10452 = vpop.f32.mrb[0].mxu0
      %v10453 = vadd.f32 %v9657, %v10452
      %v10454 = vpop.f32.mrb[0].mxu0
      %v10455 = vadd.f32 %v9661, %v10454
      %10456 = vmatprep.mubr.bf16.mxu0 %v9613
      %10457 = vmatmul.mubr.bf16.gmra.mrb[0].mxu0 %v9612
      %v10458 = vpop.f32.mrb[0].mxu0
      %v10459 = vadd.f32 %v9657, %v10458
      %v10460 = vpop.f32.mrb[0].mxu0
      %v10461 = vadd.f32 %v9661, %v10460
      %v10462 = vpop.f32.mrb[0].mxu0
      %v10463 = vadd.f32 %v9657, %v10462
      %v10464 = vpop.f32.mrb[0].mxu0
      %v10465 = vadd.f32 %v9661, %v10464
      %10466 = vmatprep.mubr.bf16.mxu0 %v9615
      %10467 = vmatmul.mubr.bf16.gmra.mrb[0].mxu0 %v9614
      %v10468 = vpop.f32.mrb[0].mxu0
      %v10469 = vadd.f32 %v9657, %v10468
      %v10470 = vpop.f32.mrb[0].mxu0
      %v10471 = vadd.f32 %v9661, %v10470
      %v10472 = vpop.f32.mrb[0].mxu0
      %v10473 = vadd.f32 %v9657, %v10472
      %v10474 = vpop.f32.mrb[0].mxu0
      %v10475 = vadd.f32 %v9661, %v10474
      %10476 = vmatprep.mubr.bf16.mxu0 %v9617
      %10477 = vmatmul.mubr.bf16.gmra.mrb[0].mxu0 %v9616
      %v10478 = vpop.f32.mrb[0].mxu0
      %v10479 = vadd.f32 %v9657, %v10478
      %v10480 = vpop.f32.mrb[0].mxu0
      %v10481 = vadd.f32 %v9661, %v10480
      %v10482 = vpop.f32.mrb[0].mxu0
      %v10483 = vadd.f32 %v9657, %v10482
      %v10484 = vpop.f32.mrb[0].mxu0
      %v10485 = vadd.f32 %v9661, %v10484
      %10486 = vmatprep.mubr.bf16.mxu0 %v9619
      %10487 = vmatmul.mubr.bf16.gmra.mrb[0].mxu0 %v9618
      %v10488 = vpop.f32.mrb[0].mxu0
      %v10489 = vadd.f32 %v9657, %v10488
      %v10490 = vpop.f32.mrb[0].mxu0
      %v10491 = vadd.f32 %v9661, %v10490
      %v10492 = vpop.f32.mrb[0].mxu0
      %v10493 = vadd.f32 %v9657, %v10492
      %v10494 = vpop.f32.mrb[0].mxu0
      %v10495 = vadd.f32 %v9661, %v10494
      %10496 = vdwg.mxu0
      %v10497 = vmax.f32 %v9859, 0.0
      %v10498 = vmax.f32 %v9861, 0.0
      %v10499 = vmax.f32 %v9863, 0.0
      %v10500 = vmax.f32 %v9865, 0.0
      %v10501 = vmax.f32 %v9869, 0.0
      %v10502 = vmax.f32 %v9871, 0.0
      %v10503 = vmax.f32 %v9873, 0.0
      %v10504 = vmax.f32 %v9875, 0.0
      %v10505 = vmax.f32 %v9879, 0.0
      %v10506 = vmax.f32 %v9881, 0.0
      %v10507 = vmax.f32 %v9883, 0.0
      %v10508 = vmax.f32 %v9885, 0.0
      %v10509 = vmax.f32 %v9889, 0.0
      %v10510 = vmax.f32 %v9891, 0.0
      %v10511 = vmax.f32 %v9893, 0.0
      %v10512 = vmax.f32 %v9895, 0.0
      %v10513 = vmax.f32 %v9899, 0.0
      %v10514 = vmax.f32 %v9901, 0.0
      %v10515 = vmax.f32 %v9903, 0.0
      %v10516 = vmax.f32 %v9905, 0.0
      %v10517 = vmax.f32 %v9909, 0.0
      %v10518 = vmax.f32 %v9911, 0.0
      %v10519 = vmax.f32 %v9913, 0.0
      %v10520 = vmax.f32 %v9915, 0.0
      %v10521 = vmax.f32 %v9919, 0.0
      %v10522 = vmax.f32 %v9921, 0.0
      %v10523 = vmax.f32 %v9923, 0.0
      %v10524 = vmax.f32 %v9925, 0.0
      %v10525 = vmax.f32 %v9929, 0.0
      %v10526 = vmax.f32 %v9931, 0.0
      %v10527 = vmax.f32 %v9933, 0.0
      %v10528 = vmax.f32 %v9935, 0.0
      %v10529 = vmax.f32 %v9939, 0.0
      %v10530 = vmax.f32 %v9941, 0.0
      %v10531 = vmax.f32 %v9943, 0.0
      %v10532 = vmax.f32 %v9945, 0.0
      %v10533 = vmax.f32 %v9949, 0.0
      %v10534 = vmax.f32 %v9951, 0.0
      %v10535 = vmax.f32 %v9953, 0.0
      %v10536 = vmax.f32 %v9955, 0.0
      %v10537 = vmax.f32 %v9959, 0.0
      %v10538 = vmax.f32 %v9961, 0.0
      %v10539 = vmax.f32 %v9963, 0.0
      %v10540 = vmax.f32 %v9965, 0.0
      %v10541 = vmax.f32 %v9969, 0.0
      %v10542 = vmax.f32 %v9971, 0.0
      %v10543 = vmax.f32 %v9973, 0.0
      %v10544 = vmax.f32 %v9975, 0.0
      %v10545 = vmax.f32 %v9979, 0.0
      %v10546 = vmax.f32 %v9981, 0.0
      %v10547 = vmax.f32 %v9983, 0.0
      %v10548 = vmax.f32 %v9985, 0.0
      %v10549 = vmax.f32 %v9989, 0.0
      %v10550 = vmax.f32 %v9991, 0.0
      %v10551 = vmax.f32 %v9993, 0.0
      %v10552 = vmax.f32 %v9995, 0.0
      %v10553 = vmax.f32 %v9999, 0.0
      %v10554 = vmax.f32 %v10001, 0.0
      %v10555 = vmax.f32 %v10003, 0.0
      %v10556 = vmax.f32 %v10005, 0.0
      %v10557 = vmax.f32 %v10009, 0.0
      %v10558 = vmax.f32 %v10011, 0.0
      %v10559 = vmax.f32 %v10013, 0.0
      %v10560 = vmax.f32 %v10015, 0.0
      %v10561 = vmax.f32 %v10019, 0.0
      %v10562 = vmax.f32 %v10021, 0.0
      %v10563 = vmax.f32 %v10023, 0.0
      %v10564 = vmax.f32 %v10025, 0.0
      %v10565 = vmax.f32 %v10029, 0.0
      %v10566 = vmax.f32 %v10031, 0.0
      %v10567 = vmax.f32 %v10033, 0.0
      %v10568 = vmax.f32 %v10035, 0.0
      %v10569 = vmax.f32 %v10039, 0.0
      %v10570 = vmax.f32 %v10041, 0.0
      %v10571 = vmax.f32 %v10043, 0.0
      %v10572 = vmax.f32 %v10045, 0.0
      %v10573 = vmax.f32 %v10049, 0.0
      %v10574 = vmax.f32 %v10051, 0.0
      %v10575 = vmax.f32 %v10053, 0.0
      %v10576 = vmax.f32 %v10055, 0.0
      %v10577 = vmax.f32 %v10059, 0.0
      %v10578 = vmax.f32 %v10061, 0.0
      %v10579 = vmax.f32 %v10063, 0.0
      %v10580 = vmax.f32 %v10065, 0.0
      %v10581 = vmax.f32 %v10069, 0.0
      %v10582 = vmax.f32 %v10071, 0.0
      %v10583 = vmax.f32 %v10073, 0.0
      %v10584 = vmax.f32 %v10075, 0.0
      %v10585 = vmax.f32 %v10079, 0.0
      %v10586 = vmax.f32 %v10081, 0.0
      %v10587 = vmax.f32 %v10083, 0.0
      %v10588 = vmax.f32 %v10085, 0.0
      %v10589 = vmax.f32 %v10089, 0.0
      %v10590 = vmax.f32 %v10091, 0.0
      %v10591 = vmax.f32 %v10093, 0.0
      %v10592 = vmax.f32 %v10095, 0.0
      %v10593 = vmax.f32 %v10099, 0.0
      %v10594 = vmax.f32 %v10101, 0.0
      %v10595 = vmax.f32 %v10103, 0.0
      %v10596 = vmax.f32 %v10105, 0.0
      %v10597 = vmax.f32 %v10109, 0.0
      %v10598 = vmax.f32 %v10111, 0.0
      %v10599 = vmax.f32 %v10113, 0.0
      %v10600 = vmax.f32 %v10115, 0.0
      %v10601 = vmax.f32 %v10119, 0.0
      %v10602 = vmax.f32 %v10121, 0.0
      %v10603 = vmax.f32 %v10123, 0.0
      %v10604 = vmax.f32 %v10125, 0.0
      %v10605 = vmax.f32 %v10129, 0.0
      %v10606 = vmax.f32 %v10131, 0.0
      %v10607 = vmax.f32 %v10133, 0.0
      %v10608 = vmax.f32 %v10135, 0.0
      %v10609 = vmax.f32 %v10139, 0.0
      %v10610 = vmax.f32 %v10141, 0.0
      %v10611 = vmax.f32 %v10143, 0.0
      %v10612 = vmax.f32 %v10145, 0.0
      %v10613 = vmax.f32 %v10149, 0.0
      %v10614 = vmax.f32 %v10151, 0.0
      %v10615 = vmax.f32 %v10153, 0.0
      %v10616 = vmax.f32 %v10155, 0.0
      %v10617 = vmax.f32 %v10159, 0.0
      %v10618 = vmax.f32 %v10161, 0.0
      %v10619 = vmax.f32 %v10163, 0.0
      %v10620 = vmax.f32 %v10165, 0.0
      %v10621 = vmax.f32 %v10169, 0.0
      %v10622 = vmax.f32 %v10171, 0.0
      %v10623 = vmax.f32 %v10173, 0.0
      %v10624 = vmax.f32 %v10175, 0.0
      %v10625 = vmax.f32 %v10179, 0.0
      %v10626 = vmax.f32 %v10181, 0.0
      %v10627 = vmax.f32 %v10183, 0.0
      %v10628 = vmax.f32 %v10185, 0.0
      %v10629 = vmax.f32 %v10189, 0.0
      %v10630 = vmax.f32 %v10191, 0.0
      %v10631 = vmax.f32 %v10193, 0.0
      %v10632 = vmax.f32 %v10195, 0.0
      %v10633 = vmax.f32 %v10199, 0.0
      %v10634 = vmax.f32 %v10201, 0.0
      %v10635 = vmax.f32 %v10203, 0.0
      %v10636 = vmax.f32 %v10205, 0.0
      %v10637 = vmax.f32 %v10209, 0.0
      %v10638 = vmax.f32 %v10211, 0.0
      %v10639 = vmax.f32 %v10213, 0.0
      %v10640 = vmax.f32 %v10215, 0.0
      %v10641 = vmax.f32 %v10219, 0.0
      %v10642 = vmax.f32 %v10221, 0.0
      %v10643 = vmax.f32 %v10223, 0.0
      %v10644 = vmax.f32 %v10225, 0.0
      %v10645 = vmax.f32 %v10229, 0.0
      %v10646 = vmax.f32 %v10231, 0.0
      %v10647 = vmax.f32 %v10233, 0.0
      %v10648 = vmax.f32 %v10235, 0.0
      %v10649 = vmax.f32 %v10239, 0.0
      %v10650 = vmax.f32 %v10241, 0.0
      %v10651 = vmax.f32 %v10243, 0.0
      %v10652 = vmax.f32 %v10245, 0.0
      %v10653 = vmax.f32 %v10249, 0.0
      %v10654 = vmax.f32 %v10251, 0.0
      %v10655 = vmax.f32 %v10253, 0.0
      %v10656 = vmax.f32 %v10255, 0.0
      %v10657 = vmax.f32 %v10259, 0.0
      %v10658 = vmax.f32 %v10261, 0.0
      %v10659 = vmax.f32 %v10263, 0.0
      %v10660 = vmax.f32 %v10265, 0.0
      %v10661 = vmax.f32 %v10269, 0.0
      %v10662 = vmax.f32 %v10271, 0.0
      %v10663 = vmax.f32 %v10273, 0.0
      %v10664 = vmax.f32 %v10275, 0.0
      %v10665 = vmax.f32 %v10279, 0.0
      %v10666 = vmax.f32 %v10281, 0.0
      %v10667 = vmax.f32 %v10283, 0.0
      %v10668 = vmax.f32 %v10285, 0.0
      %v10669 = vmax.f32 %v10289, 0.0
      %v10670 = vmax.f32 %v10291, 0.0
      %v10671 = vmax.f32 %v10293, 0.0
      %v10672 = vmax.f32 %v10295, 0.0
      %v10673 = vmax.f32 %v10299, 0.0
      %v10674 = vmax.f32 %v10301, 0.0
      %v10675 = vmax.f32 %v10303, 0.0
      %v10676 = vmax.f32 %v10305, 0.0
      %v10677 = vmax.f32 %v10309, 0.0
      %v10678 = vmax.f32 %v10311, 0.0
      %v10679 = vmax.f32 %v10313, 0.0
      %v10680 = vmax.f32 %v10315, 0.0
      %v10681 = vmax.f32 %v10319, 0.0
      %v10682 = vmax.f32 %v10321, 0.0
      %v10683 = vmax.f32 %v10323, 0.0
      %v10684 = vmax.f32 %v10325, 0.0
      %v10685 = vmax.f32 %v10329, 0.0
      %v10686 = vmax.f32 %v10331, 0.0
      %v10687 = vmax.f32 %v10333, 0.0
      %v10688 = vmax.f32 %v10335, 0.0
      %v10689 = vmax.f32 %v10339, 0.0
      %v10690 = vmax.f32 %v10341, 0.0
      %v10691 = vmax.f32 %v10343, 0.0
      %v10692 = vmax.f32 %v10345, 0.0
      %v10693 = vmax.f32 %v10349, 0.0
      %v10694 = vmax.f32 %v10351, 0.0
      %v10695 = vmax.f32 %v10353, 0.0
      %v10696 = vmax.f32 %v10355, 0.0
      %v10697 = vmax.f32 %v10359, 0.0
      %v10698 = vmax.f32 %v10361, 0.0
      %v10699 = vmax.f32 %v10363, 0.0
      %v10700 = vmax.f32 %v10365, 0.0
      %v10701 = vmax.f32 %v10369, 0.0
      %v10702 = vmax.f32 %v10371, 0.0
      %v10703 = vmax.f32 %v10373, 0.0
      %v10704 = vmax.f32 %v10375, 0.0
      %v10705 = vmax.f32 %v10379, 0.0
      %v10706 = vmax.f32 %v10381, 0.0
      %v10707 = vmax.f32 %v10383, 0.0
      %v10708 = vmax.f32 %v10385, 0.0
      %v10709 = vmax.f32 %v10389, 0.0
      %v10710 = vmax.f32 %v10391, 0.0
      %v10711 = vmax.f32 %v10393, 0.0
      %v10712 = vmax.f32 %v10395, 0.0
      %v10713 = vmax.f32 %v10399, 0.0
      %v10714 = vmax.f32 %v10401, 0.0
      %v10715 = vmax.f32 %v10403, 0.0
      %v10716 = vmax.f32 %v10405, 0.0
      %v10717 = vmax.f32 %v10409, 0.0
      %v10718 = vmax.f32 %v10411, 0.0
      %v10719 = vmax.f32 %v10413, 0.0
      %v10720 = vmax.f32 %v10415, 0.0
      %v10721 = vmax.f32 %v10419, 0.0
      %v10722 = vmax.f32 %v10421, 0.0
      %v10723 = vmax.f32 %v10423, 0.0
      %v10724 = vmax.f32 %v10425, 0.0
      %v10725 = vmax.f32 %v10429, 0.0
      %v10726 = vmax.f32 %v10431, 0.0
      %v10727 = vmax.f32 %v10433, 0.0
      %v10728 = vmax.f32 %v10435, 0.0
      %v10729 = vmax.f32 %v10439, 0.0
      %v10730 = vmax.f32 %v10441, 0.0
      %v10731 = vmax.f32 %v10443, 0.0
      %v10732 = vmax.f32 %v10445, 0.0
      %v10733 = vmax.f32 %v10449, 0.0
      %v10734 = vmax.f32 %v10451, 0.0
      %v10735 = vmax.f32 %v10453, 0.0
      %v10736 = vmax.f32 %v10455, 0.0
      %v10737 = vmax.f32 %v10459, 0.0
      %v10738 = vmax.f32 %v10461, 0.0
      %v10739 = vmax.f32 %v10463, 0.0
      %v10740 = vmax.f32 %v10465, 0.0
      %v10741 = vmax.f32 %v10469, 0.0
      %v10742 = vmax.f32 %v10471, 0.0
      %v10743 = vmax.f32 %v10473, 0.0
      %v10744 = vmax.f32 %v10475, 0.0
      %v10745 = vmax.f32 %v10479, 0.0
      %v10746 = vmax.f32 %v10481, 0.0
      %v10747 = vmax.f32 %v10483, 0.0
      %v10748 = vmax.f32 %v10485, 0.0
      %v10749 = vmax.f32 %v10489, 0.0
      %v10750 = vmax.f32 %v10491, 0.0
      %v10751 = vmax.f32 %v10493, 0.0
      %v10752 = vmax.f32 %v10495, 0.0
      %v10753 = vpack.c.bf16 %v10499, %v10497
      %v10754 = vpack.c.bf16 %v10500, %v10498
      %v10755 = vpack.c.bf16 %v10503, %v10501
      %v10756 = vpack.c.bf16 %v10504, %v10502
      %v10757 = vpack.c.bf16 %v10507, %v10505
      %v10758 = vpack.c.bf16 %v10508, %v10506
      %v10759 = vpack.c.bf16 %v10511, %v10509
      %v10760 = vpack.c.bf16 %v10512, %v10510
      %v10761 = vpack.c.bf16 %v10515, %v10513
      %v10762 = vpack.c.bf16 %v10516, %v10514
      %v10763 = vpack.c.bf16 %v10519, %v10517
      %v10764 = vpack.c.bf16 %v10520, %v10518
      %v10765 = vpack.c.bf16 %v10523, %v10521
      %v10766 = vpack.c.bf16 %v10524, %v10522
      %v10767 = vpack.c.bf16 %v10527, %v10525
      %v10768 = vpack.c.bf16 %v10528, %v10526
      %v10769 = vpack.c.bf16 %v10531, %v10529
      %v10770 = vpack.c.bf16 %v10532, %v10530
      %v10771 = vpack.c.bf16 %v10535, %v10533
      %v10772 = vpack.c.bf16 %v10536, %v10534
      %v10773 = vpack.c.bf16 %v10539, %v10537
      %v10774 = vpack.c.bf16 %v10540, %v10538
      %v10775 = vpack.c.bf16 %v10543, %v10541
      %v10776 = vpack.c.bf16 %v10544, %v10542
      %v10777 = vpack.c.bf16 %v10547, %v10545
      %v10778 = vpack.c.bf16 %v10548, %v10546
      %v10779 = vpack.c.bf16 %v10551, %v10549
      %v10780 = vpack.c.bf16 %v10552, %v10550
      %v10781 = vpack.c.bf16 %v10555, %v10553
      %v10782 = vpack.c.bf16 %v10556, %v10554
      %v10783 = vpack.c.bf16 %v10559, %v10557
      %v10784 = vpack.c.bf16 %v10560, %v10558
      %v10785 = vpack.c.bf16 %v10563, %v10561
      %v10786 = vpack.c.bf16 %v10564, %v10562
      %v10787 = vpack.c.bf16 %v10567, %v10565
      %v10788 = vpack.c.bf16 %v10568, %v10566
      %v10789 = vpack.c.bf16 %v10571, %v10569
      %v10790 = vpack.c.bf16 %v10572, %v10570
      %v10791 = vpack.c.bf16 %v10575, %v10573
      %v10792 = vpack.c.bf16 %v10576, %v10574
      %v10793 = vpack.c.bf16 %v10579, %v10577
      %v10794 = vpack.c.bf16 %v10580, %v10578
      %v10795 = vpack.c.bf16 %v10583, %v10581
      %v10796 = vpack.c.bf16 %v10584, %v10582
      %v10797 = vpack.c.bf16 %v10587, %v10585
      %v10798 = vpack.c.bf16 %v10588, %v10586
      %v10799 = vpack.c.bf16 %v10591, %v10589
      %v10800 = vpack.c.bf16 %v10592, %v10590
      %v10801 = vpack.c.bf16 %v10595, %v10593
      %v10802 = vpack.c.bf16 %v10596, %v10594
      %v10803 = vpack.c.bf16 %v10599, %v10597
      %v10804 = vpack.c.bf16 %v10600, %v10598
      %v10805 = vpack.c.bf16 %v10603, %v10601
      %v10806 = vpack.c.bf16 %v10604, %v10602
      %v10807 = vpack.c.bf16 %v10607, %v10605
      %v10808 = vpack.c.bf16 %v10608, %v10606
      %v10809 = vpack.c.bf16 %v10611, %v10609
      %v10810 = vpack.c.bf16 %v10612, %v10610
      %v10811 = vpack.c.bf16 %v10615, %v10613
      %v10812 = vpack.c.bf16 %v10616, %v10614
      %v10813 = vpack.c.bf16 %v10619, %v10617
      %v10814 = vpack.c.bf16 %v10620, %v10618
      %v10815 = vpack.c.bf16 %v10623, %v10621
      %v10816 = vpack.c.bf16 %v10624, %v10622
      %v10817 = vpack.c.bf16 %v10627, %v10625
      %v10818 = vpack.c.bf16 %v10628, %v10626
      %v10819 = vpack.c.bf16 %v10631, %v10629
      %v10820 = vpack.c.bf16 %v10632, %v10630
      %v10821 = vpack.c.bf16 %v10635, %v10633
      %v10822 = vpack.c.bf16 %v10636, %v10634
      %v10823 = vpack.c.bf16 %v10639, %v10637
      %v10824 = vpack.c.bf16 %v10640, %v10638
      %v10825 = vpack.c.bf16 %v10643, %v10641
      %v10826 = vpack.c.bf16 %v10644, %v10642
      %v10827 = vpack.c.bf16 %v10647, %v10645
      %v10828 = vpack.c.bf16 %v10648, %v10646
      %v10829 = vpack.c.bf16 %v10651, %v10649
      %v10830 = vpack.c.bf16 %v10652, %v10650
      %v10831 = vpack.c.bf16 %v10655, %v10653
      %v10832 = vpack.c.bf16 %v10656, %v10654
      %v10833 = vpack.c.bf16 %v10659, %v10657
      %v10834 = vpack.c.bf16 %v10660, %v10658
      %v10835 = vpack.c.bf16 %v10663, %v10661
      %v10836 = vpack.c.bf16 %v10664, %v10662
      %v10837 = vpack.c.bf16 %v10667, %v10665
      %v10838 = vpack.c.bf16 %v10668, %v10666
      %v10839 = vpack.c.bf16 %v10671, %v10669
      %v10840 = vpack.c.bf16 %v10672, %v10670
      %v10841 = vpack.c.bf16 %v10675, %v10673
      %v10842 = vpack.c.bf16 %v10676, %v10674
      %v10843 = vpack.c.bf16 %v10679, %v10677
      %v10844 = vpack.c.bf16 %v10680, %v10678
      %v10845 = vpack.c.bf16 %v10683, %v10681
      %v10846 = vpack.c.bf16 %v10684, %v10682
      %v10847 = vpack.c.bf16 %v10687, %v10685
      %v10848 = vpack.c.bf16 %v10688, %v10686
      %v10849 = vpack.c.bf16 %v10691, %v10689
      %v10850 = vpack.c.bf16 %v10692, %v10690
      %v10851 = vpack.c.bf16 %v10695, %v10693
      %v10852 = vpack.c.bf16 %v10696, %v10694
      %v10853 = vpack.c.bf16 %v10699, %v10697
      %v10854 = vpack.c.bf16 %v10700, %v10698
      %v10855 = vpack.c.bf16 %v10703, %v10701
      %v10856 = vpack.c.bf16 %v10704, %v10702
      %v10857 = vpack.c.bf16 %v10707, %v10705
      %v10858 = vpack.c.bf16 %v10708, %v10706
      %v10859 = vpack.c.bf16 %v10711, %v10709
      %v10860 = vpack.c.bf16 %v10712, %v10710
      %v10861 = vpack.c.bf16 %v10715, %v10713
      %v10862 = vpack.c.bf16 %v10716, %v10714
      %v10863 = vpack.c.bf16 %v10719, %v10717
      %v10864 = vpack.c.bf16 %v10720, %v10718
      %v10865 = vpack.c.bf16 %v10723, %v10721
      %v10866 = vpack.c.bf16 %v10724, %v10722
      %v10867 = vpack.c.bf16 %v10727, %v10725
      %v10868 = vpack.c.bf16 %v10728, %v10726
      %v10869 = vpack.c.bf16 %v10731, %v10729
      %v10870 = vpack.c.bf16 %v10732, %v10730
      %v10871 = vpack.c.bf16 %v10735, %v10733
      %v10872 = vpack.c.bf16 %v10736, %v10734
      %v10873 = vpack.c.bf16 %v10739, %v10737
      %v10874 = vpack.c.bf16 %v10740, %v10738
      %v10875 = vpack.c.bf16 %v10743, %v10741
      %v10876 = vpack.c.bf16 %v10744, %v10742
      %v10877 = vpack.c.bf16 %v10747, %v10745
      %v10878 = vpack.c.bf16 %v10748, %v10746
      %v10879 = vpack.c.bf16 %v10751, %v10749
      %v10880 = vpack.c.bf16 %v10752, %v10750
      %v10881 = vld [vmem:[%s16] sm:$0xf]
      %v10882 = vld [vmem:[%s16 + $0x4] sm:$0xf]
      %v10883 = vld [vmem:[%s16 + $0x8] sm:$0xf]
      %v10884 = vld [vmem:[%s16 + $0xc] sm:$0xf]
      %v10885 = vld [vmem:[%s16 + $0x10] sm:$0xf]
      %v10886 = vld [vmem:[%s16 + $0x14] sm:$0xf]
      %v10887 = vld [vmem:[%s16 + $0x18] sm:$0xf]
      %v10888 = vld [vmem:[%s16 + $0x1c] sm:$0xf]
      %v10889 = vld [vmem:[%s16 + $0x20] sm:$0xf]
      %v10890 = vld [vmem:[%s16 + $0x24] sm:$0xf]
      %v10891 = vld [vmem:[%s16 + $0x28] sm:$0xf]
      %v10892 = vld [vmem:[%s16 + $0x2c] sm:$0xf]
      %v10893 = vld [vmem:[%s16 + $0x30] sm:$0xf]
      %v10894 = vld [vmem:[%s16 + $0x34] sm:$0xf]
      %v10895 = vld [vmem:[%s16 + $0x38] sm:$0xf]
      %v10896 = vld [vmem:[%s16 + $0x3c] sm:$0xf]
      %v10897 = vld [vmem:[%s16 + $0x40] sm:$0xf]
      %v10898 = vld [vmem:[%s16 + $0x44] sm:$0xf]
      %v10899 = vld [vmem:[%s16 + $0x48] sm:$0xf]
      %v10900 = vld [vmem:[%s16 + $0x4c] sm:$0xf]
      %v10901 = vld [vmem:[%s16 + $0x50] sm:$0xf]
      %v10902 = vld [vmem:[%s16 + $0x54] sm:$0xf]
      %v10903 = vld [vmem:[%s16 + $0x58] sm:$0xf]
      %v10904 = vld [vmem:[%s16 + $0x5c] sm:$0xf]
      %v10905 = vld [vmem:[%s16 + $0x60] sm:$0xf]
      %v10906 = vld [vmem:[%s16 + $0x64] sm:$0xf]
      %v10907 = vld [vmem:[%s16 + $0x68] sm:$0xf]
      %v10908 = vld [vmem:[%s16 + $0x6c] sm:$0xf]
      %v10909 = vld [vmem:[%s16 + $0x70] sm:$0xf]
      %v10910 = vld [vmem:[%s16 + $0x74] sm:$0xf]
      %v10911 = vld [vmem:[%s16 + $0x78] sm:$0xf]
      %v10912 = vld [vmem:[%s16 + $0x7c] sm:$0xf]
      %v10913 = vld [vmem:[%s17] sm:$0x1]
      %v10915 = vlaneseq
      %v10916 = vshrl.u32 %v10915, 7
      %v10917 = vsub.s32 0, %v10916
      %v10918 = vrot.slane %v10913, %v10917
      %v10952 = vunpack.c.l.b16 %v10881
      %v10953 = vunpack.c.l.b16 %v10882
      %v10954 = vunpack.c.l.b16 %v10883
      %v10955 = vunpack.c.l.b16 %v10884
      %v10956 = vunpack.c.l.b16 %v10885
      %v10957 = vunpack.c.l.b16 %v10886
      %v10958 = vunpack.c.l.b16 %v10887
      %v10959 = vunpack.c.l.b16 %v10888
      %v10960 = vunpack.c.l.b16 %v10889
      %v10961 = vunpack.c.l.b16 %v10890
      %v10962 = vunpack.c.l.b16 %v10891
      %v10963 = vunpack.c.l.b16 %v10892
      %v10964 = vunpack.c.l.b16 %v10893
      %v10965 = vunpack.c.l.b16 %v10894
      %v10966 = vunpack.c.l.b16 %v10895
      %v10967 = vunpack.c.l.b16 %v10896
      %v10968 = vunpack.c.l.b16 %v10897
      %v10969 = vunpack.c.l.b16 %v10898
      %v10970 = vunpack.c.l.b16 %v10899
      %v10971 = vunpack.c.l.b16 %v10900
      %v10972 = vunpack.c.l.b16 %v10901
      %v10973 = vunpack.c.l.b16 %v10902
      %v10974 = vunpack.c.l.b16 %v10903
      %v10975 = vunpack.c.l.b16 %v10904
      %v10976 = vunpack.c.l.b16 %v10905
      %v10977 = vunpack.c.l.b16 %v10906
      %v10978 = vunpack.c.l.b16 %v10907
      %v10979 = vunpack.c.l.b16 %v10908
      %v10980 = vunpack.c.l.b16 %v10909
      %v10981 = vunpack.c.l.b16 %v10910
      %v10982 = vunpack.c.l.b16 %v10911
      %v10983 = vunpack.c.l.b16 %v10912
      %v10984 = vpack.c.b16 %v10953, %v10952
      %v10985 = vpack.c.b16 %v10955, %v10954
      %v10986 = vpack.c.b16 %v10957, %v10956
      %v10987 = vpack.c.b16 %v10959, %v10958
      %v10988 = vpack.c.b16 %v10961, %v10960
      %v10989 = vpack.c.b16 %v10963, %v10962
      %v10990 = vpack.c.b16 %v10965, %v10964
      %v10991 = vpack.c.b16 %v10967, %v10966
      %v10992 = vpack.c.b16 %v10969, %v10968
      %v10993 = vpack.c.b16 %v10971, %v10970
      %v10994 = vpack.c.b16 %v10973, %v10972
      %v10995 = vpack.c.b16 %v10975, %v10974
      %v10996 = vpack.c.b16 %v10977, %v10976
      %v10997 = vpack.c.b16 %v10979, %v10978
      %v10998 = vpack.c.b16 %v10981, %v10980
      %v10999 = vpack.c.b16 %v10983, %v10982
      %11016 = vmatprep.subr.bf16.mxu0 0
      %11017 = vmatpush1.bf16.msra.mxu0 %v10984
      %11018 = vmatprep.subr.bf16.mxu0 0
      %11019 = vmatpush1.bf16.msra.mxu0 %v10985
      %11020 = vmatprep.subr.bf16.mxu0 0
      %11021 = vmatpush1.bf16.msra.mxu0 %v10986
      %11022 = vmatprep.subr.bf16.mxu0 0
      %11023 = vmatpush1.bf16.msra.mxu0 %v10987
      %11024 = vmatprep.subr.bf16.mxu0 0
      %11025 = vmatpush1.bf16.msra.mxu0 %v10988
      %11026 = vmatprep.subr.bf16.mxu0 0
      %11027 = vmatpush1.bf16.msra.mxu0 %v10989
      %11028 = vmatprep.subr.bf16.mxu0 0
      %11029 = vmatpush1.bf16.msra.mxu0 %v10990
      %11030 = vmatprep.subr.bf16.mxu0 0
      %11031 = vmatpush1.bf16.msra.mxu0 %v10991
      %11032 = vmatprep.subr.bf16.mxu0 0
      %11033 = vmatpush1.bf16.msra.mxu0 %v10992
      %11034 = vmatprep.subr.bf16.mxu0 0
      %11035 = vmatpush1.bf16.msra.mxu0 %v10993
      %11036 = vmatprep.subr.bf16.mxu0 0
      %11037 = vmatpush1.bf16.msra.mxu0 %v10994
      %11038 = vmatprep.subr.bf16.mxu0 0
      %11039 = vmatpush1.bf16.msra.mxu0 %v10995
      %11040 = vmatprep.subr.bf16.mxu0 0
      %11041 = vmatpush1.bf16.msra.mxu0 %v10996
      %11042 = vmatprep.subr.bf16.mxu0 0
      %11043 = vmatpush1.bf16.msra.mxu0 %v10997
      %11044 = vmatprep.subr.bf16.mxu0 0
      %11045 = vmatpush1.bf16.msra.mxu0 %v10998
      %11046 = vmatprep.subr.bf16.mxu0 0
      %11047 = vmatpush1.bf16.msra.mxu0 %v10999
      %11048 = vmatprep.mubr.bf16.mxu0 %v10754
      %11049 = vmatmul.mubr.bf16.gmra.mrb[0].mxu0 %v10753
      %v11050 = vpop.f32.mrb[0].mxu0
      %v11051 = vadd.f32 %v10918, %v11050
      %v11052 = vpop.f32.mrb[0].mxu0
      %v11053 = vpop.f32.mrb[0].mxu0
      %v11054 = vadd.f32 %v10918, %v11053
      %v11055 = vpop.f32.mrb[0].mxu0
      %11056 = vmatprep.mubr.bf16.mxu0 %v10756
      %11057 = vmatmul.mubr.bf16.gmra.mrb[0].mxu0 %v10755
      %v11058 = vpop.f32.mrb[0].mxu0
      %v11059 = vadd.f32 %v10918, %v11058
      %v11060 = vpop.f32.mrb[0].mxu0
      %v11061 = vpop.f32.mrb[0].mxu0
      %v11062 = vadd.f32 %v10918, %v11061
      %v11063 = vpop.f32.mrb[0].mxu0
      %11064 = vmatprep.mubr.bf16.mxu0 %v10758
      %11065 = vmatmul.mubr.bf16.gmra.mrb[0].mxu0 %v10757
      %v11066 = vpop.f32.mrb[0].mxu0
      %v11067 = vadd.f32 %v10918, %v11066
      %v11068 = vpop.f32.mrb[0].mxu0
      %v11069 = vpop.f32.mrb[0].mxu0
      %v11070 = vadd.f32 %v10918, %v11069
      %v11071 = vpop.f32.mrb[0].mxu0
      %11072 = vmatprep.mubr.bf16.mxu0 %v10760
      %11073 = vmatmul.mubr.bf16.gmra.mrb[0].mxu0 %v10759
      %v11074 = vpop.f32.mrb[0].mxu0
      %v11075 = vadd.f32 %v10918, %v11074
      %v11076 = vpop.f32.mrb[0].mxu0
      %v11077 = vpop.f32.mrb[0].mxu0
      %v11078 = vadd.f32 %v10918, %v11077
      %v11079 = vpop.f32.mrb[0].mxu0
      %11080 = vmatprep.mubr.bf16.mxu0 %v10762
      %11081 = vmatmul.mubr.bf16.gmra.mrb[0].mxu0 %v10761
      %v11082 = vpop.f32.mrb[0].mxu0
      %v11083 = vadd.f32 %v10918, %v11082
      %v11084 = vpop.f32.mrb[0].mxu0
      %v11085 = vpop.f32.mrb[0].mxu0
      %v11086 = vadd.f32 %v10918, %v11085
      %v11087 = vpop.f32.mrb[0].mxu0
      %11088 = vmatprep.mubr.bf16.mxu0 %v10764
      %11089 = vmatmul.mubr.bf16.gmra.mrb[0].mxu0 %v10763
      %v11090 = vpop.f32.mrb[0].mxu0
      %v11091 = vadd.f32 %v10918, %v11090
      %v11092 = vpop.f32.mrb[0].mxu0
      %v11093 = vpop.f32.mrb[0].mxu0
      %v11094 = vadd.f32 %v10918, %v11093
      %v11095 = vpop.f32.mrb[0].mxu0
      %11096 = vmatprep.mubr.bf16.mxu0 %v10766
      %11097 = vmatmul.mubr.bf16.gmra.mrb[0].mxu0 %v10765
      %v11098 = vpop.f32.mrb[0].mxu0
      %v11099 = vadd.f32 %v10918, %v11098
      %v11100 = vpop.f32.mrb[0].mxu0
      %v11101 = vpop.f32.mrb[0].mxu0
      %v11102 = vadd.f32 %v10918, %v11101
      %v11103 = vpop.f32.mrb[0].mxu0
      %11104 = vmatprep.mubr.bf16.mxu0 %v10768
      %11105 = vmatmul.mubr.bf16.gmra.mrb[0].mxu0 %v10767
      %v11106 = vpop.f32.mrb[0].mxu0
      %v11107 = vadd.f32 %v10918, %v11106
      %v11108 = vpop.f32.mrb[0].mxu0
      %v11109 = vpop.f32.mrb[0].mxu0
      %v11110 = vadd.f32 %v10918, %v11109
      %v11111 = vpop.f32.mrb[0].mxu0
      %11112 = vmatprep.mubr.bf16.mxu0 %v10770
      %11113 = vmatmul.mubr.bf16.gmra.mrb[0].mxu0 %v10769
      %v11114 = vpop.f32.mrb[0].mxu0
      %v11115 = vadd.f32 %v10918, %v11114
      %v11116 = vpop.f32.mrb[0].mxu0
      %v11117 = vpop.f32.mrb[0].mxu0
      %v11118 = vadd.f32 %v10918, %v11117
      %v11119 = vpop.f32.mrb[0].mxu0
      %11120 = vmatprep.mubr.bf16.mxu0 %v10772
      %11121 = vmatmul.mubr.bf16.gmra.mrb[0].mxu0 %v10771
      %v11122 = vpop.f32.mrb[0].mxu0
      %v11123 = vadd.f32 %v10918, %v11122
      %v11124 = vpop.f32.mrb[0].mxu0
      %v11125 = vpop.f32.mrb[0].mxu0
      %v11126 = vadd.f32 %v10918, %v11125
      %v11127 = vpop.f32.mrb[0].mxu0
      %11128 = vmatprep.mubr.bf16.mxu0 %v10774
      %11129 = vmatmul.mubr.bf16.gmra.mrb[0].mxu0 %v10773
      %v11130 = vpop.f32.mrb[0].mxu0
      %v11131 = vadd.f32 %v10918, %v11130
      %v11132 = vpop.f32.mrb[0].mxu0
      %v11133 = vpop.f32.mrb[0].mxu0
      %v11134 = vadd.f32 %v10918, %v11133
      %v11135 = vpop.f32.mrb[0].mxu0
      %11136 = vmatprep.mubr.bf16.mxu0 %v10776
      %11137 = vmatmul.mubr.bf16.gmra.mrb[0].mxu0 %v10775
      %v11138 = vpop.f32.mrb[0].mxu0
      %v11139 = vadd.f32 %v10918, %v11138
      %v11140 = vpop.f32.mrb[0].mxu0
      %v11141 = vpop.f32.mrb[0].mxu0
      %v11142 = vadd.f32 %v10918, %v11141
      %v11143 = vpop.f32.mrb[0].mxu0
      %11144 = vmatprep.mubr.bf16.mxu0 %v10778
      %11145 = vmatmul.mubr.bf16.gmra.mrb[0].mxu0 %v10777
      %v11146 = vpop.f32.mrb[0].mxu0
      %v11147 = vadd.f32 %v10918, %v11146
      %v11148 = vpop.f32.mrb[0].mxu0
      %v11149 = vpop.f32.mrb[0].mxu0
      %v11150 = vadd.f32 %v10918, %v11149
      %v11151 = vpop.f32.mrb[0].mxu0
      %11152 = vmatprep.mubr.bf16.mxu0 %v10780
      %11153 = vmatmul.mubr.bf16.gmra.mrb[0].mxu0 %v10779
      %v11154 = vpop.f32.mrb[0].mxu0
      %v11155 = vadd.f32 %v10918, %v11154
      %v11156 = vpop.f32.mrb[0].mxu0
      %v11157 = vpop.f32.mrb[0].mxu0
      %v11158 = vadd.f32 %v10918, %v11157
      %v11159 = vpop.f32.mrb[0].mxu0
      %11160 = vmatprep.mubr.bf16.mxu0 %v10782
      %11161 = vmatmul.mubr.bf16.gmra.mrb[0].mxu0 %v10781
      %v11162 = vpop.f32.mrb[0].mxu0
      %v11163 = vadd.f32 %v10918, %v11162
      %v11164 = vpop.f32.mrb[0].mxu0
      %v11165 = vpop.f32.mrb[0].mxu0
      %v11166 = vadd.f32 %v10918, %v11165
      %v11167 = vpop.f32.mrb[0].mxu0
      %11168 = vmatprep.mubr.bf16.mxu0 %v10784
      %11169 = vmatmul.mubr.bf16.gmra.mrb[0].mxu0 %v10783
      %v11170 = vpop.f32.mrb[0].mxu0
      %v11171 = vadd.f32 %v10918, %v11170
      %v11172 = vpop.f32.mrb[0].mxu0
      %v11173 = vpop.f32.mrb[0].mxu0
      %v11174 = vadd.f32 %v10918, %v11173
      %v11175 = vpop.f32.mrb[0].mxu0
      %11176 = vmatprep.mubr.bf16.mxu0 %v10786
      %11177 = vmatmul.mubr.bf16.gmra.mrb[0].mxu0 %v10785
      %v11178 = vpop.f32.mrb[0].mxu0
      %v11179 = vadd.f32 %v10918, %v11178
      %v11180 = vpop.f32.mrb[0].mxu0
      %v11181 = vpop.f32.mrb[0].mxu0
      %v11182 = vadd.f32 %v10918, %v11181
      %v11183 = vpop.f32.mrb[0].mxu0
      %11184 = vmatprep.mubr.bf16.mxu0 %v10788
      %11185 = vmatmul.mubr.bf16.gmra.mrb[0].mxu0 %v10787
      %v11186 = vpop.f32.mrb[0].mxu0
      %v11187 = vadd.f32 %v10918, %v11186
      %v11188 = vpop.f32.mrb[0].mxu0
      %v11189 = vpop.f32.mrb[0].mxu0
      %v11190 = vadd.f32 %v10918, %v11189
      %v11191 = vpop.f32.mrb[0].mxu0
      %11192 = vmatprep.mubr.bf16.mxu0 %v10790
      %11193 = vmatmul.mubr.bf16.gmra.mrb[0].mxu0 %v10789
      %v11194 = vpop.f32.mrb[0].mxu0
      %v11195 = vadd.f32 %v10918, %v11194
      %v11196 = vpop.f32.mrb[0].mxu0
      %v11197 = vpop.f32.mrb[0].mxu0
      %v11198 = vadd.f32 %v10918, %v11197
      %v11199 = vpop.f32.mrb[0].mxu0
      %11200 = vmatprep.mubr.bf16.mxu0 %v10792
      %11201 = vmatmul.mubr.bf16.gmra.mrb[0].mxu0 %v10791
      %v11202 = vpop.f32.mrb[0].mxu0
      %v11203 = vadd.f32 %v10918, %v11202
      %v11204 = vpop.f32.mrb[0].mxu0
      %v11205 = vpop.f32.mrb[0].mxu0
      %v11206 = vadd.f32 %v10918, %v11205
      %v11207 = vpop.f32.mrb[0].mxu0
      %11208 = vmatprep.mubr.bf16.mxu0 %v10794
      %11209 = vmatmul.mubr.bf16.gmra.mrb[0].mxu0 %v10793
      %v11210 = vpop.f32.mrb[0].mxu0
      %v11211 = vadd.f32 %v10918, %v11210
      %v11212 = vpop.f32.mrb[0].mxu0
      %v11213 = vpop.f32.mrb[0].mxu0
      %v11214 = vadd.f32 %v10918, %v11213
      %v11215 = vpop.f32.mrb[0].mxu0
      %11216 = vmatprep.mubr.bf16.mxu0 %v10796
      %11217 = vmatmul.mubr.bf16.gmra.mrb[0].mxu0 %v10795
      %v11218 = vpop.f32.mrb[0].mxu0
      %v11219 = vadd.f32 %v10918, %v11218
      %v11220 = vpop.f32.mrb[0].mxu0
      %v11221 = vpop.f32.mrb[0].mxu0
      %v11222 = vadd.f32 %v10918, %v11221
      %v11223 = vpop.f32.mrb[0].mxu0
      %11224 = vmatprep.mubr.bf16.mxu0 %v10798
      %11225 = vmatmul.mubr.bf16.gmra.mrb[0].mxu0 %v10797
      %v11226 = vpop.f32.mrb[0].mxu0
      %v11227 = vadd.f32 %v10918, %v11226
      %v11228 = vpop.f32.mrb[0].mxu0
      %v11229 = vpop.f32.mrb[0].mxu0
      %v11230 = vadd.f32 %v10918, %v11229
      %v11231 = vpop.f32.mrb[0].mxu0
      %11232 = vmatprep.mubr.bf16.mxu0 %v10800
      %11233 = vmatmul.mubr.bf16.gmra.mrb[0].mxu0 %v10799
      %v11234 = vpop.f32.mrb[0].mxu0
      %v11235 = vadd.f32 %v10918, %v11234
      %v11236 = vpop.f32.mrb[0].mxu0
      %v11237 = vpop.f32.mrb[0].mxu0
      %v11238 = vadd.f32 %v10918, %v11237
      %v11239 = vpop.f32.mrb[0].mxu0
      %11240 = vmatprep.mubr.bf16.mxu0 %v10802
      %11241 = vmatmul.mubr.bf16.gmra.mrb[0].mxu0 %v10801
      %v11242 = vpop.f32.mrb[0].mxu0
      %v11243 = vadd.f32 %v10918, %v11242
      %v11244 = vpop.f32.mrb[0].mxu0
      %v11245 = vpop.f32.mrb[0].mxu0
      %v11246 = vadd.f32 %v10918, %v11245
      %v11247 = vpop.f32.mrb[0].mxu0
      %11248 = vmatprep.mubr.bf16.mxu0 %v10804
      %11249 = vmatmul.mubr.bf16.gmra.mrb[0].mxu0 %v10803
      %v11250 = vpop.f32.mrb[0].mxu0
      %v11251 = vadd.f32 %v10918, %v11250
      %v11252 = vpop.f32.mrb[0].mxu0
      %v11253 = vpop.f32.mrb[0].mxu0
      %v11254 = vadd.f32 %v10918, %v11253
      %v11255 = vpop.f32.mrb[0].mxu0
      %11256 = vmatprep.mubr.bf16.mxu0 %v10806
      %11257 = vmatmul.mubr.bf16.gmra.mrb[0].mxu0 %v10805
      %v11258 = vpop.f32.mrb[0].mxu0
      %v11259 = vadd.f32 %v10918, %v11258
      %v11260 = vpop.f32.mrb[0].mxu0
      %v11261 = vpop.f32.mrb[0].mxu0
      %v11262 = vadd.f32 %v10918, %v11261
      %v11263 = vpop.f32.mrb[0].mxu0
      %11264 = vmatprep.mubr.bf16.mxu0 %v10808
      %11265 = vmatmul.mubr.bf16.gmra.mrb[0].mxu0 %v10807
      %v11266 = vpop.f32.mrb[0].mxu0
      %v11267 = vadd.f32 %v10918, %v11266
      %v11268 = vpop.f32.mrb[0].mxu0
      %v11269 = vpop.f32.mrb[0].mxu0
      %v11270 = vadd.f32 %v10918, %v11269
      %v11271 = vpop.f32.mrb[0].mxu0
      %11272 = vmatprep.mubr.bf16.mxu0 %v10810
      %11273 = vmatmul.mubr.bf16.gmra.mrb[0].mxu0 %v10809
      %v11274 = vpop.f32.mrb[0].mxu0
      %v11275 = vadd.f32 %v10918, %v11274
      %v11276 = vpop.f32.mrb[0].mxu0
      %v11277 = vpop.f32.mrb[0].mxu0
      %v11278 = vadd.f32 %v10918, %v11277
      %v11279 = vpop.f32.mrb[0].mxu0
      %11280 = vmatprep.mubr.bf16.mxu0 %v10812
      %11281 = vmatmul.mubr.bf16.gmra.mrb[0].mxu0 %v10811
      %v11282 = vpop.f32.mrb[0].mxu0
      %v11283 = vadd.f32 %v10918, %v11282
      %v11284 = vpop.f32.mrb[0].mxu0
      %v11285 = vpop.f32.mrb[0].mxu0
      %v11286 = vadd.f32 %v10918, %v11285
      %v11287 = vpop.f32.mrb[0].mxu0
      %11288 = vmatprep.mubr.bf16.mxu0 %v10814
      %11289 = vmatmul.mubr.bf16.gmra.mrb[0].mxu0 %v10813
      %v11290 = vpop.f32.mrb[0].mxu0
      %v11291 = vadd.f32 %v10918, %v11290
      %v11292 = vpop.f32.mrb[0].mxu0
      %v11293 = vpop.f32.mrb[0].mxu0
      %v11294 = vadd.f32 %v10918, %v11293
      %v11295 = vpop.f32.mrb[0].mxu0
      %11296 = vmatprep.mubr.bf16.mxu0 %v10816
      %11297 = vmatmul.mubr.bf16.gmra.mrb[0].mxu0 %v10815
      %v11298 = vpop.f32.mrb[0].mxu0
      %v11299 = vadd.f32 %v10918, %v11298
      %v11300 = vpop.f32.mrb[0].mxu0
      %v11301 = vpop.f32.mrb[0].mxu0
      %v11302 = vadd.f32 %v10918, %v11301
      %v11303 = vpop.f32.mrb[0].mxu0
      %11304 = vmatprep.mubr.bf16.mxu0 %v10818
      %11305 = vmatmul.mubr.bf16.gmra.mrb[0].mxu0 %v10817
      %v11306 = vpop.f32.mrb[0].mxu0
      %v11307 = vadd.f32 %v10918, %v11306
      %v11308 = vpop.f32.mrb[0].mxu0
      %v11309 = vpop.f32.mrb[0].mxu0
      %v11310 = vadd.f32 %v10918, %v11309
      %v11311 = vpop.f32.mrb[0].mxu0
      %11312 = vmatprep.mubr.bf16.mxu0 %v10820
      %11313 = vmatmul.mubr.bf16.gmra.mrb[0].mxu0 %v10819
      %v11314 = vpop.f32.mrb[0].mxu0
      %v11315 = vadd.f32 %v10918, %v11314
      %v11316 = vpop.f32.mrb[0].mxu0
      %v11317 = vpop.f32.mrb[0].mxu0
      %v11318 = vadd.f32 %v10918, %v11317
      %v11319 = vpop.f32.mrb[0].mxu0
      %11320 = vmatprep.mubr.bf16.mxu0 %v10822
      %11321 = vmatmul.mubr.bf16.gmra.mrb[0].mxu0 %v10821
      %v11322 = vpop.f32.mrb[0].mxu0
      %v11323 = vadd.f32 %v10918, %v11322
      %v11324 = vpop.f32.mrb[0].mxu0
      %v11325 = vpop.f32.mrb[0].mxu0
      %v11326 = vadd.f32 %v10918, %v11325
      %v11327 = vpop.f32.mrb[0].mxu0
      %11328 = vmatprep.mubr.bf16.mxu0 %v10824
      %11329 = vmatmul.mubr.bf16.gmra.mrb[0].mxu0 %v10823
      %v11330 = vpop.f32.mrb[0].mxu0
      %v11331 = vadd.f32 %v10918, %v11330
      %v11332 = vpop.f32.mrb[0].mxu0
      %v11333 = vpop.f32.mrb[0].mxu0
      %v11334 = vadd.f32 %v10918, %v11333
      %v11335 = vpop.f32.mrb[0].mxu0
      %11336 = vmatprep.mubr.bf16.mxu0 %v10826
      %11337 = vmatmul.mubr.bf16.gmra.mrb[0].mxu0 %v10825
      %v11338 = vpop.f32.mrb[0].mxu0
      %v11339 = vadd.f32 %v10918, %v11338
      %v11340 = vpop.f32.mrb[0].mxu0
      %v11341 = vpop.f32.mrb[0].mxu0
      %v11342 = vadd.f32 %v10918, %v11341
      %v11343 = vpop.f32.mrb[0].mxu0
      %11344 = vmatprep.mubr.bf16.mxu0 %v10828
      %11345 = vmatmul.mubr.bf16.gmra.mrb[0].mxu0 %v10827
      %v11346 = vpop.f32.mrb[0].mxu0
      %v11347 = vadd.f32 %v10918, %v11346
      %v11348 = vpop.f32.mrb[0].mxu0
      %v11349 = vpop.f32.mrb[0].mxu0
      %v11350 = vadd.f32 %v10918, %v11349
      %v11351 = vpop.f32.mrb[0].mxu0
      %11352 = vmatprep.mubr.bf16.mxu0 %v10830
      %11353 = vmatmul.mubr.bf16.gmra.mrb[0].mxu0 %v10829
      %v11354 = vpop.f32.mrb[0].mxu0
      %v11355 = vadd.f32 %v10918, %v11354
      %v11356 = vpop.f32.mrb[0].mxu0
      %v11357 = vpop.f32.mrb[0].mxu0
      %v11358 = vadd.f32 %v10918, %v11357
      %v11359 = vpop.f32.mrb[0].mxu0
      %11360 = vmatprep.mubr.bf16.mxu0 %v10832
      %11361 = vmatmul.mubr.bf16.gmra.mrb[0].mxu0 %v10831
      %v11362 = vpop.f32.mrb[0].mxu0
      %v11363 = vadd.f32 %v10918, %v11362
      %v11364 = vpop.f32.mrb[0].mxu0
      %v11365 = vpop.f32.mrb[0].mxu0
      %v11366 = vadd.f32 %v10918, %v11365
      %v11367 = vpop.f32.mrb[0].mxu0
      %11368 = vmatprep.mubr.bf16.mxu0 %v10834
      %11369 = vmatmul.mubr.bf16.gmra.mrb[0].mxu0 %v10833
      %v11370 = vpop.f32.mrb[0].mxu0
      %v11371 = vadd.f32 %v10918, %v11370
      %v11372 = vpop.f32.mrb[0].mxu0
      %v11373 = vpop.f32.mrb[0].mxu0
      %v11374 = vadd.f32 %v10918, %v11373
      %v11375 = vpop.f32.mrb[0].mxu0
      %11376 = vmatprep.mubr.bf16.mxu0 %v10836
      %11377 = vmatmul.mubr.bf16.gmra.mrb[0].mxu0 %v10835
      %v11378 = vpop.f32.mrb[0].mxu0
      %v11379 = vadd.f32 %v10918, %v11378
      %v11380 = vpop.f32.mrb[0].mxu0
      %v11381 = vpop.f32.mrb[0].mxu0
      %v11382 = vadd.f32 %v10918, %v11381
      %v11383 = vpop.f32.mrb[0].mxu0
      %11384 = vmatprep.mubr.bf16.mxu0 %v10838
      %11385 = vmatmul.mubr.bf16.gmra.mrb[0].mxu0 %v10837
      %v11386 = vpop.f32.mrb[0].mxu0
      %v11387 = vadd.f32 %v10918, %v11386
      %v11388 = vpop.f32.mrb[0].mxu0
      %v11389 = vpop.f32.mrb[0].mxu0
      %v11390 = vadd.f32 %v10918, %v11389
      %v11391 = vpop.f32.mrb[0].mxu0
      %11392 = vmatprep.mubr.bf16.mxu0 %v10840
      %11393 = vmatmul.mubr.bf16.gmra.mrb[0].mxu0 %v10839
      %v11394 = vpop.f32.mrb[0].mxu0
      %v11395 = vadd.f32 %v10918, %v11394
      %v11396 = vpop.f32.mrb[0].mxu0
      %v11397 = vpop.f32.mrb[0].mxu0
      %v11398 = vadd.f32 %v10918, %v11397
      %v11399 = vpop.f32.mrb[0].mxu0
      %11400 = vmatprep.mubr.bf16.mxu0 %v10842
      %11401 = vmatmul.mubr.bf16.gmra.mrb[0].mxu0 %v10841
      %v11402 = vpop.f32.mrb[0].mxu0
      %v11403 = vadd.f32 %v10918, %v11402
      %v11404 = vpop.f32.mrb[0].mxu0
      %v11405 = vpop.f32.mrb[0].mxu0
      %v11406 = vadd.f32 %v10918, %v11405
      %v11407 = vpop.f32.mrb[0].mxu0
      %11408 = vmatprep.mubr.bf16.mxu0 %v10844
      %11409 = vmatmul.mubr.bf16.gmra.mrb[0].mxu0 %v10843
      %v11410 = vpop.f32.mrb[0].mxu0
      %v11411 = vadd.f32 %v10918, %v11410
      %v11412 = vpop.f32.mrb[0].mxu0
      %v11413 = vpop.f32.mrb[0].mxu0
      %v11414 = vadd.f32 %v10918, %v11413
      %v11415 = vpop.f32.mrb[0].mxu0
      %11416 = vmatprep.mubr.bf16.mxu0 %v10846
      %11417 = vmatmul.mubr.bf16.gmra.mrb[0].mxu0 %v10845
      %v11418 = vpop.f32.mrb[0].mxu0
      %v11419 = vadd.f32 %v10918, %v11418
      %v11420 = vpop.f32.mrb[0].mxu0
      %v11421 = vpop.f32.mrb[0].mxu0
      %v11422 = vadd.f32 %v10918, %v11421
      %v11423 = vpop.f32.mrb[0].mxu0
      %11424 = vmatprep.mubr.bf16.mxu0 %v10848
      %11425 = vmatmul.mubr.bf16.gmra.mrb[0].mxu0 %v10847
      %v11426 = vpop.f32.mrb[0].mxu0
      %v11427 = vadd.f32 %v10918, %v11426
      %v11428 = vpop.f32.mrb[0].mxu0
      %v11429 = vpop.f32.mrb[0].mxu0
      %v11430 = vadd.f32 %v10918, %v11429
      %v11431 = vpop.f32.mrb[0].mxu0
      %11432 = vmatprep.mubr.bf16.mxu0 %v10850
      %11433 = vmatmul.mubr.bf16.gmra.mrb[0].mxu0 %v10849
      %v11434 = vpop.f32.mrb[0].mxu0
      %v11435 = vadd.f32 %v10918, %v11434
      %v11436 = vpop.f32.mrb[0].mxu0
      %v11437 = vpop.f32.mrb[0].mxu0
      %v11438 = vadd.f32 %v10918, %v11437
      %v11439 = vpop.f32.mrb[0].mxu0
      %11440 = vmatprep.mubr.bf16.mxu0 %v10852
      %11441 = vmatmul.mubr.bf16.gmra.mrb[0].mxu0 %v10851
      %v11442 = vpop.f32.mrb[0].mxu0
      %v11443 = vadd.f32 %v10918, %v11442
      %v11444 = vpop.f32.mrb[0].mxu0
      %v11445 = vpop.f32.mrb[0].mxu0
      %v11446 = vadd.f32 %v10918, %v11445
      %v11447 = vpop.f32.mrb[0].mxu0
      %11448 = vmatprep.mubr.bf16.mxu0 %v10854
      %11449 = vmatmul.mubr.bf16.gmra.mrb[0].mxu0 %v10853
      %v11450 = vpop.f32.mrb[0].mxu0
      %v11451 = vadd.f32 %v10918, %v11450
      %v11452 = vpop.f32.mrb[0].mxu0
      %v11453 = vpop.f32.mrb[0].mxu0
      %v11454 = vadd.f32 %v10918, %v11453
      %v11455 = vpop.f32.mrb[0].mxu0
      %11456 = vmatprep.mubr.bf16.mxu0 %v10856
      %11457 = vmatmul.mubr.bf16.gmra.mrb[0].mxu0 %v10855
      %v11458 = vpop.f32.mrb[0].mxu0
      %v11459 = vadd.f32 %v10918, %v11458
      %v11460 = vpop.f32.mrb[0].mxu0
      %v11461 = vpop.f32.mrb[0].mxu0
      %v11462 = vadd.f32 %v10918, %v11461
      %v11463 = vpop.f32.mrb[0].mxu0
      %11464 = vmatprep.mubr.bf16.mxu0 %v10858
      %11465 = vmatmul.mubr.bf16.gmra.mrb[0].mxu0 %v10857
      %v11466 = vpop.f32.mrb[0].mxu0
      %v11467 = vadd.f32 %v10918, %v11466
      %v11468 = vpop.f32.mrb[0].mxu0
      %v11469 = vpop.f32.mrb[0].mxu0
      %v11470 = vadd.f32 %v10918, %v11469
      %v11471 = vpop.f32.mrb[0].mxu0
      %11472 = vmatprep.mubr.bf16.mxu0 %v10860
      %11473 = vmatmul.mubr.bf16.gmra.mrb[0].mxu0 %v10859
      %v11474 = vpop.f32.mrb[0].mxu0
      %v11475 = vadd.f32 %v10918, %v11474
      %v11476 = vpop.f32.mrb[0].mxu0
      %v11477 = vpop.f32.mrb[0].mxu0
      %v11478 = vadd.f32 %v10918, %v11477
      %v11479 = vpop.f32.mrb[0].mxu0
      %11480 = vmatprep.mubr.bf16.mxu0 %v10862
      %11481 = vmatmul.mubr.bf16.gmra.mrb[0].mxu0 %v10861
      %v11482 = vpop.f32.mrb[0].mxu0
      %v11483 = vadd.f32 %v10918, %v11482
      %v11484 = vpop.f32.mrb[0].mxu0
      %v11485 = vpop.f32.mrb[0].mxu0
      %v11486 = vadd.f32 %v10918, %v11485
      %v11487 = vpop.f32.mrb[0].mxu0
      %11488 = vmatprep.mubr.bf16.mxu0 %v10864
      %11489 = vmatmul.mubr.bf16.gmra.mrb[0].mxu0 %v10863
      %v11490 = vpop.f32.mrb[0].mxu0
      %v11491 = vadd.f32 %v10918, %v11490
      %v11492 = vpop.f32.mrb[0].mxu0
      %v11493 = vpop.f32.mrb[0].mxu0
      %v11494 = vadd.f32 %v10918, %v11493
      %v11495 = vpop.f32.mrb[0].mxu0
      %11496 = vmatprep.mubr.bf16.mxu0 %v10866
      %11497 = vmatmul.mubr.bf16.gmra.mrb[0].mxu0 %v10865
      %v11498 = vpop.f32.mrb[0].mxu0
      %v11499 = vadd.f32 %v10918, %v11498
      %v11500 = vpop.f32.mrb[0].mxu0
      %v11501 = vpop.f32.mrb[0].mxu0
      %v11502 = vadd.f32 %v10918, %v11501
      %v11503 = vpop.f32.mrb[0].mxu0
      %11504 = vmatprep.mubr.bf16.mxu0 %v10868
      %11505 = vmatmul.mubr.bf16.gmra.mrb[0].mxu0 %v10867
      %v11506 = vpop.f32.mrb[0].mxu0
      %v11507 = vadd.f32 %v10918, %v11506
      %v11508 = vpop.f32.mrb[0].mxu0
      %v11509 = vpop.f32.mrb[0].mxu0
      %v11510 = vadd.f32 %v10918, %v11509
      %v11511 = vpop.f32.mrb[0].mxu0
      %11512 = vmatprep.mubr.bf16.mxu0 %v10870
      %11513 = vmatmul.mubr.bf16.gmra.mrb[0].mxu0 %v10869
      %v11514 = vpop.f32.mrb[0].mxu0
      %v11515 = vadd.f32 %v10918, %v11514
      %v11516 = vpop.f32.mrb[0].mxu0
      %v11517 = vpop.f32.mrb[0].mxu0
      %v11518 = vadd.f32 %v10918, %v11517
      %v11519 = vpop.f32.mrb[0].mxu0
      %11520 = vmatprep.mubr.bf16.mxu0 %v10872
      %11521 = vmatmul.mubr.bf16.gmra.mrb[0].mxu0 %v10871
      %v11522 = vpop.f32.mrb[0].mxu0
      %v11523 = vadd.f32 %v10918, %v11522
      %v11524 = vpop.f32.mrb[0].mxu0
      %v11525 = vpop.f32.mrb[0].mxu0
      %v11526 = vadd.f32 %v10918, %v11525
      %v11527 = vpop.f32.mrb[0].mxu0
      %11528 = vmatprep.mubr.bf16.mxu0 %v10874
      %11529 = vmatmul.mubr.bf16.gmra.mrb[0].mxu0 %v10873
      %v11530 = vpop.f32.mrb[0].mxu0
      %v11531 = vadd.f32 %v10918, %v11530
      %v11532 = vpop.f32.mrb[0].mxu0
      %v11533 = vpop.f32.mrb[0].mxu0
      %v11534 = vadd.f32 %v10918, %v11533
      %v11535 = vpop.f32.mrb[0].mxu0
      %11536 = vmatprep.mubr.bf16.mxu0 %v10876
      %11537 = vmatmul.mubr.bf16.gmra.mrb[0].mxu0 %v10875
      %v11538 = vpop.f32.mrb[0].mxu0
      %v11539 = vadd.f32 %v10918, %v11538
      %v11540 = vpop.f32.mrb[0].mxu0
      %v11541 = vpop.f32.mrb[0].mxu0
      %v11542 = vadd.f32 %v10918, %v11541
      %v11543 = vpop.f32.mrb[0].mxu0
      %11544 = vmatprep.mubr.bf16.mxu0 %v10878
      %11545 = vmatmul.mubr.bf16.gmra.mrb[0].mxu0 %v10877
      %v11546 = vpop.f32.mrb[0].mxu0
      %v11547 = vadd.f32 %v10918, %v11546
      %v11548 = vpop.f32.mrb[0].mxu0
      %v11549 = vpop.f32.mrb[0].mxu0
      %v11550 = vadd.f32 %v10918, %v11549
      %v11551 = vpop.f32.mrb[0].mxu0
      %11552 = vmatprep.mubr.bf16.mxu0 %v10880
      %11553 = vmatmul.mubr.bf16.gmra.mrb[0].mxu0 %v10879
      %v11554 = vpop.f32.mrb[0].mxu0
      %v11555 = vadd.f32 %v10918, %v11554
      %v11556 = vpop.f32.mrb[0].mxu0
      %v11557 = vpop.f32.mrb[0].mxu0
      %v11558 = vadd.f32 %v10918, %v11557
      %v11559 = vpop.f32.mrb[0].mxu0
      %11560 = vdwg.mxu0
      %vm11561 = vcmask 31744
      %11562 = vst.msk [vmem:[%s577] sm:$0xff] %vm11561, %v11051
      %11563 = vst.msk [vmem:[%s577 + $0x8] sm:$0xff] %vm11561, %v11054
      %11564 = vst.msk [vmem:[%s577 + $0x10] sm:$0xff] %vm11561, %v11059
      %11565 = vst.msk [vmem:[%s577 + $0x18] sm:$0xff] %vm11561, %v11062
      %11566 = vst.msk [vmem:[%s577 + $0x20] sm:$0xff] %vm11561, %v11067
      %11567 = vst.msk [vmem:[%s577 + $0x28] sm:$0xff] %vm11561, %v11070
      %11568 = vst.msk [vmem:[%s577 + $0x30] sm:$0xff] %vm11561, %v11075
      %11569 = vst.msk [vmem:[%s577 + $0x38] sm:$0xff] %vm11561, %v11078
      %11570 = vst.msk [vmem:[%s577 + $0x40] sm:$0xff] %vm11561, %v11083
      %11571 = vst.msk [vmem:[%s577 + $0x48] sm:$0xff] %vm11561, %v11086
      %11572 = vst.msk [vmem:[%s577 + $0x50] sm:$0xff] %vm11561, %v11091
      %11573 = vst.msk [vmem:[%s577 + $0x58] sm:$0xff] %vm11561, %v11094
      %11574 = vst.msk [vmem:[%s577 + $0x60] sm:$0xff] %vm11561, %v11099
      %11575 = vst.msk [vmem:[%s577 + $0x68] sm:$0xff] %vm11561, %v11102
      %11576 = vst.msk [vmem:[%s577 + $0x70] sm:$0xff] %vm11561, %v11107
      %11577 = vst.msk [vmem:[%s577 + $0x78] sm:$0xff] %vm11561, %v11110
      %11578 = vst.msk [vmem:[%s577 + $0x80] sm:$0xff] %vm11561, %v11115
      %11579 = vst.msk [vmem:[%s577 + $0x88] sm:$0xff] %vm11561, %v11118
      %11580 = vst.msk [vmem:[%s577 + $0x90] sm:$0xff] %vm11561, %v11123
      %11581 = vst.msk [vmem:[%s577 + $0x98] sm:$0xff] %vm11561, %v11126
      %11582 = vst.msk [vmem:[%s577 + $0xa0] sm:$0xff] %vm11561, %v11131
      %11583 = vst.msk [vmem:[%s577 + $0xa8] sm:$0xff] %vm11561, %v11134
      %11584 = vst.msk [vmem:[%s577 + $0xb0] sm:$0xff] %vm11561, %v11139
      %11585 = vst.msk [vmem:[%s577 + $0xb8] sm:$0xff] %vm11561, %v11142
      %11586 = vst.msk [vmem:[%s577 + $0xc0] sm:$0xff] %vm11561, %v11147
      %11587 = vst.msk [vmem:[%s577 + $0xc8] sm:$0xff] %vm11561, %v11150
      %11588 = vst.msk [vmem:[%s577 + $0xd0] sm:$0xff] %vm11561, %v11155
      %11589 = vst.msk [vmem:[%s577 + $0xd8] sm:$0xff] %vm11561, %v11158
      %11590 = vst.msk [vmem:[%s577 + $0xe0] sm:$0xff] %vm11561, %v11163
      %11591 = vst.msk [vmem:[%s577 + $0xe8] sm:$0xff] %vm11561, %v11166
      %11592 = vst.msk [vmem:[%s577 + $0xf0] sm:$0xff] %vm11561, %v11171
      %11593 = vst.msk [vmem:[%s577 + $0xf8] sm:$0xff] %vm11561, %v11174
      %11594 = vst.msk [vmem:[%s577 + $0x100] sm:$0xff] %vm11561, %v11179
      %11595 = vst.msk [vmem:[%s577 + $0x108] sm:$0xff] %vm11561, %v11182
      %11596 = vst.msk [vmem:[%s577 + $0x110] sm:$0xff] %vm11561, %v11187
      %11597 = vst.msk [vmem:[%s577 + $0x118] sm:$0xff] %vm11561, %v11190
      %11598 = vst.msk [vmem:[%s577 + $0x120] sm:$0xff] %vm11561, %v11195
      %11599 = vst.msk [vmem:[%s577 + $0x128] sm:$0xff] %vm11561, %v11198
      %11600 = vst.msk [vmem:[%s577 + $0x130] sm:$0xff] %vm11561, %v11203
      %11601 = vst.msk [vmem:[%s577 + $0x138] sm:$0xff] %vm11561, %v11206
      %11602 = vst.msk [vmem:[%s577 + $0x140] sm:$0xff] %vm11561, %v11211
      %11603 = vst.msk [vmem:[%s577 + $0x148] sm:$0xff] %vm11561, %v11214
      %11604 = vst.msk [vmem:[%s577 + $0x150] sm:$0xff] %vm11561, %v11219
      %11605 = vst.msk [vmem:[%s577 + $0x158] sm:$0xff] %vm11561, %v11222
      %11606 = vst.msk [vmem:[%s577 + $0x160] sm:$0xff] %vm11561, %v11227
      %11607 = vst.msk [vmem:[%s577 + $0x168] sm:$0xff] %vm11561, %v11230
      %11608 = vst.msk [vmem:[%s577 + $0x170] sm:$0xff] %vm11561, %v11235
      %11609 = vst.msk [vmem:[%s577 + $0x178] sm:$0xff] %vm11561, %v11238
      %11610 = vst.msk [vmem:[%s577 + $0x180] sm:$0xff] %vm11561, %v11243
      %11611 = vst.msk [vmem:[%s577 + $0x188] sm:$0xff] %vm11561, %v11246
      %11612 = vst.msk [vmem:[%s577 + $0x190] sm:$0xff] %vm11561, %v11251
      %11613 = vst.msk [vmem:[%s577 + $0x198] sm:$0xff] %vm11561, %v11254
      %11614 = vst.msk [vmem:[%s577 + $0x1a0] sm:$0xff] %vm11561, %v11259
      %11615 = vst.msk [vmem:[%s577 + $0x1a8] sm:$0xff] %vm11561, %v11262
      %11616 = vst.msk [vmem:[%s577 + $0x1b0] sm:$0xff] %vm11561, %v11267
      %11617 = vst.msk [vmem:[%s577 + $0x1b8] sm:$0xff] %vm11561, %v11270
      %11618 = vst.msk [vmem:[%s577 + $0x1c0] sm:$0xff] %vm11561, %v11275
      %11619 = vst.msk [vmem:[%s577 + $0x1c8] sm:$0xff] %vm11561, %v11278
      %11620 = vst.msk [vmem:[%s577 + $0x1d0] sm:$0xff] %vm11561, %v11283
      %11621 = vst.msk [vmem:[%s577 + $0x1d8] sm:$0xff] %vm11561, %v11286
      %11622 = vst.msk [vmem:[%s577 + $0x1e0] sm:$0xff] %vm11561, %v11291
      %11623 = vst.msk [vmem:[%s577 + $0x1e8] sm:$0xff] %vm11561, %v11294
      %11624 = vst.msk [vmem:[%s577 + $0x1f0] sm:$0xff] %vm11561, %v11299
      %11625 = vst.msk [vmem:[%s577 + $0x1f8] sm:$0xff] %vm11561, %v11302
      %11626 = vst.msk [vmem:[%s577 + $0x200] sm:$0xff] %vm11561, %v11307
      %11627 = vst.msk [vmem:[%s577 + $0x208] sm:$0xff] %vm11561, %v11310
      %11628 = vst.msk [vmem:[%s577 + $0x210] sm:$0xff] %vm11561, %v11315
      %11629 = vst.msk [vmem:[%s577 + $0x218] sm:$0xff] %vm11561, %v11318
      %11630 = vst.msk [vmem:[%s577 + $0x220] sm:$0xff] %vm11561, %v11323
      %11631 = vst.msk [vmem:[%s577 + $0x228] sm:$0xff] %vm11561, %v11326
      %11632 = vst.msk [vmem:[%s577 + $0x230] sm:$0xff] %vm11561, %v11331
      %11633 = vst.msk [vmem:[%s577 + $0x238] sm:$0xff] %vm11561, %v11334
      %11634 = vst.msk [vmem:[%s577 + $0x240] sm:$0xff] %vm11561, %v11339
      %11635 = vst.msk [vmem:[%s577 + $0x248] sm:$0xff] %vm11561, %v11342
      %11636 = vst.msk [vmem:[%s577 + $0x250] sm:$0xff] %vm11561, %v11347
      %11637 = vst.msk [vmem:[%s577 + $0x258] sm:$0xff] %vm11561, %v11350
      %11638 = vst.msk [vmem:[%s577 + $0x260] sm:$0xff] %vm11561, %v11355
      %11639 = vst.msk [vmem:[%s577 + $0x268] sm:$0xff] %vm11561, %v11358
      %11640 = vst.msk [vmem:[%s577 + $0x270] sm:$0xff] %vm11561, %v11363
      %11641 = vst.msk [vmem:[%s577 + $0x278] sm:$0xff] %vm11561, %v11366
      %11642 = vst.msk [vmem:[%s577 + $0x280] sm:$0xff] %vm11561, %v11371
      %11643 = vst.msk [vmem:[%s577 + $0x288] sm:$0xff] %vm11561, %v11374
      %11644 = vst.msk [vmem:[%s577 + $0x290] sm:$0xff] %vm11561, %v11379
      %11645 = vst.msk [vmem:[%s577 + $0x298] sm:$0xff] %vm11561, %v11382
      %11646 = vst.msk [vmem:[%s577 + $0x2a0] sm:$0xff] %vm11561, %v11387
      %11647 = vst.msk [vmem:[%s577 + $0x2a8] sm:$0xff] %vm11561, %v11390
      %11648 = vst.msk [vmem:[%s577 + $0x2b0] sm:$0xff] %vm11561, %v11395
      %11649 = vst.msk [vmem:[%s577 + $0x2b8] sm:$0xff] %vm11561, %v11398
      %11650 = vst.msk [vmem:[%s577 + $0x2c0] sm:$0xff] %vm11561, %v11403
      %11651 = vst.msk [vmem:[%s577 + $0x2c8] sm:$0xff] %vm11561, %v11406
      %11652 = vst.msk [vmem:[%s577 + $0x2d0] sm:$0xff] %vm11561, %v11411
      %11653 = vst.msk [vmem:[%s577 + $0x2d8] sm:$0xff] %vm11561, %v11414
      %11654 = vst.msk [vmem:[%s577 + $0x2e0] sm:$0xff] %vm11561, %v11419
      %11655 = vst.msk [vmem:[%s577 + $0x2e8] sm:$0xff] %vm11561, %v11422
      %11656 = vst.msk [vmem:[%s577 + $0x2f0] sm:$0xff] %vm11561, %v11427
      %11657 = vst.msk [vmem:[%s577 + $0x2f8] sm:$0xff] %vm11561, %v11430
      %11658 = vst.msk [vmem:[%s577 + $0x300] sm:$0xff] %vm11561, %v11435
      %11659 = vst.msk [vmem:[%s577 + $0x308] sm:$0xff] %vm11561, %v11438
      %11660 = vst.msk [vmem:[%s577 + $0x310] sm:$0xff] %vm11561, %v11443
      %11661 = vst.msk [vmem:[%s577 + $0x318] sm:$0xff] %vm11561, %v11446
      %11662 = vst.msk [vmem:[%s577 + $0x320] sm:$0xff] %vm11561, %v11451
      %11663 = vst.msk [vmem:[%s577 + $0x328] sm:$0xff] %vm11561, %v11454
      %11664 = vst.msk [vmem:[%s577 + $0x330] sm:$0xff] %vm11561, %v11459
      %11665 = vst.msk [vmem:[%s577 + $0x338] sm:$0xff] %vm11561, %v11462
      %11666 = vst.msk [vmem:[%s577 + $0x340] sm:$0xff] %vm11561, %v11467
      %11667 = vst.msk [vmem:[%s577 + $0x348] sm:$0xff] %vm11561, %v11470
      %11668 = vst.msk [vmem:[%s577 + $0x350] sm:$0xff] %vm11561, %v11475
      %11669 = vst.msk [vmem:[%s577 + $0x358] sm:$0xff] %vm11561, %v11478
      %11670 = vst.msk [vmem:[%s577 + $0x360] sm:$0xff] %vm11561, %v11483
      %11671 = vst.msk [vmem:[%s577 + $0x368] sm:$0xff] %vm11561, %v11486
      %11672 = vst.msk [vmem:[%s577 + $0x370] sm:$0xff] %vm11561, %v11491
      %11673 = vst.msk [vmem:[%s577 + $0x378] sm:$0xff] %vm11561, %v11494
      %11674 = vst.msk [vmem:[%s577 + $0x380] sm:$0xff] %vm11561, %v11499
      %11675 = vst.msk [vmem:[%s577 + $0x388] sm:$0xff] %vm11561, %v11502
      %11676 = vst.msk [vmem:[%s577 + $0x390] sm:$0xff] %vm11561, %v11507
      %11677 = vst.msk [vmem:[%s577 + $0x398] sm:$0xff] %vm11561, %v11510
      %11678 = vst.msk [vmem:[%s577 + $0x3a0] sm:$0xff] %vm11561, %v11515
      %11679 = vst.msk [vmem:[%s577 + $0x3a8] sm:$0xff] %vm11561, %v11518
      %11680 = vst.msk [vmem:[%s577 + $0x3b0] sm:$0xff] %vm11561, %v11523
      %11681 = vst.msk [vmem:[%s577 + $0x3b8] sm:$0xff] %vm11561, %v11526
      %11682 = vst.msk [vmem:[%s577 + $0x3c0] sm:$0xff] %vm11561, %v11531
      %11683 = vst.msk [vmem:[%s577 + $0x3c8] sm:$0xff] %vm11561, %v11534
      %11684 = vst.msk [vmem:[%s577 + $0x3d0] sm:$0xff] %vm11561, %v11539
      %11685 = vst.msk [vmem:[%s577 + $0x3d8] sm:$0xff] %vm11561, %v11542
      %11686 = vst.msk [vmem:[%s577 + $0x3e0] sm:$0xff] %vm11561, %v11547
      %11687 = vst.msk [vmem:[%s577 + $0x3e8] sm:$0xff] %vm11561, %v11550
      %11688 = vst.msk [vmem:[%s577 + $0x3f0] sm:$0xff] %vm11561, %v11555
      %11689 = vst.msk [vmem:[%s577 + $0x3f8] sm:$0xff] %vm11561, %v11558
      %s11690 = smul.u32 128, %s29
      %p11691 = scmp.lt.s32.totalorder %s11690, 511
      %s11692 = scalar_select %p11691, %s11690, 511
      %s11693 = smul.addr %s11692, 8
      %s11694 = scalar_lea.vmem %s18, %s11693
      // Predicated region
      $region93: #{nerf_forward.1} parent=91 // pred_check
        %p11695 = pneg %p430
      $region94: #{nerf_forward.1} parent=91 // pred_check_branch
        %11697 = sbr.rel (%p11695) target = $region96
      $region95: #{nerf_forward.1} parent=91 // pred_region
        %s11698 = smul.u32 128, %s29
      $region96: #{nerf_forward.1} parent=91 // pred_fallthru
        _
    $region92: #{nerf_forward.1} parent=5 // pred_fallthru
      _
    %p11699 = scmp.le.s32.totalorder 2, %s24
    // Predicated region
    $region97: #{nerf_forward.1} parent=5 // pred_check
      %p11700 = pneg %p11699
    $region98: #{nerf_forward.1} parent=5 // pred_check_branch
      %11702 = sbr.rel (%p11700) target = $region100
    $region99: #{nerf_forward.1} parent=5 // pred_region
      %s11703 = ssub.s32 %s24, 2
      // Predicated region
      $region101: #{nerf_forward.1} parent=99 // pred_check
        %p11704 = pneg %p436
      $region102: #{nerf_forward.1} parent=99 // pred_check_branch
        %11706 = sbr.rel (%p11704) target = $region104
      $region103: #{nerf_forward.1} parent=99 // pred_region
        %s11707 = smul.u32 128, %s30
        %p11708 = scmp.lt.s32.totalorder %s11707, 511
        %s11709 = scalar_select %p11708, %s11707, 511
        %s11710 = smul.addr %s11709, 8
        %s11711 = scalar_lea.vmem %s18, %s11710
      $region104: #{nerf_forward.1} parent=99 // pred_fallthru
        _
    $region100: #{nerf_forward.1} parent=5 // pred_fallthru
      _
  $region6: #{nerf_forward.1} parent=0 // loop_footer
    %s28 = sadd.s32 1, %s24
  $region7: #{nerf_forward.1} parent=0 // loop_footer_branch
    %23 = sbr.rel target = $region3
  $region8: #{nerf_forward.1} parent=0 // loop_exit
    _

</llo_original>
